<compile_context>
chip_gen: v7x
topology: tpu7x:2x2x1
jax: 0.10.0
libtpu: 0.0.40
codegen_flags: <defaults>
</compile_context>

<pallas_src>
import functools
import math

import numpy as np

import jax
import jax.numpy as jnp
from jax import lax
from jax.experimental import pallas as pl
from jax.experimental.pallas import tpu as pltpu


LANE = 128      # per-gate / per-direction hidden padding (lane width)
SUBLANE = 16    # batch padding (native bf16 sublane tile)


def _round_up(x, m):
    return (x + m - 1) // m * m


@functools.lru_cache(maxsize=None)
def _vmem_capacity_bytes():
    """Per-generation VMEM capacity (conservative fallback: v7x 64 MiB/TC)."""
    try:
        info = pltpu.get_tpu_info()
        cap = getattr(info, "vmem_capacity_bytes", None)
        if cap:
            return int(cap)
    except Exception:
        pass
    return 64 * 1024 * 1024


# -----------------------------------------------------------------------------
# Pallas kernel: one fused bidirectional GRU layer over the full sequence
# -----------------------------------------------------------------------------
def _bigru_layer_kernel(x_ref, wih_f_ref, wih_b_ref, whh_f_ref, whh_b_ref,
                        bih_f_ref, bih_b_ref, bhh_f_ref, bhh_b_ref,
                        hseq_ref, hfin_ref, gif_ref, gib_ref):
    """Fused forward+backward GRU layer (Hp = padded hidden, B = padded batch).

    x_ref      : (T*B, E)     bf16  time-major rows; rows [t*B:(t+1)*B] = step t
    wih_{f,b}  : (E, 3*Hp)    bf16  per-direction input weights, cols [r|z|n]
    whh_{f,b}  : (Hp, 3*Hp)   bf16  per-direction recurrent weights, cols [r|z|n]
    bih_{f,b}  : (1, 3*Hp)    f32
    bhh_{f,b}  : (1, 3*Hp)    f32
    hseq_ref   : (T*B, 2*Hp)  bf16  per-step output [h_f(t) | h_b(t)]
    hfin_ref   : (B, 2*Hp)    f32   [h_f(T-1) | h_b(0)] (final hidden, concat)
    gif_ref    : (T*B, 3*Hp)  bf16  VMEM scratch: fwd input projection (+b_ih)
    gib_ref    : (T*B, 3*Hp)  bf16  VMEM scratch: bwd input projection (+b_ih)
    """
    TB = x_ref.shape[0]
    B, Hp2 = hfin_ref.shape
    Hp = Hp2 // 2
    G3 = 3 * Hp
    T = TB // B

    # --- hoisted input projections: two bf16 MXU GEMMs over all time steps --
    x = x_ref[...]
    gif_ref[...] = (
        jnp.dot(x, wih_f_ref[...], preferred_element_type=jnp.float32)
        + bih_f_ref[...]).astype(gif_ref.dtype)
    gib_ref[...] = (
        jnp.dot(x, wih_b_ref[...], preferred_element_type=jnp.float32)
        + bih_b_ref[...]).astype(gib_ref.dtype)

    whh_f = whh_f_ref[...]                               # bf16, loop-invariant
    whh_b = whh_b_ref[...]
    bhh_f = jnp.broadcast_to(bhh_f_ref[...], (B, G3))    # hoisted out of loop
    bhh_b = jnp.broadcast_to(bhh_b_ref[...], (B, G3))

    def gru_cell(gi, gh, h):
        # gi, gh: (B, 3Hp) with 128-lane-aligned gate slices [r|z|n]; h: (B,Hp)
        rz = jax.nn.sigmoid(gi[:, :2 * Hp] + gh[:, :2 * Hp])
        r = rz[:, :Hp]
        z = rz[:, Hp:]
        n = jnp.tanh(gi[:, 2 * Hp:] + r * gh[:, 2 * Hp:])
        return n + z * (h - n)                            # == (1-z)*n + z*h

    def step(t, carry):
        h_f, h_b = carry                                  # (B, Hp) f32 each
        off_f = pl.multiple_of(t * B, B)                  # forward-time rows
        off_b = pl.multiple_of((T - 1 - t) * B, B)        # backward-time rows
        # Per-direction recurrent projections: dense (B,Hp)@(Hp,3Hp) dots
        # (no structurally-zero block-diagonal halves).
        gh_f = jnp.dot(h_f.astype(jnp.bfloat16), whh_f,
                       preferred_element_type=jnp.float32) + bhh_f
        gh_b = jnp.dot(h_b.astype(jnp.bfloat16), whh_b,
                       preferred_element_type=jnp.float32) + bhh_b
        # Exactly the needed 3*Hp columns per direction, no concat.
        gi_f = gif_ref[pl.ds(off_f, B), :].astype(jnp.float32)
        gi_b = gib_ref[pl.ds(off_b, B), :].astype(jnp.float32)
        h_f = gru_cell(gi_f, gh_f, h_f)
        h_b = gru_cell(gi_b, gh_b, h_b)
        # Forward half belongs to time t, backward half to time T-1-t.
        hseq_ref[pl.ds(off_f, B), 0:Hp] = h_f.astype(hseq_ref.dtype)
        hseq_ref[pl.ds(off_b, B), Hp:Hp2] = h_b.astype(hseq_ref.dtype)
        return h_f, h_b

    h0 = jnp.zeros((B, Hp), jnp.float32)
    unroll = T if T <= 8 else 4                           # serial chain: unroll
    h_f, h_b = lax.fori_loop(0, T, step, (h0, h0), unroll=unroll)
    hfin_ref[:, 0:Hp] = h_f                               # h_f final (t = T-1)
    hfin_ref[:, Hp:Hp2] = h_b                             # h_b final (t = 0)


def bigru_layer(x2d, pf, pb, *, batch):
    """x2d: (T*B, E) bf16 -> (hseq (T*B, 2Hp) bf16, hfin (B, 2Hp) f32)."""
    TB, Ein = x2d.shape
    G3 = pf["whh"].shape[1]
    Hp = G3 // 3
    Hp2 = 2 * Hp

    # Size the scoped-VMEM limit from the actual buffers (+50% headroom),
    # capped at 80% of this generation's physical VMEM.
    needed = (
        TB * Ein * 2                    # x (bf16)
        + 2 * Ein * G3 * 2              # wih fwd/bwd (bf16)
        + 2 * Hp * G3 * 2               # whh fwd/bwd (bf16)
        + 4 * G3 * 4                    # biases (f32)
        + TB * Hp2 * 2                  # hseq out (bf16)
        + batch * Hp2 * 4               # hfin out (f32)
        + 2 * TB * G3 * 2               # gi scratch fwd/bwd (bf16)
    )
    vmem_limit = min(max(needed * 3 // 2 + (2 << 20), 16 << 20),
                     (_vmem_capacity_bytes() * 4) // 5)

    return pl.pallas_call(
        _bigru_layer_kernel,
        out_shape=(jax.ShapeDtypeStruct((TB, Hp2), jnp.bfloat16),
                   jax.ShapeDtypeStruct((batch, Hp2), jnp.float32)),
        in_specs=[pl.BlockSpec(memory_space=pltpu.MemorySpace.VMEM)] * 9,
        out_specs=(pl.BlockSpec(memory_space=pltpu.MemorySpace.VMEM),
                   pl.BlockSpec(memory_space=pltpu.MemorySpace.VMEM)),
        scratch_shapes=[pltpu.VMEM((TB, G3), jnp.bfloat16),
                        pltpu.VMEM((TB, G3), jnp.bfloat16)],
        compiler_params=pltpu.CompilerParams(vmem_limit_bytes=vmem_limit),
    )(x2d, pf["wih"], pb["wih"], pf["whh"], pb["whh"],
      pf["bih"], pb["bih"], pf["bhh"], pb["bhh"])


# -----------------------------------------------------------------------------
# Parameter construction (reference PyTorch-layout shapes, deterministic)
# -----------------------------------------------------------------------------
def init_params(key, vocab_size, embedding_dim, hidden_dim, n_layers):
    params = {}
    k_emb, key = jax.random.split(key)
    params["embedding"] = jax.random.normal(
        k_emb, (vocab_size, embedding_dim), jnp.float32) * 0.1

    bound = 1.0 / math.sqrt(hidden_dim)
    gru = []
    for layer in range(n_layers):
        in_size = embedding_dim if layer == 0 else 2 * hidden_dim
        layer_p = {}
        for direction in ("fwd", "bwd"):
            keys = jax.random.split(key, 5)
            key = keys[0]
            layer_p[direction] = dict(
                wih=jax.random.uniform(keys[1], (in_size, 3 * hidden_dim),
                                       jnp.float32, -bound, bound),
                whh=jax.random.uniform(keys[2], (hidden_dim, 3 * hidden_dim),
                                       jnp.float32, -bound, bound),
                bih=jax.random.uniform(keys[3], (1, 3 * hidden_dim),
                                       jnp.float32, -bound, bound),
                bhh=jax.random.uniform(keys[4], (1, 3 * hidden_dim),
                                       jnp.float32, -bound, bound),
            )
        gru.append(layer_p)
    params["gru"] = gru

    k_w, k_b = jax.random.split(key)
    fc_bound = 1.0 / math.sqrt(2 * hidden_dim)
    params["fc_w"] = jax.random.uniform(k_w, (2 * hidden_dim, 1),
                                        jnp.float32, -fc_bound, fc_bound)
    params["fc_b"] = jax.random.uniform(k_b, (1, 1),
                                        jnp.float32, -fc_bound, fc_bound)
    return params


def _pack_dir(p, in_rows, in_pad, H, Hp):
    """Zero-padded, lane-aligned weights for one direction of one layer.

    Column layout (width 3*Hp): [r | z | n], each gate padded to Hp lanes.
    `in_rows[j]` = padded row of reference input feature j, so the zero pad
    lanes of the previous layer's output never touch real weight rows; padded
    weight rows/cols and biases are zero, so pad lanes of h stay exactly 0.
    """
    G3 = 3 * Hp
    wih = np.zeros((in_pad, G3), np.float32)
    whh = np.zeros((Hp, G3), np.float32)
    bih = np.zeros((1, G3), np.float32)
    bhh = np.zeros((1, G3), np.float32)
    w_ih = np.asarray(p["wih"])
    w_hh = np.asarray(p["whh"])
    b_ih = np.asarray(p["bih"])
    b_hh = np.asarray(p["bhh"])
    for g in range(3):                                   # gates r, z, n
        col = g * Hp
        wih[in_rows, col:col + H] = w_ih[:, g * H:(g + 1) * H]
        whh[:H, col:col + H] = w_hh[:, g * H:(g + 1) * H]
        bih[0, col:col + H] = b_ih[0, g * H:(g + 1) * H]
        bhh[0, col:col + H] = b_hh[0, g * H:(g + 1) * H]
    return dict(wih=jnp.asarray(wih, jnp.bfloat16),
                whh=jnp.asarray(whh, jnp.bfloat16),
                bih=jnp.asarray(bih),
                bhh=jnp.asarray(bhh))


def prepare_params(params, embedding_dim, hidden_dim, n_layers):
    """Pad + repack reference params into the kernel's lane-aligned layout."""
    H = hidden_dim
    Hp = _round_up(max(H, LANE), LANE)
    Ep = _round_up(max(embedding_dim, LANE), LANE)

    emb = np.zeros((params["embedding"].shape[0], Ep), np.float32)
    emb[:, :embedding_dim] = np.asarray(params["embedding"])

    packed = {"embedding": jnp.asarray(emb, jnp.bfloat16), "gru": []}
    for layer in range(n_layers):
        if layer == 0:
            in_rows = np.arange(embedding_dim)
            in_pad = Ep
        else:
            in_rows = np.concatenate([np.arange(H), Hp + np.arange(H)])
            in_pad = 2 * Hp
        packed["gru"].append(
            {"fwd": _pack_dir(params["gru"][layer]["fwd"], in_rows, in_pad, H, Hp),
             "bwd": _pack_dir(params["gru"][layer]["bwd"], in_rows, in_pad, H, Hp)})

    fc_w = np.zeros((2 * Hp, 1), np.float32)
    fc_w_ref = np.asarray(params["fc_w"])
    fc_w[:H, :] = fc_w_ref[:H, :]
    fc_w[Hp:Hp + H, :] = fc_w_ref[H:2 * H, :]
    packed["fc_w"] = jnp.asarray(fc_w)
    packed["fc_b"] = jnp.asarray(params["fc_b"])
    return packed


# -----------------------------------------------------------------------------
# Forward pass (glue in JAX, the GRU recurrence in Pallas)
# -----------------------------------------------------------------------------
@functools.partial(jax.jit, static_argnames=("n_layers",))
def rnn_forward(packed, input_sequence, length, label, n_layers):
    B, T = input_sequence.shape
    Bp = _round_up(max(B, SUBLANE), SUBLANE)

    # sort by length, descending (reproduces torch.sort(..., descending=True);
    # NOTE: jnp.argsort is stable, torch.sort is not guaranteed stable — ties
    # of equal length may be ordered differently, logit/label pairing is kept).
    sorted_idx = jnp.argsort(-length)
    input_sequence = input_sequence[sorted_idx]
    label = label[sorted_idx]

    # embedding lookup (gather stays in XLA glue); table is bf16, lane-padded
    emb = packed["embedding"][input_sequence]              # (B, T, Ep) bf16
    # TODO(synk): embedded_dropout / nn.Dropout Bernoulli masks skipped
    # (identity, eval mode / p=0).

    # NOTE: reference pack_padded_sequence effectively uses length T for every
    # row, so the GRU runs all T steps per sequence; reproduced (no masking).
    x = jnp.transpose(emb, (1, 0, 2))                      # (T, B, Ep)
    x = jnp.pad(x, ((0, 0), (0, Bp - B), (0, 0)))          # pad batch sublanes
    x2d = x.reshape(T * Bp, -1)                            # time-major rows

    hfin = None
    for layer in range(n_layers):
        p = packed["gru"][layer]
        x2d, hfin = bigru_layer(x2d, p["fwd"], p["bwd"], batch=Bp)

    hidden = hfin[:B]                                      # (B, 2Hp) f32
    # Tiny classifier head (output dim 1) left to XLA; pad rows of fc_w are 0.
    logits = hidden @ packed["fc_w"] + packed["fc_b"]      # (B, 1)
    return logits, label


# -----------------------------------------------------------------------------
# Example run
# -----------------------------------------------------------------------------
if __name__ == "__main__":
    VOCAB = 32
    EMB = 16
    HID = 32
    N_LAYERS = 2
    B = 2
    T = 8

    key = jax.random.PRNGKey(0)
    k_params, k_seq, k_len, k_lab = jax.random.split(key, 4)

    params = init_params(k_params, VOCAB, EMB, HID, N_LAYERS)
    packed = prepare_params(params, EMB, HID, N_LAYERS)

    input_sequence = jax.random.randint(k_seq, (B, T), 0, VOCAB, jnp.int32)
    length = jax.random.randint(k_len, (B,), 1, T + 1, jnp.int32)
    label = jax.random.randint(k_lab, (B,), 0, 2, jnp.int32)

    logits, label_sorted = rnn_forward(packed, input_sequence, length, label,
                                       n_layers=N_LAYERS)
    jax.block_until_ready((logits, label_sorted))

    assert logits.shape == (B, 1)
    assert label_sorted.shape == (B,)
    assert bool(jnp.all(jnp.isfinite(logits)))
    print("KERNEL_OK")
</pallas_src>

<mosaic_0001>
module attributes {stable_mosaic.version = 11 : i64} {
  func.func @_bigru_layer_kernel(%arg0: memref<128x128xbf16, #tpu.memory_space<vmem>>, %arg1: memref<128x384xbf16, #tpu.memory_space<vmem>>, %arg2: memref<128x384xbf16, #tpu.memory_space<vmem>>, %arg3: memref<128x384xbf16, #tpu.memory_space<vmem>>, %arg4: memref<128x384xbf16, #tpu.memory_space<vmem>>, %arg5: memref<1x384xf32, #tpu.memory_space<vmem>>, %arg6: memref<1x384xf32, #tpu.memory_space<vmem>>, %arg7: memref<1x384xf32, #tpu.memory_space<vmem>>, %arg8: memref<1x384xf32, #tpu.memory_space<vmem>>, %arg9: memref<128x256xbf16, #tpu.memory_space<vmem>>, %arg10: memref<16x256xf32, #tpu.memory_space<vmem>>, %arg11: memref<128x384xbf16, #tpu.memory_space<vmem>>, %arg12: memref<128x384xbf16, #tpu.memory_space<vmem>>) attributes {dimension_semantics = [], scalar_prefetch = 0 : i64, scratch_operands = 2 : i64, tpu.core_type = #tpu.core_type<tc>} {
    %c0 = arith.constant 0 : index
    %c0_0 = arith.constant 0 : index
    %0 = vector.load %arg0[%c0, %c0_0] : memref<128x128xbf16, #tpu.memory_space<vmem>>, vector<128x128xbf16>
    %c0_1 = arith.constant 0 : index
    %c0_2 = arith.constant 0 : index
    %1 = vector.load %arg1[%c0_1, %c0_2] : memref<128x384xbf16, #tpu.memory_space<vmem>>, vector<128x384xbf16>
    %cst = arith.constant dense<0.000000e+00> : vector<128x384xf32>
    %2 = tpu.matmul %0, %1, %cst {dimension_numbers = #tpu.dot_dimension_numbers<[1], [0], [0], [1], [0, 0, 1, 1], [], []>} : vector<128x128xbf16>, vector<128x384xbf16>, vector<128x384xf32> -> vector<128x384xf32>
    %c0_3 = arith.constant 0 : index
    %c0_4 = arith.constant 0 : index
    %3 = vector.load %arg5[%c0_3, %c0_4] : memref<1x384xf32, #tpu.memory_space<vmem>>, vector<1x384xf32>
    %4 = vector.broadcast %3 : vector<1x384xf32> to vector<128x384xf32>
    %5 = arith.addf %2, %4 : vector<128x384xf32>
    %6 = arith.truncf %5 : vector<128x384xf32> to vector<128x384xbf16>
    %c0_5 = arith.constant 0 : index
    %c0_6 = arith.constant 0 : index
    %7 = vector.load %arg11[%c0_5, %c0_6] : memref<128x384xbf16, #tpu.memory_space<vmem>>, vector<128x384xbf16>
    tpu.vector_store %arg11[%c0_5, %c0_6], %6 {strides = array<i32>} : memref<128x384xbf16, #tpu.memory_space<vmem>>, vector<128x384xbf16>,
    %c0_7 = arith.constant 0 : index
    %c0_8 = arith.constant 0 : index
    %8 = vector.load %arg2[%c0_7, %c0_8] : memref<128x384xbf16, #tpu.memory_space<vmem>>, vector<128x384xbf16>
    %cst_9 = arith.constant dense<0.000000e+00> : vector<128x384xf32>
    %9 = tpu.matmul %0, %8, %cst_9 {dimension_numbers = #tpu.dot_dimension_numbers<[1], [0], [0], [1], [0, 0, 1, 1], [], []>} : vector<128x128xbf16>, vector<128x384xbf16>, vector<128x384xf32> -> vector<128x384xf32>
    %c0_10 = arith.constant 0 : index
    %c0_11 = arith.constant 0 : index
    %10 = vector.load %arg6[%c0_10, %c0_11] : memref<1x384xf32, #tpu.memory_space<vmem>>, vector<1x384xf32>
    %11 = vector.broadcast %10 : vector<1x384xf32> to vector<128x384xf32>
    %12 = arith.addf %9, %11 : vector<128x384xf32>
    %13 = arith.truncf %12 : vector<128x384xf32> to vector<128x384xbf16>
    %c0_12 = arith.constant 0 : index
    %c0_13 = arith.constant 0 : index
    %14 = vector.load %arg12[%c0_12, %c0_13] : memref<128x384xbf16, #tpu.memory_space<vmem>>, vector<128x384xbf16>
    tpu.vector_store %arg12[%c0_12, %c0_13], %13 {strides = array<i32>} : memref<128x384xbf16, #tpu.memory_space<vmem>>, vector<128x384xbf16>,
    %c0_14 = arith.constant 0 : index
    %c0_15 = arith.constant 0 : index
    %15 = vector.load %arg3[%c0_14, %c0_15] : memref<128x384xbf16, #tpu.memory_space<vmem>>, vector<128x384xbf16>
    %c0_16 = arith.constant 0 : index
    %c0_17 = arith.constant 0 : index
    %16 = vector.load %arg4[%c0_16, %c0_17] : memref<128x384xbf16, #tpu.memory_space<vmem>>, vector<128x384xbf16>
    %c0_18 = arith.constant 0 : index
    %c0_19 = arith.constant 0 : index
    %17 = vector.load %arg7[%c0_18, %c0_19] : memref<1x384xf32, #tpu.memory_space<vmem>>, vector<1x384xf32>
    %18 = vector.shape_cast %17 : vector<1x384xf32> to vector<1x384xf32>
    %19 = vector.broadcast %18 : vector<1x384xf32> to vector<16x384xf32>
    %c0_20 = arith.constant 0 : index
    %c0_21 = arith.constant 0 : index
    %20 = vector.load %arg8[%c0_20, %c0_21] : memref<1x384xf32, #tpu.memory_space<vmem>>, vector<1x384xf32>
    %21 = vector.shape_cast %20 : vector<1x384xf32> to vector<1x384xf32>
    %22 = vector.broadcast %21 : vector<1x384xf32> to vector<16x384xf32>
    %cst_22 = arith.constant 0.000000e+00 : f32
    %23 = vector.broadcast %cst_22 : f32 to vector<16x128xf32>
    %c0_i32 = arith.constant 0 : i32
    %c16_i32 = arith.constant 16 : i32
    %24 = arith.muli %c0_i32, %c16_i32 : i32
    %25 = tpu.assume_multiple %24, 16 : i32
    %c7_i32 = arith.constant 7 : i32
    %26 = arith.subi %c7_i32, %c0_i32 : i32
    %c16_i32_23 = arith.constant 16 : i32
    %27 = arith.muli %26, %c16_i32_23 : i32
    %28 = tpu.assume_multiple %27, 16 : i32
    %29 = arith.truncf %23 : vector<16x128xf32> to vector<16x128xbf16>
    %cst_24 = arith.constant dense<0.000000e+00> : vector<16x384xf32>
    %30 = tpu.matmul %29, %15, %cst_24 {dimension_numbers = #tpu.dot_dimension_numbers<[1], [0], [0], [1], [0, 0, 1, 1], [], []>} : vector<16x128xbf16>, vector<128x384xbf16>, vector<16x384xf32> -> vector<16x384xf32>
    %31 = arith.addf %30, %19 : vector<16x384xf32>
    %32 = arith.truncf %23 : vector<16x128xf32> to vector<16x128xbf16>
    %cst_25 = arith.constant dense<0.000000e+00> : vector<16x384xf32>
    %33 = tpu.matmul %32, %16, %cst_25 {dimension_numbers = #tpu.dot_dimension_numbers<[1], [0], [0], [1], [0, 0, 1, 1], [], []>} : vector<16x128xbf16>, vector<128x384xbf16>, vector<16x384xf32> -> vector<16x384xf32>
    %34 = arith.addf %33, %22 : vector<16x384xf32>
    %35 = arith.index_cast %25 : i32 to index
    %c0_26 = arith.constant 0 : index
    %36 = vector.load %arg11[%35, %c0_26] : memref<128x384xbf16, #tpu.memory_space<vmem>>, vector<16x384xbf16>
    %37 = arith.extf %36 : vector<16x384xbf16> to vector<16x384xf32>
    %38 = arith.index_cast %28 : i32 to index
    %c0_27 = arith.constant 0 : index
    %39 = vector.load %arg12[%38, %c0_27] : memref<128x384xbf16, #tpu.memory_space<vmem>>, vector<16x384xbf16>
    %40 = arith.extf %39 : vector<16x384xbf16> to vector<16x384xf32>
    %41 = vector.extract_strided_slice %37 {offsets = [0, 0], sizes = [16, 256], strides = [1, 1]} : vector<16x384xf32> to vector<16x256xf32>
    %42 = vector.extract_strided_slice %31 {offsets = [0, 0], sizes = [16, 256], strides = [1, 1]} : vector<16x384xf32> to vector<16x256xf32>
    %43 = arith.addf %41, %42 : vector<16x256xf32>
    %44 = arith.negf %43 : vector<16x256xf32>
    %45 = math.exp %44 : vector<16x256xf32>
    %cst_28 = arith.constant 1.000000e+00 : f32
    %46 = vector.broadcast %cst_28 : f32 to vector<16x256xf32>
    %47 = arith.addf %46, %45 : vector<16x256xf32>
    %48 = arith.divf %46, %47 : vector<16x256xf32>
    %49 = vector.extract_strided_slice %48 {offsets = [0, 0], sizes = [16, 128], strides = [1, 1]} : vector<16x256xf32> to vector<16x128xf32>
    %50 = vector.extract_strided_slice %48 {offsets = [0, 128], sizes = [16, 128], strides = [1, 1]} : vector<16x256xf32> to vector<16x128xf32>
    %51 = vector.extract_strided_slice %37 {offsets = [0, 256], sizes = [16, 128], strides = [1, 1]} : vector<16x384xf32> to vector<16x128xf32>
    %52 = vector.extract_strided_slice %31 {offsets = [0, 256], sizes = [16, 128], strides = [1, 1]} : vector<16x384xf32> to vector<16x128xf32>
    %53 = arith.mulf %49, %52 : vector<16x128xf32>
    %54 = arith.addf %51, %53 : vector<16x128xf32>
    %55 = math.tanh %54 : vector<16x128xf32>
    %56 = arith.subf %23, %55 : vector<16x128xf32>
    %57 = arith.mulf %50, %56 : vector<16x128xf32>
    %58 = arith.addf %55, %57 : vector<16x128xf32>
    %59 = vector.extract_strided_slice %40 {offsets = [0, 0], sizes = [16, 256], strides = [1, 1]} : vector<16x384xf32> to vector<16x256xf32>
    %60 = vector.extract_strided_slice %34 {offsets = [0, 0], sizes = [16, 256], strides = [1, 1]} : vector<16x384xf32> to vector<16x256xf32>
    %61 = arith.addf %59, %60 : vector<16x256xf32>
    %62 = arith.negf %61 : vector<16x256xf32>
    %63 = math.exp %62 : vector<16x256xf32>
    %cst_29 = arith.constant 1.000000e+00 : f32
    %64 = vector.broadcast %cst_29 : f32 to vector<16x256xf32>
    %65 = arith.addf %64, %63 : vector<16x256xf32>
    %66 = arith.divf %64, %65 : vector<16x256xf32>
    %67 = vector.extract_strided_slice %66 {offsets = [0, 0], sizes = [16, 128], strides = [1, 1]} : vector<16x256xf32> to vector<16x128xf32>
    %68 = vector.extract_strided_slice %66 {offsets = [0, 128], sizes = [16, 128], strides = [1, 1]} : vector<16x256xf32> to vector<16x128xf32>
    %69 = vector.extract_strided_slice %40 {offsets = [0, 256], sizes = [16, 128], strides = [1, 1]} : vector<16x384xf32> to vector<16x128xf32>
    %70 = vector.extract_strided_slice %34 {offsets = [0, 256], sizes = [16, 128], strides = [1, 1]} : vector<16x384xf32> to vector<16x128xf32>
    %71 = arith.mulf %67, %70 : vector<16x128xf32>
    %72 = arith.addf %69, %71 : vector<16x128xf32>
    %73 = math.tanh %72 : vector<16x128xf32>
    %74 = arith.subf %23, %73 : vector<16x128xf32>
    %75 = arith.mulf %68, %74 : vector<16x128xf32>
    %76 = arith.addf %73, %75 : vector<16x128xf32>
    %77 = arith.truncf %58 : vector<16x128xf32> to vector<16x128xbf16>
    %78 = arith.index_cast %25 : i32 to index
    %c0_30 = arith.constant 0 : index
    %79 = vector.load %arg9[%78, %c0_30] : memref<128x256xbf16, #tpu.memory_space<vmem>>, vector<16x128xbf16>
    tpu.vector_store %arg9[%78, %c0_30], %77 {strides = array<i32>} : memref<128x256xbf16, #tpu.memory_space<vmem>>, vector<16x128xbf16>,
    %80 = arith.truncf %76 : vector<16x128xf32> to vector<16x128xbf16>
    %81 = arith.index_cast %28 : i32 to index
    %c128 = arith.constant 128 : index
    %82 = vector.load %arg9[%81, %c128] : memref<128x256xbf16, #tpu.memory_space<vmem>>, vector<16x128xbf16>
    tpu.vector_store %arg9[%81, %c128], %80 {strides = array<i32>} : memref<128x256xbf16, #tpu.memory_space<vmem>>, vector<16x128xbf16>,
    %c1_i32 = arith.constant 1 : i32
    %c16_i32_31 = arith.constant 16 : i32
    %83 = arith.muli %c1_i32, %c16_i32_31 : i32
    %84 = tpu.assume_multiple %83, 16 : i32
    %c7_i32_32 = arith.constant 7 : i32
    %85 = arith.subi %c7_i32_32, %c1_i32 : i32
    %c16_i32_33 = arith.constant 16 : i32
    %86 = arith.muli %85, %c16_i32_33 : i32
    %87 = tpu.assume_multiple %86, 16 : i32
    %88 = arith.truncf %58 : vector<16x128xf32> to vector<16x128xbf16>
    %cst_34 = arith.constant dense<0.000000e+00> : vector<16x384xf32>
    %89 = tpu.matmul %88, %15, %cst_34 {dimension_numbers = #tpu.dot_dimension_numbers<[1], [0], [0], [1], [0, 0, 1, 1], [], []>} : vector<16x128xbf16>, vector<128x384xbf16>, vector<16x384xf32> -> vector<16x384xf32>
    %90 = arith.addf %89, %19 : vector<16x384xf32>
    %91 = arith.truncf %76 : vector<16x128xf32> to vector<16x128xbf16>
    %cst_35 = arith.constant dense<0.000000e+00> : vector<16x384xf32>
    %92 = tpu.matmul %91, %16, %cst_35 {dimension_numbers = #tpu.dot_dimension_numbers<[1], [0], [0], [1], [0, 0, 1, 1], [], []>} : vector<16x128xbf16>, vector<128x384xbf16>, vector<16x384xf32> -> vector<16x384xf32>
    %93 = arith.addf %92, %22 : vector<16x384xf32>
    %94 = arith.index_cast %84 : i32 to index
    %c0_36 = arith.constant 0 : index
    %95 = vector.load %arg11[%94, %c0_36] : memref<128x384xbf16, #tpu.memory_space<vmem>>, vector<16x384xbf16>
    %96 = arith.extf %95 : vector<16x384xbf16> to vector<16x384xf32>
    %97 = arith.index_cast %87 : i32 to index
    %c0_37 = arith.constant 0 : index
    %98 = vector.load %arg12[%97, %c0_37] : memref<128x384xbf16, #tpu.memory_space<vmem>>, vector<16x384xbf16>
    %99 = arith.extf %98 : vector<16x384xbf16> to vector<16x384xf32>
    %100 = vector.extract_strided_slice %96 {offsets = [0, 0], sizes = [16, 256], strides = [1, 1]} : vector<16x384xf32> to vector<16x256xf32>
    %101 = vector.extract_strided_slice %90 {offsets = [0, 0], sizes = [16, 256], strides = [1, 1]} : vector<16x384xf32> to vector<16x256xf32>
    %102 = arith.addf %100, %101 : vector<16x256xf32>
    %103 = arith.negf %102 : vector<16x256xf32>
    %104 = math.exp %103 : vector<16x256xf32>
    %cst_38 = arith.constant 1.000000e+00 : f32
    %105 = vector.broadcast %cst_38 : f32 to vector<16x256xf32>
    %106 = arith.addf %105, %104 : vector<16x256xf32>
    %107 = arith.divf %105, %106 : vector<16x256xf32>
    %108 = vector.extract_strided_slice %107 {offsets = [0, 0], sizes = [16, 128], strides = [1, 1]} : vector<16x256xf32> to vector<16x128xf32>
    %109 = vector.extract_strided_slice %107 {offsets = [0, 128], sizes = [16, 128], strides = [1, 1]} : vector<16x256xf32> to vector<16x128xf32>
    %110 = vector.extract_strided_slice %96 {offsets = [0, 256], sizes = [16, 128], strides = [1, 1]} : vector<16x384xf32> to vector<16x128xf32>
    %111 = vector.extract_strided_slice %90 {offsets = [0, 256], sizes = [16, 128], strides = [1, 1]} : vector<16x384xf32> to vector<16x128xf32>
    %112 = arith.mulf %108, %111 : vector<16x128xf32>
    %113 = arith.addf %110, %112 : vector<16x128xf32>
    %114 = math.tanh %113 : vector<16x128xf32>
    %115 = arith.subf %58, %114 : vector<16x128xf32>
    %116 = arith.mulf %109, %115 : vector<16x128xf32>
    %117 = arith.addf %114, %116 : vector<16x128xf32>
    %118 = vector.extract_strided_slice %99 {offsets = [0, 0], sizes = [16, 256], strides = [1, 1]} : vector<16x384xf32> to vector<16x256xf32>
    %119 = vector.extract_strided_slice %93 {offsets = [0, 0], sizes = [16, 256], strides = [1, 1]} : vector<16x384xf32> to vector<16x256xf32>
    %120 = arith.addf %118, %119 : vector<16x256xf32>
    %121 = arith.negf %120 : vector<16x256xf32>
    %122 = math.exp %121 : vector<16x256xf32>
    %cst_39 = arith.constant 1.000000e+00 : f32
    %123 = vector.broadcast %cst_39 : f32 to vector<16x256xf32>
    %124 = arith.addf %123, %122 : vector<16x256xf32>
    %125 = arith.divf %123, %124 : vector<16x256xf32>
    %126 = vector.extract_strided_slice %125 {offsets = [0, 0], sizes = [16, 128], strides = [1, 1]} : vector<16x256xf32> to vector<16x128xf32>
    %127 = vector.extract_strided_slice %125 {offsets = [0, 128], sizes = [16, 128], strides = [1, 1]} : vector<16x256xf32> to vector<16x128xf32>
    %128 = vector.extract_strided_slice %99 {offsets = [0, 256], sizes = [16, 128], strides = [1, 1]} : vector<16x384xf32> to vector<16x128xf32>
    %129 = vector.extract_strided_slice %93 {offsets = [0, 256], sizes = [16, 128], strides = [1, 1]} : vector<16x384xf32> to vector<16x128xf32>
    %130 = arith.mulf %126, %129 : vector<16x128xf32>
    %131 = arith.addf %128, %130 : vector<16x128xf32>
    %132 = math.tanh %131 : vector<16x128xf32>
    %133 = arith.subf %76, %132 : vector<16x128xf32>
    %134 = arith.mulf %127, %133 : vector<16x128xf32>
    %135 = arith.addf %132, %134 : vector<16x128xf32>
    %136 = arith.truncf %117 : vector<16x128xf32> to vector<16x128xbf16>
    %137 = arith.index_cast %84 : i32 to index
    %c0_40 = arith.constant 0 : index
    %138 = vector.load %arg9[%137, %c0_40] : memref<128x256xbf16, #tpu.memory_space<vmem>>, vector<16x128xbf16>
    tpu.vector_store %arg9[%137, %c0_40], %136 {strides = array<i32>} : memref<128x256xbf16, #tpu.memory_space<vmem>>, vector<16x128xbf16>,
    %139 = arith.truncf %135 : vector<16x128xf32> to vector<16x128xbf16>
    %140 = arith.index_cast %87 : i32 to index
    %c128_41 = arith.constant 128 : index
    %141 = vector.load %arg9[%140, %c128_41] : memref<128x256xbf16, #tpu.memory_space<vmem>>, vector<16x128xbf16>
    tpu.vector_store %arg9[%140, %c128_41], %139 {strides = array<i32>} : memref<128x256xbf16, #tpu.memory_space<vmem>>, vector<16x128xbf16>,
    %c2_i32 = arith.constant 2 : i32
    %c16_i32_42 = arith.constant 16 : i32
    %142 = arith.muli %c2_i32, %c16_i32_42 : i32
    %143 = tpu.assume_multiple %142, 16 : i32
    %c7_i32_43 = arith.constant 7 : i32
    %144 = arith.subi %c7_i32_43, %c2_i32 : i32
    %c16_i32_44 = arith.constant 16 : i32
    %145 = arith.muli %144, %c16_i32_44 : i32
    %146 = tpu.assume_multiple %145, 16 : i32
    %147 = arith.truncf %117 : vector<16x128xf32> to vector<16x128xbf16>
    %cst_45 = arith.constant dense<0.000000e+00> : vector<16x384xf32>
    %148 = tpu.matmul %147, %15, %cst_45 {dimension_numbers = #tpu.dot_dimension_numbers<[1], [0], [0], [1], [0, 0, 1, 1], [], []>} : vector<16x128xbf16>, vector<128x384xbf16>, vector<16x384xf32> -> vector<16x384xf32>
    %149 = arith.addf %148, %19 : vector<16x384xf32>
    %150 = arith.truncf %135 : vector<16x128xf32> to vector<16x128xbf16>
    %cst_46 = arith.constant dense<0.000000e+00> : vector<16x384xf32>
    %151 = tpu.matmul %150, %16, %cst_46 {dimension_numbers = #tpu.dot_dimension_numbers<[1], [0], [0], [1], [0, 0, 1, 1], [], []>} : vector<16x128xbf16>, vector<128x384xbf16>, vector<16x384xf32> -> vector<16x384xf32>
    %152 = arith.addf %151, %22 : vector<16x384xf32>
    %153 = arith.index_cast %143 : i32 to index
    %c0_47 = arith.constant 0 : index
    %154 = vector.load %arg11[%153, %c0_47] : memref<128x384xbf16, #tpu.memory_space<vmem>>, vector<16x384xbf16>
    %155 = arith.extf %154 : vector<16x384xbf16> to vector<16x384xf32>
    %156 = arith.index_cast %146 : i32 to index
    %c0_48 = arith.constant 0 : index
    %157 = vector.load %arg12[%156, %c0_48] : memref<128x384xbf16, #tpu.memory_space<vmem>>, vector<16x384xbf16>
    %158 = arith.extf %157 : vector<16x384xbf16> to vector<16x384xf32>
    %159 = vector.extract_strided_slice %155 {offsets = [0, 0], sizes = [16, 256], strides = [1, 1]} : vector<16x384xf32> to vector<16x256xf32>
    %160 = vector.extract_strided_slice %149 {offsets = [0, 0], sizes = [16, 256], strides = [1, 1]} : vector<16x384xf32> to vector<16x256xf32>
    %161 = arith.addf %159, %160 : vector<16x256xf32>
    %162 = arith.negf %161 : vector<16x256xf32>
    %163 = math.exp %162 : vector<16x256xf32>
    %cst_49 = arith.constant 1.000000e+00 : f32
    %164 = vector.broadcast %cst_49 : f32 to vector<16x256xf32>
    %165 = arith.addf %164, %163 : vector<16x256xf32>
    %166 = arith.divf %164, %165 : vector<16x256xf32>
    %167 = vector.extract_strided_slice %166 {offsets = [0, 0], sizes = [16, 128], strides = [1, 1]} : vector<16x256xf32> to vector<16x128xf32>
    %168 = vector.extract_strided_slice %166 {offsets = [0, 128], sizes = [16, 128], strides = [1, 1]} : vector<16x256xf32> to vector<16x128xf32>
    %169 = vector.extract_strided_slice %155 {offsets = [0, 256], sizes = [16, 128], strides = [1, 1]} : vector<16x384xf32> to vector<16x128xf32>
    %170 = vector.extract_strided_slice %149 {offsets = [0, 256], sizes = [16, 128], strides = [1, 1]} : vector<16x384xf32> to vector<16x128xf32>
    %171 = arith.mulf %167, %170 : vector<16x128xf32>
    %172 = arith.addf %169, %171 : vector<16x128xf32>
    %173 = math.tanh %172 : vector<16x128xf32>
    %174 = arith.subf %117, %173 : vector<16x128xf32>
    %175 = arith.mulf %168, %174 : vector<16x128xf32>
    %176 = arith.addf %173, %175 : vector<16x128xf32>
    %177 = vector.extract_strided_slice %158 {offsets = [0, 0], sizes = [16, 256], strides = [1, 1]} : vector<16x384xf32> to vector<16x256xf32>
    %178 = vector.extract_strided_slice %152 {offsets = [0, 0], sizes = [16, 256], strides = [1, 1]} : vector<16x384xf32> to vector<16x256xf32>
    %179 = arith.addf %177, %178 : vector<16x256xf32>
    %180 = arith.negf %179 : vector<16x256xf32>
    %181 = math.exp %180 : vector<16x256xf32>
    %cst_50 = arith.constant 1.000000e+00 : f32
    %182 = vector.broadcast %cst_50 : f32 to vector<16x256xf32>
    %183 = arith.addf %182, %181 : vector<16x256xf32>
    %184 = arith.divf %182, %183 : vector<16x256xf32>
    %185 = vector.extract_strided_slice %184 {offsets = [0, 0], sizes = [16, 128], strides = [1, 1]} : vector<16x256xf32> to vector<16x128xf32>
    %186 = vector.extract_strided_slice %184 {offsets = [0, 128], sizes = [16, 128], strides = [1, 1]} : vector<16x256xf32> to vector<16x128xf32>
    %187 = vector.extract_strided_slice %158 {offsets = [0, 256], sizes = [16, 128], strides = [1, 1]} : vector<16x384xf32> to vector<16x128xf32>
    %188 = vector.extract_strided_slice %152 {offsets = [0, 256], sizes = [16, 128], strides = [1, 1]} : vector<16x384xf32> to vector<16x128xf32>
    %189 = arith.mulf %185, %188 : vector<16x128xf32>
    %190 = arith.addf %187, %189 : vector<16x128xf32>
    %191 = math.tanh %190 : vector<16x128xf32>
    %192 = arith.subf %135, %191 : vector<16x128xf32>
    %193 = arith.mulf %186, %192 : vector<16x128xf32>
    %194 = arith.addf %191, %193 : vector<16x128xf32>
    %195 = arith.truncf %176 : vector<16x128xf32> to vector<16x128xbf16>
    %196 = arith.index_cast %143 : i32 to index
    %c0_51 = arith.constant 0 : index
    %197 = vector.load %arg9[%196, %c0_51] : memref<128x256xbf16, #tpu.memory_space<vmem>>, vector<16x128xbf16>
    tpu.vector_store %arg9[%196, %c0_51], %195 {strides = array<i32>} : memref<128x256xbf16, #tpu.memory_space<vmem>>, vector<16x128xbf16>,
    %198 = arith.truncf %194 : vector<16x128xf32> to vector<16x128xbf16>
    %199 = arith.index_cast %146 : i32 to index
    %c128_52 = arith.constant 128 : index
    %200 = vector.load %arg9[%199, %c128_52] : memref<128x256xbf16, #tpu.memory_space<vmem>>, vector<16x128xbf16>
    tpu.vector_store %arg9[%199, %c128_52], %198 {strides = array<i32>} : memref<128x256xbf16, #tpu.memory_space<vmem>>, vector<16x128xbf16>,
    %c3_i32 = arith.constant 3 : i32
    %c16_i32_53 = arith.constant 16 : i32
    %201 = arith.muli %c3_i32, %c16_i32_53 : i32
    %202 = tpu.assume_multiple %201, 16 : i32
    %c7_i32_54 = arith.constant 7 : i32
    %203 = arith.subi %c7_i32_54, %c3_i32 : i32
    %c16_i32_55 = arith.constant 16 : i32
    %204 = arith.muli %203, %c16_i32_55 : i32
    %205 = tpu.assume_multiple %204, 16 : i32
    %206 = arith.truncf %176 : vector<16x128xf32> to vector<16x128xbf16>
    %cst_56 = arith.constant dense<0.000000e+00> : vector<16x384xf32>
    %207 = tpu.matmul %206, %15, %cst_56 {dimension_numbers = #tpu.dot_dimension_numbers<[1], [0], [0], [1], [0, 0, 1, 1], [], []>} : vector<16x128xbf16>, vector<128x384xbf16>, vector<16x384xf32> -> vector<16x384xf32>
    %208 = arith.addf %207, %19 : vector<16x384xf32>
    %209 = arith.truncf %194 : vector<16x128xf32> to vector<16x128xbf16>
    %cst_57 = arith.constant dense<0.000000e+00> : vector<16x384xf32>
    %210 = tpu.matmul %209, %16, %cst_57 {dimension_numbers = #tpu.dot_dimension_numbers<[1], [0], [0], [1], [0, 0, 1, 1], [], []>} : vector<16x128xbf16>, vector<128x384xbf16>, vector<16x384xf32> -> vector<16x384xf32>
    %211 = arith.addf %210, %22 : vector<16x384xf32>
    %212 = arith.index_cast %202 : i32 to index
    %c0_58 = arith.constant 0 : index
    %213 = vector.load %arg11[%212, %c0_58] : memref<128x384xbf16, #tpu.memory_space<vmem>>, vector<16x384xbf16>
    %214 = arith.extf %213 : vector<16x384xbf16> to vector<16x384xf32>
    %215 = arith.index_cast %205 : i32 to index
    %c0_59 = arith.constant 0 : index
    %216 = vector.load %arg12[%215, %c0_59] : memref<128x384xbf16, #tpu.memory_space<vmem>>, vector<16x384xbf16>
    %217 = arith.extf %216 : vector<16x384xbf16> to vector<16x384xf32>
    %218 = vector.extract_strided_slice %214 {offsets = [0, 0], sizes = [16, 256], strides = [1, 1]} : vector<16x384xf32> to vector<16x256xf32>
    %219 = vector.extract_strided_slice %208 {offsets = [0, 0], sizes = [16, 256], strides = [1, 1]} : vector<16x384xf32> to vector<16x256xf32>
    %220 = arith.addf %218, %219 : vector<16x256xf32>
    %221 = arith.negf %220 : vector<16x256xf32>
    %222 = math.exp %221 : vector<16x256xf32>
    %cst_60 = arith.constant 1.000000e+00 : f32
    %223 = vector.broadcast %cst_60 : f32 to vector<16x256xf32>
    %224 = arith.addf %223, %222 : vector<16x256xf32>
    %225 = arith.divf %223, %224 : vector<16x256xf32>
    %226 = vector.extract_strided_slice %225 {offsets = [0, 0], sizes = [16, 128], strides = [1, 1]} : vector<16x256xf32> to vector<16x128xf32>
    %227 = vector.extract_strided_slice %225 {offsets = [0, 128], sizes = [16, 128], strides = [1, 1]} : vector<16x256xf32> to vector<16x128xf32>
    %228 = vector.extract_strided_slice %214 {offsets = [0, 256], sizes = [16, 128], strides = [1, 1]} : vector<16x384xf32> to vector<16x128xf32>
    %229 = vector.extract_strided_slice %208 {offsets = [0, 256], sizes = [16, 128], strides = [1, 1]} : vector<16x384xf32> to vector<16x128xf32>
    %230 = arith.mulf %226, %229 : vector<16x128xf32>
    %231 = arith.addf %228, %230 : vector<16x128xf32>
    %232 = math.tanh %231 : vector<16x128xf32>
    %233 = arith.subf %176, %232 : vector<16x128xf32>
    %234 = arith.mulf %227, %233 : vector<16x128xf32>
    %235 = arith.addf %232, %234 : vector<16x128xf32>
    %236 = vector.extract_strided_slice %217 {offsets = [0, 0], sizes = [16, 256], strides = [1, 1]} : vector<16x384xf32> to vector<16x256xf32>
    %237 = vector.extract_strided_slice %211 {offsets = [0, 0], sizes = [16, 256], strides = [1, 1]} : vector<16x384xf32> to vector<16x256xf32>
    %238 = arith.addf %236, %237 : vector<16x256xf32>
    %239 = arith.negf %238 : vector<16x256xf32>
    %240 = math.exp %239 : vector<16x256xf32>
    %cst_61 = arith.constant 1.000000e+00 : f32
    %241 = vector.broadcast %cst_61 : f32 to vector<16x256xf32>
    %242 = arith.addf %241, %240 : vector<16x256xf32>
    %243 = arith.divf %241, %242 : vector<16x256xf32>
    %244 = vector.extract_strided_slice %243 {offsets = [0, 0], sizes = [16, 128], strides = [1, 1]} : vector<16x256xf32> to vector<16x128xf32>
    %245 = vector.extract_strided_slice %243 {offsets = [0, 128], sizes = [16, 128], strides = [1, 1]} : vector<16x256xf32> to vector<16x128xf32>
    %246 = vector.extract_strided_slice %217 {offsets = [0, 256], sizes = [16, 128], strides = [1, 1]} : vector<16x384xf32> to vector<16x128xf32>
    %247 = vector.extract_strided_slice %211 {offsets = [0, 256], sizes = [16, 128], strides = [1, 1]} : vector<16x384xf32> to vector<16x128xf32>
    %248 = arith.mulf %244, %247 : vector<16x128xf32>
    %249 = arith.addf %246, %248 : vector<16x128xf32>
    %250 = math.tanh %249 : vector<16x128xf32>
    %251 = arith.subf %194, %250 : vector<16x128xf32>
    %252 = arith.mulf %245, %251 : vector<16x128xf32>
    %253 = arith.addf %250, %252 : vector<16x128xf32>
    %254 = arith.truncf %235 : vector<16x128xf32> to vector<16x128xbf16>
    %255 = arith.index_cast %202 : i32 to index
    %c0_62 = arith.constant 0 : index
    %256 = vector.load %arg9[%255, %c0_62] : memref<128x256xbf16, #tpu.memory_space<vmem>>, vector<16x128xbf16>
    tpu.vector_store %arg9[%255, %c0_62], %254 {strides = array<i32>} : memref<128x256xbf16, #tpu.memory_space<vmem>>, vector<16x128xbf16>,
    %257 = arith.truncf %253 : vector<16x128xf32> to vector<16x128xbf16>
    %258 = arith.index_cast %205 : i32 to index
    %c128_63 = arith.constant 128 : index
    %259 = vector.load %arg9[%258, %c128_63] : memref<128x256xbf16, #tpu.memory_space<vmem>>, vector<16x128xbf16>
    tpu.vector_store %arg9[%258, %c128_63], %257 {strides = array<i32>} : memref<128x256xbf16, #tpu.memory_space<vmem>>, vector<16x128xbf16>,
    %c4_i32 = arith.constant 4 : i32
    %c16_i32_64 = arith.constant 16 : i32
    %260 = arith.muli %c4_i32, %c16_i32_64 : i32
    %261 = tpu.assume_multiple %260, 16 : i32
    %c7_i32_65 = arith.constant 7 : i32
    %262 = arith.subi %c7_i32_65, %c4_i32 : i32
    %c16_i32_66 = arith.constant 16 : i32
    %263 = arith.muli %262, %c16_i32_66 : i32
    %264 = tpu.assume_multiple %263, 16 : i32
    %265 = arith.truncf %235 : vector<16x128xf32> to vector<16x128xbf16>
    %cst_67 = arith.constant dense<0.000000e+00> : vector<16x384xf32>
    %266 = tpu.matmul %265, %15, %cst_67 {dimension_numbers = #tpu.dot_dimension_numbers<[1], [0], [0], [1], [0, 0, 1, 1], [], []>} : vector<16x128xbf16>, vector<128x384xbf16>, vector<16x384xf32> -> vector<16x384xf32>
    %267 = arith.addf %266, %19 : vector<16x384xf32>
    %268 = arith.truncf %253 : vector<16x128xf32> to vector<16x128xbf16>
    %cst_68 = arith.constant dense<0.000000e+00> : vector<16x384xf32>
    %269 = tpu.matmul %268, %16, %cst_68 {dimension_numbers = #tpu.dot_dimension_numbers<[1], [0], [0], [1], [0, 0, 1, 1], [], []>} : vector<16x128xbf16>, vector<128x384xbf16>, vector<16x384xf32> -> vector<16x384xf32>
    %270 = arith.addf %269, %22 : vector<16x384xf32>
    %271 = arith.index_cast %261 : i32 to index
    %c0_69 = arith.constant 0 : index
    %272 = vector.load %arg11[%271, %c0_69] : memref<128x384xbf16, #tpu.memory_space<vmem>>, vector<16x384xbf16>
    %273 = arith.extf %272 : vector<16x384xbf16> to vector<16x384xf32>
    %274 = arith.index_cast %264 : i32 to index
    %c0_70 = arith.constant 0 : index
    %275 = vector.load %arg12[%274, %c0_70] : memref<128x384xbf16, #tpu.memory_space<vmem>>, vector<16x384xbf16>
    %276 = arith.extf %275 : vector<16x384xbf16> to vector<16x384xf32>
    %277 = vector.extract_strided_slice %273 {offsets = [0, 0], sizes = [16, 256], strides = [1, 1]} : vector<16x384xf32> to vector<16x256xf32>
    %278 = vector.extract_strided_slice %267 {offsets = [0, 0], sizes = [16, 256], strides = [1, 1]} : vector<16x384xf32> to vector<16x256xf32>
    %279 = arith.addf %277, %278 : vector<16x256xf32>
    %280 = arith.negf %279 : vector<16x256xf32>
    %281 = math.exp %280 : vector<16x256xf32>
    %cst_71 = arith.constant 1.000000e+00 : f32
    %282 = vector.broadcast %cst_71 : f32 to vector<16x256xf32>
    %283 = arith.addf %282, %281 : vector<16x256xf32>
    %284 = arith.divf %282, %283 : vector<16x256xf32>
    %285 = vector.extract_strided_slice %284 {offsets = [0, 0], sizes = [16, 128], strides = [1, 1]} : vector<16x256xf32> to vector<16x128xf32>
    %286 = vector.extract_strided_slice %284 {offsets = [0, 128], sizes = [16, 128], strides = [1, 1]} : vector<16x256xf32> to vector<16x128xf32>
    %287 = vector.extract_strided_slice %273 {offsets = [0, 256], sizes = [16, 128], strides = [1, 1]} : vector<16x384xf32> to vector<16x128xf32>
    %288 = vector.extract_strided_slice %267 {offsets = [0, 256], sizes = [16, 128], strides = [1, 1]} : vector<16x384xf32> to vector<16x128xf32>
    %289 = arith.mulf %285, %288 : vector<16x128xf32>
    %290 = arith.addf %287, %289 : vector<16x128xf32>
    %291 = math.tanh %290 : vector<16x128xf32>
    %292 = arith.subf %235, %291 : vector<16x128xf32>
    %293 = arith.mulf %286, %292 : vector<16x128xf32>
    %294 = arith.addf %291, %293 : vector<16x128xf32>
    %295 = vector.extract_strided_slice %276 {offsets = [0, 0], sizes = [16, 256], strides = [1, 1]} : vector<16x384xf32> to vector<16x256xf32>
    %296 = vector.extract_strided_slice %270 {offsets = [0, 0], sizes = [16, 256], strides = [1, 1]} : vector<16x384xf32> to vector<16x256xf32>
    %297 = arith.addf %295, %296 : vector<16x256xf32>
    %298 = arith.negf %297 : vector<16x256xf32>
    %299 = math.exp %298 : vector<16x256xf32>
    %cst_72 = arith.constant 1.000000e+00 : f32
    %300 = vector.broadcast %cst_72 : f32 to vector<16x256xf32>
    %301 = arith.addf %300, %299 : vector<16x256xf32>
    %302 = arith.divf %300, %301 : vector<16x256xf32>
    %303 = vector.extract_strided_slice %302 {offsets = [0, 0], sizes = [16, 128], strides = [1, 1]} : vector<16x256xf32> to vector<16x128xf32>
    %304 = vector.extract_strided_slice %302 {offsets = [0, 128], sizes = [16, 128], strides = [1, 1]} : vector<16x256xf32> to vector<16x128xf32>
    %305 = vector.extract_strided_slice %276 {offsets = [0, 256], sizes = [16, 128], strides = [1, 1]} : vector<16x384xf32> to vector<16x128xf32>
    %306 = vector.extract_strided_slice %270 {offsets = [0, 256], sizes = [16, 128], strides = [1, 1]} : vector<16x384xf32> to vector<16x128xf32>
    %307 = arith.mulf %303, %306 : vector<16x128xf32>
    %308 = arith.addf %305, %307 : vector<16x128xf32>
    %309 = math.tanh %308 : vector<16x128xf32>
    %310 = arith.subf %253, %309 : vector<16x128xf32>
    %311 = arith.mulf %304, %310 : vector<16x128xf32>
    %312 = arith.addf %309, %311 : vector<16x128xf32>
    %313 = arith.truncf %294 : vector<16x128xf32> to vector<16x128xbf16>
    %314 = arith.index_cast %261 : i32 to index
    %c0_73 = arith.constant 0 : index
    %315 = vector.load %arg9[%314, %c0_73] : memref<128x256xbf16, #tpu.memory_space<vmem>>, vector<16x128xbf16>
    tpu.vector_store %arg9[%314, %c0_73], %313 {strides = array<i32>} : memref<128x256xbf16, #tpu.memory_space<vmem>>, vector<16x128xbf16>,
    %316 = arith.truncf %312 : vector<16x128xf32> to vector<16x128xbf16>
    %317 = arith.index_cast %264 : i32 to index
    %c128_74 = arith.constant 128 : index
    %318 = vector.load %arg9[%317, %c128_74] : memref<128x256xbf16, #tpu.memory_space<vmem>>, vector<16x128xbf16>
    tpu.vector_store %arg9[%317, %c128_74], %316 {strides = array<i32>} : memref<128x256xbf16, #tpu.memory_space<vmem>>, vector<16x128xbf16>,
    %c5_i32 = arith.constant 5 : i32
    %c16_i32_75 = arith.constant 16 : i32
    %319 = arith.muli %c5_i32, %c16_i32_75 : i32
    %320 = tpu.assume_multiple %319, 16 : i32
    %c7_i32_76 = arith.constant 7 : i32
    %321 = arith.subi %c7_i32_76, %c5_i32 : i32
    %c16_i32_77 = arith.constant 16 : i32
    %322 = arith.muli %321, %c16_i32_77 : i32
    %323 = tpu.assume_multiple %322, 16 : i32
    %324 = arith.truncf %294 : vector<16x128xf32> to vector<16x128xbf16>
    %cst_78 = arith.constant dense<0.000000e+00> : vector<16x384xf32>
    %325 = tpu.matmul %324, %15, %cst_78 {dimension_numbers = #tpu.dot_dimension_numbers<[1], [0], [0], [1], [0, 0, 1, 1], [], []>} : vector<16x128xbf16>, vector<128x384xbf16>, vector<16x384xf32> -> vector<16x384xf32>
    %326 = arith.addf %325, %19 : vector<16x384xf32>
    %327 = arith.truncf %312 : vector<16x128xf32> to vector<16x128xbf16>
    %cst_79 = arith.constant dense<0.000000e+00> : vector<16x384xf32>
    %328 = tpu.matmul %327, %16, %cst_79 {dimension_numbers = #tpu.dot_dimension_numbers<[1], [0], [0], [1], [0, 0, 1, 1], [], []>} : vector<16x128xbf16>, vector<128x384xbf16>, vector<16x384xf32> -> vector<16x384xf32>
    %329 = arith.addf %328, %22 : vector<16x384xf32>
    %330 = arith.index_cast %320 : i32 to index
    %c0_80 = arith.constant 0 : index
    %331 = vector.load %arg11[%330, %c0_80] : memref<128x384xbf16, #tpu.memory_space<vmem>>, vector<16x384xbf16>
    %332 = arith.extf %331 : vector<16x384xbf16> to vector<16x384xf32>
    %333 = arith.index_cast %323 : i32 to index
    %c0_81 = arith.constant 0 : index
    %334 = vector.load %arg12[%333, %c0_81] : memref<128x384xbf16, #tpu.memory_space<vmem>>, vector<16x384xbf16>
    %335 = arith.extf %334 : vector<16x384xbf16> to vector<16x384xf32>
    %336 = vector.extract_strided_slice %332 {offsets = [0, 0], sizes = [16, 256], strides = [1, 1]} : vector<16x384xf32> to vector<16x256xf32>
    %337 = vector.extract_strided_slice %326 {offsets = [0, 0], sizes = [16, 256], strides = [1, 1]} : vector<16x384xf32> to vector<16x256xf32>
    %338 = arith.addf %336, %337 : vector<16x256xf32>
    %339 = arith.negf %338 : vector<16x256xf32>
    %340 = math.exp %339 : vector<16x256xf32>
    %cst_82 = arith.constant 1.000000e+00 : f32
    %341 = vector.broadcast %cst_82 : f32 to vector<16x256xf32>
    %342 = arith.addf %341, %340 : vector<16x256xf32>
    %343 = arith.divf %341, %342 : vector<16x256xf32>
    %344 = vector.extract_strided_slice %343 {offsets = [0, 0], sizes = [16, 128], strides = [1, 1]} : vector<16x256xf32> to vector<16x128xf32>
    %345 = vector.extract_strided_slice %343 {offsets = [0, 128], sizes = [16, 128], strides = [1, 1]} : vector<16x256xf32> to vector<16x128xf32>
    %346 = vector.extract_strided_slice %332 {offsets = [0, 256], sizes = [16, 128], strides = [1, 1]} : vector<16x384xf32> to vector<16x128xf32>
    %347 = vector.extract_strided_slice %326 {offsets = [0, 256], sizes = [16, 128], strides = [1, 1]} : vector<16x384xf32> to vector<16x128xf32>
    %348 = arith.mulf %344, %347 : vector<16x128xf32>
    %349 = arith.addf %346, %348 : vector<16x128xf32>
    %350 = math.tanh %349 : vector<16x128xf32>
    %351 = arith.subf %294, %350 : vector<16x128xf32>
    %352 = arith.mulf %345, %351 : vector<16x128xf32>
    %353 = arith.addf %350, %352 : vector<16x128xf32>
    %354 = vector.extract_strided_slice %335 {offsets = [0, 0], sizes = [16, 256], strides = [1, 1]} : vector<16x384xf32> to vector<16x256xf32>
    %355 = vector.extract_strided_slice %329 {offsets = [0, 0], sizes = [16, 256], strides = [1, 1]} : vector<16x384xf32> to vector<16x256xf32>
    %356 = arith.addf %354, %355 : vector<16x256xf32>
    %357 = arith.negf %356 : vector<16x256xf32>
    %358 = math.exp %357 : vector<16x256xf32>
    %cst_83 = arith.constant 1.000000e+00 : f32
    %359 = vector.broadcast %cst_83 : f32 to vector<16x256xf32>
    %360 = arith.addf %359, %358 : vector<16x256xf32>
    %361 = arith.divf %359, %360 : vector<16x256xf32>
    %362 = vector.extract_strided_slice %361 {offsets = [0, 0], sizes = [16, 128], strides = [1, 1]} : vector<16x256xf32> to vector<16x128xf32>
    %363 = vector.extract_strided_slice %361 {offsets = [0, 128], sizes = [16, 128], strides = [1, 1]} : vector<16x256xf32> to vector<16x128xf32>
    %364 = vector.extract_strided_slice %335 {offsets = [0, 256], sizes = [16, 128], strides = [1, 1]} : vector<16x384xf32> to vector<16x128xf32>
    %365 = vector.extract_strided_slice %329 {offsets = [0, 256], sizes = [16, 128], strides = [1, 1]} : vector<16x384xf32> to vector<16x128xf32>
    %366 = arith.mulf %362, %365 : vector<16x128xf32>
    %367 = arith.addf %364, %366 : vector<16x128xf32>
    %368 = math.tanh %367 : vector<16x128xf32>
    %369 = arith.subf %312, %368 : vector<16x128xf32>
    %370 = arith.mulf %363, %369 : vector<16x128xf32>
    %371 = arith.addf %368, %370 : vector<16x128xf32>
    %372 = arith.truncf %353 : vector<16x128xf32> to vector<16x128xbf16>
    %373 = arith.index_cast %320 : i32 to index
    %c0_84 = arith.constant 0 : index
    %374 = vector.load %arg9[%373, %c0_84] : memref<128x256xbf16, #tpu.memory_space<vmem>>, vector<16x128xbf16>
    tpu.vector_store %arg9[%373, %c0_84], %372 {strides = array<i32>} : memref<128x256xbf16, #tpu.memory_space<vmem>>, vector<16x128xbf16>,
    %375 = arith.truncf %371 : vector<16x128xf32> to vector<16x128xbf16>
    %376 = arith.index_cast %323 : i32 to index
    %c128_85 = arith.constant 128 : index
    %377 = vector.load %arg9[%376, %c128_85] : memref<128x256xbf16, #tpu.memory_space<vmem>>, vector<16x128xbf16>
    tpu.vector_store %arg9[%376, %c128_85], %375 {strides = array<i32>} : memref<128x256xbf16, #tpu.memory_space<vmem>>, vector<16x128xbf16>,
    %c6_i32 = arith.constant 6 : i32
    %c16_i32_86 = arith.constant 16 : i32
    %378 = arith.muli %c6_i32, %c16_i32_86 : i32
    %379 = tpu.assume_multiple %378, 16 : i32
    %c7_i32_87 = arith.constant 7 : i32
    %380 = arith.subi %c7_i32_87, %c6_i32 : i32
    %c16_i32_88 = arith.constant 16 : i32
    %381 = arith.muli %380, %c16_i32_88 : i32
    %382 = tpu.assume_multiple %381, 16 : i32
    %383 = arith.truncf %353 : vector<16x128xf32> to vector<16x128xbf16>
    %cst_89 = arith.constant dense<0.000000e+00> : vector<16x384xf32>
    %384 = tpu.matmul %383, %15, %cst_89 {dimension_numbers = #tpu.dot_dimension_numbers<[1], [0], [0], [1], [0, 0, 1, 1], [], []>} : vector<16x128xbf16>, vector<128x384xbf16>, vector<16x384xf32> -> vector<16x384xf32>
    %385 = arith.addf %384, %19 : vector<16x384xf32>
    %386 = arith.truncf %371 : vector<16x128xf32> to vector<16x128xbf16>
    %cst_90 = arith.constant dense<0.000000e+00> : vector<16x384xf32>
    %387 = tpu.matmul %386, %16, %cst_90 {dimension_numbers = #tpu.dot_dimension_numbers<[1], [0], [0], [1], [0, 0, 1, 1], [], []>} : vector<16x128xbf16>, vector<128x384xbf16>, vector<16x384xf32> -> vector<16x384xf32>
    %388 = arith.addf %387, %22 : vector<16x384xf32>
    %389 = arith.index_cast %379 : i32 to index
    %c0_91 = arith.constant 0 : index
    %390 = vector.load %arg11[%389, %c0_91] : memref<128x384xbf16, #tpu.memory_space<vmem>>, vector<16x384xbf16>
    %391 = arith.extf %390 : vector<16x384xbf16> to vector<16x384xf32>
    %392 = arith.index_cast %382 : i32 to index
    %c0_92 = arith.constant 0 : index
    %393 = vector.load %arg12[%392, %c0_92] : memref<128x384xbf16, #tpu.memory_space<vmem>>, vector<16x384xbf16>
    %394 = arith.extf %393 : vector<16x384xbf16> to vector<16x384xf32>
    %395 = vector.extract_strided_slice %391 {offsets = [0, 0], sizes = [16, 256], strides = [1, 1]} : vector<16x384xf32> to vector<16x256xf32>
    %396 = vector.extract_strided_slice %385 {offsets = [0, 0], sizes = [16, 256], strides = [1, 1]} : vector<16x384xf32> to vector<16x256xf32>
    %397 = arith.addf %395, %396 : vector<16x256xf32>
    %398 = arith.negf %397 : vector<16x256xf32>
    %399 = math.exp %398 : vector<16x256xf32>
    %cst_93 = arith.constant 1.000000e+00 : f32
    %400 = vector.broadcast %cst_93 : f32 to vector<16x256xf32>
    %401 = arith.addf %400, %399 : vector<16x256xf32>
    %402 = arith.divf %400, %401 : vector<16x256xf32>
    %403 = vector.extract_strided_slice %402 {offsets = [0, 0], sizes = [16, 128], strides = [1, 1]} : vector<16x256xf32> to vector<16x128xf32>
    %404 = vector.extract_strided_slice %402 {offsets = [0, 128], sizes = [16, 128], strides = [1, 1]} : vector<16x256xf32> to vector<16x128xf32>
    %405 = vector.extract_strided_slice %391 {offsets = [0, 256], sizes = [16, 128], strides = [1, 1]} : vector<16x384xf32> to vector<16x128xf32>
    %406 = vector.extract_strided_slice %385 {offsets = [0, 256], sizes = [16, 128], strides = [1, 1]} : vector<16x384xf32> to vector<16x128xf32>
    %407 = arith.mulf %403, %406 : vector<16x128xf32>
    %408 = arith.addf %405, %407 : vector<16x128xf32>
    %409 = math.tanh %408 : vector<16x128xf32>
    %410 = arith.subf %353, %409 : vector<16x128xf32>
    %411 = arith.mulf %404, %410 : vector<16x128xf32>
    %412 = arith.addf %409, %411 : vector<16x128xf32>
    %413 = vector.extract_strided_slice %394 {offsets = [0, 0], sizes = [16, 256], strides = [1, 1]} : vector<16x384xf32> to vector<16x256xf32>
    %414 = vector.extract_strided_slice %388 {offsets = [0, 0], sizes = [16, 256], strides = [1, 1]} : vector<16x384xf32> to vector<16x256xf32>
    %415 = arith.addf %413, %414 : vector<16x256xf32>
    %416 = arith.negf %415 : vector<16x256xf32>
    %417 = math.exp %416 : vector<16x256xf32>
    %cst_94 = arith.constant 1.000000e+00 : f32
    %418 = vector.broadcast %cst_94 : f32 to vector<16x256xf32>
    %419 = arith.addf %418, %417 : vector<16x256xf32>
    %420 = arith.divf %418, %419 : vector<16x256xf32>
    %421 = vector.extract_strided_slice %420 {offsets = [0, 0], sizes = [16, 128], strides = [1, 1]} : vector<16x256xf32> to vector<16x128xf32>
    %422 = vector.extract_strided_slice %420 {offsets = [0, 128], sizes = [16, 128], strides = [1, 1]} : vector<16x256xf32> to vector<16x128xf32>
    %423 = vector.extract_strided_slice %394 {offsets = [0, 256], sizes = [16, 128], strides = [1, 1]} : vector<16x384xf32> to vector<16x128xf32>
    %424 = vector.extract_strided_slice %388 {offsets = [0, 256], sizes = [16, 128], strides = [1, 1]} : vector<16x384xf32> to vector<16x128xf32>
    %425 = arith.mulf %421, %424 : vector<16x128xf32>
    %426 = arith.addf %423, %425 : vector<16x128xf32>
    %427 = math.tanh %426 : vector<16x128xf32>
    %428 = arith.subf %371, %427 : vector<16x128xf32>
    %429 = arith.mulf %422, %428 : vector<16x128xf32>
    %430 = arith.addf %427, %429 : vector<16x128xf32>
    %431 = arith.truncf %412 : vector<16x128xf32> to vector<16x128xbf16>
    %432 = arith.index_cast %379 : i32 to index
    %c0_95 = arith.constant 0 : index
    %433 = vector.load %arg9[%432, %c0_95] : memref<128x256xbf16, #tpu.memory_space<vmem>>, vector<16x128xbf16>
    tpu.vector_store %arg9[%432, %c0_95], %431 {strides = array<i32>} : memref<128x256xbf16, #tpu.memory_space<vmem>>, vector<16x128xbf16>,
    %434 = arith.truncf %430 : vector<16x128xf32> to vector<16x128xbf16>
    %435 = arith.index_cast %382 : i32 to index
    %c128_96 = arith.constant 128 : index
    %436 = vector.load %arg9[%435, %c128_96] : memref<128x256xbf16, #tpu.memory_space<vmem>>, vector<16x128xbf16>
    tpu.vector_store %arg9[%435, %c128_96], %434 {strides = array<i32>} : memref<128x256xbf16, #tpu.memory_space<vmem>>, vector<16x128xbf16>,
    %c7_i32_97 = arith.constant 7 : i32
    %c16_i32_98 = arith.constant 16 : i32
    %437 = arith.muli %c7_i32_97, %c16_i32_98 : i32
    %438 = tpu.assume_multiple %437, 16 : i32
    %c7_i32_99 = arith.constant 7 : i32
    %439 = arith.subi %c7_i32_99, %c7_i32_97 : i32
    %c16_i32_100 = arith.constant 16 : i32
    %440 = arith.muli %439, %c16_i32_100 : i32
    %441 = tpu.assume_multiple %440, 16 : i32
    %442 = arith.truncf %412 : vector<16x128xf32> to vector<16x128xbf16>
    %cst_101 = arith.constant dense<0.000000e+00> : vector<16x384xf32>
    %443 = tpu.matmul %442, %15, %cst_101 {dimension_numbers = #tpu.dot_dimension_numbers<[1], [0], [0], [1], [0, 0, 1, 1], [], []>} : vector<16x128xbf16>, vector<128x384xbf16>, vector<16x384xf32> -> vector<16x384xf32>
    %444 = arith.addf %443, %19 : vector<16x384xf32>
    %445 = arith.truncf %430 : vector<16x128xf32> to vector<16x128xbf16>
    %cst_102 = arith.constant dense<0.000000e+00> : vector<16x384xf32>
    %446 = tpu.matmul %445, %16, %cst_102 {dimension_numbers = #tpu.dot_dimension_numbers<[1], [0], [0], [1], [0, 0, 1, 1], [], []>} : vector<16x128xbf16>, vector<128x384xbf16>, vector<16x384xf32> -> vector<16x384xf32>
    %447 = arith.addf %446, %22 : vector<16x384xf32>
    %448 = arith.index_cast %438 : i32 to index
    %c0_103 = arith.constant 0 : index
    %449 = vector.load %arg11[%448, %c0_103] : memref<128x384xbf16, #tpu.memory_space<vmem>>, vector<16x384xbf16>
    %450 = arith.extf %449 : vector<16x384xbf16> to vector<16x384xf32>
    %451 = arith.index_cast %441 : i32 to index
    %c0_104 = arith.constant 0 : index
    %452 = vector.load %arg12[%451, %c0_104] : memref<128x384xbf16, #tpu.memory_space<vmem>>, vector<16x384xbf16>
    %453 = arith.extf %452 : vector<16x384xbf16> to vector<16x384xf32>
    %454 = vector.extract_strided_slice %450 {offsets = [0, 0], sizes = [16, 256], strides = [1, 1]} : vector<16x384xf32> to vector<16x256xf32>
    %455 = vector.extract_strided_slice %444 {offsets = [0, 0], sizes = [16, 256], strides = [1, 1]} : vector<16x384xf32> to vector<16x256xf32>
    %456 = arith.addf %454, %455 : vector<16x256xf32>
    %457 = arith.negf %456 : vector<16x256xf32>
    %458 = math.exp %457 : vector<16x256xf32>
    %cst_105 = arith.constant 1.000000e+00 : f32
    %459 = vector.broadcast %cst_105 : f32 to vector<16x256xf32>
    %460 = arith.addf %459, %458 : vector<16x256xf32>
    %461 = arith.divf %459, %460 : vector<16x256xf32>
    %462 = vector.extract_strided_slice %461 {offsets = [0, 0], sizes = [16, 128], strides = [1, 1]} : vector<16x256xf32> to vector<16x128xf32>
    %463 = vector.extract_strided_slice %461 {offsets = [0, 128], sizes = [16, 128], strides = [1, 1]} : vector<16x256xf32> to vector<16x128xf32>
    %464 = vector.extract_strided_slice %450 {offsets = [0, 256], sizes = [16, 128], strides = [1, 1]} : vector<16x384xf32> to vector<16x128xf32>
    %465 = vector.extract_strided_slice %444 {offsets = [0, 256], sizes = [16, 128], strides = [1, 1]} : vector<16x384xf32> to vector<16x128xf32>
    %466 = arith.mulf %462, %465 : vector<16x128xf32>
    %467 = arith.addf %464, %466 : vector<16x128xf32>
    %468 = math.tanh %467 : vector<16x128xf32>
    %469 = arith.subf %412, %468 : vector<16x128xf32>
    %470 = arith.mulf %463, %469 : vector<16x128xf32>
    %471 = arith.addf %468, %470 : vector<16x128xf32>
    %472 = vector.extract_strided_slice %453 {offsets = [0, 0], sizes = [16, 256], strides = [1, 1]} : vector<16x384xf32> to vector<16x256xf32>
    %473 = vector.extract_strided_slice %447 {offsets = [0, 0], sizes = [16, 256], strides = [1, 1]} : vector<16x384xf32> to vector<16x256xf32>
    %474 = arith.addf %472, %473 : vector<16x256xf32>
    %475 = arith.negf %474 : vector<16x256xf32>
    %476 = math.exp %475 : vector<16x256xf32>
    %cst_106 = arith.constant 1.000000e+00 : f32
    %477 = vector.broadcast %cst_106 : f32 to vector<16x256xf32>
    %478 = arith.addf %477, %476 : vector<16x256xf32>
    %479 = arith.divf %477, %478 : vector<16x256xf32>
    %480 = vector.extract_strided_slice %479 {offsets = [0, 0], sizes = [16, 128], strides = [1, 1]} : vector<16x256xf32> to vector<16x128xf32>
    %481 = vector.extract_strided_slice %479 {offsets = [0, 128], sizes = [16, 128], strides = [1, 1]} : vector<16x256xf32> to vector<16x128xf32>
    %482 = vector.extract_strided_slice %453 {offsets = [0, 256], sizes = [16, 128], strides = [1, 1]} : vector<16x384xf32> to vector<16x128xf32>
    %483 = vector.extract_strided_slice %447 {offsets = [0, 256], sizes = [16, 128], strides = [1, 1]} : vector<16x384xf32> to vector<16x128xf32>
    %484 = arith.mulf %480, %483 : vector<16x128xf32>
    %485 = arith.addf %482, %484 : vector<16x128xf32>
    %486 = math.tanh %485 : vector<16x128xf32>
    %487 = arith.subf %430, %486 : vector<16x128xf32>
    %488 = arith.mulf %481, %487 : vector<16x128xf32>
    %489 = arith.addf %486, %488 : vector<16x128xf32>
    %490 = arith.truncf %471 : vector<16x128xf32> to vector<16x128xbf16>
    %491 = arith.index_cast %438 : i32 to index
    %c0_107 = arith.constant 0 : index
    %492 = vector.load %arg9[%491, %c0_107] : memref<128x256xbf16, #tpu.memory_space<vmem>>, vector<16x128xbf16>
    tpu.vector_store %arg9[%491, %c0_107], %490 {strides = array<i32>} : memref<128x256xbf16, #tpu.memory_space<vmem>>, vector<16x128xbf16>,
    %493 = arith.truncf %489 : vector<16x128xf32> to vector<16x128xbf16>
    %494 = arith.index_cast %441 : i32 to index
    %c128_108 = arith.constant 128 : index
    %495 = vector.load %arg9[%494, %c128_108] : memref<128x256xbf16, #tpu.memory_space<vmem>>, vector<16x128xbf16>
    tpu.vector_store %arg9[%494, %c128_108], %493 {strides = array<i32>} : memref<128x256xbf16, #tpu.memory_space<vmem>>, vector<16x128xbf16>,
    %c8_i32 = arith.constant 8 : i32
    %c0_109 = arith.constant 0 : index
    %c0_110 = arith.constant 0 : index
    %496 = vector.load %arg10[%c0_109, %c0_110] : memref<16x256xf32, #tpu.memory_space<vmem>>, vector<16x128xf32>
    tpu.vector_store %arg10[%c0_109, %c0_110], %471 {strides = array<i32>} : memref<16x256xf32, #tpu.memory_space<vmem>>, vector<16x128xf32>,
    %c0_111 = arith.constant 0 : index
    %c128_112 = arith.constant 128 : index
    %497 = vector.load %arg10[%c0_111, %c128_112] : memref<16x256xf32, #tpu.memory_space<vmem>>, vector<16x128xf32>
    tpu.vector_store %arg10[%c0_111, %c128_112], %489 {strides = array<i32>} : memref<16x256xf32, #tpu.memory_space<vmem>>, vector<16x128xf32>,
    return
  }
}

module attributes {stable_mosaic.version = 11 : i64} {
  func.func @_bigru_layer_kernel(%arg0: memref<128x256xbf16, #tpu.memory_space<vmem>>, %arg1: memref<256x384xbf16, #tpu.memory_space<vmem>>, %arg2: memref<256x384xbf16, #tpu.memory_space<vmem>>, %arg3: memref<128x384xbf16, #tpu.memory_space<vmem>>, %arg4: memref<128x384xbf16, #tpu.memory_space<vmem>>, %arg5: memref<1x384xf32, #tpu.memory_space<vmem>>, %arg6: memref<1x384xf32, #tpu.memory_space<vmem>>, %arg7: memref<1x384xf32, #tpu.memory_space<vmem>>, %arg8: memref<1x384xf32, #tpu.memory_space<vmem>>, %arg9: memref<128x256xbf16, #tpu.memory_space<vmem>>, %arg10: memref<16x256xf32, #tpu.memory_space<vmem>>, %arg11: memref<128x384xbf16, #tpu.memory_space<vmem>>, %arg12: memref<128x384xbf16, #tpu.memory_space<vmem>>) attributes {dimension_semantics = [], scalar_prefetch = 0 : i64, scratch_operands = 2 : i64, tpu.core_type = #tpu.core_type<tc>} {
    %c0 = arith.constant 0 : index
    %c0_0 = arith.constant 0 : index
    %0 = vector.load %arg0[%c0, %c0_0] : memref<128x256xbf16, #tpu.memory_space<vmem>>, vector<128x256xbf16>
    %c0_1 = arith.constant 0 : index
    %c0_2 = arith.constant 0 : index
    %1 = vector.load %arg1[%c0_1, %c0_2] : memref<256x384xbf16, #tpu.memory_space<vmem>>, vector<256x384xbf16>
    %cst = arith.constant dense<0.000000e+00> : vector<128x384xf32>
    %2 = tpu.matmul %0, %1, %cst {dimension_numbers = #tpu.dot_dimension_numbers<[1], [0], [0], [1], [0, 0, 1, 1], [], []>} : vector<128x256xbf16>, vector<256x384xbf16>, vector<128x384xf32> -> vector<128x384xf32>
    %c0_3 = arith.constant 0 : index
    %c0_4 = arith.constant 0 : index
    %3 = vector.load %arg5[%c0_3, %c0_4] : memref<1x384xf32, #tpu.memory_space<vmem>>, vector<1x384xf32>
    %4 = vector.broadcast %3 : vector<1x384xf32> to vector<128x384xf32>
    %5 = arith.addf %2, %4 : vector<128x384xf32>
    %6 = arith.truncf %5 : vector<128x384xf32> to vector<128x384xbf16>
    %c0_5 = arith.constant 0 : index
    %c0_6 = arith.constant 0 : index
    %7 = vector.load %arg11[%c0_5, %c0_6] : memref<128x384xbf16, #tpu.memory_space<vmem>>, vector<128x384xbf16>
    tpu.vector_store %arg11[%c0_5, %c0_6], %6 {strides = array<i32>} : memref<128x384xbf16, #tpu.memory_space<vmem>>, vector<128x384xbf16>,
    %c0_7 = arith.constant 0 : index
    %c0_8 = arith.constant 0 : index
    %8 = vector.load %arg2[%c0_7, %c0_8] : memref<256x384xbf16, #tpu.memory_space<vmem>>, vector<256x384xbf16>
    %cst_9 = arith.constant dense<0.000000e+00> : vector<128x384xf32>
    %9 = tpu.matmul %0, %8, %cst_9 {dimension_numbers = #tpu.dot_dimension_numbers<[1], [0], [0], [1], [0, 0, 1, 1], [], []>} : vector<128x256xbf16>, vector<256x384xbf16>, vector<128x384xf32> -> vector<128x384xf32>
    %c0_10 = arith.constant 0 : index
    %c0_11 = arith.constant 0 : index
    %10 = vector.load %arg6[%c0_10, %c0_11] : memref<1x384xf32, #tpu.memory_space<vmem>>, vector<1x384xf32>
    %11 = vector.broadcast %10 : vector<1x384xf32> to vector<128x384xf32>
    %12 = arith.addf %9, %11 : vector<128x384xf32>
    %13 = arith.truncf %12 : vector<128x384xf32> to vector<128x384xbf16>
    %c0_12 = arith.constant 0 : index
    %c0_13 = arith.constant 0 : index
    %14 = vector.load %arg12[%c0_12, %c0_13] : memref<128x384xbf16, #tpu.memory_space<vmem>>, vector<128x384xbf16>
    tpu.vector_store %arg12[%c0_12, %c0_13], %13 {strides = array<i32>} : memref<128x384xbf16, #tpu.memory_space<vmem>>, vector<128x384xbf16>,
    %c0_14 = arith.constant 0 : index
    %c0_15 = arith.constant 0 : index
    %15 = vector.load %arg3[%c0_14, %c0_15] : memref<128x384xbf16, #tpu.memory_space<vmem>>, vector<128x384xbf16>
    %c0_16 = arith.constant 0 : index
    %c0_17 = arith.constant 0 : index
    %16 = vector.load %arg4[%c0_16, %c0_17] : memref<128x384xbf16, #tpu.memory_space<vmem>>, vector<128x384xbf16>
    %c0_18 = arith.constant 0 : index
    %c0_19 = arith.constant 0 : index
    %17 = vector.load %arg7[%c0_18, %c0_19] : memref<1x384xf32, #tpu.memory_space<vmem>>, vector<1x384xf32>
    %18 = vector.shape_cast %17 : vector<1x384xf32> to vector<1x384xf32>
    %19 = vector.broadcast %18 : vector<1x384xf32> to vector<16x384xf32>
    %c0_20 = arith.constant 0 : index
    %c0_21 = arith.constant 0 : index
    %20 = vector.load %arg8[%c0_20, %c0_21] : memref<1x384xf32, #tpu.memory_space<vmem>>, vector<1x384xf32>
    %21 = vector.shape_cast %20 : vector<1x384xf32> to vector<1x384xf32>
    %22 = vector.broadcast %21 : vector<1x384xf32> to vector<16x384xf32>
    %cst_22 = arith.constant 0.000000e+00 : f32
    %23 = vector.broadcast %cst_22 : f32 to vector<16x128xf32>
    %c0_i32 = arith.constant 0 : i32
    %c16_i32 = arith.constant 16 : i32
    %24 = arith.muli %c0_i32, %c16_i32 : i32
    %25 = tpu.assume_multiple %24, 16 : i32
    %c7_i32 = arith.constant 7 : i32
    %26 = arith.subi %c7_i32, %c0_i32 : i32
    %c16_i32_23 = arith.constant 16 : i32
    %27 = arith.muli %26, %c16_i32_23 : i32
    %28 = tpu.assume_multiple %27, 16 : i32
    %29 = arith.truncf %23 : vector<16x128xf32> to vector<16x128xbf16>
    %cst_24 = arith.constant dense<0.000000e+00> : vector<16x384xf32>
    %30 = tpu.matmul %29, %15, %cst_24 {dimension_numbers = #tpu.dot_dimension_numbers<[1], [0], [0], [1], [0, 0, 1, 1], [], []>} : vector<16x128xbf16>, vector<128x384xbf16>, vector<16x384xf32> -> vector<16x384xf32>
    %31 = arith.addf %30, %19 : vector<16x384xf32>
    %32 = arith.truncf %23 : vector<16x128xf32> to vector<16x128xbf16>
    %cst_25 = arith.constant dense<0.000000e+00> : vector<16x384xf32>
    %33 = tpu.matmul %32, %16, %cst_25 {dimension_numbers = #tpu.dot_dimension_numbers<[1], [0], [0], [1], [0, 0, 1, 1], [], []>} : vector<16x128xbf16>, vector<128x384xbf16>, vector<16x384xf32> -> vector<16x384xf32>
    %34 = arith.addf %33, %22 : vector<16x384xf32>
    %35 = arith.index_cast %25 : i32 to index
    %c0_26 = arith.constant 0 : index
    %36 = vector.load %arg11[%35, %c0_26] : memref<128x384xbf16, #tpu.memory_space<vmem>>, vector<16x384xbf16>
    %37 = arith.extf %36 : vector<16x384xbf16> to vector<16x384xf32>
    %38 = arith.index_cast %28 : i32 to index
    %c0_27 = arith.constant 0 : index
    %39 = vector.load %arg12[%38, %c0_27] : memref<128x384xbf16, #tpu.memory_space<vmem>>, vector<16x384xbf16>
    %40 = arith.extf %39 : vector<16x384xbf16> to vector<16x384xf32>
    %41 = vector.extract_strided_slice %37 {offsets = [0, 0], sizes = [16, 256], strides = [1, 1]} : vector<16x384xf32> to vector<16x256xf32>
    %42 = vector.extract_strided_slice %31 {offsets = [0, 0], sizes = [16, 256], strides = [1, 1]} : vector<16x384xf32> to vector<16x256xf32>
    %43 = arith.addf %41, %42 : vector<16x256xf32>
    %44 = arith.negf %43 : vector<16x256xf32>
    %45 = math.exp %44 : vector<16x256xf32>
    %cst_28 = arith.constant 1.000000e+00 : f32
    %46 = vector.broadcast %cst_28 : f32 to vector<16x256xf32>
    %47 = arith.addf %46, %45 : vector<16x256xf32>
    %48 = arith.divf %46, %47 : vector<16x256xf32>
    %49 = vector.extract_strided_slice %48 {offsets = [0, 0], sizes = [16, 128], strides = [1, 1]} : vector<16x256xf32> to vector<16x128xf32>
    %50 = vector.extract_strided_slice %48 {offsets = [0, 128], sizes = [16, 128], strides = [1, 1]} : vector<16x256xf32> to vector<16x128xf32>
    %51 = vector.extract_strided_slice %37 {offsets = [0, 256], sizes = [16, 128], strides = [1, 1]} : vector<16x384xf32> to vector<16x128xf32>
    %52 = vector.extract_strided_slice %31 {offsets = [0, 256], sizes = [16, 128], strides = [1, 1]} : vector<16x384xf32> to vector<16x128xf32>
    %53 = arith.mulf %49, %52 : vector<16x128xf32>
    %54 = arith.addf %51, %53 : vector<16x128xf32>
    %55 = math.tanh %54 : vector<16x128xf32>
    %56 = arith.subf %23, %55 : vector<16x128xf32>
    %57 = arith.mulf %50, %56 : vector<16x128xf32>
    %58 = arith.addf %55, %57 : vector<16x128xf32>
    %59 = vector.extract_strided_slice %40 {offsets = [0, 0], sizes = [16, 256], strides = [1, 1]} : vector<16x384xf32> to vector<16x256xf32>
    %60 = vector.extract_strided_slice %34 {offsets = [0, 0], sizes = [16, 256], strides = [1, 1]} : vector<16x384xf32> to vector<16x256xf32>
    %61 = arith.addf %59, %60 : vector<16x256xf32>
    %62 = arith.negf %61 : vector<16x256xf32>
    %63 = math.exp %62 : vector<16x256xf32>
    %cst_29 = arith.constant 1.000000e+00 : f32
    %64 = vector.broadcast %cst_29 : f32 to vector<16x256xf32>
    %65 = arith.addf %64, %63 : vector<16x256xf32>
    %66 = arith.divf %64, %65 : vector<16x256xf32>
    %67 = vector.extract_strided_slice %66 {offsets = [0, 0], sizes = [16, 128], strides = [1, 1]} : vector<16x256xf32> to vector<16x128xf32>
    %68 = vector.extract_strided_slice %66 {offsets = [0, 128], sizes = [16, 128], strides = [1, 1]} : vector<16x256xf32> to vector<16x128xf32>
    %69 = vector.extract_strided_slice %40 {offsets = [0, 256], sizes = [16, 128], strides = [1, 1]} : vector<16x384xf32> to vector<16x128xf32>
    %70 = vector.extract_strided_slice %34 {offsets = [0, 256], sizes = [16, 128], strides = [1, 1]} : vector<16x384xf32> to vector<16x128xf32>
    %71 = arith.mulf %67, %70 : vector<16x128xf32>
    %72 = arith.addf %69, %71 : vector<16x128xf32>
    %73 = math.tanh %72 : vector<16x128xf32>
    %74 = arith.subf %23, %73 : vector<16x128xf32>
    %75 = arith.mulf %68, %74 : vector<16x128xf32>
    %76 = arith.addf %73, %75 : vector<16x128xf32>
    %77 = arith.truncf %58 : vector<16x128xf32> to vector<16x128xbf16>
    %78 = arith.index_cast %25 : i32 to index
    %c0_30 = arith.constant 0 : index
    %79 = vector.load %arg9[%78, %c0_30] : memref<128x256xbf16, #tpu.memory_space<vmem>>, vector<16x128xbf16>
    tpu.vector_store %arg9[%78, %c0_30], %77 {strides = array<i32>} : memref<128x256xbf16, #tpu.memory_space<vmem>>, vector<16x128xbf16>,
    %80 = arith.truncf %76 : vector<16x128xf32> to vector<16x128xbf16>
    %81 = arith.index_cast %28 : i32 to index
    %c128 = arith.constant 128 : index
    %82 = vector.load %arg9[%81, %c128] : memref<128x256xbf16, #tpu.memory_space<vmem>>, vector<16x128xbf16>
    tpu.vector_store %arg9[%81, %c128], %80 {strides = array<i32>} : memref<128x256xbf16, #tpu.memory_space<vmem>>, vector<16x128xbf16>,
    %c1_i32 = arith.constant 1 : i32
    %c16_i32_31 = arith.constant 16 : i32
    %83 = arith.muli %c1_i32, %c16_i32_31 : i32
    %84 = tpu.assume_multiple %83, 16 : i32
    %c7_i32_32 = arith.constant 7 : i32
    %85 = arith.subi %c7_i32_32, %c1_i32 : i32
    %c16_i32_33 = arith.constant 16 : i32
    %86 = arith.muli %85, %c16_i32_33 : i32
    %87 = tpu.assume_multiple %86, 16 : i32
    %88 = arith.truncf %58 : vector<16x128xf32> to vector<16x128xbf16>
    %cst_34 = arith.constant dense<0.000000e+00> : vector<16x384xf32>
    %89 = tpu.matmul %88, %15, %cst_34 {dimension_numbers = #tpu.dot_dimension_numbers<[1], [0], [0], [1], [0, 0, 1, 1], [], []>} : vector<16x128xbf16>, vector<128x384xbf16>, vector<16x384xf32> -> vector<16x384xf32>
    %90 = arith.addf %89, %19 : vector<16x384xf32>
    %91 = arith.truncf %76 : vector<16x128xf32> to vector<16x128xbf16>
    %cst_35 = arith.constant dense<0.000000e+00> : vector<16x384xf32>
    %92 = tpu.matmul %91, %16, %cst_35 {dimension_numbers = #tpu.dot_dimension_numbers<[1], [0], [0], [1], [0, 0, 1, 1], [], []>} : vector<16x128xbf16>, vector<128x384xbf16>, vector<16x384xf32> -> vector<16x384xf32>
    %93 = arith.addf %92, %22 : vector<16x384xf32>
    %94 = arith.index_cast %84 : i32 to index
    %c0_36 = arith.constant 0 : index
    %95 = vector.load %arg11[%94, %c0_36] : memref<128x384xbf16, #tpu.memory_space<vmem>>, vector<16x384xbf16>
    %96 = arith.extf %95 : vector<16x384xbf16> to vector<16x384xf32>
    %97 = arith.index_cast %87 : i32 to index
    %c0_37 = arith.constant 0 : index
    %98 = vector.load %arg12[%97, %c0_37] : memref<128x384xbf16, #tpu.memory_space<vmem>>, vector<16x384xbf16>
    %99 = arith.extf %98 : vector<16x384xbf16> to vector<16x384xf32>
    %100 = vector.extract_strided_slice %96 {offsets = [0, 0], sizes = [16, 256], strides = [1, 1]} : vector<16x384xf32> to vector<16x256xf32>
    %101 = vector.extract_strided_slice %90 {offsets = [0, 0], sizes = [16, 256], strides = [1, 1]} : vector<16x384xf32> to vector<16x256xf32>
    %102 = arith.addf %100, %101 : vector<16x256xf32>
    %103 = arith.negf %102 : vector<16x256xf32>
    %104 = math.exp %103 : vector<16x256xf32>
    %cst_38 = arith.constant 1.000000e+00 : f32
    %105 = vector.broadcast %cst_38 : f32 to vector<16x256xf32>
    %106 = arith.addf %105, %104 : vector<16x256xf32>
    %107 = arith.divf %105, %106 : vector<16x256xf32>
    %108 = vector.extract_strided_slice %107 {offsets = [0, 0], sizes = [16, 128], strides = [1, 1]} : vector<16x256xf32> to vector<16x128xf32>
    %109 = vector.extract_strided_slice %107 {offsets = [0, 128], sizes = [16, 128], strides = [1, 1]} : vector<16x256xf32> to vector<16x128xf32>
    %110 = vector.extract_strided_slice %96 {offsets = [0, 256], sizes = [16, 128], strides = [1, 1]} : vector<16x384xf32> to vector<16x128xf32>
    %111 = vector.extract_strided_slice %90 {offsets = [0, 256], sizes = [16, 128], strides = [1, 1]} : vector<16x384xf32> to vector<16x128xf32>
    %112 = arith.mulf %108, %111 : vector<16x128xf32>
    %113 = arith.addf %110, %112 : vector<16x128xf32>
    %114 = math.tanh %113 : vector<16x128xf32>
    %115 = arith.subf %58, %114 : vector<16x128xf32>
    %116 = arith.mulf %109, %115 : vector<16x128xf32>
    %117 = arith.addf %114, %116 : vector<16x128xf32>
    %118 = vector.extract_strided_slice %99 {offsets = [0, 0], sizes = [16, 256], strides = [1, 1]} : vector<16x384xf32> to vector<16x256xf32>
    %119 = vector.extract_strided_slice %93 {offsets = [0, 0], sizes = [16, 256], strides = [1, 1]} : vector<16x384xf32> to vector<16x256xf32>
    %120 = arith.addf %118, %119 : vector<16x256xf32>
    %121 = arith.negf %120 : vector<16x256xf32>
    %122 = math.exp %121 : vector<16x256xf32>
    %cst_39 = arith.constant 1.000000e+00 : f32
    %123 = vector.broadcast %cst_39 : f32 to vector<16x256xf32>
    %124 = arith.addf %123, %122 : vector<16x256xf32>
    %125 = arith.divf %123, %124 : vector<16x256xf32>
    %126 = vector.extract_strided_slice %125 {offsets = [0, 0], sizes = [16, 128], strides = [1, 1]} : vector<16x256xf32> to vector<16x128xf32>
    %127 = vector.extract_strided_slice %125 {offsets = [0, 128], sizes = [16, 128], strides = [1, 1]} : vector<16x256xf32> to vector<16x128xf32>
    %128 = vector.extract_strided_slice %99 {offsets = [0, 256], sizes = [16, 128], strides = [1, 1]} : vector<16x384xf32> to vector<16x128xf32>
    %129 = vector.extract_strided_slice %93 {offsets = [0, 256], sizes = [16, 128], strides = [1, 1]} : vector<16x384xf32> to vector<16x128xf32>
    %130 = arith.mulf %126, %129 : vector<16x128xf32>
    %131 = arith.addf %128, %130 : vector<16x128xf32>
    %132 = math.tanh %131 : vector<16x128xf32>
    %133 = arith.subf %76, %132 : vector<16x128xf32>
    %134 = arith.mulf %127, %133 : vector<16x128xf32>
    %135 = arith.addf %132, %134 : vector<16x128xf32>
    %136 = arith.truncf %117 : vector<16x128xf32> to vector<16x128xbf16>
    %137 = arith.index_cast %84 : i32 to index
    %c0_40 = arith.constant 0 : index
    %138 = vector.load %arg9[%137, %c0_40] : memref<128x256xbf16, #tpu.memory_space<vmem>>, vector<16x128xbf16>
    tpu.vector_store %arg9[%137, %c0_40], %136 {strides = array<i32>} : memref<128x256xbf16, #tpu.memory_space<vmem>>, vector<16x128xbf16>,
    %139 = arith.truncf %135 : vector<16x128xf32> to vector<16x128xbf16>
    %140 = arith.index_cast %87 : i32 to index
    %c128_41 = arith.constant 128 : index
    %141 = vector.load %arg9[%140, %c128_41] : memref<128x256xbf16, #tpu.memory_space<vmem>>, vector<16x128xbf16>
    tpu.vector_store %arg9[%140, %c128_41], %139 {strides = array<i32>} : memref<128x256xbf16, #tpu.memory_space<vmem>>, vector<16x128xbf16>,
    %c2_i32 = arith.constant 2 : i32
    %c16_i32_42 = arith.constant 16 : i32
    %142 = arith.muli %c2_i32, %c16_i32_42 : i32
    %143 = tpu.assume_multiple %142, 16 : i32
    %c7_i32_43 = arith.constant 7 : i32
    %144 = arith.subi %c7_i32_43, %c2_i32 : i32
    %c16_i32_44 = arith.constant 16 : i32
    %145 = arith.muli %144, %c16_i32_44 : i32
    %146 = tpu.assume_multiple %145, 16 : i32
    %147 = arith.truncf %117 : vector<16x128xf32> to vector<16x128xbf16>
    %cst_45 = arith.constant dense<0.000000e+00> : vector<16x384xf32>
    %148 = tpu.matmul %147, %15, %cst_45 {dimension_numbers = #tpu.dot_dimension_numbers<[1], [0], [0], [1], [0, 0, 1, 1], [], []>} : vector<16x128xbf16>, vector<128x384xbf16>, vector<16x384xf32> -> vector<16x384xf32>
    %149 = arith.addf %148, %19 : vector<16x384xf32>
    %150 = arith.truncf %135 : vector<16x128xf32> to vector<16x128xbf16>
    %cst_46 = arith.constant dense<0.000000e+00> : vector<16x384xf32>
    %151 = tpu.matmul %150, %16, %cst_46 {dimension_numbers = #tpu.dot_dimension_numbers<[1], [0], [0], [1], [0, 0, 1, 1], [], []>} : vector<16x128xbf16>, vector<128x384xbf16>, vector<16x384xf32> -> vector<16x384xf32>
    %152 = arith.addf %151, %22 : vector<16x384xf32>
    %153 = arith.index_cast %143 : i32 to index
    %c0_47 = arith.constant 0 : index
    %154 = vector.load %arg11[%153, %c0_47] : memref<128x384xbf16, #tpu.memory_space<vmem>>, vector<16x384xbf16>
    %155 = arith.extf %154 : vector<16x384xbf16> to vector<16x384xf32>
    %156 = arith.index_cast %146 : i32 to index
    %c0_48 = arith.constant 0 : index
    %157 = vector.load %arg12[%156, %c0_48] : memref<128x384xbf16, #tpu.memory_space<vmem>>, vector<16x384xbf16>
    %158 = arith.extf %157 : vector<16x384xbf16> to vector<16x384xf32>
    %159 = vector.extract_strided_slice %155 {offsets = [0, 0], sizes = [16, 256], strides = [1, 1]} : vector<16x384xf32> to vector<16x256xf32>
    %160 = vector.extract_strided_slice %149 {offsets = [0, 0], sizes = [16, 256], strides = [1, 1]} : vector<16x384xf32> to vector<16x256xf32>
    %161 = arith.addf %159, %160 : vector<16x256xf32>
    %162 = arith.negf %161 : vector<16x256xf32>
    %163 = math.exp %162 : vector<16x256xf32>
    %cst_49 = arith.constant 1.000000e+00 : f32
    %164 = vector.broadcast %cst_49 : f32 to vector<16x256xf32>
    %165 = arith.addf %164, %163 : vector<16x256xf32>
    %166 = arith.divf %164, %165 : vector<16x256xf32>
    %167 = vector.extract_strided_slice %166 {offsets = [0, 0], sizes = [16, 128], strides = [1, 1]} : vector<16x256xf32> to vector<16x128xf32>
    %168 = vector.extract_strided_slice %166 {offsets = [0, 128], sizes = [16, 128], strides = [1, 1]} : vector<16x256xf32> to vector<16x128xf32>
    %169 = vector.extract_strided_slice %155 {offsets = [0, 256], sizes = [16, 128], strides = [1, 1]} : vector<16x384xf32> to vector<16x128xf32>
    %170 = vector.extract_strided_slice %149 {offsets = [0, 256], sizes = [16, 128], strides = [1, 1]} : vector<16x384xf32> to vector<16x128xf32>
    %171 = arith.mulf %167, %170 : vector<16x128xf32>
    %172 = arith.addf %169, %171 : vector<16x128xf32>
    %173 = math.tanh %172 : vector<16x128xf32>
    %174 = arith.subf %117, %173 : vector<16x128xf32>
    %175 = arith.mulf %168, %174 : vector<16x128xf32>
    %176 = arith.addf %173, %175 : vector<16x128xf32>
    %177 = vector.extract_strided_slice %158 {offsets = [0, 0], sizes = [16, 256], strides = [1, 1]} : vector<16x384xf32> to vector<16x256xf32>
    %178 = vector.extract_strided_slice %152 {offsets = [0, 0], sizes = [16, 256], strides = [1, 1]} : vector<16x384xf32> to vector<16x256xf32>
    %179 = arith.addf %177, %178 : vector<16x256xf32>
    %180 = arith.negf %179 : vector<16x256xf32>
    %181 = math.exp %180 : vector<16x256xf32>
    %cst_50 = arith.constant 1.000000e+00 : f32
    %182 = vector.broadcast %cst_50 : f32 to vector<16x256xf32>
    %183 = arith.addf %182, %181 : vector<16x256xf32>
    %184 = arith.divf %182, %183 : vector<16x256xf32>
    %185 = vector.extract_strided_slice %184 {offsets = [0, 0], sizes = [16, 128], strides = [1, 1]} : vector<16x256xf32> to vector<16x128xf32>
    %186 = vector.extract_strided_slice %184 {offsets = [0, 128], sizes = [16, 128], strides = [1, 1]} : vector<16x256xf32> to vector<16x128xf32>
    %187 = vector.extract_strided_slice %158 {offsets = [0, 256], sizes = [16, 128], strides = [1, 1]} : vector<16x384xf32> to vector<16x128xf32>
    %188 = vector.extract_strided_slice %152 {offsets = [0, 256], sizes = [16, 128], strides = [1, 1]} : vector<16x384xf32> to vector<16x128xf32>
    %189 = arith.mulf %185, %188 : vector<16x128xf32>
    %190 = arith.addf %187, %189 : vector<16x128xf32>
    %191 = math.tanh %190 : vector<16x128xf32>
    %192 = arith.subf %135, %191 : vector<16x128xf32>
    %193 = arith.mulf %186, %192 : vector<16x128xf32>
    %194 = arith.addf %191, %193 : vector<16x128xf32>
    %195 = arith.truncf %176 : vector<16x128xf32> to vector<16x128xbf16>
    %196 = arith.index_cast %143 : i32 to index
    %c0_51 = arith.constant 0 : index
    %197 = vector.load %arg9[%196, %c0_51] : memref<128x256xbf16, #tpu.memory_space<vmem>>, vector<16x128xbf16>
    tpu.vector_store %arg9[%196, %c0_51], %195 {strides = array<i32>} : memref<128x256xbf16, #tpu.memory_space<vmem>>, vector<16x128xbf16>,
    %198 = arith.truncf %194 : vector<16x128xf32> to vector<16x128xbf16>
    %199 = arith.index_cast %146 : i32 to index
    %c128_52 = arith.constant 128 : index
    %200 = vector.load %arg9[%199, %c128_52] : memref<128x256xbf16, #tpu.memory_space<vmem>>, vector<16x128xbf16>
    tpu.vector_store %arg9[%199, %c128_52], %198 {strides = array<i32>} : memref<128x256xbf16, #tpu.memory_space<vmem>>, vector<16x128xbf16>,
    %c3_i32 = arith.constant 3 : i32
    %c16_i32_53 = arith.constant 16 : i32
    %201 = arith.muli %c3_i32, %c16_i32_53 : i32
    %202 = tpu.assume_multiple %201, 16 : i32
    %c7_i32_54 = arith.constant 7 : i32
    %203 = arith.subi %c7_i32_54, %c3_i32 : i32
    %c16_i32_55 = arith.constant 16 : i32
    %204 = arith.muli %203, %c16_i32_55 : i32
    %205 = tpu.assume_multiple %204, 16 : i32
    %206 = arith.truncf %176 : vector<16x128xf32> to vector<16x128xbf16>
    %cst_56 = arith.constant dense<0.000000e+00> : vector<16x384xf32>
    %207 = tpu.matmul %206, %15, %cst_56 {dimension_numbers = #tpu.dot_dimension_numbers<[1], [0], [0], [1], [0, 0, 1, 1], [], []>} : vector<16x128xbf16>, vector<128x384xbf16>, vector<16x384xf32> -> vector<16x384xf32>
    %208 = arith.addf %207, %19 : vector<16x384xf32>
    %209 = arith.truncf %194 : vector<16x128xf32> to vector<16x128xbf16>
    %cst_57 = arith.constant dense<0.000000e+00> : vector<16x384xf32>
    %210 = tpu.matmul %209, %16, %cst_57 {dimension_numbers = #tpu.dot_dimension_numbers<[1], [0], [0], [1], [0, 0, 1, 1], [], []>} : vector<16x128xbf16>, vector<128x384xbf16>, vector<16x384xf32> -> vector<16x384xf32>
    %211 = arith.addf %210, %22 : vector<16x384xf32>
    %212 = arith.index_cast %202 : i32 to index
    %c0_58 = arith.constant 0 : index
    %213 = vector.load %arg11[%212, %c0_58] : memref<128x384xbf16, #tpu.memory_space<vmem>>, vector<16x384xbf16>
    %214 = arith.extf %213 : vector<16x384xbf16> to vector<16x384xf32>
    %215 = arith.index_cast %205 : i32 to index
    %c0_59 = arith.constant 0 : index
    %216 = vector.load %arg12[%215, %c0_59] : memref<128x384xbf16, #tpu.memory_space<vmem>>, vector<16x384xbf16>
    %217 = arith.extf %216 : vector<16x384xbf16> to vector<16x384xf32>
    %218 = vector.extract_strided_slice %214 {offsets = [0, 0], sizes = [16, 256], strides = [1, 1]} : vector<16x384xf32> to vector<16x256xf32>
    %219 = vector.extract_strided_slice %208 {offsets = [0, 0], sizes = [16, 256], strides = [1, 1]} : vector<16x384xf32> to vector<16x256xf32>
    %220 = arith.addf %218, %219 : vector<16x256xf32>
    %221 = arith.negf %220 : vector<16x256xf32>
    %222 = math.exp %221 : vector<16x256xf32>
    %cst_60 = arith.constant 1.000000e+00 : f32
    %223 = vector.broadcast %cst_60 : f32 to vector<16x256xf32>
    %224 = arith.addf %223, %222 : vector<16x256xf32>
    %225 = arith.divf %223, %224 : vector<16x256xf32>
    %226 = vector.extract_strided_slice %225 {offsets = [0, 0], sizes = [16, 128], strides = [1, 1]} : vector<16x256xf32> to vector<16x128xf32>
    %227 = vector.extract_strided_slice %225 {offsets = [0, 128], sizes = [16, 128], strides = [1, 1]} : vector<16x256xf32> to vector<16x128xf32>
    %228 = vector.extract_strided_slice %214 {offsets = [0, 256], sizes = [16, 128], strides = [1, 1]} : vector<16x384xf32> to vector<16x128xf32>
    %229 = vector.extract_strided_slice %208 {offsets = [0, 256], sizes = [16, 128], strides = [1, 1]} : vector<16x384xf32> to vector<16x128xf32>
    %230 = arith.mulf %226, %229 : vector<16x128xf32>
    %231 = arith.addf %228, %230 : vector<16x128xf32>
    %232 = math.tanh %231 : vector<16x128xf32>
    %233 = arith.subf %176, %232 : vector<16x128xf32>
    %234 = arith.mulf %227, %233 : vector<16x128xf32>
    %235 = arith.addf %232, %234 : vector<16x128xf32>
    %236 = vector.extract_strided_slice %217 {offsets = [0, 0], sizes = [16, 256], strides = [1, 1]} : vector<16x384xf32> to vector<16x256xf32>
    %237 = vector.extract_strided_slice %211 {offsets = [0, 0], sizes = [16, 256], strides = [1, 1]} : vector<16x384xf32> to vector<16x256xf32>
    %238 = arith.addf %236, %237 : vector<16x256xf32>
    %239 = arith.negf %238 : vector<16x256xf32>
    %240 = math.exp %239 : vector<16x256xf32>
    %cst_61 = arith.constant 1.000000e+00 : f32
    %241 = vector.broadcast %cst_61 : f32 to vector<16x256xf32>
    %242 = arith.addf %241, %240 : vector<16x256xf32>
    %243 = arith.divf %241, %242 : vector<16x256xf32>
    %244 = vector.extract_strided_slice %243 {offsets = [0, 0], sizes = [16, 128], strides = [1, 1]} : vector<16x256xf32> to vector<16x128xf32>
    %245 = vector.extract_strided_slice %243 {offsets = [0, 128], sizes = [16, 128], strides = [1, 1]} : vector<16x256xf32> to vector<16x128xf32>
    %246 = vector.extract_strided_slice %217 {offsets = [0, 256], sizes = [16, 128], strides = [1, 1]} : vector<16x384xf32> to vector<16x128xf32>
    %247 = vector.extract_strided_slice %211 {offsets = [0, 256], sizes = [16, 128], strides = [1, 1]} : vector<16x384xf32> to vector<16x128xf32>
    %248 = arith.mulf %244, %247 : vector<16x128xf32>
    %249 = arith.addf %246, %248 : vector<16x128xf32>
    %250 = math.tanh %249 : vector<16x128xf32>
    %251 = arith.subf %194, %250 : vector<16x128xf32>
    %252 = arith.mulf %245, %251 : vector<16x128xf32>
    %253 = arith.addf %250, %252 : vector<16x128xf32>
    %254 = arith.truncf %235 : vector<16x128xf32> to vector<16x128xbf16>
    %255 = arith.index_cast %202 : i32 to index
    %c0_62 = arith.constant 0 : index
    %256 = vector.load %arg9[%255, %c0_62] : memref<128x256xbf16, #tpu.memory_space<vmem>>, vector<16x128xbf16>
    tpu.vector_store %arg9[%255, %c0_62], %254 {strides = array<i32>} : memref<128x256xbf16, #tpu.memory_space<vmem>>, vector<16x128xbf16>,
    %257 = arith.truncf %253 : vector<16x128xf32> to vector<16x128xbf16>
    %258 = arith.index_cast %205 : i32 to index
    %c128_63 = arith.constant 128 : index
    %259 = vector.load %arg9[%258, %c128_63] : memref<128x256xbf16, #tpu.memory_space<vmem>>, vector<16x128xbf16>
    tpu.vector_store %arg9[%258, %c128_63], %257 {strides = array<i32>} : memref<128x256xbf16, #tpu.memory_space<vmem>>, vector<16x128xbf16>,
    %c4_i32 = arith.constant 4 : i32
    %c16_i32_64 = arith.constant 16 : i32
    %260 = arith.muli %c4_i32, %c16_i32_64 : i32
    %261 = tpu.assume_multiple %260, 16 : i32
    %c7_i32_65 = arith.constant 7 : i32
    %262 = arith.subi %c7_i32_65, %c4_i32 : i32
    %c16_i32_66 = arith.constant 16 : i32
    %263 = arith.muli %262, %c16_i32_66 : i32
    %264 = tpu.assume_multiple %263, 16 : i32
    %265 = arith.truncf %235 : vector<16x128xf32> to vector<16x128xbf16>
    %cst_67 = arith.constant dense<0.000000e+00> : vector<16x384xf32>
    %266 = tpu.matmul %265, %15, %cst_67 {dimension_numbers = #tpu.dot_dimension_numbers<[1], [0], [0], [1], [0, 0, 1, 1], [], []>} : vector<16x128xbf16>, vector<128x384xbf16>, vector<16x384xf32> -> vector<16x384xf32>
    %267 = arith.addf %266, %19 : vector<16x384xf32>
    %268 = arith.truncf %253 : vector<16x128xf32> to vector<16x128xbf16>
    %cst_68 = arith.constant dense<0.000000e+00> : vector<16x384xf32>
    %269 = tpu.matmul %268, %16, %cst_68 {dimension_numbers = #tpu.dot_dimension_numbers<[1], [0], [0], [1], [0, 0, 1, 1], [], []>} : vector<16x128xbf16>, vector<128x384xbf16>, vector<16x384xf32> -> vector<16x384xf32>
    %270 = arith.addf %269, %22 : vector<16x384xf32>
    %271 = arith.index_cast %261 : i32 to index
    %c0_69 = arith.constant 0 : index
    %272 = vector.load %arg11[%271, %c0_69] : memref<128x384xbf16, #tpu.memory_space<vmem>>, vector<16x384xbf16>
    %273 = arith.extf %272 : vector<16x384xbf16> to vector<16x384xf32>
    %274 = arith.index_cast %264 : i32 to index
    %c0_70 = arith.constant 0 : index
    %275 = vector.load %arg12[%274, %c0_70] : memref<128x384xbf16, #tpu.memory_space<vmem>>, vector<16x384xbf16>
    %276 = arith.extf %275 : vector<16x384xbf16> to vector<16x384xf32>
    %277 = vector.extract_strided_slice %273 {offsets = [0, 0], sizes = [16, 256], strides = [1, 1]} : vector<16x384xf32> to vector<16x256xf32>
    %278 = vector.extract_strided_slice %267 {offsets = [0, 0], sizes = [16, 256], strides = [1, 1]} : vector<16x384xf32> to vector<16x256xf32>
    %279 = arith.addf %277, %278 : vector<16x256xf32>
    %280 = arith.negf %279 : vector<16x256xf32>
    %281 = math.exp %280 : vector<16x256xf32>
    %cst_71 = arith.constant 1.000000e+00 : f32
    %282 = vector.broadcast %cst_71 : f32 to vector<16x256xf32>
    %283 = arith.addf %282, %281 : vector<16x256xf32>
    %284 = arith.divf %282, %283 : vector<16x256xf32>
    %285 = vector.extract_strided_slice %284 {offsets = [0, 0], sizes = [16, 128], strides = [1, 1]} : vector<16x256xf32> to vector<16x128xf32>
    %286 = vector.extract_strided_slice %284 {offsets = [0, 128], sizes = [16, 128], strides = [1, 1]} : vector<16x256xf32> to vector<16x128xf32>
    %287 = vector.extract_strided_slice %273 {offsets = [0, 256], sizes = [16, 128], strides = [1, 1]} : vector<16x384xf32> to vector<16x128xf32>
    %288 = vector.extract_strided_slice %267 {offsets = [0, 256], sizes = [16, 128], strides = [1, 1]} : vector<16x384xf32> to vector<16x128xf32>
    %289 = arith.mulf %285, %288 : vector<16x128xf32>
    %290 = arith.addf %287, %289 : vector<16x128xf32>
    %291 = math.tanh %290 : vector<16x128xf32>
    %292 = arith.subf %235, %291 : vector<16x128xf32>
    %293 = arith.mulf %286, %292 : vector<16x128xf32>
    %294 = arith.addf %291, %293 : vector<16x128xf32>
    %295 = vector.extract_strided_slice %276 {offsets = [0, 0], sizes = [16, 256], strides = [1, 1]} : vector<16x384xf32> to vector<16x256xf32>
    %296 = vector.extract_strided_slice %270 {offsets = [0, 0], sizes = [16, 256], strides = [1, 1]} : vector<16x384xf32> to vector<16x256xf32>
    %297 = arith.addf %295, %296 : vector<16x256xf32>
    %298 = arith.negf %297 : vector<16x256xf32>
    %299 = math.exp %298 : vector<16x256xf32>
    %cst_72 = arith.constant 1.000000e+00 : f32
    %300 = vector.broadcast %cst_72 : f32 to vector<16x256xf32>
    %301 = arith.addf %300, %299 : vector<16x256xf32>
    %302 = arith.divf %300, %301 : vector<16x256xf32>
    %303 = vector.extract_strided_slice %302 {offsets = [0, 0], sizes = [16, 128], strides = [1, 1]} : vector<16x256xf32> to vector<16x128xf32>
    %304 = vector.extract_strided_slice %302 {offsets = [0, 128], sizes = [16, 128], strides = [1, 1]} : vector<16x256xf32> to vector<16x128xf32>
    %305 = vector.extract_strided_slice %276 {offsets = [0, 256], sizes = [16, 128], strides = [1, 1]} : vector<16x384xf32> to vector<16x128xf32>
    %306 = vector.extract_strided_slice %270 {offsets = [0, 256], sizes = [16, 128], strides = [1, 1]} : vector<16x384xf32> to vector<16x128xf32>
    %307 = arith.mulf %303, %306 : vector<16x128xf32>
    %308 = arith.addf %305, %307 : vector<16x128xf32>
    %309 = math.tanh %308 : vector<16x128xf32>
    %310 = arith.subf %253, %309 : vector<16x128xf32>
    %311 = arith.mulf %304, %310 : vector<16x128xf32>
    %312 = arith.addf %309, %311 : vector<16x128xf32>
    %313 = arith.truncf %294 : vector<16x128xf32> to vector<16x128xbf16>
    %314 = arith.index_cast %261 : i32 to index
    %c0_73 = arith.constant 0 : index
    %315 = vector.load %arg9[%314, %c0_73] : memref<128x256xbf16, #tpu.memory_space<vmem>>, vector<16x128xbf16>
    tpu.vector_store %arg9[%314, %c0_73], %313 {strides = array<i32>} : memref<128x256xbf16, #tpu.memory_space<vmem>>, vector<16x128xbf16>,
    %316 = arith.truncf %312 : vector<16x128xf32> to vector<16x128xbf16>
    %317 = arith.index_cast %264 : i32 to index
    %c128_74 = arith.constant 128 : index
    %318 = vector.load %arg9[%317, %c128_74] : memref<128x256xbf16, #tpu.memory_space<vmem>>, vector<16x128xbf16>
    tpu.vector_store %arg9[%317, %c128_74], %316 {strides = array<i32>} : memref<128x256xbf16, #tpu.memory_space<vmem>>, vector<16x128xbf16>,
    %c5_i32 = arith.constant 5 : i32
    %c16_i32_75 = arith.constant 16 : i32
    %319 = arith.muli %c5_i32, %c16_i32_75 : i32
    %320 = tpu.assume_multiple %319, 16 : i32
    %c7_i32_76 = arith.constant 7 : i32
    %321 = arith.subi %c7_i32_76, %c5_i32 : i32
    %c16_i32_77 = arith.constant 16 : i32
    %322 = arith.muli %321, %c16_i32_77 : i32
    %323 = tpu.assume_multiple %322, 16 : i32
    %324 = arith.truncf %294 : vector<16x128xf32> to vector<16x128xbf16>
    %cst_78 = arith.constant dense<0.000000e+00> : vector<16x384xf32>
    %325 = tpu.matmul %324, %15, %cst_78 {dimension_numbers = #tpu.dot_dimension_numbers<[1], [0], [0], [1], [0, 0, 1, 1], [], []>} : vector<16x128xbf16>, vector<128x384xbf16>, vector<16x384xf32> -> vector<16x384xf32>
    %326 = arith.addf %325, %19 : vector<16x384xf32>
    %327 = arith.truncf %312 : vector<16x128xf32> to vector<16x128xbf16>
    %cst_79 = arith.constant dense<0.000000e+00> : vector<16x384xf32>
    %328 = tpu.matmul %327, %16, %cst_79 {dimension_numbers = #tpu.dot_dimension_numbers<[1], [0], [0], [1], [0, 0, 1, 1], [], []>} : vector<16x128xbf16>, vector<128x384xbf16>, vector<16x384xf32> -> vector<16x384xf32>
    %329 = arith.addf %328, %22 : vector<16x384xf32>
    %330 = arith.index_cast %320 : i32 to index
    %c0_80 = arith.constant 0 : index
    %331 = vector.load %arg11[%330, %c0_80] : memref<128x384xbf16, #tpu.memory_space<vmem>>, vector<16x384xbf16>
    %332 = arith.extf %331 : vector<16x384xbf16> to vector<16x384xf32>
    %333 = arith.index_cast %323 : i32 to index
    %c0_81 = arith.constant 0 : index
    %334 = vector.load %arg12[%333, %c0_81] : memref<128x384xbf16, #tpu.memory_space<vmem>>, vector<16x384xbf16>
    %335 = arith.extf %334 : vector<16x384xbf16> to vector<16x384xf32>
    %336 = vector.extract_strided_slice %332 {offsets = [0, 0], sizes = [16, 256], strides = [1, 1]} : vector<16x384xf32> to vector<16x256xf32>
    %337 = vector.extract_strided_slice %326 {offsets = [0, 0], sizes = [16, 256], strides = [1, 1]} : vector<16x384xf32> to vector<16x256xf32>
    %338 = arith.addf %336, %337 : vector<16x256xf32>
    %339 = arith.negf %338 : vector<16x256xf32>
    %340 = math.exp %339 : vector<16x256xf32>
    %cst_82 = arith.constant 1.000000e+00 : f32
    %341 = vector.broadcast %cst_82 : f32 to vector<16x256xf32>
    %342 = arith.addf %341, %340 : vector<16x256xf32>
    %343 = arith.divf %341, %342 : vector<16x256xf32>
    %344 = vector.extract_strided_slice %343 {offsets = [0, 0], sizes = [16, 128], strides = [1, 1]} : vector<16x256xf32> to vector<16x128xf32>
    %345 = vector.extract_strided_slice %343 {offsets = [0, 128], sizes = [16, 128], strides = [1, 1]} : vector<16x256xf32> to vector<16x128xf32>
    %346 = vector.extract_strided_slice %332 {offsets = [0, 256], sizes = [16, 128], strides = [1, 1]} : vector<16x384xf32> to vector<16x128xf32>
    %347 = vector.extract_strided_slice %326 {offsets = [0, 256], sizes = [16, 128], strides = [1, 1]} : vector<16x384xf32> to vector<16x128xf32>
    %348 = arith.mulf %344, %347 : vector<16x128xf32>
    %349 = arith.addf %346, %348 : vector<16x128xf32>
    %350 = math.tanh %349 : vector<16x128xf32>
    %351 = arith.subf %294, %350 : vector<16x128xf32>
    %352 = arith.mulf %345, %351 : vector<16x128xf32>
    %353 = arith.addf %350, %352 : vector<16x128xf32>
    %354 = vector.extract_strided_slice %335 {offsets = [0, 0], sizes = [16, 256], strides = [1, 1]} : vector<16x384xf32> to vector<16x256xf32>
    %355 = vector.extract_strided_slice %329 {offsets = [0, 0], sizes = [16, 256], strides = [1, 1]} : vector<16x384xf32> to vector<16x256xf32>
    %356 = arith.addf %354, %355 : vector<16x256xf32>
    %357 = arith.negf %356 : vector<16x256xf32>
    %358 = math.exp %357 : vector<16x256xf32>
    %cst_83 = arith.constant 1.000000e+00 : f32
    %359 = vector.broadcast %cst_83 : f32 to vector<16x256xf32>
    %360 = arith.addf %359, %358 : vector<16x256xf32>
    %361 = arith.divf %359, %360 : vector<16x256xf32>
    %362 = vector.extract_strided_slice %361 {offsets = [0, 0], sizes = [16, 128], strides = [1, 1]} : vector<16x256xf32> to vector<16x128xf32>
    %363 = vector.extract_strided_slice %361 {offsets = [0, 128], sizes = [16, 128], strides = [1, 1]} : vector<16x256xf32> to vector<16x128xf32>
    %364 = vector.extract_strided_slice %335 {offsets = [0, 256], sizes = [16, 128], strides = [1, 1]} : vector<16x384xf32> to vector<16x128xf32>
    %365 = vector.extract_strided_slice %329 {offsets = [0, 256], sizes = [16, 128], strides = [1, 1]} : vector<16x384xf32> to vector<16x128xf32>
    %366 = arith.mulf %362, %365 : vector<16x128xf32>
    %367 = arith.addf %364, %366 : vector<16x128xf32>
    %368 = math.tanh %367 : vector<16x128xf32>
    %369 = arith.subf %312, %368 : vector<16x128xf32>
    %370 = arith.mulf %363, %369 : vector<16x128xf32>
    %371 = arith.addf %368, %370 : vector<16x128xf32>
    %372 = arith.truncf %353 : vector<16x128xf32> to vector<16x128xbf16>
    %373 = arith.index_cast %320 : i32 to index
    %c0_84 = arith.constant 0 : index
    %374 = vector.load %arg9[%373, %c0_84] : memref<128x256xbf16, #tpu.memory_space<vmem>>, vector<16x128xbf16>
    tpu.vector_store %arg9[%373, %c0_84], %372 {strides = array<i32>} : memref<128x256xbf16, #tpu.memory_space<vmem>>, vector<16x128xbf16>,
    %375 = arith.truncf %371 : vector<16x128xf32> to vector<16x128xbf16>
    %376 = arith.index_cast %323 : i32 to index
    %c128_85 = arith.constant 128 : index
    %377 = vector.load %arg9[%376, %c128_85] : memref<128x256xbf16, #tpu.memory_space<vmem>>, vector<16x128xbf16>
    tpu.vector_store %arg9[%376, %c128_85], %375 {strides = array<i32>} : memref<128x256xbf16, #tpu.memory_space<vmem>>, vector<16x128xbf16>,
    %c6_i32 = arith.constant 6 : i32
    %c16_i32_86 = arith.constant 16 : i32
    %378 = arith.muli %c6_i32, %c16_i32_86 : i32
    %379 = tpu.assume_multiple %378, 16 : i32
    %c7_i32_87 = arith.constant 7 : i32
    %380 = arith.subi %c7_i32_87, %c6_i32 : i32
    %c16_i32_88 = arith.constant 16 : i32
    %381 = arith.muli %380, %c16_i32_88 : i32
    %382 = tpu.assume_multiple %381, 16 : i32
    %383 = arith.truncf %353 : vector<16x128xf32> to vector<16x128xbf16>
    %cst_89 = arith.constant dense<0.000000e+00> : vector<16x384xf32>
    %384 = tpu.matmul %383, %15, %cst_89 {dimension_numbers = #tpu.dot_dimension_numbers<[1], [0], [0], [1], [0, 0, 1, 1], [], []>} : vector<16x128xbf16>, vector<128x384xbf16>, vector<16x384xf32> -> vector<16x384xf32>
    %385 = arith.addf %384, %19 : vector<16x384xf32>
    %386 = arith.truncf %371 : vector<16x128xf32> to vector<16x128xbf16>
    %cst_90 = arith.constant dense<0.000000e+00> : vector<16x384xf32>
    %387 = tpu.matmul %386, %16, %cst_90 {dimension_numbers = #tpu.dot_dimension_numbers<[1], [0], [0], [1], [0, 0, 1, 1], [], []>} : vector<16x128xbf16>, vector<128x384xbf16>, vector<16x384xf32> -> vector<16x384xf32>
    %388 = arith.addf %387, %22 : vector<16x384xf32>
    %389 = arith.index_cast %379 : i32 to index
    %c0_91 = arith.constant 0 : index
    %390 = vector.load %arg11[%389, %c0_91] : memref<128x384xbf16, #tpu.memory_space<vmem>>, vector<16x384xbf16>
    %391 = arith.extf %390 : vector<16x384xbf16> to vector<16x384xf32>
    %392 = arith.index_cast %382 : i32 to index
    %c0_92 = arith.constant 0 : index
    %393 = vector.load %arg12[%392, %c0_92] : memref<128x384xbf16, #tpu.memory_space<vmem>>, vector<16x384xbf16>
    %394 = arith.extf %393 : vector<16x384xbf16> to vector<16x384xf32>
    %395 = vector.extract_strided_slice %391 {offsets = [0, 0], sizes = [16, 256], strides = [1, 1]} : vector<16x384xf32> to vector<16x256xf32>
    %396 = vector.extract_strided_slice %385 {offsets = [0, 0], sizes = [16, 256], strides = [1, 1]} : vector<16x384xf32> to vector<16x256xf32>
    %397 = arith.addf %395, %396 : vector<16x256xf32>
    %398 = arith.negf %397 : vector<16x256xf32>
    %399 = math.exp %398 : vector<16x256xf32>
    %cst_93 = arith.constant 1.000000e+00 : f32
    %400 = vector.broadcast %cst_93 : f32 to vector<16x256xf32>
    %401 = arith.addf %400, %399 : vector<16x256xf32>
    %402 = arith.divf %400, %401 : vector<16x256xf32>
    %403 = vector.extract_strided_slice %402 {offsets = [0, 0], sizes = [16, 128], strides = [1, 1]} : vector<16x256xf32> to vector<16x128xf32>
    %404 = vector.extract_strided_slice %402 {offsets = [0, 128], sizes = [16, 128], strides = [1, 1]} : vector<16x256xf32> to vector<16x128xf32>
    %405 = vector.extract_strided_slice %391 {offsets = [0, 256], sizes = [16, 128], strides = [1, 1]} : vector<16x384xf32> to vector<16x128xf32>
    %406 = vector.extract_strided_slice %385 {offsets = [0, 256], sizes = [16, 128], strides = [1, 1]} : vector<16x384xf32> to vector<16x128xf32>
    %407 = arith.mulf %403, %406 : vector<16x128xf32>
    %408 = arith.addf %405, %407 : vector<16x128xf32>
    %409 = math.tanh %408 : vector<16x128xf32>
    %410 = arith.subf %353, %409 : vector<16x128xf32>
    %411 = arith.mulf %404, %410 : vector<16x128xf32>
    %412 = arith.addf %409, %411 : vector<16x128xf32>
    %413 = vector.extract_strided_slice %394 {offsets = [0, 0], sizes = [16, 256], strides = [1, 1]} : vector<16x384xf32> to vector<16x256xf32>
    %414 = vector.extract_strided_slice %388 {offsets = [0, 0], sizes = [16, 256], strides = [1, 1]} : vector<16x384xf32> to vector<16x256xf32>
    %415 = arith.addf %413, %414 : vector<16x256xf32>
    %416 = arith.negf %415 : vector<16x256xf32>
    %417 = math.exp %416 : vector<16x256xf32>
    %cst_94 = arith.constant 1.000000e+00 : f32
    %418 = vector.broadcast %cst_94 : f32 to vector<16x256xf32>
    %419 = arith.addf %418, %417 : vector<16x256xf32>
    %420 = arith.divf %418, %419 : vector<16x256xf32>
    %421 = vector.extract_strided_slice %420 {offsets = [0, 0], sizes = [16, 128], strides = [1, 1]} : vector<16x256xf32> to vector<16x128xf32>
    %422 = vector.extract_strided_slice %420 {offsets = [0, 128], sizes = [16, 128], strides = [1, 1]} : vector<16x256xf32> to vector<16x128xf32>
    %423 = vector.extract_strided_slice %394 {offsets = [0, 256], sizes = [16, 128], strides = [1, 1]} : vector<16x384xf32> to vector<16x128xf32>
    %424 = vector.extract_strided_slice %388 {offsets = [0, 256], sizes = [16, 128], strides = [1, 1]} : vector<16x384xf32> to vector<16x128xf32>
    %425 = arith.mulf %421, %424 : vector<16x128xf32>
    %426 = arith.addf %423, %425 : vector<16x128xf32>
    %427 = math.tanh %426 : vector<16x128xf32>
    %428 = arith.subf %371, %427 : vector<16x128xf32>
    %429 = arith.mulf %422, %428 : vector<16x128xf32>
    %430 = arith.addf %427, %429 : vector<16x128xf32>
    %431 = arith.truncf %412 : vector<16x128xf32> to vector<16x128xbf16>
    %432 = arith.index_cast %379 : i32 to index
    %c0_95 = arith.constant 0 : index
    %433 = vector.load %arg9[%432, %c0_95] : memref<128x256xbf16, #tpu.memory_space<vmem>>, vector<16x128xbf16>
    tpu.vector_store %arg9[%432, %c0_95], %431 {strides = array<i32>} : memref<128x256xbf16, #tpu.memory_space<vmem>>, vector<16x128xbf16>,
    %434 = arith.truncf %430 : vector<16x128xf32> to vector<16x128xbf16>
    %435 = arith.index_cast %382 : i32 to index
    %c128_96 = arith.constant 128 : index
    %436 = vector.load %arg9[%435, %c128_96] : memref<128x256xbf16, #tpu.memory_space<vmem>>, vector<16x128xbf16>
    tpu.vector_store %arg9[%435, %c128_96], %434 {strides = array<i32>} : memref<128x256xbf16, #tpu.memory_space<vmem>>, vector<16x128xbf16>,
    %c7_i32_97 = arith.constant 7 : i32
    %c16_i32_98 = arith.constant 16 : i32
    %437 = arith.muli %c7_i32_97, %c16_i32_98 : i32
    %438 = tpu.assume_multiple %437, 16 : i32
    %c7_i32_99 = arith.constant 7 : i32
    %439 = arith.subi %c7_i32_99, %c7_i32_97 : i32
    %c16_i32_100 = arith.constant 16 : i32
    %440 = arith.muli %439, %c16_i32_100 : i32
    %441 = tpu.assume_multiple %440, 16 : i32
    %442 = arith.truncf %412 : vector<16x128xf32> to vector<16x128xbf16>
    %cst_101 = arith.constant dense<0.000000e+00> : vector<16x384xf32>
    %443 = tpu.matmul %442, %15, %cst_101 {dimension_numbers = #tpu.dot_dimension_numbers<[1], [0], [0], [1], [0, 0, 1, 1], [], []>} : vector<16x128xbf16>, vector<128x384xbf16>, vector<16x384xf32> -> vector<16x384xf32>
    %444 = arith.addf %443, %19 : vector<16x384xf32>
    %445 = arith.truncf %430 : vector<16x128xf32> to vector<16x128xbf16>
    %cst_102 = arith.constant dense<0.000000e+00> : vector<16x384xf32>
    %446 = tpu.matmul %445, %16, %cst_102 {dimension_numbers = #tpu.dot_dimension_numbers<[1], [0], [0], [1], [0, 0, 1, 1], [], []>} : vector<16x128xbf16>, vector<128x384xbf16>, vector<16x384xf32> -> vector<16x384xf32>
    %447 = arith.addf %446, %22 : vector<16x384xf32>
    %448 = arith.index_cast %438 : i32 to index
    %c0_103 = arith.constant 0 : index
    %449 = vector.load %arg11[%448, %c0_103] : memref<128x384xbf16, #tpu.memory_space<vmem>>, vector<16x384xbf16>
    %450 = arith.extf %449 : vector<16x384xbf16> to vector<16x384xf32>
    %451 = arith.index_cast %441 : i32 to index
    %c0_104 = arith.constant 0 : index
    %452 = vector.load %arg12[%451, %c0_104] : memref<128x384xbf16, #tpu.memory_space<vmem>>, vector<16x384xbf16>
    %453 = arith.extf %452 : vector<16x384xbf16> to vector<16x384xf32>
    %454 = vector.extract_strided_slice %450 {offsets = [0, 0], sizes = [16, 256], strides = [1, 1]} : vector<16x384xf32> to vector<16x256xf32>
    %455 = vector.extract_strided_slice %444 {offsets = [0, 0], sizes = [16, 256], strides = [1, 1]} : vector<16x384xf32> to vector<16x256xf32>
    %456 = arith.addf %454, %455 : vector<16x256xf32>
    %457 = arith.negf %456 : vector<16x256xf32>
    %458 = math.exp %457 : vector<16x256xf32>
    %cst_105 = arith.constant 1.000000e+00 : f32
    %459 = vector.broadcast %cst_105 : f32 to vector<16x256xf32>
    %460 = arith.addf %459, %458 : vector<16x256xf32>
    %461 = arith.divf %459, %460 : vector<16x256xf32>
    %462 = vector.extract_strided_slice %461 {offsets = [0, 0], sizes = [16, 128], strides = [1, 1]} : vector<16x256xf32> to vector<16x128xf32>
    %463 = vector.extract_strided_slice %461 {offsets = [0, 128], sizes = [16, 128], strides = [1, 1]} : vector<16x256xf32> to vector<16x128xf32>
    %464 = vector.extract_strided_slice %450 {offsets = [0, 256], sizes = [16, 128], strides = [1, 1]} : vector<16x384xf32> to vector<16x128xf32>
    %465 = vector.extract_strided_slice %444 {offsets = [0, 256], sizes = [16, 128], strides = [1, 1]} : vector<16x384xf32> to vector<16x128xf32>
    %466 = arith.mulf %462, %465 : vector<16x128xf32>
    %467 = arith.addf %464, %466 : vector<16x128xf32>
    %468 = math.tanh %467 : vector<16x128xf32>
    %469 = arith.subf %412, %468 : vector<16x128xf32>
    %470 = arith.mulf %463, %469 : vector<16x128xf32>
    %471 = arith.addf %468, %470 : vector<16x128xf32>
    %472 = vector.extract_strided_slice %453 {offsets = [0, 0], sizes = [16, 256], strides = [1, 1]} : vector<16x384xf32> to vector<16x256xf32>
    %473 = vector.extract_strided_slice %447 {offsets = [0, 0], sizes = [16, 256], strides = [1, 1]} : vector<16x384xf32> to vector<16x256xf32>
    %474 = arith.addf %472, %473 : vector<16x256xf32>
    %475 = arith.negf %474 : vector<16x256xf32>
    %476 = math.exp %475 : vector<16x256xf32>
    %cst_106 = arith.constant 1.000000e+00 : f32
    %477 = vector.broadcast %cst_106 : f32 to vector<16x256xf32>
    %478 = arith.addf %477, %476 : vector<16x256xf32>
    %479 = arith.divf %477, %478 : vector<16x256xf32>
    %480 = vector.extract_strided_slice %479 {offsets = [0, 0], sizes = [16, 128], strides = [1, 1]} : vector<16x256xf32> to vector<16x128xf32>
    %481 = vector.extract_strided_slice %479 {offsets = [0, 128], sizes = [16, 128], strides = [1, 1]} : vector<16x256xf32> to vector<16x128xf32>
    %482 = vector.extract_strided_slice %453 {offsets = [0, 256], sizes = [16, 128], strides = [1, 1]} : vector<16x384xf32> to vector<16x128xf32>
    %483 = vector.extract_strided_slice %447 {offsets = [0, 256], sizes = [16, 128], strides = [1, 1]} : vector<16x384xf32> to vector<16x128xf32>
    %484 = arith.mulf %480, %483 : vector<16x128xf32>
    %485 = arith.addf %482, %484 : vector<16x128xf32>
    %486 = math.tanh %485 : vector<16x128xf32>
    %487 = arith.subf %430, %486 : vector<16x128xf32>
    %488 = arith.mulf %481, %487 : vector<16x128xf32>
    %489 = arith.addf %486, %488 : vector<16x128xf32>
    %490 = arith.truncf %471 : vector<16x128xf32> to vector<16x128xbf16>
    %491 = arith.index_cast %438 : i32 to index
    %c0_107 = arith.constant 0 : index
    %492 = vector.load %arg9[%491, %c0_107] : memref<128x256xbf16, #tpu.memory_space<vmem>>, vector<16x128xbf16>
    tpu.vector_store %arg9[%491, %c0_107], %490 {strides = array<i32>} : memref<128x256xbf16, #tpu.memory_space<vmem>>, vector<16x128xbf16>,
    %493 = arith.truncf %489 : vector<16x128xf32> to vector<16x128xbf16>
    %494 = arith.index_cast %441 : i32 to index
    %c128_108 = arith.constant 128 : index
    %495 = vector.load %arg9[%494, %c128_108] : memref<128x256xbf16, #tpu.memory_space<vmem>>, vector<16x128xbf16>
    tpu.vector_store %arg9[%494, %c128_108], %493 {strides = array<i32>} : memref<128x256xbf16, #tpu.memory_space<vmem>>, vector<16x128xbf16>,
    %c8_i32 = arith.constant 8 : i32
    %c0_109 = arith.constant 0 : index
    %c0_110 = arith.constant 0 : index
    %496 = vector.load %arg10[%c0_109, %c0_110] : memref<16x256xf32, #tpu.memory_space<vmem>>, vector<16x128xf32>
    tpu.vector_store %arg10[%c0_109, %c0_110], %471 {strides = array<i32>} : memref<16x256xf32, #tpu.memory_space<vmem>>, vector<16x128xf32>,
    %c0_111 = arith.constant 0 : index
    %c128_112 = arith.constant 128 : index
    %497 = vector.load %arg10[%c0_111, %c128_112] : memref<16x256xf32, #tpu.memory_space<vmem>>, vector<16x128xf32>
    tpu.vector_store %arg10[%c0_111, %c128_112], %489 {strides = array<i32>} : memref<16x256xf32, #tpu.memory_space<vmem>>, vector<16x128xf32>,
    return
  }
}

</mosaic_0001>

<llo_original>
// kernel: neg.1
$region0: #{neg.1}
  #allocation0 [shape = 's32[1]{0}', space=sflag, size = 0x4, scoped, tag = 'scoped memory for neg.1']
  %s0 = inlined_call_operand.vmem [shape: s32[2], index: 0, kind: input, shape index: {}]
  %s1 = inlined_call_operand.vmem [shape: s32[2], index: 1, kind: output, shape index: {}]
  %v2 = vld [vmem:[%s0] sm:$0x1]
  %3 = xla_tuple %v2
  %4 = xla_tuple %3
  %v5 = vsub.s32 0, %v2
  %6 = xla_tuple %v5
  %7 = vst [vmem:[%s1] sm:$0x1] %v5

// kernel: rnn_forward.2
$region0: #{rnn_forward.2}
  #allocation0 [shape = 'u32[]', space=smem, size = 0x4, offset = 0x4, fixed_abs, tag = 'smem constant byte address 0x4 - core index']
  #allocation1 [shape = 'u32[144,128]{1,0:T(1,128)}', space=vmem, size = 0x12000, scoped, tag = 'internal scratch']
  #allocation2 [shape = 'bf16[128,384]{1,0:T(16,128)(2,1)}', space=vmem, size = 0x18000, scoped, tag = 'scratch operand']
  #allocation3 [shape = 'bf16[128,384]{1,0:T(16,128)(2,1)}', space=vmem, size = 0x18000, scoped, tag = 'scratch operand']
  %s0 = inlined_call_operand.vmem [shape: bf16[128,128], index: 0, kind: input, shape index: {}]
  %s1 = inlined_call_operand.vmem [shape: bf16[128,384], index: 1, kind: input, shape index: {}]
  %s2 = inlined_call_operand.vmem [shape: bf16[128,384], index: 2, kind: input, shape index: {}]
  %s3 = inlined_call_operand.vmem [shape: bf16[128,384], index: 3, kind: input, shape index: {}]
  %s4 = inlined_call_operand.vmem [shape: bf16[128,384], index: 4, kind: input, shape index: {}]
  %s5 = inlined_call_operand.vmem [shape: f32[1,384], index: 5, kind: input, shape index: {}]
  %s6 = inlined_call_operand.vmem [shape: f32[1,384], index: 6, kind: input, shape index: {}]
  %s7 = inlined_call_operand.vmem [shape: f32[1,384], index: 7, kind: input, shape index: {}]
  %s8 = inlined_call_operand.vmem [shape: f32[1,384], index: 8, kind: input, shape index: {}]
  %s9 = inlined_call_operand.vmem [shape: bf16[128,256], index: 9, kind: output, shape index: {0}]
  %s10 = inlined_call_operand.hbm [shape: f32[16,256], index: 10, kind: output, shape index: {1}]
  %11 = xla_tuple %s9, %s10
  %s12 = sld [smem:[#allocation0]]
  $region54: #{rnn_forward.2} parent=0
    _
  %s14 = ssub.s32 1, %s12
  %s15 = scalar_select 0, %s14, %s12
  $region1: #{rnn_forward.2} parent=0
    #allocation4 [shape = 'u8[16384]{0}', space=vmem, size = 0x4000, scoped, tag = 'output window, operand 1, single buffered']
    #allocation5 [shape = 's32[1]{0}', space=sflag, size = 0x4, scoped, tag = 'scoped memory for rnn_forward.2']
    %16 = vsyncpa [#allocation5], 0
    // Predicated region
    $region2: #{rnn_forward.2} parent=1 // pred_check
      _
    $region3: #{rnn_forward.2} parent=1 // pred_check_branch
      %18 = sbr.rel (0) target = $region5
    $region4: #{rnn_forward.2} parent=1 // pred_region
      _
    $region5: #{rnn_forward.2} parent=1 // pred_fallthru
      _
    // Predicated region
    $region6: #{rnn_forward.2} parent=1 // pred_check
      _
    $region7: #{rnn_forward.2} parent=1 // pred_check_branch
      %20 = sbr.rel (0) target = $region9
    $region8: #{rnn_forward.2} parent=1 // pred_region
      _
    $region9: #{rnn_forward.2} parent=1 // pred_fallthru
      _
    // Predicated region
    $region10: #{rnn_forward.2} parent=1 // pred_check
      _
    $region11: #{rnn_forward.2} parent=1 // pred_check_branch
      %22 = sbr.rel (0) target = $region13
    $region12: #{rnn_forward.2} parent=1 // pred_region
      _
    $region13: #{rnn_forward.2} parent=1 // pred_fallthru
      _
    // Predicated region
    $region14: #{rnn_forward.2} parent=1 // pred_check
      _
    $region15: #{rnn_forward.2} parent=1 // pred_check_branch
      %24 = sbr.rel (0) target = $region17
    $region16: #{rnn_forward.2} parent=1 // pred_region
      _
    $region17: #{rnn_forward.2} parent=1 // pred_fallthru
      _
    // Predicated region
    $region18: #{rnn_forward.2} parent=1 // pred_check
      _
    $region19: #{rnn_forward.2} parent=1 // pred_check_branch
      %26 = sbr.rel (0) target = $region21
    $region20: #{rnn_forward.2} parent=1 // pred_region
      _
    $region21: #{rnn_forward.2} parent=1 // pred_fallthru
      _
    // Predicated region
    $region22: #{rnn_forward.2} parent=1 // pred_check
      _
    $region23: #{rnn_forward.2} parent=1 // pred_check_branch
      %28 = sbr.rel (0) target = $region25
    $region24: #{rnn_forward.2} parent=1 // pred_region
      _
    $region25: #{rnn_forward.2} parent=1 // pred_fallthru
      _
    // Predicated region
    $region26: #{rnn_forward.2} parent=1 // pred_check
      _
    $region27: #{rnn_forward.2} parent=1 // pred_check_branch
      %30 = sbr.rel (0) target = $region29
    $region28: #{rnn_forward.2} parent=1 // pred_region
      _
    $region29: #{rnn_forward.2} parent=1 // pred_fallthru
      _
    // Predicated region
    $region30: #{rnn_forward.2} parent=1 // pred_check
      _
    $region31: #{rnn_forward.2} parent=1 // pred_check_branch
      %32 = sbr.rel (0) target = $region33
    $region32: #{rnn_forward.2} parent=1 // pred_region
      _
    $region33: #{rnn_forward.2} parent=1 // pred_fallthru
      _
    // Predicated region
    $region34: #{rnn_forward.2} parent=1 // pred_check
      _
    $region35: #{rnn_forward.2} parent=1 // pred_check_branch
      %34 = sbr.rel (0) target = $region37
    $region36: #{rnn_forward.2} parent=1 // pred_region
      _
    $region37: #{rnn_forward.2} parent=1 // pred_fallthru
      _
    %v36 = vld [vmem:[%s0] sm:$0xf]
    %v37 = vld [vmem:[%s0 + $0x4] sm:$0xf]
    %v38 = vld [vmem:[%s0 + $0x8] sm:$0xf]
    %v39 = vld [vmem:[%s0 + $0xc] sm:$0xf]
    %v40 = vld [vmem:[%s0 + $0x10] sm:$0xf]
    %v41 = vld [vmem:[%s0 + $0x14] sm:$0xf]
    %v42 = vld [vmem:[%s0 + $0x18] sm:$0xf]
    %v43 = vld [vmem:[%s0 + $0x1c] sm:$0xf]
    %v44 = vld [vmem:[%s0 + $0x20] sm:$0xf]
    %v45 = vld [vmem:[%s0 + $0x24] sm:$0xf]
    %v46 = vld [vmem:[%s0 + $0x28] sm:$0xf]
    %v47 = vld [vmem:[%s0 + $0x2c] sm:$0xf]
    %v48 = vld [vmem:[%s0 + $0x30] sm:$0xf]
    %v49 = vld [vmem:[%s0 + $0x34] sm:$0xf]
    %v50 = vld [vmem:[%s0 + $0x38] sm:$0xf]
    %v51 = vld [vmem:[%s0 + $0x3c] sm:$0xf]
    %v52 = vld [vmem:[%s1] sm:$0xff]
    %v53 = vld [vmem:[%s1 + $0x8] sm:$0xf]
    %v54 = vld [vmem:[%s1 + $0xc] sm:$0xff]
    %v55 = vld [vmem:[%s1 + $0x14] sm:$0xf]
    %v56 = vld [vmem:[%s1 + $0x18] sm:$0xff]
    %v57 = vld [vmem:[%s1 + $0x20] sm:$0xf]
    %v58 = vld [vmem:[%s1 + $0x24] sm:$0xff]
    %v59 = vld [vmem:[%s1 + $0x2c] sm:$0xf]
    %v60 = vld [vmem:[%s1 + $0x30] sm:$0xff]
    %v61 = vld [vmem:[%s1 + $0x38] sm:$0xf]
    %v62 = vld [vmem:[%s1 + $0x3c] sm:$0xff]
    %v63 = vld [vmem:[%s1 + $0x44] sm:$0xf]
    %v64 = vld [vmem:[%s1 + $0x48] sm:$0xff]
    %v65 = vld [vmem:[%s1 + $0x50] sm:$0xf]
    %v66 = vld [vmem:[%s1 + $0x54] sm:$0xff]
    %v67 = vld [vmem:[%s1 + $0x5c] sm:$0xf]
    %v68 = vld [vmem:[%s1 + $0x60] sm:$0xff]
    %v69 = vld [vmem:[%s1 + $0x68] sm:$0xf]
    %v70 = vld [vmem:[%s1 + $0x6c] sm:$0xff]
    %v71 = vld [vmem:[%s1 + $0x74] sm:$0xf]
    %v72 = vld [vmem:[%s1 + $0x78] sm:$0xff]
    %v73 = vld [vmem:[%s1 + $0x80] sm:$0xf]
    %v74 = vld [vmem:[%s1 + $0x84] sm:$0xff]
    %v75 = vld [vmem:[%s1 + $0x8c] sm:$0xf]
    %v76 = vld [vmem:[%s1 + $0x90] sm:$0xff]
    %v77 = vld [vmem:[%s1 + $0x98] sm:$0xf]
    %v78 = vld [vmem:[%s1 + $0x9c] sm:$0xff]
    %v79 = vld [vmem:[%s1 + $0xa4] sm:$0xf]
    %v80 = vld [vmem:[%s1 + $0xa8] sm:$0xff]
    %v81 = vld [vmem:[%s1 + $0xb0] sm:$0xf]
    %v82 = vld [vmem:[%s1 + $0xb4] sm:$0xff]
    %v83 = vld [vmem:[%s1 + $0xbc] sm:$0xf]
    %v84 = vld [vmem:[%s5] sm:$0x7]
    %v86 = vlaneseq
    %v87 = vshrl.u32 %v86, 7
    %v88 = vsub.s32 0, %v87
    %v89 = vrot.slane %v84, %v88
    %v90 = vlaneseq
    %v91 = vshrl.u32 %v90, 7
    %v92 = vsub.s32 1, %v91
    %v93 = vrot.slane %v84, %v92
    %v94 = vlaneseq
    %v95 = vshrl.u32 %v94, 7
    %v96 = vsub.s32 2, %v95
    %v97 = vrot.slane %v84, %v96
    %v117 = vunpack.c.l.b16 %v36
    %v118 = vunpack.c.l.b16 %v37
    %v119 = vunpack.c.l.b16 %v38
    %v120 = vunpack.c.l.b16 %v39
    %v121 = vunpack.c.l.b16 %v40
    %v122 = vunpack.c.l.b16 %v41
    %v123 = vunpack.c.l.b16 %v42
    %v124 = vunpack.c.l.b16 %v43
    %v125 = vunpack.c.l.b16 %v44
    %v126 = vunpack.c.l.b16 %v45
    %v127 = vunpack.c.l.b16 %v46
    %v128 = vunpack.c.l.b16 %v47
    %v129 = vunpack.c.l.b16 %v48
    %v130 = vunpack.c.l.b16 %v49
    %v131 = vunpack.c.l.b16 %v50
    %v132 = vunpack.c.l.b16 %v51
    %v133 = vpack.c.b16 %v118, %v117
    %v134 = vpack.c.b16 %v120, %v119
    %v135 = vpack.c.b16 %v122, %v121
    %v136 = vpack.c.b16 %v124, %v123
    %v137 = vpack.c.b16 %v126, %v125
    %v138 = vpack.c.b16 %v128, %v127
    %v139 = vpack.c.b16 %v130, %v129
    %v140 = vpack.c.b16 %v132, %v131
    %v181 = vunpack.c.l.b16 %v52
    %v182 = vunpack.c.h.b16 %v52
    %v183 = vunpack.c.l.b16 %v53
    %v184 = vunpack.c.l.b16 %v54
    %v185 = vunpack.c.h.b16 %v54
    %v186 = vunpack.c.l.b16 %v55
    %v187 = vunpack.c.l.b16 %v56
    %v188 = vunpack.c.h.b16 %v56
    %v189 = vunpack.c.l.b16 %v57
    %v190 = vunpack.c.l.b16 %v58
    %v191 = vunpack.c.h.b16 %v58
    %v192 = vunpack.c.l.b16 %v59
    %v193 = vunpack.c.l.b16 %v60
    %v194 = vunpack.c.h.b16 %v60
    %v195 = vunpack.c.l.b16 %v61
    %v196 = vunpack.c.l.b16 %v62
    %v197 = vunpack.c.h.b16 %v62
    %v198 = vunpack.c.l.b16 %v63
    %v199 = vunpack.c.l.b16 %v64
    %v200 = vunpack.c.h.b16 %v64
    %v201 = vunpack.c.l.b16 %v65
    %v202 = vunpack.c.l.b16 %v66
    %v203 = vunpack.c.h.b16 %v66
    %v204 = vunpack.c.l.b16 %v67
    %v205 = vunpack.c.l.b16 %v68
    %v206 = vunpack.c.h.b16 %v68
    %v207 = vunpack.c.l.b16 %v69
    %v208 = vunpack.c.l.b16 %v70
    %v209 = vunpack.c.h.b16 %v70
    %v210 = vunpack.c.l.b16 %v71
    %v211 = vunpack.c.l.b16 %v72
    %v212 = vunpack.c.h.b16 %v72
    %v213 = vunpack.c.l.b16 %v73
    %v214 = vunpack.c.l.b16 %v74
    %v215 = vunpack.c.h.b16 %v74
    %v216 = vunpack.c.l.b16 %v75
    %v217 = vunpack.c.l.b16 %v76
    %v218 = vunpack.c.h.b16 %v76
    %v219 = vunpack.c.l.b16 %v77
    %v220 = vunpack.c.l.b16 %v78
    %v221 = vunpack.c.h.b16 %v78
    %v222 = vunpack.c.l.b16 %v79
    %v223 = vunpack.c.l.b16 %v80
    %v224 = vunpack.c.h.b16 %v80
    %v225 = vunpack.c.l.b16 %v81
    %v226 = vunpack.c.l.b16 %v82
    %v227 = vunpack.c.h.b16 %v82
    %v228 = vunpack.c.l.b16 %v83
    %v229 = vpack.c.b16 %v184, %v181
    %v230 = vpack.c.b16 %v185, %v182
    %v231 = vpack.c.b16 %v186, %v183
    %v232 = vpack.c.b16 %v190, %v187
    %v233 = vpack.c.b16 %v191, %v188
    %v234 = vpack.c.b16 %v192, %v189
    %v235 = vpack.c.b16 %v196, %v193
    %v236 = vpack.c.b16 %v197, %v194
    %v237 = vpack.c.b16 %v198, %v195
    %v238 = vpack.c.b16 %v202, %v199
    %v239 = vpack.c.b16 %v203, %v200
    %v240 = vpack.c.b16 %v204, %v201
    %v241 = vpack.c.b16 %v208, %v205
    %v242 = vpack.c.b16 %v209, %v206
    %v243 = vpack.c.b16 %v210, %v207
    %v244 = vpack.c.b16 %v214, %v211
    %v245 = vpack.c.b16 %v215, %v212
    %v246 = vpack.c.b16 %v216, %v213
    %v247 = vpack.c.b16 %v220, %v217
    %v248 = vpack.c.b16 %v221, %v218
    %v249 = vpack.c.b16 %v222, %v219
    %v250 = vpack.c.b16 %v226, %v223
    %v251 = vpack.c.b16 %v227, %v224
    %v252 = vpack.c.b16 %v228, %v225
    %277 = vmatprep.subr.bf16.mxu0 %v230
    %278 = vmatpush1.bf16.msra.mxu0 %v229
    %279 = vmatprep.subr.bf16.mxu0 %v233
    %280 = vmatpush1.bf16.msra.mxu0 %v232
    %281 = vmatprep.subr.bf16.mxu0 %v236
    %282 = vmatpush1.bf16.msra.mxu0 %v235
    %283 = vmatprep.subr.bf16.mxu0 %v239
    %284 = vmatpush1.bf16.msra.mxu0 %v238
    %285 = vmatprep.subr.bf16.mxu0 %v242
    %286 = vmatpush1.bf16.msra.mxu0 %v241
    %287 = vmatprep.subr.bf16.mxu0 %v245
    %288 = vmatpush1.bf16.msra.mxu0 %v244
    %289 = vmatprep.subr.bf16.mxu0 %v248
    %290 = vmatpush1.bf16.msra.mxu0 %v247
    %291 = vmatprep.subr.bf16.mxu0 %v251
    %292 = vmatpush1.bf16.msra.mxu0 %v250
    %293 = vmatprep.subr.bf16.mxu0 0
    %294 = vmatpush1.bf16.msra.mxu0 0
    %295 = vmatprep.subr.bf16.mxu0 0
    %296 = vmatpush1.bf16.msra.mxu0 0
    %297 = vmatprep.subr.bf16.mxu0 0
    %298 = vmatpush1.bf16.msra.mxu0 0
    %299 = vmatprep.subr.bf16.mxu0 0
    %300 = vmatpush1.bf16.msra.mxu0 0
    %301 = vmatprep.subr.bf16.mxu0 0
    %302 = vmatpush1.bf16.msra.mxu0 0
    %303 = vmatprep.subr.bf16.mxu0 0
    %304 = vmatpush1.bf16.msra.mxu0 0
    %305 = vmatprep.subr.bf16.mxu0 0
    %306 = vmatpush1.bf16.msra.mxu0 0
    %307 = vmatprep.subr.bf16.mxu0 0
    %308 = vmatpush1.bf16.msra.mxu0 0
    %309 = vmatprep.mubr.bf16.mxu0 0
    %310 = vmatmul.mubr.bf16.gmra.mrb[0].mxu0 %v133
    %v311 = vpop.f32.mrb[0].mxu0
    %v312 = vadd.f32 %v89, %v311
    %v313 = vpop.f32.mrb[0].mxu0
    %v314 = vadd.f32 %v93, %v313
    %v315 = vpop.f32.mrb[0].mxu0
    %v316 = vadd.f32 %v89, %v315
    %v317 = vpop.f32.mrb[0].mxu0
    %v318 = vadd.f32 %v93, %v317
    %319 = vmatprep.mubr.bf16.mxu0 0
    %320 = vmatmul.mubr.bf16.gmra.mrb[0].mxu0 %v134
    %v321 = vpop.f32.mrb[0].mxu0
    %v322 = vadd.f32 %v89, %v321
    %v323 = vpop.f32.mrb[0].mxu0
    %v324 = vadd.f32 %v93, %v323
    %v325 = vpop.f32.mrb[0].mxu0
    %v326 = vadd.f32 %v89, %v325
    %v327 = vpop.f32.mrb[0].mxu0
    %v328 = vadd.f32 %v93, %v327
    %329 = vmatprep.mubr.bf16.mxu0 0
    %330 = vmatmul.mubr.bf16.gmra.mrb[0].mxu0 %v135
    %v331 = vpop.f32.mrb[0].mxu0
    %v332 = vadd.f32 %v89, %v331
    %v333 = vpop.f32.mrb[0].mxu0
    %v334 = vadd.f32 %v93, %v333
    %v335 = vpop.f32.mrb[0].mxu0
    %v336 = vadd.f32 %v89, %v335
    %v337 = vpop.f32.mrb[0].mxu0
    %v338 = vadd.f32 %v93, %v337
    %339 = vmatprep.mubr.bf16.mxu0 0
    %340 = vmatmul.mubr.bf16.gmra.mrb[0].mxu0 %v136
    %v341 = vpop.f32.mrb[0].mxu0
    %v342 = vadd.f32 %v89, %v341
    %v343 = vpop.f32.mrb[0].mxu0
    %v344 = vadd.f32 %v93, %v343
    %v345 = vpop.f32.mrb[0].mxu0
    %v346 = vadd.f32 %v89, %v345
    %v347 = vpop.f32.mrb[0].mxu0
    %v348 = vadd.f32 %v93, %v347
    %349 = vmatprep.mubr.bf16.mxu0 0
    %350 = vmatmul.mubr.bf16.gmra.mrb[0].mxu0 %v137
    %v351 = vpop.f32.mrb[0].mxu0
    %v352 = vadd.f32 %v89, %v351
    %v353 = vpop.f32.mrb[0].mxu0
    %v354 = vadd.f32 %v93, %v353
    %v355 = vpop.f32.mrb[0].mxu0
    %v356 = vadd.f32 %v89, %v355
    %v357 = vpop.f32.mrb[0].mxu0
    %v358 = vadd.f32 %v93, %v357
    %359 = vmatprep.mubr.bf16.mxu0 0
    %360 = vmatmul.mubr.bf16.gmra.mrb[0].mxu0 %v138
    %v361 = vpop.f32.mrb[0].mxu0
    %v362 = vadd.f32 %v89, %v361
    %v363 = vpop.f32.mrb[0].mxu0
    %v364 = vadd.f32 %v93, %v363
    %v365 = vpop.f32.mrb[0].mxu0
    %v366 = vadd.f32 %v89, %v365
    %v367 = vpop.f32.mrb[0].mxu0
    %v368 = vadd.f32 %v93, %v367
    %369 = vmatprep.mubr.bf16.mxu0 0
    %370 = vmatmul.mubr.bf16.gmra.mrb[0].mxu0 %v139
    %v371 = vpop.f32.mrb[0].mxu0
    %v372 = vadd.f32 %v89, %v371
    %v373 = vpop.f32.mrb[0].mxu0
    %v374 = vadd.f32 %v93, %v373
    %v375 = vpop.f32.mrb[0].mxu0
    %v376 = vadd.f32 %v89, %v375
    %v377 = vpop.f32.mrb[0].mxu0
    %v378 = vadd.f32 %v93, %v377
    %379 = vmatprep.mubr.bf16.mxu0 0
    %380 = vmatmul.mubr.bf16.gmra.mrb[0].mxu0 %v140
    %v381 = vpop.f32.mrb[0].mxu0
    %v382 = vadd.f32 %v89, %v381
    %v383 = vpop.f32.mrb[0].mxu0
    %v384 = vadd.f32 %v93, %v383
    %v385 = vpop.f32.mrb[0].mxu0
    %v386 = vadd.f32 %v89, %v385
    %v387 = vpop.f32.mrb[0].mxu0
    %v388 = vadd.f32 %v93, %v387
    %389 = vdwg.mxu0
    %390 = vmatprep.subr.bf16.mxu0 0
    %391 = vmatpush1.bf16.msra.mxu0 %v231
    %392 = vmatprep.subr.bf16.mxu0 0
    %393 = vmatpush1.bf16.msra.mxu0 %v234
    %394 = vmatprep.subr.bf16.mxu0 0
    %395 = vmatpush1.bf16.msra.mxu0 %v237
    %396 = vmatprep.subr.bf16.mxu0 0
    %397 = vmatpush1.bf16.msra.mxu0 %v240
    %398 = vmatprep.subr.bf16.mxu0 0
    %399 = vmatpush1.bf16.msra.mxu0 %v243
    %400 = vmatprep.subr.bf16.mxu0 0
    %401 = vmatpush1.bf16.msra.mxu0 %v246
    %402 = vmatprep.subr.bf16.mxu0 0
    %403 = vmatpush1.bf16.msra.mxu0 %v249
    %404 = vmatprep.subr.bf16.mxu0 0
    %405 = vmatpush1.bf16.msra.mxu0 %v252
    %406 = vmatprep.subr.bf16.mxu0 0
    %407 = vmatpush1.bf16.msra.mxu0 0
    %408 = vmatprep.subr.bf16.mxu0 0
    %409 = vmatpush1.bf16.msra.mxu0 0
    %410 = vmatprep.subr.bf16.mxu0 0
    %411 = vmatpush1.bf16.msra.mxu0 0
    %412 = vmatprep.subr.bf16.mxu0 0
    %413 = vmatpush1.bf16.msra.mxu0 0
    %414 = vmatprep.subr.bf16.mxu0 0
    %415 = vmatpush1.bf16.msra.mxu0 0
    %416 = vmatprep.subr.bf16.mxu0 0
    %417 = vmatpush1.bf16.msra.mxu0 0
    %418 = vmatprep.subr.bf16.mxu0 0
    %419 = vmatpush1.bf16.msra.mxu0 0
    %420 = vmatprep.subr.bf16.mxu0 0
    %421 = vmatpush1.bf16.msra.mxu0 0
    %422 = vmatprep.mubr.bf16.mxu0 0
    %423 = vmatmul.mubr.bf16.gmra.mrb[0].mxu0 %v133
    %v424 = vpop.f32.mrb[0].mxu0
    %v425 = vadd.f32 %v97, %v424
    %v426 = vpop.f32.mrb[0].mxu0
    %v427 = vpop.f32.mrb[0].mxu0
    %v428 = vadd.f32 %v97, %v427
    %v429 = vpop.f32.mrb[0].mxu0
    %430 = vmatprep.mubr.bf16.mxu0 0
    %431 = vmatmul.mubr.bf16.gmra.mrb[0].mxu0 %v134
    %v432 = vpop.f32.mrb[0].mxu0
    %v433 = vadd.f32 %v97, %v432
    %v434 = vpop.f32.mrb[0].mxu0
    %v435 = vpop.f32.mrb[0].mxu0
    %v436 = vadd.f32 %v97, %v435
    %v437 = vpop.f32.mrb[0].mxu0
    %438 = vmatprep.mubr.bf16.mxu0 0
    %439 = vmatmul.mubr.bf16.gmra.mrb[0].mxu0 %v135
    %v440 = vpop.f32.mrb[0].mxu0
    %v441 = vadd.f32 %v97, %v440
    %v442 = vpop.f32.mrb[0].mxu0
    %v443 = vpop.f32.mrb[0].mxu0
    %v444 = vadd.f32 %v97, %v443
    %v445 = vpop.f32.mrb[0].mxu0
    %446 = vmatprep.mubr.bf16.mxu0 0
    %447 = vmatmul.mubr.bf16.gmra.mrb[0].mxu0 %v136
    %v448 = vpop.f32.mrb[0].mxu0
    %v449 = vadd.f32 %v97, %v448
    %v450 = vpop.f32.mrb[0].mxu0
    %v451 = vpop.f32.mrb[0].mxu0
    %v452 = vadd.f32 %v97, %v451
    %v453 = vpop.f32.mrb[0].mxu0
    %454 = vmatprep.mubr.bf16.mxu0 0
    %455 = vmatmul.mubr.bf16.gmra.mrb[0].mxu0 %v137
    %v456 = vpop.f32.mrb[0].mxu0
    %v457 = vadd.f32 %v97, %v456
    %v458 = vpop.f32.mrb[0].mxu0
    %v459 = vpop.f32.mrb[0].mxu0
    %v460 = vadd.f32 %v97, %v459
    %v461 = vpop.f32.mrb[0].mxu0
    %462 = vmatprep.mubr.bf16.mxu0 0
    %463 = vmatmul.mubr.bf16.gmra.mrb[0].mxu0 %v138
    %v464 = vpop.f32.mrb[0].mxu0
    %v465 = vadd.f32 %v97, %v464
    %v466 = vpop.f32.mrb[0].mxu0
    %v467 = vpop.f32.mrb[0].mxu0
    %v468 = vadd.f32 %v97, %v467
    %v469 = vpop.f32.mrb[0].mxu0
    %470 = vmatprep.mubr.bf16.mxu0 0
    %471 = vmatmul.mubr.bf16.gmra.mrb[0].mxu0 %v139
    %v472 = vpop.f32.mrb[0].mxu0
    %v473 = vadd.f32 %v97, %v472
    %v474 = vpop.f32.mrb[0].mxu0
    %v475 = vpop.f32.mrb[0].mxu0
    %v476 = vadd.f32 %v97, %v475
    %v477 = vpop.f32.mrb[0].mxu0
    %478 = vmatprep.mubr.bf16.mxu0 0
    %479 = vmatmul.mubr.bf16.gmra.mrb[0].mxu0 %v140
    %v480 = vpop.f32.mrb[0].mxu0
    %v481 = vadd.f32 %v97, %v480
    %v482 = vpop.f32.mrb[0].mxu0
    %v483 = vpop.f32.mrb[0].mxu0
    %v484 = vadd.f32 %v97, %v483
    %v485 = vpop.f32.mrb[0].mxu0
    %486 = vdwg.mxu0
    %v487 = vpack.c.bf16 %v316, %v312
    %v488 = vpack.c.bf16 %v318, %v314
    %v489 = vpack.c.bf16 %v428, %v425
    %v490 = vpack.c.bf16 %v326, %v322
    %v491 = vpack.c.bf16 %v328, %v324
    %v492 = vpack.c.bf16 %v436, %v433
    %v493 = vpack.c.bf16 %v336, %v332
    %v494 = vpack.c.bf16 %v338, %v334
    %v495 = vpack.c.bf16 %v444, %v441
    %v496 = vpack.c.bf16 %v346, %v342
    %v497 = vpack.c.bf16 %v348, %v344
    %v498 = vpack.c.bf16 %v452, %v449
    %v499 = vpack.c.bf16 %v356, %v352
    %v500 = vpack.c.bf16 %v358, %v354
    %v501 = vpack.c.bf16 %v460, %v457
    %v502 = vpack.c.bf16 %v366, %v362
    %v503 = vpack.c.bf16 %v368, %v364
    %v504 = vpack.c.bf16 %v468, %v465
    %v505 = vpack.c.bf16 %v376, %v372
    %v506 = vpack.c.bf16 %v378, %v374
    %v507 = vpack.c.bf16 %v476, %v473
    %v508 = vpack.c.bf16 %v386, %v382
    %v509 = vpack.c.bf16 %v388, %v384
    %v510 = vpack.c.bf16 %v484, %v481
    %511 = vst [vmem:[#allocation2] sm:$0xff] %v487
    %512 = vst [vmem:[#allocation2 + $0x8] sm:$0xff] %v488
    %513 = vst [vmem:[#allocation2 + $0x10] sm:$0xff] %v489
    %514 = vst [vmem:[#allocation2 + $0x18] sm:$0xff] %v490
    %515 = vst [vmem:[#allocation2 + $0x20] sm:$0xff] %v491
    %516 = vst [vmem:[#allocation2 + $0x28] sm:$0xff] %v492
    %517 = vst [vmem:[#allocation2 + $0x30] sm:$0xff] %v493
    %518 = vst [vmem:[#allocation2 + $0x38] sm:$0xff] %v494
    %519 = vst [vmem:[#allocation2 + $0x40] sm:$0xff] %v495
    %520 = vst [vmem:[#allocation2 + $0x48] sm:$0xff] %v496
    %521 = vst [vmem:[#allocation2 + $0x50] sm:$0xff] %v497
    %522 = vst [vmem:[#allocation2 + $0x58] sm:$0xff] %v498
    %523 = vst [vmem:[#allocation2 + $0x60] sm:$0xff] %v499
    %524 = vst [vmem:[#allocation2 + $0x68] sm:$0xff] %v500
    %525 = vst [vmem:[#allocation2 + $0x70] sm:$0xff] %v501
    %526 = vst [vmem:[#allocation2 + $0x78] sm:$0xff] %v502
    %527 = vst [vmem:[#allocation2 + $0x80] sm:$0xff] %v503
    %528 = vst [vmem:[#allocation2 + $0x88] sm:$0xff] %v504
    %529 = vst [vmem:[#allocation2 + $0x90] sm:$0xff] %v505
    %530 = vst [vmem:[#allocation2 + $0x98] sm:$0xff] %v506
    %531 = vst [vmem:[#allocation2 + $0xa0] sm:$0xff] %v507
    %532 = vst [vmem:[#allocation2 + $0xa8] sm:$0xff] %v508
    %533 = vst [vmem:[#allocation2 + $0xb0] sm:$0xff] %v509
    %534 = vst [vmem:[#allocation2 + $0xb8] sm:$0xff] %v510
    %v535 = vld [vmem:[%s2] sm:$0xff]
    %v536 = vld [vmem:[%s2 + $0x8] sm:$0xf]
    %v537 = vld [vmem:[%s2 + $0xc] sm:$0xff]
    %v538 = vld [vmem:[%s2 + $0x14] sm:$0xf]
    %v539 = vld [vmem:[%s2 + $0x18] sm:$0xff]
    %v540 = vld [vmem:[%s2 + $0x20] sm:$0xf]
    %v541 = vld [vmem:[%s2 + $0x24] sm:$0xff]
    %v542 = vld [vmem:[%s2 + $0x2c] sm:$0xf]
    %v543 = vld [vmem:[%s2 + $0x30] sm:$0xff]
    %v544 = vld [vmem:[%s2 + $0x38] sm:$0xf]
    %v545 = vld [vmem:[%s2 + $0x3c] sm:$0xff]
    %v546 = vld [vmem:[%s2 + $0x44] sm:$0xf]
    %v547 = vld [vmem:[%s2 + $0x48] sm:$0xff]
    %v548 = vld [vmem:[%s2 + $0x50] sm:$0xf]
    %v549 = vld [vmem:[%s2 + $0x54] sm:$0xff]
    %v550 = vld [vmem:[%s2 + $0x5c] sm:$0xf]
    %v551 = vld [vmem:[%s2 + $0x60] sm:$0xff]
    %v552 = vld [vmem:[%s2 + $0x68] sm:$0xf]
    %v553 = vld [vmem:[%s2 + $0x6c] sm:$0xff]
    %v554 = vld [vmem:[%s2 + $0x74] sm:$0xf]
    %v555 = vld [vmem:[%s2 + $0x78] sm:$0xff]
    %v556 = vld [vmem:[%s2 + $0x80] sm:$0xf]
    %v557 = vld [vmem:[%s2 + $0x84] sm:$0xff]
    %v558 = vld [vmem:[%s2 + $0x8c] sm:$0xf]
    %v559 = vld [vmem:[%s2 + $0x90] sm:$0xff]
    %v560 = vld [vmem:[%s2 + $0x98] sm:$0xf]
    %v561 = vld [vmem:[%s2 + $0x9c] sm:$0xff]
    %v562 = vld [vmem:[%s2 + $0xa4] sm:$0xf]
    %v563 = vld [vmem:[%s2 + $0xa8] sm:$0xff]
    %v564 = vld [vmem:[%s2 + $0xb0] sm:$0xf]
    %v565 = vld [vmem:[%s2 + $0xb4] sm:$0xff]
    %v566 = vld [vmem:[%s2 + $0xbc] sm:$0xf]
    %v567 = vld [vmem:[%s6] sm:$0x7]
    %v569 = vlaneseq
    %v570 = vshrl.u32 %v569, 7
    %v571 = vsub.s32 0, %v570
    %v572 = vrot.slane %v567, %v571
    %v573 = vlaneseq
    %v574 = vshrl.u32 %v573, 7
    %v575 = vsub.s32 1, %v574
    %v576 = vrot.slane %v567, %v575
    %v577 = vlaneseq
    %v578 = vshrl.u32 %v577, 7
    %v579 = vsub.s32 2, %v578
    %v580 = vrot.slane %v567, %v579
    %v616 = vunpack.c.l.b16 %v535
    %v617 = vunpack.c.h.b16 %v535
    %v618 = vunpack.c.l.b16 %v536
    %v619 = vunpack.c.l.b16 %v537
    %v620 = vunpack.c.h.b16 %v537
    %v621 = vunpack.c.l.b16 %v538
    %v622 = vunpack.c.l.b16 %v539
    %v623 = vunpack.c.h.b16 %v539
    %v624 = vunpack.c.l.b16 %v540
    %v625 = vunpack.c.l.b16 %v541
    %v626 = vunpack.c.h.b16 %v541
    %v627 = vunpack.c.l.b16 %v542
    %v628 = vunpack.c.l.b16 %v543
    %v629 = vunpack.c.h.b16 %v543
    %v630 = vunpack.c.l.b16 %v544
    %v631 = vunpack.c.l.b16 %v545
    %v632 = vunpack.c.h.b16 %v545
    %v633 = vunpack.c.l.b16 %v546
    %v634 = vunpack.c.l.b16 %v547
    %v635 = vunpack.c.h.b16 %v547
    %v636 = vunpack.c.l.b16 %v548
    %v637 = vunpack.c.l.b16 %v549
    %v638 = vunpack.c.h.b16 %v549
    %v639 = vunpack.c.l.b16 %v550
    %v640 = vunpack.c.l.b16 %v551
    %v641 = vunpack.c.h.b16 %v551
    %v642 = vunpack.c.l.b16 %v552
    %v643 = vunpack.c.l.b16 %v553
    %v644 = vunpack.c.h.b16 %v553
    %v645 = vunpack.c.l.b16 %v554
    %v646 = vunpack.c.l.b16 %v555
    %v647 = vunpack.c.h.b16 %v555
    %v648 = vunpack.c.l.b16 %v556
    %v649 = vunpack.c.l.b16 %v557
    %v650 = vunpack.c.h.b16 %v557
    %v651 = vunpack.c.l.b16 %v558
    %v652 = vunpack.c.l.b16 %v559
    %v653 = vunpack.c.h.b16 %v559
    %v654 = vunpack.c.l.b16 %v560
    %v655 = vunpack.c.l.b16 %v561
    %v656 = vunpack.c.h.b16 %v561
    %v657 = vunpack.c.l.b16 %v562
    %v658 = vunpack.c.l.b16 %v563
    %v659 = vunpack.c.h.b16 %v563
    %v660 = vunpack.c.l.b16 %v564
    %v661 = vunpack.c.l.b16 %v565
    %v662 = vunpack.c.h.b16 %v565
    %v663 = vunpack.c.l.b16 %v566
    %v664 = vpack.c.b16 %v619, %v616
    %v665 = vpack.c.b16 %v620, %v617
    %v666 = vpack.c.b16 %v621, %v618
    %v667 = vpack.c.b16 %v625, %v622
    %v668 = vpack.c.b16 %v626, %v623
    %v669 = vpack.c.b16 %v627, %v624
    %v670 = vpack.c.b16 %v631, %v628
    %v671 = vpack.c.b16 %v632, %v629
    %v672 = vpack.c.b16 %v633, %v630
    %v673 = vpack.c.b16 %v637, %v634
    %v674 = vpack.c.b16 %v638, %v635
    %v675 = vpack.c.b16 %v639, %v636
    %v676 = vpack.c.b16 %v643, %v640
    %v677 = vpack.c.b16 %v644, %v641
    %v678 = vpack.c.b16 %v645, %v642
    %v679 = vpack.c.b16 %v649, %v646
    %v680 = vpack.c.b16 %v650, %v647
    %v681 = vpack.c.b16 %v651, %v648
    %v682 = vpack.c.b16 %v655, %v652
    %v683 = vpack.c.b16 %v656, %v653
    %v684 = vpack.c.b16 %v657, %v654
    %v685 = vpack.c.b16 %v661, %v658
    %v686 = vpack.c.b16 %v662, %v659
    %v687 = vpack.c.b16 %v663, %v660
    %712 = vmatprep.subr.bf16.mxu0 %v665
    %713 = vmatpush1.bf16.msra.mxu0 %v664
    %714 = vmatprep.subr.bf16.mxu0 %v668
    %715 = vmatpush1.bf16.msra.mxu0 %v667
    %716 = vmatprep.subr.bf16.mxu0 %v671
    %717 = vmatpush1.bf16.msra.mxu0 %v670
    %718 = vmatprep.subr.bf16.mxu0 %v674
    %719 = vmatpush1.bf16.msra.mxu0 %v673
    %720 = vmatprep.subr.bf16.mxu0 %v677
    %721 = vmatpush1.bf16.msra.mxu0 %v676
    %722 = vmatprep.subr.bf16.mxu0 %v680
    %723 = vmatpush1.bf16.msra.mxu0 %v679
    %724 = vmatprep.subr.bf16.mxu0 %v683
    %725 = vmatpush1.bf16.msra.mxu0 %v682
    %726 = vmatprep.subr.bf16.mxu0 %v686
    %727 = vmatpush1.bf16.msra.mxu0 %v685
    %728 = vmatprep.subr.bf16.mxu0 0
    %729 = vmatpush1.bf16.msra.mxu0 0
    %730 = vmatprep.subr.bf16.mxu0 0
    %731 = vmatpush1.bf16.msra.mxu0 0
    %732 = vmatprep.subr.bf16.mxu0 0
    %733 = vmatpush1.bf16.msra.mxu0 0
    %734 = vmatprep.subr.bf16.mxu0 0
    %735 = vmatpush1.bf16.msra.mxu0 0
    %736 = vmatprep.subr.bf16.mxu0 0
    %737 = vmatpush1.bf16.msra.mxu0 0
    %738 = vmatprep.subr.bf16.mxu0 0
    %739 = vmatpush1.bf16.msra.mxu0 0
    %740 = vmatprep.subr.bf16.mxu0 0
    %741 = vmatpush1.bf16.msra.mxu0 0
    %742 = vmatprep.subr.bf16.mxu0 0
    %743 = vmatpush1.bf16.msra.mxu0 0
    %744 = vmatprep.mubr.bf16.mxu0 0
    %745 = vmatmul.mubr.bf16.gmra.mrb[0].mxu0 %v133
    %v746 = vpop.f32.mrb[0].mxu0
    %v747 = vadd.f32 %v572, %v746
    %v748 = vpop.f32.mrb[0].mxu0
    %v749 = vadd.f32 %v576, %v748
    %v750 = vpop.f32.mrb[0].mxu0
    %v751 = vadd.f32 %v572, %v750
    %v752 = vpop.f32.mrb[0].mxu0
    %v753 = vadd.f32 %v576, %v752
    %754 = vmatprep.mubr.bf16.mxu0 0
    %755 = vmatmul.mubr.bf16.gmra.mrb[0].mxu0 %v134
    %v756 = vpop.f32.mrb[0].mxu0
    %v757 = vadd.f32 %v572, %v756
    %v758 = vpop.f32.mrb[0].mxu0
    %v759 = vadd.f32 %v576, %v758
    %v760 = vpop.f32.mrb[0].mxu0
    %v761 = vadd.f32 %v572, %v760
    %v762 = vpop.f32.mrb[0].mxu0
    %v763 = vadd.f32 %v576, %v762
    %764 = vmatprep.mubr.bf16.mxu0 0
    %765 = vmatmul.mubr.bf16.gmra.mrb[0].mxu0 %v135
    %v766 = vpop.f32.mrb[0].mxu0
    %v767 = vadd.f32 %v572, %v766
    %v768 = vpop.f32.mrb[0].mxu0
    %v769 = vadd.f32 %v576, %v768
    %v770 = vpop.f32.mrb[0].mxu0
    %v771 = vadd.f32 %v572, %v770
    %v772 = vpop.f32.mrb[0].mxu0
    %v773 = vadd.f32 %v576, %v772
    %774 = vmatprep.mubr.bf16.mxu0 0
    %775 = vmatmul.mubr.bf16.gmra.mrb[0].mxu0 %v136
    %v776 = vpop.f32.mrb[0].mxu0
    %v777 = vadd.f32 %v572, %v776
    %v778 = vpop.f32.mrb[0].mxu0
    %v779 = vadd.f32 %v576, %v778
    %v780 = vpop.f32.mrb[0].mxu0
    %v781 = vadd.f32 %v572, %v780
    %v782 = vpop.f32.mrb[0].mxu0
    %v783 = vadd.f32 %v576, %v782
    %784 = vmatprep.mubr.bf16.mxu0 0
    %785 = vmatmul.mubr.bf16.gmra.mrb[0].mxu0 %v137
    %v786 = vpop.f32.mrb[0].mxu0
    %v787 = vadd.f32 %v572, %v786
    %v788 = vpop.f32.mrb[0].mxu0
    %v789 = vadd.f32 %v576, %v788
    %v790 = vpop.f32.mrb[0].mxu0
    %v791 = vadd.f32 %v572, %v790
    %v792 = vpop.f32.mrb[0].mxu0
    %v793 = vadd.f32 %v576, %v792
    %794 = vmatprep.mubr.bf16.mxu0 0
    %795 = vmatmul.mubr.bf16.gmra.mrb[0].mxu0 %v138
    %v796 = vpop.f32.mrb[0].mxu0
    %v797 = vadd.f32 %v572, %v796
    %v798 = vpop.f32.mrb[0].mxu0
    %v799 = vadd.f32 %v576, %v798
    %v800 = vpop.f32.mrb[0].mxu0
    %v801 = vadd.f32 %v572, %v800
    %v802 = vpop.f32.mrb[0].mxu0
    %v803 = vadd.f32 %v576, %v802
    %804 = vmatprep.mubr.bf16.mxu0 0
    %805 = vmatmul.mubr.bf16.gmra.mrb[0].mxu0 %v139
    %v806 = vpop.f32.mrb[0].mxu0
    %v807 = vadd.f32 %v572, %v806
    %v808 = vpop.f32.mrb[0].mxu0
    %v809 = vadd.f32 %v576, %v808
    %v810 = vpop.f32.mrb[0].mxu0
    %v811 = vadd.f32 %v572, %v810
    %v812 = vpop.f32.mrb[0].mxu0
    %v813 = vadd.f32 %v576, %v812
    %814 = vmatprep.mubr.bf16.mxu0 0
    %815 = vmatmul.mubr.bf16.gmra.mrb[0].mxu0 %v140
    %v816 = vpop.f32.mrb[0].mxu0
    %v817 = vadd.f32 %v572, %v816
    %v818 = vpop.f32.mrb[0].mxu0
    %v819 = vadd.f32 %v576, %v818
    %v820 = vpop.f32.mrb[0].mxu0
    %v821 = vadd.f32 %v572, %v820
    %v822 = vpop.f32.mrb[0].mxu0
    %v823 = vadd.f32 %v576, %v822
    %824 = vdwg.mxu0
    %825 = vmatprep.subr.bf16.mxu0 0
    %826 = vmatpush1.bf16.msra.mxu0 %v666
    %827 = vmatprep.subr.bf16.mxu0 0
    %828 = vmatpush1.bf16.msra.mxu0 %v669
    %829 = vmatprep.subr.bf16.mxu0 0
    %830 = vmatpush1.bf16.msra.mxu0 %v672
    %831 = vmatprep.subr.bf16.mxu0 0
    %832 = vmatpush1.bf16.msra.mxu0 %v675
    %833 = vmatprep.subr.bf16.mxu0 0
    %834 = vmatpush1.bf16.msra.mxu0 %v678
    %835 = vmatprep.subr.bf16.mxu0 0
    %836 = vmatpush1.bf16.msra.mxu0 %v681
    %837 = vmatprep.subr.bf16.mxu0 0
    %838 = vmatpush1.bf16.msra.mxu0 %v684
    %839 = vmatprep.subr.bf16.mxu0 0
    %840 = vmatpush1.bf16.msra.mxu0 %v687
    %841 = vmatprep.subr.bf16.mxu0 0
    %842 = vmatpush1.bf16.msra.mxu0 0
    %843 = vmatprep.subr.bf16.mxu0 0
    %844 = vmatpush1.bf16.msra.mxu0 0
    %845 = vmatprep.subr.bf16.mxu0 0
    %846 = vmatpush1.bf16.msra.mxu0 0
    %847 = vmatprep.subr.bf16.mxu0 0
    %848 = vmatpush1.bf16.msra.mxu0 0
    %849 = vmatprep.subr.bf16.mxu0 0
    %850 = vmatpush1.bf16.msra.mxu0 0
    %851 = vmatprep.subr.bf16.mxu0 0
    %852 = vmatpush1.bf16.msra.mxu0 0
    %853 = vmatprep.subr.bf16.mxu0 0
    %854 = vmatpush1.bf16.msra.mxu0 0
    %855 = vmatprep.subr.bf16.mxu0 0
    %856 = vmatpush1.bf16.msra.mxu0 0
    %857 = vmatprep.mubr.bf16.mxu0 0
    %858 = vmatmul.mubr.bf16.gmra.mrb[0].mxu0 %v133
    %v859 = vpop.f32.mrb[0].mxu0
    %v860 = vadd.f32 %v580, %v859
    %v861 = vpop.f32.mrb[0].mxu0
    %v862 = vpop.f32.mrb[0].mxu0
    %v863 = vadd.f32 %v580, %v862
    %v864 = vpop.f32.mrb[0].mxu0
    %865 = vmatprep.mubr.bf16.mxu0 0
    %866 = vmatmul.mubr.bf16.gmra.mrb[0].mxu0 %v134
    %v867 = vpop.f32.mrb[0].mxu0
    %v868 = vadd.f32 %v580, %v867
    %v869 = vpop.f32.mrb[0].mxu0
    %v870 = vpop.f32.mrb[0].mxu0
    %v871 = vadd.f32 %v580, %v870
    %v872 = vpop.f32.mrb[0].mxu0
    %873 = vmatprep.mubr.bf16.mxu0 0
    %874 = vmatmul.mubr.bf16.gmra.mrb[0].mxu0 %v135
    %v875 = vpop.f32.mrb[0].mxu0
    %v876 = vadd.f32 %v580, %v875
    %v877 = vpop.f32.mrb[0].mxu0
    %v878 = vpop.f32.mrb[0].mxu0
    %v879 = vadd.f32 %v580, %v878
    %v880 = vpop.f32.mrb[0].mxu0
    %881 = vmatprep.mubr.bf16.mxu0 0
    %882 = vmatmul.mubr.bf16.gmra.mrb[0].mxu0 %v136
    %v883 = vpop.f32.mrb[0].mxu0
    %v884 = vadd.f32 %v580, %v883
    %v885 = vpop.f32.mrb[0].mxu0
    %v886 = vpop.f32.mrb[0].mxu0
    %v887 = vadd.f32 %v580, %v886
    %v888 = vpop.f32.mrb[0].mxu0
    %889 = vmatprep.mubr.bf16.mxu0 0
    %890 = vmatmul.mubr.bf16.gmra.mrb[0].mxu0 %v137
    %v891 = vpop.f32.mrb[0].mxu0
    %v892 = vadd.f32 %v580, %v891
    %v893 = vpop.f32.mrb[0].mxu0
    %v894 = vpop.f32.mrb[0].mxu0
    %v895 = vadd.f32 %v580, %v894
    %v896 = vpop.f32.mrb[0].mxu0
    %897 = vmatprep.mubr.bf16.mxu0 0
    %898 = vmatmul.mubr.bf16.gmra.mrb[0].mxu0 %v138
    %v899 = vpop.f32.mrb[0].mxu0
    %v900 = vadd.f32 %v580, %v899
    %v901 = vpop.f32.mrb[0].mxu0
    %v902 = vpop.f32.mrb[0].mxu0
    %v903 = vadd.f32 %v580, %v902
    %v904 = vpop.f32.mrb[0].mxu0
    %905 = vmatprep.mubr.bf16.mxu0 0
    %906 = vmatmul.mubr.bf16.gmra.mrb[0].mxu0 %v139
    %v907 = vpop.f32.mrb[0].mxu0
    %v908 = vadd.f32 %v580, %v907
    %v909 = vpop.f32.mrb[0].mxu0
    %v910 = vpop.f32.mrb[0].mxu0
    %v911 = vadd.f32 %v580, %v910
    %v912 = vpop.f32.mrb[0].mxu0
    %913 = vmatprep.mubr.bf16.mxu0 0
    %914 = vmatmul.mubr.bf16.gmra.mrb[0].mxu0 %v140
    %v915 = vpop.f32.mrb[0].mxu0
    %v916 = vadd.f32 %v580, %v915
    %v917 = vpop.f32.mrb[0].mxu0
    %v918 = vpop.f32.mrb[0].mxu0
    %v919 = vadd.f32 %v580, %v918
    %v920 = vpop.f32.mrb[0].mxu0
    %921 = vdwg.mxu0
    %v922 = vpack.c.bf16 %v751, %v747
    %v923 = vpack.c.bf16 %v753, %v749
    %v924 = vpack.c.bf16 %v863, %v860
    %v925 = vpack.c.bf16 %v761, %v757
    %v926 = vpack.c.bf16 %v763, %v759
    %v927 = vpack.c.bf16 %v871, %v868
    %v928 = vpack.c.bf16 %v771, %v767
    %v929 = vpack.c.bf16 %v773, %v769
    %v930 = vpack.c.bf16 %v879, %v876
    %v931 = vpack.c.bf16 %v781, %v777
    %v932 = vpack.c.bf16 %v783, %v779
    %v933 = vpack.c.bf16 %v887, %v884
    %v934 = vpack.c.bf16 %v791, %v787
    %v935 = vpack.c.bf16 %v793, %v789
    %v936 = vpack.c.bf16 %v895, %v892
    %v937 = vpack.c.bf16 %v801, %v797
    %v938 = vpack.c.bf16 %v803, %v799
    %v939 = vpack.c.bf16 %v903, %v900
    %v940 = vpack.c.bf16 %v811, %v807
    %v941 = vpack.c.bf16 %v813, %v809
    %v942 = vpack.c.bf16 %v911, %v908
    %v943 = vpack.c.bf16 %v821, %v817
    %v944 = vpack.c.bf16 %v823, %v819
    %v945 = vpack.c.bf16 %v919, %v916
    %946 = vst [vmem:[#allocation3] sm:$0xff] %v922
    %947 = vst [vmem:[#allocation3 + $0x8] sm:$0xff] %v923
    %948 = vst [vmem:[#allocation3 + $0x10] sm:$0xff] %v924
    %949 = vst [vmem:[#allocation3 + $0x18] sm:$0xff] %v925
    %950 = vst [vmem:[#allocation3 + $0x20] sm:$0xff] %v926
    %951 = vst [vmem:[#allocation3 + $0x28] sm:$0xff] %v927
    %952 = vst [vmem:[#allocation3 + $0x30] sm:$0xff] %v928
    %953 = vst [vmem:[#allocation3 + $0x38] sm:$0xff] %v929
    %954 = vst [vmem:[#allocation3 + $0x40] sm:$0xff] %v930
    %955 = vst [vmem:[#allocation3 + $0x48] sm:$0xff] %v931
    %956 = vst [vmem:[#allocation3 + $0x50] sm:$0xff] %v932
    %957 = vst [vmem:[#allocation3 + $0x58] sm:$0xff] %v933
    %958 = vst [vmem:[#allocation3 + $0x60] sm:$0xff] %v934
    %959 = vst [vmem:[#allocation3 + $0x68] sm:$0xff] %v935
    %960 = vst [vmem:[#allocation3 + $0x70] sm:$0xff] %v936
    %961 = vst [vmem:[#allocation3 + $0x78] sm:$0xff] %v937
    %962 = vst [vmem:[#allocation3 + $0x80] sm:$0xff] %v938
    %963 = vst [vmem:[#allocation3 + $0x88] sm:$0xff] %v939
    %964 = vst [vmem:[#allocation3 + $0x90] sm:$0xff] %v940
    %965 = vst [vmem:[#allocation3 + $0x98] sm:$0xff] %v941
    %966 = vst [vmem:[#allocation3 + $0xa0] sm:$0xff] %v942
    %967 = vst [vmem:[#allocation3 + $0xa8] sm:$0xff] %v943
    %968 = vst [vmem:[#allocation3 + $0xb0] sm:$0xff] %v944
    %969 = vst [vmem:[#allocation3 + $0xb8] sm:$0xff] %v945
    %v970 = vld [vmem:[%s3] sm:$0xff]
    %v971 = vld [vmem:[%s3 + $0x8] sm:$0xf]
    %v972 = vld [vmem:[%s3 + $0xc] sm:$0xff]
    %v973 = vld [vmem:[%s3 + $0x14] sm:$0xf]
    %v974 = vld [vmem:[%s3 + $0x18] sm:$0xff]
    %v975 = vld [vmem:[%s3 + $0x20] sm:$0xf]
    %v976 = vld [vmem:[%s3 + $0x24] sm:$0xff]
    %v977 = vld [vmem:[%s3 + $0x2c] sm:$0xf]
    %v978 = vld [vmem:[%s3 + $0x30] sm:$0xff]
    %v979 = vld [vmem:[%s3 + $0x38] sm:$0xf]
    %v980 = vld [vmem:[%s3 + $0x3c] sm:$0xff]
    %v981 = vld [vmem:[%s3 + $0x44] sm:$0xf]
    %v982 = vld [vmem:[%s3 + $0x48] sm:$0xff]
    %v983 = vld [vmem:[%s3 + $0x50] sm:$0xf]
    %v984 = vld [vmem:[%s3 + $0x54] sm:$0xff]
    %v985 = vld [vmem:[%s3 + $0x5c] sm:$0xf]
    %v986 = vld [vmem:[%s3 + $0x60] sm:$0xff]
    %v987 = vld [vmem:[%s3 + $0x68] sm:$0xf]
    %v988 = vld [vmem:[%s3 + $0x6c] sm:$0xff]
    %v989 = vld [vmem:[%s3 + $0x74] sm:$0xf]
    %v990 = vld [vmem:[%s3 + $0x78] sm:$0xff]
    %v991 = vld [vmem:[%s3 + $0x80] sm:$0xf]
    %v992 = vld [vmem:[%s3 + $0x84] sm:$0xff]
    %v993 = vld [vmem:[%s3 + $0x8c] sm:$0xf]
    %v994 = vld [vmem:[%s3 + $0x90] sm:$0xff]
    %v995 = vld [vmem:[%s3 + $0x98] sm:$0xf]
    %v996 = vld [vmem:[%s3 + $0x9c] sm:$0xff]
    %v997 = vld [vmem:[%s3 + $0xa4] sm:$0xf]
    %v998 = vld [vmem:[%s3 + $0xa8] sm:$0xff]
    %v999 = vld [vmem:[%s3 + $0xb0] sm:$0xf]
    %v1000 = vld [vmem:[%s3 + $0xb4] sm:$0xff]
    %v1001 = vld [vmem:[%s3 + $0xbc] sm:$0xf]
    %v1002 = vld [vmem:[%s4] sm:$0xff]
    %v1003 = vld [vmem:[%s4 + $0x8] sm:$0xf]
    %v1004 = vld [vmem:[%s4 + $0xc] sm:$0xff]
    %v1005 = vld [vmem:[%s4 + $0x14] sm:$0xf]
    %v1006 = vld [vmem:[%s4 + $0x18] sm:$0xff]
    %v1007 = vld [vmem:[%s4 + $0x20] sm:$0xf]
    %v1008 = vld [vmem:[%s4 + $0x24] sm:$0xff]
    %v1009 = vld [vmem:[%s4 + $0x2c] sm:$0xf]
    %v1010 = vld [vmem:[%s4 + $0x30] sm:$0xff]
    %v1011 = vld [vmem:[%s4 + $0x38] sm:$0xf]
    %v1012 = vld [vmem:[%s4 + $0x3c] sm:$0xff]
    %v1013 = vld [vmem:[%s4 + $0x44] sm:$0xf]
    %v1014 = vld [vmem:[%s4 + $0x48] sm:$0xff]
    %v1015 = vld [vmem:[%s4 + $0x50] sm:$0xf]
    %v1016 = vld [vmem:[%s4 + $0x54] sm:$0xff]
    %v1017 = vld [vmem:[%s4 + $0x5c] sm:$0xf]
    %v1018 = vld [vmem:[%s4 + $0x60] sm:$0xff]
    %v1019 = vld [vmem:[%s4 + $0x68] sm:$0xf]
    %v1020 = vld [vmem:[%s4 + $0x6c] sm:$0xff]
    %v1021 = vld [vmem:[%s4 + $0x74] sm:$0xf]
    %v1022 = vld [vmem:[%s4 + $0x78] sm:$0xff]
    %v1023 = vld [vmem:[%s4 + $0x80] sm:$0xf]
    %v1024 = vld [vmem:[%s4 + $0x84] sm:$0xff]
    %v1025 = vld [vmem:[%s4 + $0x8c] sm:$0xf]
    %v1026 = vld [vmem:[%s4 + $0x90] sm:$0xff]
    %v1027 = vld [vmem:[%s4 + $0x98] sm:$0xf]
    %v1028 = vld [vmem:[%s4 + $0x9c] sm:$0xff]
    %v1029 = vld [vmem:[%s4 + $0xa4] sm:$0xf]
    %v1030 = vld [vmem:[%s4 + $0xa8] sm:$0xff]
    %v1031 = vld [vmem:[%s4 + $0xb0] sm:$0xf]
    %v1032 = vld [vmem:[%s4 + $0xb4] sm:$0xff]
    %v1033 = vld [vmem:[%s4 + $0xbc] sm:$0xf]
    %v1034 = vld [vmem:[%s7] sm:$0x7]
    %v1036 = vlaneseq
    %v1037 = vshrl.u32 %v1036, 7
    %v1038 = vsub.s32 0, %v1037
    %v1039 = vrot.slane %v1034, %v1038
    %v1040 = vlaneseq
    %v1041 = vshrl.u32 %v1040, 7
    %v1042 = vsub.s32 1, %v1041
    %v1043 = vrot.slane %v1034, %v1042
    %v1044 = vlaneseq
    %v1045 = vshrl.u32 %v1044, 7
    %v1046 = vsub.s32 2, %v1045
    %v1047 = vrot.slane %v1034, %v1046
    %v1051 = vld [vmem:[%s8] sm:$0x7]
    %v1053 = vlaneseq
    %v1054 = vshrl.u32 %v1053, 7
    %v1055 = vsub.s32 0, %v1054
    %v1056 = vrot.slane %v1051, %v1055
    %v1057 = vlaneseq
    %v1058 = vshrl.u32 %v1057, 7
    %v1059 = vsub.s32 1, %v1058
    %v1060 = vrot.slane %v1051, %v1059
    %v1061 = vlaneseq
    %v1062 = vshrl.u32 %v1061, 7
    %v1063 = vsub.s32 2, %v1062
    %v1064 = vrot.slane %v1051, %v1063
    %v1100 = vunpack.c.l.b16 %v970
    %v1101 = vunpack.c.h.b16 %v970
    %v1102 = vunpack.c.l.b16 %v971
    %v1103 = vunpack.c.l.b16 %v972
    %v1104 = vunpack.c.h.b16 %v972
    %v1105 = vunpack.c.l.b16 %v973
    %v1106 = vunpack.c.l.b16 %v974
    %v1107 = vunpack.c.h.b16 %v974
    %v1108 = vunpack.c.l.b16 %v975
    %v1109 = vunpack.c.l.b16 %v976
    %v1110 = vunpack.c.h.b16 %v976
    %v1111 = vunpack.c.l.b16 %v977
    %v1112 = vunpack.c.l.b16 %v978
    %v1113 = vunpack.c.h.b16 %v978
    %v1114 = vunpack.c.l.b16 %v979
    %v1115 = vunpack.c.l.b16 %v980
    %v1116 = vunpack.c.h.b16 %v980
    %v1117 = vunpack.c.l.b16 %v981
    %v1118 = vunpack.c.l.b16 %v982
    %v1119 = vunpack.c.h.b16 %v982
    %v1120 = vunpack.c.l.b16 %v983
    %v1121 = vunpack.c.l.b16 %v984
    %v1122 = vunpack.c.h.b16 %v984
    %v1123 = vunpack.c.l.b16 %v985
    %v1124 = vunpack.c.l.b16 %v986
    %v1125 = vunpack.c.h.b16 %v986
    %v1126 = vunpack.c.l.b16 %v987
    %v1127 = vunpack.c.l.b16 %v988
    %v1128 = vunpack.c.h.b16 %v988
    %v1129 = vunpack.c.l.b16 %v989
    %v1130 = vunpack.c.l.b16 %v990
    %v1131 = vunpack.c.h.b16 %v990
    %v1132 = vunpack.c.l.b16 %v991
    %v1133 = vunpack.c.l.b16 %v992
    %v1134 = vunpack.c.h.b16 %v992
    %v1135 = vunpack.c.l.b16 %v993
    %v1136 = vunpack.c.l.b16 %v994
    %v1137 = vunpack.c.h.b16 %v994
    %v1138 = vunpack.c.l.b16 %v995
    %v1139 = vunpack.c.l.b16 %v996
    %v1140 = vunpack.c.h.b16 %v996
    %v1141 = vunpack.c.l.b16 %v997
    %v1142 = vunpack.c.l.b16 %v998
    %v1143 = vunpack.c.h.b16 %v998
    %v1144 = vunpack.c.l.b16 %v999
    %v1145 = vunpack.c.l.b16 %v1000
    %v1146 = vunpack.c.h.b16 %v1000
    %v1147 = vunpack.c.l.b16 %v1001
    %v1148 = vpack.c.b16 %v1103, %v1100
    %v1149 = vpack.c.b16 %v1104, %v1101
    %v1150 = vpack.c.b16 %v1105, %v1102
    %v1151 = vpack.c.b16 %v1109, %v1106
    %v1152 = vpack.c.b16 %v1110, %v1107
    %v1153 = vpack.c.b16 %v1111, %v1108
    %v1154 = vpack.c.b16 %v1115, %v1112
    %v1155 = vpack.c.b16 %v1116, %v1113
    %v1156 = vpack.c.b16 %v1117, %v1114
    %v1157 = vpack.c.b16 %v1121, %v1118
    %v1158 = vpack.c.b16 %v1122, %v1119
    %v1159 = vpack.c.b16 %v1123, %v1120
    %v1160 = vpack.c.b16 %v1127, %v1124
    %v1161 = vpack.c.b16 %v1128, %v1125
    %v1162 = vpack.c.b16 %v1129, %v1126
    %v1163 = vpack.c.b16 %v1133, %v1130
    %v1164 = vpack.c.b16 %v1134, %v1131
    %v1165 = vpack.c.b16 %v1135, %v1132
    %v1166 = vpack.c.b16 %v1139, %v1136
    %v1167 = vpack.c.b16 %v1140, %v1137
    %v1168 = vpack.c.b16 %v1141, %v1138
    %v1169 = vpack.c.b16 %v1145, %v1142
    %v1170 = vpack.c.b16 %v1146, %v1143
    %v1171 = vpack.c.b16 %v1147, %v1144
    %1196 = vmatprep.subr.bf16.mxu0 %v1149
    %1197 = vmatpush1.bf16.msra.mxu0 %v1148
    %1198 = vmatprep.subr.bf16.mxu0 %v1152
    %1199 = vmatpush1.bf16.msra.mxu0 %v1151
    %1200 = vmatprep.subr.bf16.mxu0 %v1155
    %1201 = vmatpush1.bf16.msra.mxu0 %v1154
    %1202 = vmatprep.subr.bf16.mxu0 %v1158
    %1203 = vmatpush1.bf16.msra.mxu0 %v1157
    %1204 = vmatprep.subr.bf16.mxu0 %v1161
    %1205 = vmatpush1.bf16.msra.mxu0 %v1160
    %1206 = vmatprep.subr.bf16.mxu0 %v1164
    %1207 = vmatpush1.bf16.msra.mxu0 %v1163
    %1208 = vmatprep.subr.bf16.mxu0 %v1167
    %1209 = vmatpush1.bf16.msra.mxu0 %v1166
    %1210 = vmatprep.subr.bf16.mxu0 %v1170
    %1211 = vmatpush1.bf16.msra.mxu0 %v1169
    %1212 = vmatprep.subr.bf16.mxu0 0
    %1213 = vmatpush1.bf16.msra.mxu0 0
    %1214 = vmatprep.subr.bf16.mxu0 0
    %1215 = vmatpush1.bf16.msra.mxu0 0
    %1216 = vmatprep.subr.bf16.mxu0 0
    %1217 = vmatpush1.bf16.msra.mxu0 0
    %1218 = vmatprep.subr.bf16.mxu0 0
    %1219 = vmatpush1.bf16.msra.mxu0 0
    %1220 = vmatprep.subr.bf16.mxu0 0
    %1221 = vmatpush1.bf16.msra.mxu0 0
    %1222 = vmatprep.subr.bf16.mxu0 0
    %1223 = vmatpush1.bf16.msra.mxu0 0
    %1224 = vmatprep.subr.bf16.mxu0 0
    %1225 = vmatpush1.bf16.msra.mxu0 0
    %1226 = vmatprep.subr.bf16.mxu0 0
    %1227 = vmatpush1.bf16.msra.mxu0 0
    %1228 = vmatprep.mubr.bf16.mxu0 0
    %1229 = vmatmul.mubr.bf16.gmra.mrb[0].mxu0 0
    %v1230 = vpop.f32.mrb[0].mxu0
    %v1231 = vadd.f32 %v1039, %v1230
    %v1232 = vpop.f32.mrb[0].mxu0
    %v1233 = vadd.f32 %v1043, %v1232
    %v1234 = vpop.f32.mrb[0].mxu0
    %v1235 = vadd.f32 %v1039, %v1234
    %v1236 = vpop.f32.mrb[0].mxu0
    %v1237 = vadd.f32 %v1043, %v1236
    %1238 = vdwg.mxu0
    %1239 = vmatprep.subr.bf16.mxu0 0
    %1240 = vmatpush1.bf16.msra.mxu0 %v1150
    %1241 = vmatprep.subr.bf16.mxu0 0
    %1242 = vmatpush1.bf16.msra.mxu0 %v1153
    %1243 = vmatprep.subr.bf16.mxu0 0
    %1244 = vmatpush1.bf16.msra.mxu0 %v1156
    %1245 = vmatprep.subr.bf16.mxu0 0
    %1246 = vmatpush1.bf16.msra.mxu0 %v1159
    %1247 = vmatprep.subr.bf16.mxu0 0
    %1248 = vmatpush1.bf16.msra.mxu0 %v1162
    %1249 = vmatprep.subr.bf16.mxu0 0
    %1250 = vmatpush1.bf16.msra.mxu0 %v1165
    %1251 = vmatprep.subr.bf16.mxu0 0
    %1252 = vmatpush1.bf16.msra.mxu0 %v1168
    %1253 = vmatprep.subr.bf16.mxu0 0
    %1254 = vmatpush1.bf16.msra.mxu0 %v1171
    %1255 = vmatprep.subr.bf16.mxu0 0
    %1256 = vmatpush1.bf16.msra.mxu0 0
    %1257 = vmatprep.subr.bf16.mxu0 0
    %1258 = vmatpush1.bf16.msra.mxu0 0
    %1259 = vmatprep.subr.bf16.mxu0 0
    %1260 = vmatpush1.bf16.msra.mxu0 0
    %1261 = vmatprep.subr.bf16.mxu0 0
    %1262 = vmatpush1.bf16.msra.mxu0 0
    %1263 = vmatprep.subr.bf16.mxu0 0
    %1264 = vmatpush1.bf16.msra.mxu0 0
    %1265 = vmatprep.subr.bf16.mxu0 0
    %1266 = vmatpush1.bf16.msra.mxu0 0
    %1267 = vmatprep.subr.bf16.mxu0 0
    %1268 = vmatpush1.bf16.msra.mxu0 0
    %1269 = vmatprep.subr.bf16.mxu0 0
    %1270 = vmatpush1.bf16.msra.mxu0 0
    %1271 = vmatprep.mubr.bf16.mxu0 0
    %1272 = vmatmul.mubr.bf16.gmra.mrb[0].mxu0 0
    %v1273 = vpop.f32.mrb[0].mxu0
    %v1274 = vadd.f32 %v1047, %v1273
    %v1275 = vpop.f32.mrb[0].mxu0
    %v1276 = vpop.f32.mrb[0].mxu0
    %v1277 = vadd.f32 %v1047, %v1276
    %v1278 = vpop.f32.mrb[0].mxu0
    %1279 = vdwg.mxu0
    %v1312 = vunpack.c.l.b16 %v1002
    %v1313 = vunpack.c.h.b16 %v1002
    %v1314 = vunpack.c.l.b16 %v1003
    %v1315 = vunpack.c.l.b16 %v1004
    %v1316 = vunpack.c.h.b16 %v1004
    %v1317 = vunpack.c.l.b16 %v1005
    %v1318 = vunpack.c.l.b16 %v1006
    %v1319 = vunpack.c.h.b16 %v1006
    %v1320 = vunpack.c.l.b16 %v1007
    %v1321 = vunpack.c.l.b16 %v1008
    %v1322 = vunpack.c.h.b16 %v1008
    %v1323 = vunpack.c.l.b16 %v1009
    %v1324 = vunpack.c.l.b16 %v1010
    %v1325 = vunpack.c.h.b16 %v1010
    %v1326 = vunpack.c.l.b16 %v1011
    %v1327 = vunpack.c.l.b16 %v1012
    %v1328 = vunpack.c.h.b16 %v1012
    %v1329 = vunpack.c.l.b16 %v1013
    %v1330 = vunpack.c.l.b16 %v1014
    %v1331 = vunpack.c.h.b16 %v1014
    %v1332 = vunpack.c.l.b16 %v1015
    %v1333 = vunpack.c.l.b16 %v1016
    %v1334 = vunpack.c.h.b16 %v1016
    %v1335 = vunpack.c.l.b16 %v1017
    %v1336 = vunpack.c.l.b16 %v1018
    %v1337 = vunpack.c.h.b16 %v1018
    %v1338 = vunpack.c.l.b16 %v1019
    %v1339 = vunpack.c.l.b16 %v1020
    %v1340 = vunpack.c.h.b16 %v1020
    %v1341 = vunpack.c.l.b16 %v1021
    %v1342 = vunpack.c.l.b16 %v1022
    %v1343 = vunpack.c.h.b16 %v1022
    %v1344 = vunpack.c.l.b16 %v1023
    %v1345 = vunpack.c.l.b16 %v1024
    %v1346 = vunpack.c.h.b16 %v1024
    %v1347 = vunpack.c.l.b16 %v1025
    %v1348 = vunpack.c.l.b16 %v1026
    %v1349 = vunpack.c.h.b16 %v1026
    %v1350 = vunpack.c.l.b16 %v1027
    %v1351 = vunpack.c.l.b16 %v1028
    %v1352 = vunpack.c.h.b16 %v1028
    %v1353 = vunpack.c.l.b16 %v1029
    %v1354 = vunpack.c.l.b16 %v1030
    %v1355 = vunpack.c.h.b16 %v1030
    %v1356 = vunpack.c.l.b16 %v1031
    %v1357 = vunpack.c.l.b16 %v1032
    %v1358 = vunpack.c.h.b16 %v1032
    %v1359 = vunpack.c.l.b16 %v1033
    %v1360 = vpack.c.b16 %v1315, %v1312
    %v1361 = vpack.c.b16 %v1316, %v1313
    %v1362 = vpack.c.b16 %v1317, %v1314
    %v1363 = vpack.c.b16 %v1321, %v1318
    %v1364 = vpack.c.b16 %v1322, %v1319
    %v1365 = vpack.c.b16 %v1323, %v1320
    %v1366 = vpack.c.b16 %v1327, %v1324
    %v1367 = vpack.c.b16 %v1328, %v1325
    %v1368 = vpack.c.b16 %v1329, %v1326
    %v1369 = vpack.c.b16 %v1333, %v1330
    %v1370 = vpack.c.b16 %v1334, %v1331
    %v1371 = vpack.c.b16 %v1335, %v1332
    %v1372 = vpack.c.b16 %v1339, %v1336
    %v1373 = vpack.c.b16 %v1340, %v1337
    %v1374 = vpack.c.b16 %v1341, %v1338
    %v1375 = vpack.c.b16 %v1345, %v1342
    %v1376 = vpack.c.b16 %v1346, %v1343
    %v1377 = vpack.c.b16 %v1347, %v1344
    %v1378 = vpack.c.b16 %v1351, %v1348
    %v1379 = vpack.c.b16 %v1352, %v1349
    %v1380 = vpack.c.b16 %v1353, %v1350
    %v1381 = vpack.c.b16 %v1357, %v1354
    %v1382 = vpack.c.b16 %v1358, %v1355
    %v1383 = vpack.c.b16 %v1359, %v1356
    %1408 = vmatprep.subr.bf16.mxu0 %v1361
    %1409 = vmatpush1.bf16.msra.mxu0 %v1360
    %1410 = vmatprep.subr.bf16.mxu0 %v1364
    %1411 = vmatpush1.bf16.msra.mxu0 %v1363
    %1412 = vmatprep.subr.bf16.mxu0 %v1367
    %1413 = vmatpush1.bf16.msra.mxu0 %v1366
    %1414 = vmatprep.subr.bf16.mxu0 %v1370
    %1415 = vmatpush1.bf16.msra.mxu0 %v1369
    %1416 = vmatprep.subr.bf16.mxu0 %v1373
    %1417 = vmatpush1.bf16.msra.mxu0 %v1372
    %1418 = vmatprep.subr.bf16.mxu0 %v1376
    %1419 = vmatpush1.bf16.msra.mxu0 %v1375
    %1420 = vmatprep.subr.bf16.mxu0 %v1379
    %1421 = vmatpush1.bf16.msra.mxu0 %v1378
    %1422 = vmatprep.subr.bf16.mxu0 %v1382
    %1423 = vmatpush1.bf16.msra.mxu0 %v1381
    %1424 = vmatprep.subr.bf16.mxu0 0
    %1425 = vmatpush1.bf16.msra.mxu0 0
    %1426 = vmatprep.subr.bf16.mxu0 0
    %1427 = vmatpush1.bf16.msra.mxu0 0
    %1428 = vmatprep.subr.bf16.mxu0 0
    %1429 = vmatpush1.bf16.msra.mxu0 0
    %1430 = vmatprep.subr.bf16.mxu0 0
    %1431 = vmatpush1.bf16.msra.mxu0 0
    %1432 = vmatprep.subr.bf16.mxu0 0
    %1433 = vmatpush1.bf16.msra.mxu0 0
    %1434 = vmatprep.subr.bf16.mxu0 0
    %1435 = vmatpush1.bf16.msra.mxu0 0
    %1436 = vmatprep.subr.bf16.mxu0 0
    %1437 = vmatpush1.bf16.msra.mxu0 0
    %1438 = vmatprep.subr.bf16.mxu0 0
    %1439 = vmatpush1.bf16.msra.mxu0 0
    %1440 = vmatprep.mubr.bf16.mxu0 0
    %1441 = vmatmul.mubr.bf16.gmra.mrb[0].mxu0 0
    %v1442 = vpop.f32.mrb[0].mxu0
    %v1443 = vadd.f32 %v1056, %v1442
    %v1444 = vpop.f32.mrb[0].mxu0
    %v1445 = vadd.f32 %v1060, %v1444
    %v1446 = vpop.f32.mrb[0].mxu0
    %v1447 = vadd.f32 %v1056, %v1446
    %v1448 = vpop.f32.mrb[0].mxu0
    %v1449 = vadd.f32 %v1060, %v1448
    %1450 = vdwg.mxu0
    %1451 = vmatprep.subr.bf16.mxu0 0
    %1452 = vmatpush1.bf16.msra.mxu0 %v1362
    %1453 = vmatprep.subr.bf16.mxu0 0
    %1454 = vmatpush1.bf16.msra.mxu0 %v1365
    %1455 = vmatprep.subr.bf16.mxu0 0
    %1456 = vmatpush1.bf16.msra.mxu0 %v1368
    %1457 = vmatprep.subr.bf16.mxu0 0
    %1458 = vmatpush1.bf16.msra.mxu0 %v1371
    %1459 = vmatprep.subr.bf16.mxu0 0
    %1460 = vmatpush1.bf16.msra.mxu0 %v1374
    %1461 = vmatprep.subr.bf16.mxu0 0
    %1462 = vmatpush1.bf16.msra.mxu0 %v1377
    %1463 = vmatprep.subr.bf16.mxu0 0
    %1464 = vmatpush1.bf16.msra.mxu0 %v1380
    %1465 = vmatprep.subr.bf16.mxu0 0
    %1466 = vmatpush1.bf16.msra.mxu0 %v1383
    %1467 = vmatprep.subr.bf16.mxu0 0
    %1468 = vmatpush1.bf16.msra.mxu0 0
    %1469 = vmatprep.subr.bf16.mxu0 0
    %1470 = vmatpush1.bf16.msra.mxu0 0
    %1471 = vmatprep.subr.bf16.mxu0 0
    %1472 = vmatpush1.bf16.msra.mxu0 0
    %1473 = vmatprep.subr.bf16.mxu0 0
    %1474 = vmatpush1.bf16.msra.mxu0 0
    %1475 = vmatprep.subr.bf16.mxu0 0
    %1476 = vmatpush1.bf16.msra.mxu0 0
    %1477 = vmatprep.subr.bf16.mxu0 0
    %1478 = vmatpush1.bf16.msra.mxu0 0
    %1479 = vmatprep.subr.bf16.mxu0 0
    %1480 = vmatpush1.bf16.msra.mxu0 0
    %1481 = vmatprep.subr.bf16.mxu0 0
    %1482 = vmatpush1.bf16.msra.mxu0 0
    %1483 = vmatprep.mubr.bf16.mxu0 0
    %1484 = vmatmul.mubr.bf16.gmra.mrb[0].mxu0 0
    %v1485 = vpop.f32.mrb[0].mxu0
    %v1486 = vadd.f32 %v1064, %v1485
    %v1487 = vpop.f32.mrb[0].mxu0
    %v1488 = vpop.f32.mrb[0].mxu0
    %v1489 = vadd.f32 %v1064, %v1488
    %v1490 = vpop.f32.mrb[0].mxu0
    %1491 = vdwg.mxu0
    %s1492 = smul.u32 0, 3
    %s1493 = smul.addr %s1492, 8
    %s1494 = scalar_lea.vmem [#allocation2], %s1493
    %v1495 = vld [vmem:[%s1494] sm:$0xff]
    %v1496 = vld [vmem:[%s1494 + $0x8] sm:$0xff]
    %v1497 = vld [vmem:[%s1494 + $0x10] sm:$0xff]
    %v1498 = vunpack.c.l.bf16 %v1495
    %v1499 = vunpack.c.l.bf16 %v1496
    %v1500 = vunpack.c.l.bf16 %v1497
    %v1501 = vunpack.c.h.bf16 %v1495
    %v1502 = vunpack.c.h.bf16 %v1496
    %v1503 = vunpack.c.h.bf16 %v1497
    %s1504 = smul.u32 7, 3
    %s1505 = smul.addr %s1504, 8
    %s1506 = scalar_lea.vmem [#allocation3], %s1505
    %v1507 = vld [vmem:[%s1506] sm:$0xff]
    %v1508 = vld [vmem:[%s1506 + $0x8] sm:$0xff]
    %v1509 = vld [vmem:[%s1506 + $0x10] sm:$0xff]
    %v1510 = vunpack.c.l.bf16 %v1507
    %v1511 = vunpack.c.l.bf16 %v1508
    %v1512 = vunpack.c.l.bf16 %v1509
    %v1513 = vunpack.c.h.bf16 %v1507
    %v1514 = vunpack.c.h.bf16 %v1508
    %v1515 = vunpack.c.h.bf16 %v1509
    %v1516 = vadd.f32 %v1498, %v1231
    %v1517 = vadd.f32 %v1499, %v1233
    %v1518 = vadd.f32 %v1501, %v1235
    %v1519 = vadd.f32 %v1502, %v1237
    %v1520 = vxor.u32 %v1516, 2147483648
    %v1521 = vxor.u32 %v1517, 2147483648
    %v1522 = vxor.u32 %v1518, 2147483648
    %v1523 = vxor.u32 %v1519, 2147483648
    %v1524 = vmul.f32 %v1520, 1.442695
    %v1525 = vpow.pop %v1524
    %v1526 = vmul.f32 %v1521, 1.442695
    %v1527 = vpow.pop %v1526
    %v1528 = vmul.f32 %v1522, 1.442695
    %v1529 = vpow.pop %v1528
    %v1530 = vmul.f32 %v1523, 1.442695
    %v1531 = vpow.pop %v1530
    %v1532 = vadd.f32 %v1525, 1.0
    %v1533 = vadd.f32 %v1527, 1.0
    %v1534 = vadd.f32 %v1529, 1.0
    %v1535 = vadd.f32 %v1531, 1.0
    %v1536 = vrcp.pop %v1532
    %v1537 = vmul.f32 1.0, %v1536
    %v1538 = vrcp.pop %v1533
    %v1539 = vmul.f32 1.0, %v1538
    %v1540 = vrcp.pop %v1534
    %v1541 = vmul.f32 1.0, %v1540
    %v1542 = vrcp.pop %v1535
    %v1543 = vmul.f32 1.0, %v1542
    %v1544 = vmul.f32 %v1537, %v1274
    %v1545 = vmul.f32 %v1541, %v1277
    %v1546 = vadd.f32 %v1500, %v1544
    %v1547 = vadd.f32 %v1503, %v1545
    %v1548 = vtanh.pop %v1546
    %v1549 = vtanh.pop %v1547
    %v1550 = vsub.f32 0.0, %v1548
    %v1551 = vsub.f32 0.0, %v1549
    %v1552 = vmul.f32 %v1539, %v1550
    %v1553 = vmul.f32 %v1543, %v1551
    %v1554 = vadd.f32 %v1548, %v1552
    %v1555 = vadd.f32 %v1549, %v1553
    %v1556 = vadd.f32 %v1510, %v1443
    %v1557 = vadd.f32 %v1511, %v1445
    %v1558 = vadd.f32 %v1513, %v1447
    %v1559 = vadd.f32 %v1514, %v1449
    %v1560 = vxor.u32 %v1556, 2147483648
    %v1561 = vxor.u32 %v1557, 2147483648
    %v1562 = vxor.u32 %v1558, 2147483648
    %v1563 = vxor.u32 %v1559, 2147483648
    %v1564 = vmul.f32 %v1560, 1.442695
    %v1565 = vpow.pop %v1564
    %v1566 = vmul.f32 %v1561, 1.442695
    %v1567 = vpow.pop %v1566
    %v1568 = vmul.f32 %v1562, 1.442695
    %v1569 = vpow.pop %v1568
    %v1570 = vmul.f32 %v1563, 1.442695
    %v1571 = vpow.pop %v1570
    %v1572 = vadd.f32 %v1565, 1.0
    %v1573 = vadd.f32 %v1567, 1.0
    %v1574 = vadd.f32 %v1569, 1.0
    %v1575 = vadd.f32 %v1571, 1.0
    %v1576 = vrcp.pop %v1572
    %v1577 = vmul.f32 1.0, %v1576
    %v1578 = vrcp.pop %v1573
    %v1579 = vmul.f32 1.0, %v1578
    %v1580 = vrcp.pop %v1574
    %v1581 = vmul.f32 1.0, %v1580
    %v1582 = vrcp.pop %v1575
    %v1583 = vmul.f32 1.0, %v1582
    %v1584 = vmul.f32 %v1577, %v1486
    %v1585 = vmul.f32 %v1581, %v1489
    %v1586 = vadd.f32 %v1512, %v1584
    %v1587 = vadd.f32 %v1515, %v1585
    %v1588 = vtanh.pop %v1586
    %v1589 = vtanh.pop %v1587
    %v1590 = vsub.f32 0.0, %v1588
    %v1591 = vsub.f32 0.0, %v1589
    %v1592 = vmul.f32 %v1579, %v1590
    %v1593 = vmul.f32 %v1583, %v1591
    %v1594 = vadd.f32 %v1588, %v1592
    %v1595 = vadd.f32 %v1589, %v1593
    %v1596 = vpack.c.bf16 %v1555, %v1554
    %v1598 = vunpack.c.l.b16 %v1596
    %v1599 = vunpack.c.h.b16 %v1596
    %v1600 = vpack.c.b16 %v1598, %v1598
    %v1601 = vpack.c.b16 %v1599, %v1599
    %s1604 = smul.u32 0, 2
    %s1605 = smul.addr %s1604, 4
    %s1606 = scalar_lea.vmem %s9, %s1605
    %1607 = vst [vmem:[%s1606] sm:$0xf] %v1600
    %1608 = vst [vmem:[%s1606 + $0x8] sm:$0xf] %v1601
    %v1609 = vpack.c.bf16 %v1595, %v1594
    %v1611 = vunpack.c.l.b16 %v1609
    %v1612 = vunpack.c.h.b16 %v1609
    %v1613 = vpack.c.b16 %v1611, %v1611
    %v1614 = vpack.c.b16 %v1612, %v1612
    %s1617 = smul.u32 14, 2
    %s1618 = smul.addr %s1617, 4
    %s1619 = scalar_lea.vmem %s9, %s1618
    %1620 = vst [vmem:[%s1619 + $0x4] sm:$0xf] %v1613
    %1621 = vst [vmem:[%s1619 + $0xc] sm:$0xf] %v1614
    %1622 = vmatprep.subr.bf16.mxu0 %v1149
    %1623 = vmatpush1.bf16.msra.mxu0 %v1148
    %1624 = vmatprep.subr.bf16.mxu0 %v1152
    %1625 = vmatpush1.bf16.msra.mxu0 %v1151
    %1626 = vmatprep.subr.bf16.mxu0 %v1155
    %1627 = vmatpush1.bf16.msra.mxu0 %v1154
    %1628 = vmatprep.subr.bf16.mxu0 %v1158
    %1629 = vmatpush1.bf16.msra.mxu0 %v1157
    %1630 = vmatprep.subr.bf16.mxu0 %v1161
    %1631 = vmatpush1.bf16.msra.mxu0 %v1160
    %1632 = vmatprep.subr.bf16.mxu0 %v1164
    %1633 = vmatpush1.bf16.msra.mxu0 %v1163
    %1634 = vmatprep.subr.bf16.mxu0 %v1167
    %1635 = vmatpush1.bf16.msra.mxu0 %v1166
    %1636 = vmatprep.subr.bf16.mxu0 %v1170
    %1637 = vmatpush1.bf16.msra.mxu0 %v1169
    %1638 = vmatprep.subr.bf16.mxu0 0
    %1639 = vmatpush1.bf16.msra.mxu0 0
    %1640 = vmatprep.subr.bf16.mxu0 0
    %1641 = vmatpush1.bf16.msra.mxu0 0
    %1642 = vmatprep.subr.bf16.mxu0 0
    %1643 = vmatpush1.bf16.msra.mxu0 0
    %1644 = vmatprep.subr.bf16.mxu0 0
    %1645 = vmatpush1.bf16.msra.mxu0 0
    %1646 = vmatprep.subr.bf16.mxu0 0
    %1647 = vmatpush1.bf16.msra.mxu0 0
    %1648 = vmatprep.subr.bf16.mxu0 0
    %1649 = vmatpush1.bf16.msra.mxu0 0
    %1650 = vmatprep.subr.bf16.mxu0 0
    %1651 = vmatpush1.bf16.msra.mxu0 0
    %1652 = vmatprep.subr.bf16.mxu0 0
    %1653 = vmatpush1.bf16.msra.mxu0 0
    %1654 = vmatprep.mubr.bf16.mxu0 0
    %1655 = vmatmul.mubr.bf16.gmra.mrb[0].mxu0 %v1596
    %v1656 = vpop.f32.mrb[0].mxu0
    %v1657 = vadd.f32 %v1039, %v1656
    %v1658 = vpop.f32.mrb[0].mxu0
    %v1659 = vadd.f32 %v1043, %v1658
    %v1660 = vpop.f32.mrb[0].mxu0
    %v1661 = vadd.f32 %v1039, %v1660
    %v1662 = vpop.f32.mrb[0].mxu0
    %v1663 = vadd.f32 %v1043, %v1662
    %1664 = vdwg.mxu0
    %1665 = vmatprep.subr.bf16.mxu0 0
    %1666 = vmatpush1.bf16.msra.mxu0 %v1150
    %1667 = vmatprep.subr.bf16.mxu0 0
    %1668 = vmatpush1.bf16.msra.mxu0 %v1153
    %1669 = vmatprep.subr.bf16.mxu0 0
    %1670 = vmatpush1.bf16.msra.mxu0 %v1156
    %1671 = vmatprep.subr.bf16.mxu0 0
    %1672 = vmatpush1.bf16.msra.mxu0 %v1159
    %1673 = vmatprep.subr.bf16.mxu0 0
    %1674 = vmatpush1.bf16.msra.mxu0 %v1162
    %1675 = vmatprep.subr.bf16.mxu0 0
    %1676 = vmatpush1.bf16.msra.mxu0 %v1165
    %1677 = vmatprep.subr.bf16.mxu0 0
    %1678 = vmatpush1.bf16.msra.mxu0 %v1168
    %1679 = vmatprep.subr.bf16.mxu0 0
    %1680 = vmatpush1.bf16.msra.mxu0 %v1171
    %1681 = vmatprep.subr.bf16.mxu0 0
    %1682 = vmatpush1.bf16.msra.mxu0 0
    %1683 = vmatprep.subr.bf16.mxu0 0
    %1684 = vmatpush1.bf16.msra.mxu0 0
    %1685 = vmatprep.subr.bf16.mxu0 0
    %1686 = vmatpush1.bf16.msra.mxu0 0
    %1687 = vmatprep.subr.bf16.mxu0 0
    %1688 = vmatpush1.bf16.msra.mxu0 0
    %1689 = vmatprep.subr.bf16.mxu0 0
    %1690 = vmatpush1.bf16.msra.mxu0 0
    %1691 = vmatprep.subr.bf16.mxu0 0
    %1692 = vmatpush1.bf16.msra.mxu0 0
    %1693 = vmatprep.subr.bf16.mxu0 0
    %1694 = vmatpush1.bf16.msra.mxu0 0
    %1695 = vmatprep.subr.bf16.mxu0 0
    %1696 = vmatpush1.bf16.msra.mxu0 0
    %1697 = vmatprep.mubr.bf16.mxu0 0
    %1698 = vmatmul.mubr.bf16.gmra.mrb[0].mxu0 %v1596
    %v1699 = vpop.f32.mrb[0].mxu0
    %v1700 = vadd.f32 %v1047, %v1699
    %v1701 = vpop.f32.mrb[0].mxu0
    %v1702 = vpop.f32.mrb[0].mxu0
    %v1703 = vadd.f32 %v1047, %v1702
    %v1704 = vpop.f32.mrb[0].mxu0
    %1705 = vdwg.mxu0
    %1706 = vmatprep.subr.bf16.mxu0 %v1361
    %1707 = vmatpush1.bf16.msra.mxu0 %v1360
    %1708 = vmatprep.subr.bf16.mxu0 %v1364
    %1709 = vmatpush1.bf16.msra.mxu0 %v1363
    %1710 = vmatprep.subr.bf16.mxu0 %v1367
    %1711 = vmatpush1.bf16.msra.mxu0 %v1366
    %1712 = vmatprep.subr.bf16.mxu0 %v1370
    %1713 = vmatpush1.bf16.msra.mxu0 %v1369
    %1714 = vmatprep.subr.bf16.mxu0 %v1373
    %1715 = vmatpush1.bf16.msra.mxu0 %v1372
    %1716 = vmatprep.subr.bf16.mxu0 %v1376
    %1717 = vmatpush1.bf16.msra.mxu0 %v1375
    %1718 = vmatprep.subr.bf16.mxu0 %v1379
    %1719 = vmatpush1.bf16.msra.mxu0 %v1378
    %1720 = vmatprep.subr.bf16.mxu0 %v1382
    %1721 = vmatpush1.bf16.msra.mxu0 %v1381
    %1722 = vmatprep.subr.bf16.mxu0 0
    %1723 = vmatpush1.bf16.msra.mxu0 0
    %1724 = vmatprep.subr.bf16.mxu0 0
    %1725 = vmatpush1.bf16.msra.mxu0 0
    %1726 = vmatprep.subr.bf16.mxu0 0
    %1727 = vmatpush1.bf16.msra.mxu0 0
    %1728 = vmatprep.subr.bf16.mxu0 0
    %1729 = vmatpush1.bf16.msra.mxu0 0
    %1730 = vmatprep.subr.bf16.mxu0 0
    %1731 = vmatpush1.bf16.msra.mxu0 0
    %1732 = vmatprep.subr.bf16.mxu0 0
    %1733 = vmatpush1.bf16.msra.mxu0 0
    %1734 = vmatprep.subr.bf16.mxu0 0
    %1735 = vmatpush1.bf16.msra.mxu0 0
    %1736 = vmatprep.subr.bf16.mxu0 0
    %1737 = vmatpush1.bf16.msra.mxu0 0
    %1738 = vmatprep.mubr.bf16.mxu0 0
    %1739 = vmatmul.mubr.bf16.gmra.mrb[0].mxu0 %v1609
    %v1740 = vpop.f32.mrb[0].mxu0
    %v1741 = vadd.f32 %v1056, %v1740
    %v1742 = vpop.f32.mrb[0].mxu0
    %v1743 = vadd.f32 %v1060, %v1742
    %v1744 = vpop.f32.mrb[0].mxu0
    %v1745 = vadd.f32 %v1056, %v1744
    %v1746 = vpop.f32.mrb[0].mxu0
    %v1747 = vadd.f32 %v1060, %v1746
    %1748 = vdwg.mxu0
    %1749 = vmatprep.subr.bf16.mxu0 0
    %1750 = vmatpush1.bf16.msra.mxu0 %v1362
    %1751 = vmatprep.subr.bf16.mxu0 0
    %1752 = vmatpush1.bf16.msra.mxu0 %v1365
    %1753 = vmatprep.subr.bf16.mxu0 0
    %1754 = vmatpush1.bf16.msra.mxu0 %v1368
    %1755 = vmatprep.subr.bf16.mxu0 0
    %1756 = vmatpush1.bf16.msra.mxu0 %v1371
    %1757 = vmatprep.subr.bf16.mxu0 0
    %1758 = vmatpush1.bf16.msra.mxu0 %v1374
    %1759 = vmatprep.subr.bf16.mxu0 0
    %1760 = vmatpush1.bf16.msra.mxu0 %v1377
    %1761 = vmatprep.subr.bf16.mxu0 0
    %1762 = vmatpush1.bf16.msra.mxu0 %v1380
    %1763 = vmatprep.subr.bf16.mxu0 0
    %1764 = vmatpush1.bf16.msra.mxu0 %v1383
    %1765 = vmatprep.subr.bf16.mxu0 0
    %1766 = vmatpush1.bf16.msra.mxu0 0
    %1767 = vmatprep.subr.bf16.mxu0 0
    %1768 = vmatpush1.bf16.msra.mxu0 0
    %1769 = vmatprep.subr.bf16.mxu0 0
    %1770 = vmatpush1.bf16.msra.mxu0 0
    %1771 = vmatprep.subr.bf16.mxu0 0
    %1772 = vmatpush1.bf16.msra.mxu0 0
    %1773 = vmatprep.subr.bf16.mxu0 0
    %1774 = vmatpush1.bf16.msra.mxu0 0
    %1775 = vmatprep.subr.bf16.mxu0 0
    %1776 = vmatpush1.bf16.msra.mxu0 0
    %1777 = vmatprep.subr.bf16.mxu0 0
    %1778 = vmatpush1.bf16.msra.mxu0 0
    %1779 = vmatprep.subr.bf16.mxu0 0
    %1780 = vmatpush1.bf16.msra.mxu0 0
    %1781 = vmatprep.mubr.bf16.mxu0 0
    %1782 = vmatmul.mubr.bf16.gmra.mrb[0].mxu0 %v1609
    %v1783 = vpop.f32.mrb[0].mxu0
    %v1784 = vadd.f32 %v1064, %v1783
    %v1785 = vpop.f32.mrb[0].mxu0
    %v1786 = vpop.f32.mrb[0].mxu0
    %v1787 = vadd.f32 %v1064, %v1786
    %v1788 = vpop.f32.mrb[0].mxu0
    %1789 = vdwg.mxu0
    %s1790 = smul.u32 1, 3
    %s1791 = smul.addr %s1790, 8
    %s1792 = scalar_lea.vmem [#allocation2], %s1791
    %v1793 = vld [vmem:[%s1792] sm:$0xff]
    %v1794 = vld [vmem:[%s1792 + $0x8] sm:$0xff]
    %v1795 = vld [vmem:[%s1792 + $0x10] sm:$0xff]
    %v1796 = vunpack.c.l.bf16 %v1793
    %v1797 = vunpack.c.l.bf16 %v1794
    %v1798 = vunpack.c.l.bf16 %v1795
    %v1799 = vunpack.c.h.bf16 %v1793
    %v1800 = vunpack.c.h.bf16 %v1794
    %v1801 = vunpack.c.h.bf16 %v1795
    %s1802 = smul.u32 6, 3
    %s1803 = smul.addr %s1802, 8
    %s1804 = scalar_lea.vmem [#allocation3], %s1803
    %v1805 = vld [vmem:[%s1804] sm:$0xff]
    %v1806 = vld [vmem:[%s1804 + $0x8] sm:$0xff]
    %v1807 = vld [vmem:[%s1804 + $0x10] sm:$0xff]
    %v1808 = vunpack.c.l.bf16 %v1805
    %v1809 = vunpack.c.l.bf16 %v1806
    %v1810 = vunpack.c.l.bf16 %v1807
    %v1811 = vunpack.c.h.bf16 %v1805
    %v1812 = vunpack.c.h.bf16 %v1806
    %v1813 = vunpack.c.h.bf16 %v1807
    %v1814 = vadd.f32 %v1796, %v1657
    %v1815 = vadd.f32 %v1797, %v1659
    %v1816 = vadd.f32 %v1799, %v1661
    %v1817 = vadd.f32 %v1800, %v1663
    %v1818 = vxor.u32 %v1814, 2147483648
    %v1819 = vxor.u32 %v1815, 2147483648
    %v1820 = vxor.u32 %v1816, 2147483648
    %v1821 = vxor.u32 %v1817, 2147483648
    %v1822 = vmul.f32 %v1818, 1.442695
    %v1823 = vpow.pop %v1822
    %v1824 = vmul.f32 %v1819, 1.442695
    %v1825 = vpow.pop %v1824
    %v1826 = vmul.f32 %v1820, 1.442695
    %v1827 = vpow.pop %v1826
    %v1828 = vmul.f32 %v1821, 1.442695
    %v1829 = vpow.pop %v1828
    %v1830 = vadd.f32 %v1823, 1.0
    %v1831 = vadd.f32 %v1825, 1.0
    %v1832 = vadd.f32 %v1827, 1.0
    %v1833 = vadd.f32 %v1829, 1.0
    %v1834 = vrcp.pop %v1830
    %v1835 = vmul.f32 1.0, %v1834
    %v1836 = vrcp.pop %v1831
    %v1837 = vmul.f32 1.0, %v1836
    %v1838 = vrcp.pop %v1832
    %v1839 = vmul.f32 1.0, %v1838
    %v1840 = vrcp.pop %v1833
    %v1841 = vmul.f32 1.0, %v1840
    %v1842 = vmul.f32 %v1835, %v1700
    %v1843 = vmul.f32 %v1839, %v1703
    %v1844 = vadd.f32 %v1798, %v1842
    %v1845 = vadd.f32 %v1801, %v1843
    %v1846 = vtanh.pop %v1844
    %v1847 = vtanh.pop %v1845
    %v1848 = vsub.f32 %v1554, %v1846
    %v1849 = vsub.f32 %v1555, %v1847
    %v1850 = vmul.f32 %v1837, %v1848
    %v1851 = vmul.f32 %v1841, %v1849
    %v1852 = vadd.f32 %v1846, %v1850
    %v1853 = vadd.f32 %v1847, %v1851
    %v1854 = vadd.f32 %v1808, %v1741
    %v1855 = vadd.f32 %v1809, %v1743
    %v1856 = vadd.f32 %v1811, %v1745
    %v1857 = vadd.f32 %v1812, %v1747
    %v1858 = vxor.u32 %v1854, 2147483648
    %v1859 = vxor.u32 %v1855, 2147483648
    %v1860 = vxor.u32 %v1856, 2147483648
    %v1861 = vxor.u32 %v1857, 2147483648
    %v1862 = vmul.f32 %v1858, 1.442695
    %v1863 = vpow.pop %v1862
    %v1864 = vmul.f32 %v1859, 1.442695
    %v1865 = vpow.pop %v1864
    %v1866 = vmul.f32 %v1860, 1.442695
    %v1867 = vpow.pop %v1866
    %v1868 = vmul.f32 %v1861, 1.442695
    %v1869 = vpow.pop %v1868
    %v1870 = vadd.f32 %v1863, 1.0
    %v1871 = vadd.f32 %v1865, 1.0
    %v1872 = vadd.f32 %v1867, 1.0
    %v1873 = vadd.f32 %v1869, 1.0
    %v1874 = vrcp.pop %v1870
    %v1875 = vmul.f32 1.0, %v1874
    %v1876 = vrcp.pop %v1871
    %v1877 = vmul.f32 1.0, %v1876
    %v1878 = vrcp.pop %v1872
    %v1879 = vmul.f32 1.0, %v1878
    %v1880 = vrcp.pop %v1873
    %v1881 = vmul.f32 1.0, %v1880
    %v1882 = vmul.f32 %v1875, %v1784
    %v1883 = vmul.f32 %v1879, %v1787
    %v1884 = vadd.f32 %v1810, %v1882
    %v1885 = vadd.f32 %v1813, %v1883
    %v1886 = vtanh.pop %v1884
    %v1887 = vtanh.pop %v1885
    %v1888 = vsub.f32 %v1594, %v1886
    %v1889 = vsub.f32 %v1595, %v1887
    %v1890 = vmul.f32 %v1877, %v1888
    %v1891 = vmul.f32 %v1881, %v1889
    %v1892 = vadd.f32 %v1886, %v1890
    %v1893 = vadd.f32 %v1887, %v1891
    %v1894 = vpack.c.bf16 %v1853, %v1852
    %v1896 = vunpack.c.l.b16 %v1894
    %v1897 = vunpack.c.h.b16 %v1894
    %v1898 = vpack.c.b16 %v1896, %v1896
    %v1899 = vpack.c.b16 %v1897, %v1897
    %s1902 = smul.u32 2, 2
    %s1903 = smul.addr %s1902, 4
    %s1904 = scalar_lea.vmem %s9, %s1903
    %1905 = vst [vmem:[%s1904] sm:$0xf] %v1898
    %1906 = vst [vmem:[%s1904 + $0x8] sm:$0xf] %v1899
    %v1907 = vpack.c.bf16 %v1893, %v1892
    %v1909 = vunpack.c.l.b16 %v1907
    %v1910 = vunpack.c.h.b16 %v1907
    %v1911 = vpack.c.b16 %v1909, %v1909
    %v1912 = vpack.c.b16 %v1910, %v1910
    %s1915 = smul.u32 12, 2
    %s1916 = smul.addr %s1915, 4
    %s1917 = scalar_lea.vmem %s9, %s1916
    %1918 = vst [vmem:[%s1917 + $0x4] sm:$0xf] %v1911
    %1919 = vst [vmem:[%s1917 + $0xc] sm:$0xf] %v1912
    %1920 = vmatprep.subr.bf16.mxu0 %v1149
    %1921 = vmatpush1.bf16.msra.mxu0 %v1148
    %1922 = vmatprep.subr.bf16.mxu0 %v1152
    %1923 = vmatpush1.bf16.msra.mxu0 %v1151
    %1924 = vmatprep.subr.bf16.mxu0 %v1155
    %1925 = vmatpush1.bf16.msra.mxu0 %v1154
    %1926 = vmatprep.subr.bf16.mxu0 %v1158
    %1927 = vmatpush1.bf16.msra.mxu0 %v1157
    %1928 = vmatprep.subr.bf16.mxu0 %v1161
    %1929 = vmatpush1.bf16.msra.mxu0 %v1160
    %1930 = vmatprep.subr.bf16.mxu0 %v1164
    %1931 = vmatpush1.bf16.msra.mxu0 %v1163
    %1932 = vmatprep.subr.bf16.mxu0 %v1167
    %1933 = vmatpush1.bf16.msra.mxu0 %v1166
    %1934 = vmatprep.subr.bf16.mxu0 %v1170
    %1935 = vmatpush1.bf16.msra.mxu0 %v1169
    %1936 = vmatprep.subr.bf16.mxu0 0
    %1937 = vmatpush1.bf16.msra.mxu0 0
    %1938 = vmatprep.subr.bf16.mxu0 0
    %1939 = vmatpush1.bf16.msra.mxu0 0
    %1940 = vmatprep.subr.bf16.mxu0 0
    %1941 = vmatpush1.bf16.msra.mxu0 0
    %1942 = vmatprep.subr.bf16.mxu0 0
    %1943 = vmatpush1.bf16.msra.mxu0 0
    %1944 = vmatprep.subr.bf16.mxu0 0
    %1945 = vmatpush1.bf16.msra.mxu0 0
    %1946 = vmatprep.subr.bf16.mxu0 0
    %1947 = vmatpush1.bf16.msra.mxu0 0
    %1948 = vmatprep.subr.bf16.mxu0 0
    %1949 = vmatpush1.bf16.msra.mxu0 0
    %1950 = vmatprep.subr.bf16.mxu0 0
    %1951 = vmatpush1.bf16.msra.mxu0 0
    %1952 = vmatprep.mubr.bf16.mxu0 0
    %1953 = vmatmul.mubr.bf16.gmra.mrb[0].mxu0 %v1894
    %v1954 = vpop.f32.mrb[0].mxu0
    %v1955 = vadd.f32 %v1039, %v1954
    %v1956 = vpop.f32.mrb[0].mxu0
    %v1957 = vadd.f32 %v1043, %v1956
    %v1958 = vpop.f32.mrb[0].mxu0
    %v1959 = vadd.f32 %v1039, %v1958
    %v1960 = vpop.f32.mrb[0].mxu0
    %v1961 = vadd.f32 %v1043, %v1960
    %1962 = vdwg.mxu0
    %1963 = vmatprep.subr.bf16.mxu0 0
    %1964 = vmatpush1.bf16.msra.mxu0 %v1150
    %1965 = vmatprep.subr.bf16.mxu0 0
    %1966 = vmatpush1.bf16.msra.mxu0 %v1153
    %1967 = vmatprep.subr.bf16.mxu0 0
    %1968 = vmatpush1.bf16.msra.mxu0 %v1156
    %1969 = vmatprep.subr.bf16.mxu0 0
    %1970 = vmatpush1.bf16.msra.mxu0 %v1159
    %1971 = vmatprep.subr.bf16.mxu0 0
    %1972 = vmatpush1.bf16.msra.mxu0 %v1162
    %1973 = vmatprep.subr.bf16.mxu0 0
    %1974 = vmatpush1.bf16.msra.mxu0 %v1165
    %1975 = vmatprep.subr.bf16.mxu0 0
    %1976 = vmatpush1.bf16.msra.mxu0 %v1168
    %1977 = vmatprep.subr.bf16.mxu0 0
    %1978 = vmatpush1.bf16.msra.mxu0 %v1171
    %1979 = vmatprep.subr.bf16.mxu0 0
    %1980 = vmatpush1.bf16.msra.mxu0 0
    %1981 = vmatprep.subr.bf16.mxu0 0
    %1982 = vmatpush1.bf16.msra.mxu0 0
    %1983 = vmatprep.subr.bf16.mxu0 0
    %1984 = vmatpush1.bf16.msra.mxu0 0
    %1985 = vmatprep.subr.bf16.mxu0 0
    %1986 = vmatpush1.bf16.msra.mxu0 0
    %1987 = vmatprep.subr.bf16.mxu0 0
    %1988 = vmatpush1.bf16.msra.mxu0 0
    %1989 = vmatprep.subr.bf16.mxu0 0
    %1990 = vmatpush1.bf16.msra.mxu0 0
    %1991 = vmatprep.subr.bf16.mxu0 0
    %1992 = vmatpush1.bf16.msra.mxu0 0
    %1993 = vmatprep.subr.bf16.mxu0 0
    %1994 = vmatpush1.bf16.msra.mxu0 0
    %1995 = vmatprep.mubr.bf16.mxu0 0
    %1996 = vmatmul.mubr.bf16.gmra.mrb[0].mxu0 %v1894
    %v1997 = vpop.f32.mrb[0].mxu0
    %v1998 = vadd.f32 %v1047, %v1997
    %v1999 = vpop.f32.mrb[0].mxu0
    %v2000 = vpop.f32.mrb[0].mxu0
    %v2001 = vadd.f32 %v1047, %v2000
    %v2002 = vpop.f32.mrb[0].mxu0
    %2003 = vdwg.mxu0
    %2004 = vmatprep.subr.bf16.mxu0 %v1361
    %2005 = vmatpush1.bf16.msra.mxu0 %v1360
    %2006 = vmatprep.subr.bf16.mxu0 %v1364
    %2007 = vmatpush1.bf16.msra.mxu0 %v1363
    %2008 = vmatprep.subr.bf16.mxu0 %v1367
    %2009 = vmatpush1.bf16.msra.mxu0 %v1366
    %2010 = vmatprep.subr.bf16.mxu0 %v1370
    %2011 = vmatpush1.bf16.msra.mxu0 %v1369
    %2012 = vmatprep.subr.bf16.mxu0 %v1373
    %2013 = vmatpush1.bf16.msra.mxu0 %v1372
    %2014 = vmatprep.subr.bf16.mxu0 %v1376
    %2015 = vmatpush1.bf16.msra.mxu0 %v1375
    %2016 = vmatprep.subr.bf16.mxu0 %v1379
    %2017 = vmatpush1.bf16.msra.mxu0 %v1378
    %2018 = vmatprep.subr.bf16.mxu0 %v1382
    %2019 = vmatpush1.bf16.msra.mxu0 %v1381
    %2020 = vmatprep.subr.bf16.mxu0 0
    %2021 = vmatpush1.bf16.msra.mxu0 0
    %2022 = vmatprep.subr.bf16.mxu0 0
    %2023 = vmatpush1.bf16.msra.mxu0 0
    %2024 = vmatprep.subr.bf16.mxu0 0
    %2025 = vmatpush1.bf16.msra.mxu0 0
    %2026 = vmatprep.subr.bf16.mxu0 0
    %2027 = vmatpush1.bf16.msra.mxu0 0
    %2028 = vmatprep.subr.bf16.mxu0 0
    %2029 = vmatpush1.bf16.msra.mxu0 0
    %2030 = vmatprep.subr.bf16.mxu0 0
    %2031 = vmatpush1.bf16.msra.mxu0 0
    %2032 = vmatprep.subr.bf16.mxu0 0
    %2033 = vmatpush1.bf16.msra.mxu0 0
    %2034 = vmatprep.subr.bf16.mxu0 0
    %2035 = vmatpush1.bf16.msra.mxu0 0
    %2036 = vmatprep.mubr.bf16.mxu0 0
    %2037 = vmatmul.mubr.bf16.gmra.mrb[0].mxu0 %v1907
    %v2038 = vpop.f32.mrb[0].mxu0
    %v2039 = vadd.f32 %v1056, %v2038
    %v2040 = vpop.f32.mrb[0].mxu0
    %v2041 = vadd.f32 %v1060, %v2040
    %v2042 = vpop.f32.mrb[0].mxu0
    %v2043 = vadd.f32 %v1056, %v2042
    %v2044 = vpop.f32.mrb[0].mxu0
    %v2045 = vadd.f32 %v1060, %v2044
    %2046 = vdwg.mxu0
    %2047 = vmatprep.subr.bf16.mxu0 0
    %2048 = vmatpush1.bf16.msra.mxu0 %v1362
    %2049 = vmatprep.subr.bf16.mxu0 0
    %2050 = vmatpush1.bf16.msra.mxu0 %v1365
    %2051 = vmatprep.subr.bf16.mxu0 0
    %2052 = vmatpush1.bf16.msra.mxu0 %v1368
    %2053 = vmatprep.subr.bf16.mxu0 0
    %2054 = vmatpush1.bf16.msra.mxu0 %v1371
    %2055 = vmatprep.subr.bf16.mxu0 0
    %2056 = vmatpush1.bf16.msra.mxu0 %v1374
    %2057 = vmatprep.subr.bf16.mxu0 0
    %2058 = vmatpush1.bf16.msra.mxu0 %v1377
    %2059 = vmatprep.subr.bf16.mxu0 0
    %2060 = vmatpush1.bf16.msra.mxu0 %v1380
    %2061 = vmatprep.subr.bf16.mxu0 0
    %2062 = vmatpush1.bf16.msra.mxu0 %v1383
    %2063 = vmatprep.subr.bf16.mxu0 0
    %2064 = vmatpush1.bf16.msra.mxu0 0
    %2065 = vmatprep.subr.bf16.mxu0 0
    %2066 = vmatpush1.bf16.msra.mxu0 0
    %2067 = vmatprep.subr.bf16.mxu0 0
    %2068 = vmatpush1.bf16.msra.mxu0 0
    %2069 = vmatprep.subr.bf16.mxu0 0
    %2070 = vmatpush1.bf16.msra.mxu0 0
    %2071 = vmatprep.subr.bf16.mxu0 0
    %2072 = vmatpush1.bf16.msra.mxu0 0
    %2073 = vmatprep.subr.bf16.mxu0 0
    %2074 = vmatpush1.bf16.msra.mxu0 0
    %2075 = vmatprep.subr.bf16.mxu0 0
    %2076 = vmatpush1.bf16.msra.mxu0 0
    %2077 = vmatprep.subr.bf16.mxu0 0
    %2078 = vmatpush1.bf16.msra.mxu0 0
    %2079 = vmatprep.mubr.bf16.mxu0 0
    %2080 = vmatmul.mubr.bf16.gmra.mrb[0].mxu0 %v1907
    %v2081 = vpop.f32.mrb[0].mxu0
    %v2082 = vadd.f32 %v1064, %v2081
    %v2083 = vpop.f32.mrb[0].mxu0
    %v2084 = vpop.f32.mrb[0].mxu0
    %v2085 = vadd.f32 %v1064, %v2084
    %v2086 = vpop.f32.mrb[0].mxu0
    %2087 = vdwg.mxu0
    %s2088 = smul.u32 2, 3
    %s2089 = smul.addr %s2088, 8
    %s2090 = scalar_lea.vmem [#allocation2], %s2089
    %v2091 = vld [vmem:[%s2090] sm:$0xff]
    %v2092 = vld [vmem:[%s2090 + $0x8] sm:$0xff]
    %v2093 = vld [vmem:[%s2090 + $0x10] sm:$0xff]
    %v2094 = vunpack.c.l.bf16 %v2091
    %v2095 = vunpack.c.l.bf16 %v2092
    %v2096 = vunpack.c.l.bf16 %v2093
    %v2097 = vunpack.c.h.bf16 %v2091
    %v2098 = vunpack.c.h.bf16 %v2092
    %v2099 = vunpack.c.h.bf16 %v2093
    %s2100 = smul.u32 5, 3
    %s2101 = smul.addr %s2100, 8
    %s2102 = scalar_lea.vmem [#allocation3], %s2101
    %v2103 = vld [vmem:[%s2102] sm:$0xff]
    %v2104 = vld [vmem:[%s2102 + $0x8] sm:$0xff]
    %v2105 = vld [vmem:[%s2102 + $0x10] sm:$0xff]
    %v2106 = vunpack.c.l.bf16 %v2103
    %v2107 = vunpack.c.l.bf16 %v2104
    %v2108 = vunpack.c.l.bf16 %v2105
    %v2109 = vunpack.c.h.bf16 %v2103
    %v2110 = vunpack.c.h.bf16 %v2104
    %v2111 = vunpack.c.h.bf16 %v2105
    %v2112 = vadd.f32 %v2094, %v1955
    %v2113 = vadd.f32 %v2095, %v1957
    %v2114 = vadd.f32 %v2097, %v1959
    %v2115 = vadd.f32 %v2098, %v1961
    %v2116 = vxor.u32 %v2112, 2147483648
    %v2117 = vxor.u32 %v2113, 2147483648
    %v2118 = vxor.u32 %v2114, 2147483648
    %v2119 = vxor.u32 %v2115, 2147483648
    %v2120 = vmul.f32 %v2116, 1.442695
    %v2121 = vpow.pop %v2120
    %v2122 = vmul.f32 %v2117, 1.442695
    %v2123 = vpow.pop %v2122
    %v2124 = vmul.f32 %v2118, 1.442695
    %v2125 = vpow.pop %v2124
    %v2126 = vmul.f32 %v2119, 1.442695
    %v2127 = vpow.pop %v2126
    %v2128 = vadd.f32 %v2121, 1.0
    %v2129 = vadd.f32 %v2123, 1.0
    %v2130 = vadd.f32 %v2125, 1.0
    %v2131 = vadd.f32 %v2127, 1.0
    %v2132 = vrcp.pop %v2128
    %v2133 = vmul.f32 1.0, %v2132
    %v2134 = vrcp.pop %v2129
    %v2135 = vmul.f32 1.0, %v2134
    %v2136 = vrcp.pop %v2130
    %v2137 = vmul.f32 1.0, %v2136
    %v2138 = vrcp.pop %v2131
    %v2139 = vmul.f32 1.0, %v2138
    %v2140 = vmul.f32 %v2133, %v1998
    %v2141 = vmul.f32 %v2137, %v2001
    %v2142 = vadd.f32 %v2096, %v2140
    %v2143 = vadd.f32 %v2099, %v2141
    %v2144 = vtanh.pop %v2142
    %v2145 = vtanh.pop %v2143
    %v2146 = vsub.f32 %v1852, %v2144
    %v2147 = vsub.f32 %v1853, %v2145
    %v2148 = vmul.f32 %v2135, %v2146
    %v2149 = vmul.f32 %v2139, %v2147
    %v2150 = vadd.f32 %v2144, %v2148
    %v2151 = vadd.f32 %v2145, %v2149
    %v2152 = vadd.f32 %v2106, %v2039
    %v2153 = vadd.f32 %v2107, %v2041
    %v2154 = vadd.f32 %v2109, %v2043
    %v2155 = vadd.f32 %v2110, %v2045
    %v2156 = vxor.u32 %v2152, 2147483648
    %v2157 = vxor.u32 %v2153, 2147483648
    %v2158 = vxor.u32 %v2154, 2147483648
    %v2159 = vxor.u32 %v2155, 2147483648
    %v2160 = vmul.f32 %v2156, 1.442695
    %v2161 = vpow.pop %v2160
    %v2162 = vmul.f32 %v2157, 1.442695
    %v2163 = vpow.pop %v2162
    %v2164 = vmul.f32 %v2158, 1.442695
    %v2165 = vpow.pop %v2164
    %v2166 = vmul.f32 %v2159, 1.442695
    %v2167 = vpow.pop %v2166
    %v2168 = vadd.f32 %v2161, 1.0
    %v2169 = vadd.f32 %v2163, 1.0
    %v2170 = vadd.f32 %v2165, 1.0
    %v2171 = vadd.f32 %v2167, 1.0
    %v2172 = vrcp.pop %v2168
    %v2173 = vmul.f32 1.0, %v2172
    %v2174 = vrcp.pop %v2169
    %v2175 = vmul.f32 1.0, %v2174
    %v2176 = vrcp.pop %v2170
    %v2177 = vmul.f32 1.0, %v2176
    %v2178 = vrcp.pop %v2171
    %v2179 = vmul.f32 1.0, %v2178
    %v2180 = vmul.f32 %v2173, %v2082
    %v2181 = vmul.f32 %v2177, %v2085
    %v2182 = vadd.f32 %v2108, %v2180
    %v2183 = vadd.f32 %v2111, %v2181
    %v2184 = vtanh.pop %v2182
    %v2185 = vtanh.pop %v2183
    %v2186 = vsub.f32 %v1892, %v2184
    %v2187 = vsub.f32 %v1893, %v2185
    %v2188 = vmul.f32 %v2175, %v2186
    %v2189 = vmul.f32 %v2179, %v2187
    %v2190 = vadd.f32 %v2184, %v2188
    %v2191 = vadd.f32 %v2185, %v2189
    %v2192 = vpack.c.bf16 %v2151, %v2150
    %v2194 = vunpack.c.l.b16 %v2192
    %v2195 = vunpack.c.h.b16 %v2192
    %v2196 = vpack.c.b16 %v2194, %v2194
    %v2197 = vpack.c.b16 %v2195, %v2195
    %s2200 = smul.u32 4, 2
    %s2201 = smul.addr %s2200, 4
    %s2202 = scalar_lea.vmem %s9, %s2201
    %2203 = vst [vmem:[%s2202] sm:$0xf] %v2196
    %2204 = vst [vmem:[%s2202 + $0x8] sm:$0xf] %v2197
    %v2205 = vpack.c.bf16 %v2191, %v2190
    %v2207 = vunpack.c.l.b16 %v2205
    %v2208 = vunpack.c.h.b16 %v2205
    %v2209 = vpack.c.b16 %v2207, %v2207
    %v2210 = vpack.c.b16 %v2208, %v2208
    %s2213 = smul.u32 10, 2
    %s2214 = smul.addr %s2213, 4
    %s2215 = scalar_lea.vmem %s9, %s2214
    %2216 = vst [vmem:[%s2215 + $0x4] sm:$0xf] %v2209
    %2217 = vst [vmem:[%s2215 + $0xc] sm:$0xf] %v2210
    %2218 = vmatprep.subr.bf16.mxu0 %v1149
    %2219 = vmatpush1.bf16.msra.mxu0 %v1148
    %2220 = vmatprep.subr.bf16.mxu0 %v1152
    %2221 = vmatpush1.bf16.msra.mxu0 %v1151
    %2222 = vmatprep.subr.bf16.mxu0 %v1155
    %2223 = vmatpush1.bf16.msra.mxu0 %v1154
    %2224 = vmatprep.subr.bf16.mxu0 %v1158
    %2225 = vmatpush1.bf16.msra.mxu0 %v1157
    %2226 = vmatprep.subr.bf16.mxu0 %v1161
    %2227 = vmatpush1.bf16.msra.mxu0 %v1160
    %2228 = vmatprep.subr.bf16.mxu0 %v1164
    %2229 = vmatpush1.bf16.msra.mxu0 %v1163
    %2230 = vmatprep.subr.bf16.mxu0 %v1167
    %2231 = vmatpush1.bf16.msra.mxu0 %v1166
    %2232 = vmatprep.subr.bf16.mxu0 %v1170
    %2233 = vmatpush1.bf16.msra.mxu0 %v1169
    %2234 = vmatprep.subr.bf16.mxu0 0
    %2235 = vmatpush1.bf16.msra.mxu0 0
    %2236 = vmatprep.subr.bf16.mxu0 0
    %2237 = vmatpush1.bf16.msra.mxu0 0
    %2238 = vmatprep.subr.bf16.mxu0 0
    %2239 = vmatpush1.bf16.msra.mxu0 0
    %2240 = vmatprep.subr.bf16.mxu0 0
    %2241 = vmatpush1.bf16.msra.mxu0 0
    %2242 = vmatprep.subr.bf16.mxu0 0
    %2243 = vmatpush1.bf16.msra.mxu0 0
    %2244 = vmatprep.subr.bf16.mxu0 0
    %2245 = vmatpush1.bf16.msra.mxu0 0
    %2246 = vmatprep.subr.bf16.mxu0 0
    %2247 = vmatpush1.bf16.msra.mxu0 0
    %2248 = vmatprep.subr.bf16.mxu0 0
    %2249 = vmatpush1.bf16.msra.mxu0 0
    %2250 = vmatprep.mubr.bf16.mxu0 0
    %2251 = vmatmul.mubr.bf16.gmra.mrb[0].mxu0 %v2192
    %v2252 = vpop.f32.mrb[0].mxu0
    %v2253 = vadd.f32 %v1039, %v2252
    %v2254 = vpop.f32.mrb[0].mxu0
    %v2255 = vadd.f32 %v1043, %v2254
    %v2256 = vpop.f32.mrb[0].mxu0
    %v2257 = vadd.f32 %v1039, %v2256
    %v2258 = vpop.f32.mrb[0].mxu0
    %v2259 = vadd.f32 %v1043, %v2258
    %2260 = vdwg.mxu0
    %2261 = vmatprep.subr.bf16.mxu0 0
    %2262 = vmatpush1.bf16.msra.mxu0 %v1150
    %2263 = vmatprep.subr.bf16.mxu0 0
    %2264 = vmatpush1.bf16.msra.mxu0 %v1153
    %2265 = vmatprep.subr.bf16.mxu0 0
    %2266 = vmatpush1.bf16.msra.mxu0 %v1156
    %2267 = vmatprep.subr.bf16.mxu0 0
    %2268 = vmatpush1.bf16.msra.mxu0 %v1159
    %2269 = vmatprep.subr.bf16.mxu0 0
    %2270 = vmatpush1.bf16.msra.mxu0 %v1162
    %2271 = vmatprep.subr.bf16.mxu0 0
    %2272 = vmatpush1.bf16.msra.mxu0 %v1165
    %2273 = vmatprep.subr.bf16.mxu0 0
    %2274 = vmatpush1.bf16.msra.mxu0 %v1168
    %2275 = vmatprep.subr.bf16.mxu0 0
    %2276 = vmatpush1.bf16.msra.mxu0 %v1171
    %2277 = vmatprep.subr.bf16.mxu0 0
    %2278 = vmatpush1.bf16.msra.mxu0 0
    %2279 = vmatprep.subr.bf16.mxu0 0
    %2280 = vmatpush1.bf16.msra.mxu0 0
    %2281 = vmatprep.subr.bf16.mxu0 0
    %2282 = vmatpush1.bf16.msra.mxu0 0
    %2283 = vmatprep.subr.bf16.mxu0 0
    %2284 = vmatpush1.bf16.msra.mxu0 0
    %2285 = vmatprep.subr.bf16.mxu0 0
    %2286 = vmatpush1.bf16.msra.mxu0 0
    %2287 = vmatprep.subr.bf16.mxu0 0
    %2288 = vmatpush1.bf16.msra.mxu0 0
    %2289 = vmatprep.subr.bf16.mxu0 0
    %2290 = vmatpush1.bf16.msra.mxu0 0
    %2291 = vmatprep.subr.bf16.mxu0 0
    %2292 = vmatpush1.bf16.msra.mxu0 0
    %2293 = vmatprep.mubr.bf16.mxu0 0
    %2294 = vmatmul.mubr.bf16.gmra.mrb[0].mxu0 %v2192
    %v2295 = vpop.f32.mrb[0].mxu0
    %v2296 = vadd.f32 %v1047, %v2295
    %v2297 = vpop.f32.mrb[0].mxu0
    %v2298 = vpop.f32.mrb[0].mxu0
    %v2299 = vadd.f32 %v1047, %v2298
    %v2300 = vpop.f32.mrb[0].mxu0
    %2301 = vdwg.mxu0
    %2302 = vmatprep.subr.bf16.mxu0 %v1361
    %2303 = vmatpush1.bf16.msra.mxu0 %v1360
    %2304 = vmatprep.subr.bf16.mxu0 %v1364
    %2305 = vmatpush1.bf16.msra.mxu0 %v1363
    %2306 = vmatprep.subr.bf16.mxu0 %v1367
    %2307 = vmatpush1.bf16.msra.mxu0 %v1366
    %2308 = vmatprep.subr.bf16.mxu0 %v1370
    %2309 = vmatpush1.bf16.msra.mxu0 %v1369
    %2310 = vmatprep.subr.bf16.mxu0 %v1373
    %2311 = vmatpush1.bf16.msra.mxu0 %v1372
    %2312 = vmatprep.subr.bf16.mxu0 %v1376
    %2313 = vmatpush1.bf16.msra.mxu0 %v1375
    %2314 = vmatprep.subr.bf16.mxu0 %v1379
    %2315 = vmatpush1.bf16.msra.mxu0 %v1378
    %2316 = vmatprep.subr.bf16.mxu0 %v1382
    %2317 = vmatpush1.bf16.msra.mxu0 %v1381
    %2318 = vmatprep.subr.bf16.mxu0 0
    %2319 = vmatpush1.bf16.msra.mxu0 0
    %2320 = vmatprep.subr.bf16.mxu0 0
    %2321 = vmatpush1.bf16.msra.mxu0 0
    %2322 = vmatprep.subr.bf16.mxu0 0
    %2323 = vmatpush1.bf16.msra.mxu0 0
    %2324 = vmatprep.subr.bf16.mxu0 0
    %2325 = vmatpush1.bf16.msra.mxu0 0
    %2326 = vmatprep.subr.bf16.mxu0 0
    %2327 = vmatpush1.bf16.msra.mxu0 0
    %2328 = vmatprep.subr.bf16.mxu0 0
    %2329 = vmatpush1.bf16.msra.mxu0 0
    %2330 = vmatprep.subr.bf16.mxu0 0
    %2331 = vmatpush1.bf16.msra.mxu0 0
    %2332 = vmatprep.subr.bf16.mxu0 0
    %2333 = vmatpush1.bf16.msra.mxu0 0
    %2334 = vmatprep.mubr.bf16.mxu0 0
    %2335 = vmatmul.mubr.bf16.gmra.mrb[0].mxu0 %v2205
    %v2336 = vpop.f32.mrb[0].mxu0
    %v2337 = vadd.f32 %v1056, %v2336
    %v2338 = vpop.f32.mrb[0].mxu0
    %v2339 = vadd.f32 %v1060, %v2338
    %v2340 = vpop.f32.mrb[0].mxu0
    %v2341 = vadd.f32 %v1056, %v2340
    %v2342 = vpop.f32.mrb[0].mxu0
    %v2343 = vadd.f32 %v1060, %v2342
    %2344 = vdwg.mxu0
    %2345 = vmatprep.subr.bf16.mxu0 0
    %2346 = vmatpush1.bf16.msra.mxu0 %v1362
    %2347 = vmatprep.subr.bf16.mxu0 0
    %2348 = vmatpush1.bf16.msra.mxu0 %v1365
    %2349 = vmatprep.subr.bf16.mxu0 0
    %2350 = vmatpush1.bf16.msra.mxu0 %v1368
    %2351 = vmatprep.subr.bf16.mxu0 0
    %2352 = vmatpush1.bf16.msra.mxu0 %v1371
    %2353 = vmatprep.subr.bf16.mxu0 0
    %2354 = vmatpush1.bf16.msra.mxu0 %v1374
    %2355 = vmatprep.subr.bf16.mxu0 0
    %2356 = vmatpush1.bf16.msra.mxu0 %v1377
    %2357 = vmatprep.subr.bf16.mxu0 0
    %2358 = vmatpush1.bf16.msra.mxu0 %v1380
    %2359 = vmatprep.subr.bf16.mxu0 0
    %2360 = vmatpush1.bf16.msra.mxu0 %v1383
    %2361 = vmatprep.subr.bf16.mxu0 0
    %2362 = vmatpush1.bf16.msra.mxu0 0
    %2363 = vmatprep.subr.bf16.mxu0 0
    %2364 = vmatpush1.bf16.msra.mxu0 0
    %2365 = vmatprep.subr.bf16.mxu0 0
    %2366 = vmatpush1.bf16.msra.mxu0 0
    %2367 = vmatprep.subr.bf16.mxu0 0
    %2368 = vmatpush1.bf16.msra.mxu0 0
    %2369 = vmatprep.subr.bf16.mxu0 0
    %2370 = vmatpush1.bf16.msra.mxu0 0
    %2371 = vmatprep.subr.bf16.mxu0 0
    %2372 = vmatpush1.bf16.msra.mxu0 0
    %2373 = vmatprep.subr.bf16.mxu0 0
    %2374 = vmatpush1.bf16.msra.mxu0 0
    %2375 = vmatprep.subr.bf16.mxu0 0
    %2376 = vmatpush1.bf16.msra.mxu0 0
    %2377 = vmatprep.mubr.bf16.mxu0 0
    %2378 = vmatmul.mubr.bf16.gmra.mrb[0].mxu0 %v2205
    %v2379 = vpop.f32.mrb[0].mxu0
    %v2380 = vadd.f32 %v1064, %v2379
    %v2381 = vpop.f32.mrb[0].mxu0
    %v2382 = vpop.f32.mrb[0].mxu0
    %v2383 = vadd.f32 %v1064, %v2382
    %v2384 = vpop.f32.mrb[0].mxu0
    %2385 = vdwg.mxu0
    %s2386 = smul.u32 3, 3
    %s2387 = smul.addr %s2386, 8
    %s2388 = scalar_lea.vmem [#allocation2], %s2387
    %v2389 = vld [vmem:[%s2388] sm:$0xff]
    %v2390 = vld [vmem:[%s2388 + $0x8] sm:$0xff]
    %v2391 = vld [vmem:[%s2388 + $0x10] sm:$0xff]
    %v2392 = vunpack.c.l.bf16 %v2389
    %v2393 = vunpack.c.l.bf16 %v2390
    %v2394 = vunpack.c.l.bf16 %v2391
    %v2395 = vunpack.c.h.bf16 %v2389
    %v2396 = vunpack.c.h.bf16 %v2390
    %v2397 = vunpack.c.h.bf16 %v2391
    %s2398 = smul.u32 4, 3
    %s2399 = smul.addr %s2398, 8
    %s2400 = scalar_lea.vmem [#allocation3], %s2399
    %v2401 = vld [vmem:[%s2400] sm:$0xff]
    %v2402 = vld [vmem:[%s2400 + $0x8] sm:$0xff]
    %v2403 = vld [vmem:[%s2400 + $0x10] sm:$0xff]
    %v2404 = vunpack.c.l.bf16 %v2401
    %v2405 = vunpack.c.l.bf16 %v2402
    %v2406 = vunpack.c.l.bf16 %v2403
    %v2407 = vunpack.c.h.bf16 %v2401
    %v2408 = vunpack.c.h.bf16 %v2402
    %v2409 = vunpack.c.h.bf16 %v2403
    %v2410 = vadd.f32 %v2392, %v2253
    %v2411 = vadd.f32 %v2393, %v2255
    %v2412 = vadd.f32 %v2395, %v2257
    %v2413 = vadd.f32 %v2396, %v2259
    %v2414 = vxor.u32 %v2410, 2147483648
    %v2415 = vxor.u32 %v2411, 2147483648
    %v2416 = vxor.u32 %v2412, 2147483648
    %v2417 = vxor.u32 %v2413, 2147483648
    %v2418 = vmul.f32 %v2414, 1.442695
    %v2419 = vpow.pop %v2418
    %v2420 = vmul.f32 %v2415, 1.442695
    %v2421 = vpow.pop %v2420
    %v2422 = vmul.f32 %v2416, 1.442695
    %v2423 = vpow.pop %v2422
    %v2424 = vmul.f32 %v2417, 1.442695
    %v2425 = vpow.pop %v2424
    %v2426 = vadd.f32 %v2419, 1.0
    %v2427 = vadd.f32 %v2421, 1.0
    %v2428 = vadd.f32 %v2423, 1.0
    %v2429 = vadd.f32 %v2425, 1.0
    %v2430 = vrcp.pop %v2426
    %v2431 = vmul.f32 1.0, %v2430
    %v2432 = vrcp.pop %v2427
    %v2433 = vmul.f32 1.0, %v2432
    %v2434 = vrcp.pop %v2428
    %v2435 = vmul.f32 1.0, %v2434
    %v2436 = vrcp.pop %v2429
    %v2437 = vmul.f32 1.0, %v2436
    %v2438 = vmul.f32 %v2431, %v2296
    %v2439 = vmul.f32 %v2435, %v2299
    %v2440 = vadd.f32 %v2394, %v2438
    %v2441 = vadd.f32 %v2397, %v2439
    %v2442 = vtanh.pop %v2440
    %v2443 = vtanh.pop %v2441
    %v2444 = vsub.f32 %v2150, %v2442
    %v2445 = vsub.f32 %v2151, %v2443
    %v2446 = vmul.f32 %v2433, %v2444
    %v2447 = vmul.f32 %v2437, %v2445
    %v2448 = vadd.f32 %v2442, %v2446
    %v2449 = vadd.f32 %v2443, %v2447
    %v2450 = vadd.f32 %v2404, %v2337
    %v2451 = vadd.f32 %v2405, %v2339
    %v2452 = vadd.f32 %v2407, %v2341
    %v2453 = vadd.f32 %v2408, %v2343
    %v2454 = vxor.u32 %v2450, 2147483648
    %v2455 = vxor.u32 %v2451, 2147483648
    %v2456 = vxor.u32 %v2452, 2147483648
    %v2457 = vxor.u32 %v2453, 2147483648
    %v2458 = vmul.f32 %v2454, 1.442695
    %v2459 = vpow.pop %v2458
    %v2460 = vmul.f32 %v2455, 1.442695
    %v2461 = vpow.pop %v2460
    %v2462 = vmul.f32 %v2456, 1.442695
    %v2463 = vpow.pop %v2462
    %v2464 = vmul.f32 %v2457, 1.442695
    %v2465 = vpow.pop %v2464
    %v2466 = vadd.f32 %v2459, 1.0
    %v2467 = vadd.f32 %v2461, 1.0
    %v2468 = vadd.f32 %v2463, 1.0
    %v2469 = vadd.f32 %v2465, 1.0
    %v2470 = vrcp.pop %v2466
    %v2471 = vmul.f32 1.0, %v2470
    %v2472 = vrcp.pop %v2467
    %v2473 = vmul.f32 1.0, %v2472
    %v2474 = vrcp.pop %v2468
    %v2475 = vmul.f32 1.0, %v2474
    %v2476 = vrcp.pop %v2469
    %v2477 = vmul.f32 1.0, %v2476
    %v2478 = vmul.f32 %v2471, %v2380
    %v2479 = vmul.f32 %v2475, %v2383
    %v2480 = vadd.f32 %v2406, %v2478
    %v2481 = vadd.f32 %v2409, %v2479
    %v2482 = vtanh.pop %v2480
    %v2483 = vtanh.pop %v2481
    %v2484 = vsub.f32 %v2190, %v2482
    %v2485 = vsub.f32 %v2191, %v2483
    %v2486 = vmul.f32 %v2473, %v2484
    %v2487 = vmul.f32 %v2477, %v2485
    %v2488 = vadd.f32 %v2482, %v2486
    %v2489 = vadd.f32 %v2483, %v2487
    %v2490 = vpack.c.bf16 %v2449, %v2448
    %v2492 = vunpack.c.l.b16 %v2490
    %v2493 = vunpack.c.h.b16 %v2490
    %v2494 = vpack.c.b16 %v2492, %v2492
    %v2495 = vpack.c.b16 %v2493, %v2493
    %s2498 = smul.u32 6, 2
    %s2499 = smul.addr %s2498, 4
    %s2500 = scalar_lea.vmem %s9, %s2499
    %2501 = vst [vmem:[%s2500] sm:$0xf] %v2494
    %2502 = vst [vmem:[%s2500 + $0x8] sm:$0xf] %v2495
    %v2503 = vpack.c.bf16 %v2489, %v2488
    %v2505 = vunpack.c.l.b16 %v2503
    %v2506 = vunpack.c.h.b16 %v2503
    %v2507 = vpack.c.b16 %v2505, %v2505
    %v2508 = vpack.c.b16 %v2506, %v2506
    %s2511 = smul.u32 8, 2
    %s2512 = smul.addr %s2511, 4
    %s2513 = scalar_lea.vmem %s9, %s2512
    %2514 = vst [vmem:[%s2513 + $0x4] sm:$0xf] %v2507
    %2515 = vst [vmem:[%s2513 + $0xc] sm:$0xf] %v2508
    %2516 = vmatprep.subr.bf16.mxu0 %v1149
    %2517 = vmatpush1.bf16.msra.mxu0 %v1148
    %2518 = vmatprep.subr.bf16.mxu0 %v1152
    %2519 = vmatpush1.bf16.msra.mxu0 %v1151
    %2520 = vmatprep.subr.bf16.mxu0 %v1155
    %2521 = vmatpush1.bf16.msra.mxu0 %v1154
    %2522 = vmatprep.subr.bf16.mxu0 %v1158
    %2523 = vmatpush1.bf16.msra.mxu0 %v1157
    %2524 = vmatprep.subr.bf16.mxu0 %v1161
    %2525 = vmatpush1.bf16.msra.mxu0 %v1160
    %2526 = vmatprep.subr.bf16.mxu0 %v1164
    %2527 = vmatpush1.bf16.msra.mxu0 %v1163
    %2528 = vmatprep.subr.bf16.mxu0 %v1167
    %2529 = vmatpush1.bf16.msra.mxu0 %v1166
    %2530 = vmatprep.subr.bf16.mxu0 %v1170
    %2531 = vmatpush1.bf16.msra.mxu0 %v1169
    %2532 = vmatprep.subr.bf16.mxu0 0
    %2533 = vmatpush1.bf16.msra.mxu0 0
    %2534 = vmatprep.subr.bf16.mxu0 0
    %2535 = vmatpush1.bf16.msra.mxu0 0
    %2536 = vmatprep.subr.bf16.mxu0 0
    %2537 = vmatpush1.bf16.msra.mxu0 0
    %2538 = vmatprep.subr.bf16.mxu0 0
    %2539 = vmatpush1.bf16.msra.mxu0 0
    %2540 = vmatprep.subr.bf16.mxu0 0
    %2541 = vmatpush1.bf16.msra.mxu0 0
    %2542 = vmatprep.subr.bf16.mxu0 0
    %2543 = vmatpush1.bf16.msra.mxu0 0
    %2544 = vmatprep.subr.bf16.mxu0 0
    %2545 = vmatpush1.bf16.msra.mxu0 0
    %2546 = vmatprep.subr.bf16.mxu0 0
    %2547 = vmatpush1.bf16.msra.mxu0 0
    %2548 = vmatprep.mubr.bf16.mxu0 0
    %2549 = vmatmul.mubr.bf16.gmra.mrb[0].mxu0 %v2490
    %v2550 = vpop.f32.mrb[0].mxu0
    %v2551 = vadd.f32 %v1039, %v2550
    %v2552 = vpop.f32.mrb[0].mxu0
    %v2553 = vadd.f32 %v1043, %v2552
    %v2554 = vpop.f32.mrb[0].mxu0
    %v2555 = vadd.f32 %v1039, %v2554
    %v2556 = vpop.f32.mrb[0].mxu0
    %v2557 = vadd.f32 %v1043, %v2556
    %2558 = vdwg.mxu0
    %2559 = vmatprep.subr.bf16.mxu0 0
    %2560 = vmatpush1.bf16.msra.mxu0 %v1150
    %2561 = vmatprep.subr.bf16.mxu0 0
    %2562 = vmatpush1.bf16.msra.mxu0 %v1153
    %2563 = vmatprep.subr.bf16.mxu0 0
    %2564 = vmatpush1.bf16.msra.mxu0 %v1156
    %2565 = vmatprep.subr.bf16.mxu0 0
    %2566 = vmatpush1.bf16.msra.mxu0 %v1159
    %2567 = vmatprep.subr.bf16.mxu0 0
    %2568 = vmatpush1.bf16.msra.mxu0 %v1162
    %2569 = vmatprep.subr.bf16.mxu0 0
    %2570 = vmatpush1.bf16.msra.mxu0 %v1165
    %2571 = vmatprep.subr.bf16.mxu0 0
    %2572 = vmatpush1.bf16.msra.mxu0 %v1168
    %2573 = vmatprep.subr.bf16.mxu0 0
    %2574 = vmatpush1.bf16.msra.mxu0 %v1171
    %2575 = vmatprep.subr.bf16.mxu0 0
    %2576 = vmatpush1.bf16.msra.mxu0 0
    %2577 = vmatprep.subr.bf16.mxu0 0
    %2578 = vmatpush1.bf16.msra.mxu0 0
    %2579 = vmatprep.subr.bf16.mxu0 0
    %2580 = vmatpush1.bf16.msra.mxu0 0
    %2581 = vmatprep.subr.bf16.mxu0 0
    %2582 = vmatpush1.bf16.msra.mxu0 0
    %2583 = vmatprep.subr.bf16.mxu0 0
    %2584 = vmatpush1.bf16.msra.mxu0 0
    %2585 = vmatprep.subr.bf16.mxu0 0
    %2586 = vmatpush1.bf16.msra.mxu0 0
    %2587 = vmatprep.subr.bf16.mxu0 0
    %2588 = vmatpush1.bf16.msra.mxu0 0
    %2589 = vmatprep.subr.bf16.mxu0 0
    %2590 = vmatpush1.bf16.msra.mxu0 0
    %2591 = vmatprep.mubr.bf16.mxu0 0
    %2592 = vmatmul.mubr.bf16.gmra.mrb[0].mxu0 %v2490
    %v2593 = vpop.f32.mrb[0].mxu0
    %v2594 = vadd.f32 %v1047, %v2593
    %v2595 = vpop.f32.mrb[0].mxu0
    %v2596 = vpop.f32.mrb[0].mxu0
    %v2597 = vadd.f32 %v1047, %v2596
    %v2598 = vpop.f32.mrb[0].mxu0
    %2599 = vdwg.mxu0
    %2600 = vmatprep.subr.bf16.mxu0 %v1361
    %2601 = vmatpush1.bf16.msra.mxu0 %v1360
    %2602 = vmatprep.subr.bf16.mxu0 %v1364
    %2603 = vmatpush1.bf16.msra.mxu0 %v1363
    %2604 = vmatprep.subr.bf16.mxu0 %v1367
    %2605 = vmatpush1.bf16.msra.mxu0 %v1366
    %2606 = vmatprep.subr.bf16.mxu0 %v1370
    %2607 = vmatpush1.bf16.msra.mxu0 %v1369
    %2608 = vmatprep.subr.bf16.mxu0 %v1373
    %2609 = vmatpush1.bf16.msra.mxu0 %v1372
    %2610 = vmatprep.subr.bf16.mxu0 %v1376
    %2611 = vmatpush1.bf16.msra.mxu0 %v1375
    %2612 = vmatprep.subr.bf16.mxu0 %v1379
    %2613 = vmatpush1.bf16.msra.mxu0 %v1378
    %2614 = vmatprep.subr.bf16.mxu0 %v1382
    %2615 = vmatpush1.bf16.msra.mxu0 %v1381
    %2616 = vmatprep.subr.bf16.mxu0 0
    %2617 = vmatpush1.bf16.msra.mxu0 0
    %2618 = vmatprep.subr.bf16.mxu0 0
    %2619 = vmatpush1.bf16.msra.mxu0 0
    %2620 = vmatprep.subr.bf16.mxu0 0
    %2621 = vmatpush1.bf16.msra.mxu0 0
    %2622 = vmatprep.subr.bf16.mxu0 0
    %2623 = vmatpush1.bf16.msra.mxu0 0
    %2624 = vmatprep.subr.bf16.mxu0 0
    %2625 = vmatpush1.bf16.msra.mxu0 0
    %2626 = vmatprep.subr.bf16.mxu0 0
    %2627 = vmatpush1.bf16.msra.mxu0 0
    %2628 = vmatprep.subr.bf16.mxu0 0
    %2629 = vmatpush1.bf16.msra.mxu0 0
    %2630 = vmatprep.subr.bf16.mxu0 0
    %2631 = vmatpush1.bf16.msra.mxu0 0
    %2632 = vmatprep.mubr.bf16.mxu0 0
    %2633 = vmatmul.mubr.bf16.gmra.mrb[0].mxu0 %v2503
    %v2634 = vpop.f32.mrb[0].mxu0
    %v2635 = vadd.f32 %v1056, %v2634
    %v2636 = vpop.f32.mrb[0].mxu0
    %v2637 = vadd.f32 %v1060, %v2636
    %v2638 = vpop.f32.mrb[0].mxu0
    %v2639 = vadd.f32 %v1056, %v2638
    %v2640 = vpop.f32.mrb[0].mxu0
    %v2641 = vadd.f32 %v1060, %v2640
    %2642 = vdwg.mxu0
    %2643 = vmatprep.subr.bf16.mxu0 0
    %2644 = vmatpush1.bf16.msra.mxu0 %v1362
    %2645 = vmatprep.subr.bf16.mxu0 0
    %2646 = vmatpush1.bf16.msra.mxu0 %v1365
    %2647 = vmatprep.subr.bf16.mxu0 0
    %2648 = vmatpush1.bf16.msra.mxu0 %v1368
    %2649 = vmatprep.subr.bf16.mxu0 0
    %2650 = vmatpush1.bf16.msra.mxu0 %v1371
    %2651 = vmatprep.subr.bf16.mxu0 0
    %2652 = vmatpush1.bf16.msra.mxu0 %v1374
    %2653 = vmatprep.subr.bf16.mxu0 0
    %2654 = vmatpush1.bf16.msra.mxu0 %v1377
    %2655 = vmatprep.subr.bf16.mxu0 0
    %2656 = vmatpush1.bf16.msra.mxu0 %v1380
    %2657 = vmatprep.subr.bf16.mxu0 0
    %2658 = vmatpush1.bf16.msra.mxu0 %v1383
    %2659 = vmatprep.subr.bf16.mxu0 0
    %2660 = vmatpush1.bf16.msra.mxu0 0
    %2661 = vmatprep.subr.bf16.mxu0 0
    %2662 = vmatpush1.bf16.msra.mxu0 0
    %2663 = vmatprep.subr.bf16.mxu0 0
    %2664 = vmatpush1.bf16.msra.mxu0 0
    %2665 = vmatprep.subr.bf16.mxu0 0
    %2666 = vmatpush1.bf16.msra.mxu0 0
    %2667 = vmatprep.subr.bf16.mxu0 0
    %2668 = vmatpush1.bf16.msra.mxu0 0
    %2669 = vmatprep.subr.bf16.mxu0 0
    %2670 = vmatpush1.bf16.msra.mxu0 0
    %2671 = vmatprep.subr.bf16.mxu0 0
    %2672 = vmatpush1.bf16.msra.mxu0 0
    %2673 = vmatprep.subr.bf16.mxu0 0
    %2674 = vmatpush1.bf16.msra.mxu0 0
    %2675 = vmatprep.mubr.bf16.mxu0 0
    %2676 = vmatmul.mubr.bf16.gmra.mrb[0].mxu0 %v2503
    %v2677 = vpop.f32.mrb[0].mxu0
    %v2678 = vadd.f32 %v1064, %v2677
    %v2679 = vpop.f32.mrb[0].mxu0
    %v2680 = vpop.f32.mrb[0].mxu0
    %v2681 = vadd.f32 %v1064, %v2680
    %v2682 = vpop.f32.mrb[0].mxu0
    %2683 = vdwg.mxu0
    %s2684 = smul.addr %s2398, 8
    %s2685 = scalar_lea.vmem [#allocation2], %s2684
    %v2686 = vld [vmem:[%s2685] sm:$0xff]
    %v2687 = vld [vmem:[%s2685 + $0x8] sm:$0xff]
    %v2688 = vld [vmem:[%s2685 + $0x10] sm:$0xff]
    %v2689 = vunpack.c.l.bf16 %v2686
    %v2690 = vunpack.c.l.bf16 %v2687
    %v2691 = vunpack.c.l.bf16 %v2688
    %v2692 = vunpack.c.h.bf16 %v2686
    %v2693 = vunpack.c.h.bf16 %v2687
    %v2694 = vunpack.c.h.bf16 %v2688
    %s2695 = smul.addr %s2386, 8
    %s2696 = scalar_lea.vmem [#allocation3], %s2695
    %v2697 = vld [vmem:[%s2696] sm:$0xff]
    %v2698 = vld [vmem:[%s2696 + $0x8] sm:$0xff]
    %v2699 = vld [vmem:[%s2696 + $0x10] sm:$0xff]
    %v2700 = vunpack.c.l.bf16 %v2697
    %v2701 = vunpack.c.l.bf16 %v2698
    %v2702 = vunpack.c.l.bf16 %v2699
    %v2703 = vunpack.c.h.bf16 %v2697
    %v2704 = vunpack.c.h.bf16 %v2698
    %v2705 = vunpack.c.h.bf16 %v2699
    %v2706 = vadd.f32 %v2689, %v2551
    %v2707 = vadd.f32 %v2690, %v2553
    %v2708 = vadd.f32 %v2692, %v2555
    %v2709 = vadd.f32 %v2693, %v2557
    %v2710 = vxor.u32 %v2706, 2147483648
    %v2711 = vxor.u32 %v2707, 2147483648
    %v2712 = vxor.u32 %v2708, 2147483648
    %v2713 = vxor.u32 %v2709, 2147483648
    %v2714 = vmul.f32 %v2710, 1.442695
    %v2715 = vpow.pop %v2714
    %v2716 = vmul.f32 %v2711, 1.442695
    %v2717 = vpow.pop %v2716
    %v2718 = vmul.f32 %v2712, 1.442695
    %v2719 = vpow.pop %v2718
    %v2720 = vmul.f32 %v2713, 1.442695
    %v2721 = vpow.pop %v2720
    %v2722 = vadd.f32 %v2715, 1.0
    %v2723 = vadd.f32 %v2717, 1.0
    %v2724 = vadd.f32 %v2719, 1.0
    %v2725 = vadd.f32 %v2721, 1.0
    %v2726 = vrcp.pop %v2722
    %v2727 = vmul.f32 1.0, %v2726
    %v2728 = vrcp.pop %v2723
    %v2729 = vmul.f32 1.0, %v2728
    %v2730 = vrcp.pop %v2724
    %v2731 = vmul.f32 1.0, %v2730
    %v2732 = vrcp.pop %v2725
    %v2733 = vmul.f32 1.0, %v2732
    %v2734 = vmul.f32 %v2727, %v2594
    %v2735 = vmul.f32 %v2731, %v2597
    %v2736 = vadd.f32 %v2691, %v2734
    %v2737 = vadd.f32 %v2694, %v2735
    %v2738 = vtanh.pop %v2736
    %v2739 = vtanh.pop %v2737
    %v2740 = vsub.f32 %v2448, %v2738
    %v2741 = vsub.f32 %v2449, %v2739
    %v2742 = vmul.f32 %v2729, %v2740
    %v2743 = vmul.f32 %v2733, %v2741
    %v2744 = vadd.f32 %v2738, %v2742
    %v2745 = vadd.f32 %v2739, %v2743
    %v2746 = vadd.f32 %v2700, %v2635
    %v2747 = vadd.f32 %v2701, %v2637
    %v2748 = vadd.f32 %v2703, %v2639
    %v2749 = vadd.f32 %v2704, %v2641
    %v2750 = vxor.u32 %v2746, 2147483648
    %v2751 = vxor.u32 %v2747, 2147483648
    %v2752 = vxor.u32 %v2748, 2147483648
    %v2753 = vxor.u32 %v2749, 2147483648
    %v2754 = vmul.f32 %v2750, 1.442695
    %v2755 = vpow.pop %v2754
    %v2756 = vmul.f32 %v2751, 1.442695
    %v2757 = vpow.pop %v2756
    %v2758 = vmul.f32 %v2752, 1.442695
    %v2759 = vpow.pop %v2758
    %v2760 = vmul.f32 %v2753, 1.442695
    %v2761 = vpow.pop %v2760
    %v2762 = vadd.f32 %v2755, 1.0
    %v2763 = vadd.f32 %v2757, 1.0
    %v2764 = vadd.f32 %v2759, 1.0
    %v2765 = vadd.f32 %v2761, 1.0
    %v2766 = vrcp.pop %v2762
    %v2767 = vmul.f32 1.0, %v2766
    %v2768 = vrcp.pop %v2763
    %v2769 = vmul.f32 1.0, %v2768
    %v2770 = vrcp.pop %v2764
    %v2771 = vmul.f32 1.0, %v2770
    %v2772 = vrcp.pop %v2765
    %v2773 = vmul.f32 1.0, %v2772
    %v2774 = vmul.f32 %v2767, %v2678
    %v2775 = vmul.f32 %v2771, %v2681
    %v2776 = vadd.f32 %v2702, %v2774
    %v2777 = vadd.f32 %v2705, %v2775
    %v2778 = vtanh.pop %v2776
    %v2779 = vtanh.pop %v2777
    %v2780 = vsub.f32 %v2488, %v2778
    %v2781 = vsub.f32 %v2489, %v2779
    %v2782 = vmul.f32 %v2769, %v2780
    %v2783 = vmul.f32 %v2773, %v2781
    %v2784 = vadd.f32 %v2778, %v2782
    %v2785 = vadd.f32 %v2779, %v2783
    %v2786 = vpack.c.bf16 %v2745, %v2744
    %v2788 = vunpack.c.l.b16 %v2786
    %v2789 = vunpack.c.h.b16 %v2786
    %v2790 = vpack.c.b16 %v2788, %v2788
    %v2791 = vpack.c.b16 %v2789, %v2789
    %2794 = vst [vmem:[%s2513] sm:$0xf] %v2790
    %2795 = vst [vmem:[%s2513 + $0x8] sm:$0xf] %v2791
    %v2796 = vpack.c.bf16 %v2785, %v2784
    %v2798 = vunpack.c.l.b16 %v2796
    %v2799 = vunpack.c.h.b16 %v2796
    %v2800 = vpack.c.b16 %v2798, %v2798
    %v2801 = vpack.c.b16 %v2799, %v2799
    %2804 = vst [vmem:[%s2500 + $0x4] sm:$0xf] %v2800
    %2805 = vst [vmem:[%s2500 + $0xc] sm:$0xf] %v2801
    %2806 = vmatprep.subr.bf16.mxu0 %v1149
    %2807 = vmatpush1.bf16.msra.mxu0 %v1148
    %2808 = vmatprep.subr.bf16.mxu0 %v1152
    %2809 = vmatpush1.bf16.msra.mxu0 %v1151
    %2810 = vmatprep.subr.bf16.mxu0 %v1155
    %2811 = vmatpush1.bf16.msra.mxu0 %v1154
    %2812 = vmatprep.subr.bf16.mxu0 %v1158
    %2813 = vmatpush1.bf16.msra.mxu0 %v1157
    %2814 = vmatprep.subr.bf16.mxu0 %v1161
    %2815 = vmatpush1.bf16.msra.mxu0 %v1160
    %2816 = vmatprep.subr.bf16.mxu0 %v1164
    %2817 = vmatpush1.bf16.msra.mxu0 %v1163
    %2818 = vmatprep.subr.bf16.mxu0 %v1167
    %2819 = vmatpush1.bf16.msra.mxu0 %v1166
    %2820 = vmatprep.subr.bf16.mxu0 %v1170
    %2821 = vmatpush1.bf16.msra.mxu0 %v1169
    %2822 = vmatprep.subr.bf16.mxu0 0
    %2823 = vmatpush1.bf16.msra.mxu0 0
    %2824 = vmatprep.subr.bf16.mxu0 0
    %2825 = vmatpush1.bf16.msra.mxu0 0
    %2826 = vmatprep.subr.bf16.mxu0 0
    %2827 = vmatpush1.bf16.msra.mxu0 0
    %2828 = vmatprep.subr.bf16.mxu0 0
    %2829 = vmatpush1.bf16.msra.mxu0 0
    %2830 = vmatprep.subr.bf16.mxu0 0
    %2831 = vmatpush1.bf16.msra.mxu0 0
    %2832 = vmatprep.subr.bf16.mxu0 0
    %2833 = vmatpush1.bf16.msra.mxu0 0
    %2834 = vmatprep.subr.bf16.mxu0 0
    %2835 = vmatpush1.bf16.msra.mxu0 0
    %2836 = vmatprep.subr.bf16.mxu0 0
    %2837 = vmatpush1.bf16.msra.mxu0 0
    %2838 = vmatprep.mubr.bf16.mxu0 0
    %2839 = vmatmul.mubr.bf16.gmra.mrb[0].mxu0 %v2786
    %v2840 = vpop.f32.mrb[0].mxu0
    %v2841 = vadd.f32 %v1039, %v2840
    %v2842 = vpop.f32.mrb[0].mxu0
    %v2843 = vadd.f32 %v1043, %v2842
    %v2844 = vpop.f32.mrb[0].mxu0
    %v2845 = vadd.f32 %v1039, %v2844
    %v2846 = vpop.f32.mrb[0].mxu0
    %v2847 = vadd.f32 %v1043, %v2846
    %2848 = vdwg.mxu0
    %2849 = vmatprep.subr.bf16.mxu0 0
    %2850 = vmatpush1.bf16.msra.mxu0 %v1150
    %2851 = vmatprep.subr.bf16.mxu0 0
    %2852 = vmatpush1.bf16.msra.mxu0 %v1153
    %2853 = vmatprep.subr.bf16.mxu0 0
    %2854 = vmatpush1.bf16.msra.mxu0 %v1156
    %2855 = vmatprep.subr.bf16.mxu0 0
    %2856 = vmatpush1.bf16.msra.mxu0 %v1159
    %2857 = vmatprep.subr.bf16.mxu0 0
    %2858 = vmatpush1.bf16.msra.mxu0 %v1162
    %2859 = vmatprep.subr.bf16.mxu0 0
    %2860 = vmatpush1.bf16.msra.mxu0 %v1165
    %2861 = vmatprep.subr.bf16.mxu0 0
    %2862 = vmatpush1.bf16.msra.mxu0 %v1168
    %2863 = vmatprep.subr.bf16.mxu0 0
    %2864 = vmatpush1.bf16.msra.mxu0 %v1171
    %2865 = vmatprep.subr.bf16.mxu0 0
    %2866 = vmatpush1.bf16.msra.mxu0 0
    %2867 = vmatprep.subr.bf16.mxu0 0
    %2868 = vmatpush1.bf16.msra.mxu0 0
    %2869 = vmatprep.subr.bf16.mxu0 0
    %2870 = vmatpush1.bf16.msra.mxu0 0
    %2871 = vmatprep.subr.bf16.mxu0 0
    %2872 = vmatpush1.bf16.msra.mxu0 0
    %2873 = vmatprep.subr.bf16.mxu0 0
    %2874 = vmatpush1.bf16.msra.mxu0 0
    %2875 = vmatprep.subr.bf16.mxu0 0
    %2876 = vmatpush1.bf16.msra.mxu0 0
    %2877 = vmatprep.subr.bf16.mxu0 0
    %2878 = vmatpush1.bf16.msra.mxu0 0
    %2879 = vmatprep.subr.bf16.mxu0 0
    %2880 = vmatpush1.bf16.msra.mxu0 0
    %2881 = vmatprep.mubr.bf16.mxu0 0
    %2882 = vmatmul.mubr.bf16.gmra.mrb[0].mxu0 %v2786
    %v2883 = vpop.f32.mrb[0].mxu0
    %v2884 = vadd.f32 %v1047, %v2883
    %v2885 = vpop.f32.mrb[0].mxu0
    %v2886 = vpop.f32.mrb[0].mxu0
    %v2887 = vadd.f32 %v1047, %v2886
    %v2888 = vpop.f32.mrb[0].mxu0
    %2889 = vdwg.mxu0
    %2890 = vmatprep.subr.bf16.mxu0 %v1361
    %2891 = vmatpush1.bf16.msra.mxu0 %v1360
    %2892 = vmatprep.subr.bf16.mxu0 %v1364
    %2893 = vmatpush1.bf16.msra.mxu0 %v1363
    %2894 = vmatprep.subr.bf16.mxu0 %v1367
    %2895 = vmatpush1.bf16.msra.mxu0 %v1366
    %2896 = vmatprep.subr.bf16.mxu0 %v1370
    %2897 = vmatpush1.bf16.msra.mxu0 %v1369
    %2898 = vmatprep.subr.bf16.mxu0 %v1373
    %2899 = vmatpush1.bf16.msra.mxu0 %v1372
    %2900 = vmatprep.subr.bf16.mxu0 %v1376
    %2901 = vmatpush1.bf16.msra.mxu0 %v1375
    %2902 = vmatprep.subr.bf16.mxu0 %v1379
    %2903 = vmatpush1.bf16.msra.mxu0 %v1378
    %2904 = vmatprep.subr.bf16.mxu0 %v1382
    %2905 = vmatpush1.bf16.msra.mxu0 %v1381
    %2906 = vmatprep.subr.bf16.mxu0 0
    %2907 = vmatpush1.bf16.msra.mxu0 0
    %2908 = vmatprep.subr.bf16.mxu0 0
    %2909 = vmatpush1.bf16.msra.mxu0 0
    %2910 = vmatprep.subr.bf16.mxu0 0
    %2911 = vmatpush1.bf16.msra.mxu0 0
    %2912 = vmatprep.subr.bf16.mxu0 0
    %2913 = vmatpush1.bf16.msra.mxu0 0
    %2914 = vmatprep.subr.bf16.mxu0 0
    %2915 = vmatpush1.bf16.msra.mxu0 0
    %2916 = vmatprep.subr.bf16.mxu0 0
    %2917 = vmatpush1.bf16.msra.mxu0 0
    %2918 = vmatprep.subr.bf16.mxu0 0
    %2919 = vmatpush1.bf16.msra.mxu0 0
    %2920 = vmatprep.subr.bf16.mxu0 0
    %2921 = vmatpush1.bf16.msra.mxu0 0
    %2922 = vmatprep.mubr.bf16.mxu0 0
    %2923 = vmatmul.mubr.bf16.gmra.mrb[0].mxu0 %v2796
    %v2924 = vpop.f32.mrb[0].mxu0
    %v2925 = vadd.f32 %v1056, %v2924
    %v2926 = vpop.f32.mrb[0].mxu0
    %v2927 = vadd.f32 %v1060, %v2926
    %v2928 = vpop.f32.mrb[0].mxu0
    %v2929 = vadd.f32 %v1056, %v2928
    %v2930 = vpop.f32.mrb[0].mxu0
    %v2931 = vadd.f32 %v1060, %v2930
    %2932 = vdwg.mxu0
    %2933 = vmatprep.subr.bf16.mxu0 0
    %2934 = vmatpush1.bf16.msra.mxu0 %v1362
    %2935 = vmatprep.subr.bf16.mxu0 0
    %2936 = vmatpush1.bf16.msra.mxu0 %v1365
    %2937 = vmatprep.subr.bf16.mxu0 0
    %2938 = vmatpush1.bf16.msra.mxu0 %v1368
    %2939 = vmatprep.subr.bf16.mxu0 0
    %2940 = vmatpush1.bf16.msra.mxu0 %v1371
    %2941 = vmatprep.subr.bf16.mxu0 0
    %2942 = vmatpush1.bf16.msra.mxu0 %v1374
    %2943 = vmatprep.subr.bf16.mxu0 0
    %2944 = vmatpush1.bf16.msra.mxu0 %v1377
    %2945 = vmatprep.subr.bf16.mxu0 0
    %2946 = vmatpush1.bf16.msra.mxu0 %v1380
    %2947 = vmatprep.subr.bf16.mxu0 0
    %2948 = vmatpush1.bf16.msra.mxu0 %v1383
    %2949 = vmatprep.subr.bf16.mxu0 0
    %2950 = vmatpush1.bf16.msra.mxu0 0
    %2951 = vmatprep.subr.bf16.mxu0 0
    %2952 = vmatpush1.bf16.msra.mxu0 0
    %2953 = vmatprep.subr.bf16.mxu0 0
    %2954 = vmatpush1.bf16.msra.mxu0 0
    %2955 = vmatprep.subr.bf16.mxu0 0
    %2956 = vmatpush1.bf16.msra.mxu0 0
    %2957 = vmatprep.subr.bf16.mxu0 0
    %2958 = vmatpush1.bf16.msra.mxu0 0
    %2959 = vmatprep.subr.bf16.mxu0 0
    %2960 = vmatpush1.bf16.msra.mxu0 0
    %2961 = vmatprep.subr.bf16.mxu0 0
    %2962 = vmatpush1.bf16.msra.mxu0 0
    %2963 = vmatprep.subr.bf16.mxu0 0
    %2964 = vmatpush1.bf16.msra.mxu0 0
    %2965 = vmatprep.mubr.bf16.mxu0 0
    %2966 = vmatmul.mubr.bf16.gmra.mrb[0].mxu0 %v2796
    %v2967 = vpop.f32.mrb[0].mxu0
    %v2968 = vadd.f32 %v1064, %v2967
    %v2969 = vpop.f32.mrb[0].mxu0
    %v2970 = vpop.f32.mrb[0].mxu0
    %v2971 = vadd.f32 %v1064, %v2970
    %v2972 = vpop.f32.mrb[0].mxu0
    %2973 = vdwg.mxu0
    %s2974 = smul.addr %s2100, 8
    %s2975 = scalar_lea.vmem [#allocation2], %s2974
    %v2976 = vld [vmem:[%s2975] sm:$0xff]
    %v2977 = vld [vmem:[%s2975 + $0x8] sm:$0xff]
    %v2978 = vld [vmem:[%s2975 + $0x10] sm:$0xff]
    %v2979 = vunpack.c.l.bf16 %v2976
    %v2980 = vunpack.c.l.bf16 %v2977
    %v2981 = vunpack.c.l.bf16 %v2978
    %v2982 = vunpack.c.h.bf16 %v2976
    %v2983 = vunpack.c.h.bf16 %v2977
    %v2984 = vunpack.c.h.bf16 %v2978
    %s2985 = smul.addr %s2088, 8
    %s2986 = scalar_lea.vmem [#allocation3], %s2985
    %v2987 = vld [vmem:[%s2986] sm:$0xff]
    %v2988 = vld [vmem:[%s2986 + $0x8] sm:$0xff]
    %v2989 = vld [vmem:[%s2986 + $0x10] sm:$0xff]
    %v2990 = vunpack.c.l.bf16 %v2987
    %v2991 = vunpack.c.l.bf16 %v2988
    %v2992 = vunpack.c.l.bf16 %v2989
    %v2993 = vunpack.c.h.bf16 %v2987
    %v2994 = vunpack.c.h.bf16 %v2988
    %v2995 = vunpack.c.h.bf16 %v2989
    %v2996 = vadd.f32 %v2979, %v2841
    %v2997 = vadd.f32 %v2980, %v2843
    %v2998 = vadd.f32 %v2982, %v2845
    %v2999 = vadd.f32 %v2983, %v2847
    %v3000 = vxor.u32 %v2996, 2147483648
    %v3001 = vxor.u32 %v2997, 2147483648
    %v3002 = vxor.u32 %v2998, 2147483648
    %v3003 = vxor.u32 %v2999, 2147483648
    %v3004 = vmul.f32 %v3000, 1.442695
    %v3005 = vpow.pop %v3004
    %v3006 = vmul.f32 %v3001, 1.442695
    %v3007 = vpow.pop %v3006
    %v3008 = vmul.f32 %v3002, 1.442695
    %v3009 = vpow.pop %v3008
    %v3010 = vmul.f32 %v3003, 1.442695
    %v3011 = vpow.pop %v3010
    %v3012 = vadd.f32 %v3005, 1.0
    %v3013 = vadd.f32 %v3007, 1.0
    %v3014 = vadd.f32 %v3009, 1.0
    %v3015 = vadd.f32 %v3011, 1.0
    %v3016 = vrcp.pop %v3012
    %v3017 = vmul.f32 1.0, %v3016
    %v3018 = vrcp.pop %v3013
    %v3019 = vmul.f32 1.0, %v3018
    %v3020 = vrcp.pop %v3014
    %v3021 = vmul.f32 1.0, %v3020
    %v3022 = vrcp.pop %v3015
    %v3023 = vmul.f32 1.0, %v3022
    %v3024 = vmul.f32 %v3017, %v2884
    %v3025 = vmul.f32 %v3021, %v2887
    %v3026 = vadd.f32 %v2981, %v3024
    %v3027 = vadd.f32 %v2984, %v3025
    %v3028 = vtanh.pop %v3026
    %v3029 = vtanh.pop %v3027
    %v3030 = vsub.f32 %v2744, %v3028
    %v3031 = vsub.f32 %v2745, %v3029
    %v3032 = vmul.f32 %v3019, %v3030
    %v3033 = vmul.f32 %v3023, %v3031
    %v3034 = vadd.f32 %v3028, %v3032
    %v3035 = vadd.f32 %v3029, %v3033
    %v3036 = vadd.f32 %v2990, %v2925
    %v3037 = vadd.f32 %v2991, %v2927
    %v3038 = vadd.f32 %v2993, %v2929
    %v3039 = vadd.f32 %v2994, %v2931
    %v3040 = vxor.u32 %v3036, 2147483648
    %v3041 = vxor.u32 %v3037, 2147483648
    %v3042 = vxor.u32 %v3038, 2147483648
    %v3043 = vxor.u32 %v3039, 2147483648
    %v3044 = vmul.f32 %v3040, 1.442695
    %v3045 = vpow.pop %v3044
    %v3046 = vmul.f32 %v3041, 1.442695
    %v3047 = vpow.pop %v3046
    %v3048 = vmul.f32 %v3042, 1.442695
    %v3049 = vpow.pop %v3048
    %v3050 = vmul.f32 %v3043, 1.442695
    %v3051 = vpow.pop %v3050
    %v3052 = vadd.f32 %v3045, 1.0
    %v3053 = vadd.f32 %v3047, 1.0
    %v3054 = vadd.f32 %v3049, 1.0
    %v3055 = vadd.f32 %v3051, 1.0
    %v3056 = vrcp.pop %v3052
    %v3057 = vmul.f32 1.0, %v3056
    %v3058 = vrcp.pop %v3053
    %v3059 = vmul.f32 1.0, %v3058
    %v3060 = vrcp.pop %v3054
    %v3061 = vmul.f32 1.0, %v3060
    %v3062 = vrcp.pop %v3055
    %v3063 = vmul.f32 1.0, %v3062
    %v3064 = vmul.f32 %v3057, %v2968
    %v3065 = vmul.f32 %v3061, %v2971
    %v3066 = vadd.f32 %v2992, %v3064
    %v3067 = vadd.f32 %v2995, %v3065
    %v3068 = vtanh.pop %v3066
    %v3069 = vtanh.pop %v3067
    %v3070 = vsub.f32 %v2784, %v3068
    %v3071 = vsub.f32 %v2785, %v3069
    %v3072 = vmul.f32 %v3059, %v3070
    %v3073 = vmul.f32 %v3063, %v3071
    %v3074 = vadd.f32 %v3068, %v3072
    %v3075 = vadd.f32 %v3069, %v3073
    %v3076 = vpack.c.bf16 %v3035, %v3034
    %v3078 = vunpack.c.l.b16 %v3076
    %v3079 = vunpack.c.h.b16 %v3076
    %v3080 = vpack.c.b16 %v3078, %v3078
    %v3081 = vpack.c.b16 %v3079, %v3079
    %3084 = vst [vmem:[%s2215] sm:$0xf] %v3080
    %3085 = vst [vmem:[%s2215 + $0x8] sm:$0xf] %v3081
    %v3086 = vpack.c.bf16 %v3075, %v3074
    %v3088 = vunpack.c.l.b16 %v3086
    %v3089 = vunpack.c.h.b16 %v3086
    %v3090 = vpack.c.b16 %v3088, %v3088
    %v3091 = vpack.c.b16 %v3089, %v3089
    %3094 = vst [vmem:[%s2202 + $0x4] sm:$0xf] %v3090
    %3095 = vst [vmem:[%s2202 + $0xc] sm:$0xf] %v3091
    %3096 = vmatprep.subr.bf16.mxu0 %v1149
    %3097 = vmatpush1.bf16.msra.mxu0 %v1148
    %3098 = vmatprep.subr.bf16.mxu0 %v1152
    %3099 = vmatpush1.bf16.msra.mxu0 %v1151
    %3100 = vmatprep.subr.bf16.mxu0 %v1155
    %3101 = vmatpush1.bf16.msra.mxu0 %v1154
    %3102 = vmatprep.subr.bf16.mxu0 %v1158
    %3103 = vmatpush1.bf16.msra.mxu0 %v1157
    %3104 = vmatprep.subr.bf16.mxu0 %v1161
    %3105 = vmatpush1.bf16.msra.mxu0 %v1160
    %3106 = vmatprep.subr.bf16.mxu0 %v1164
    %3107 = vmatpush1.bf16.msra.mxu0 %v1163
    %3108 = vmatprep.subr.bf16.mxu0 %v1167
    %3109 = vmatpush1.bf16.msra.mxu0 %v1166
    %3110 = vmatprep.subr.bf16.mxu0 %v1170
    %3111 = vmatpush1.bf16.msra.mxu0 %v1169
    %3112 = vmatprep.subr.bf16.mxu0 0
    %3113 = vmatpush1.bf16.msra.mxu0 0
    %3114 = vmatprep.subr.bf16.mxu0 0
    %3115 = vmatpush1.bf16.msra.mxu0 0
    %3116 = vmatprep.subr.bf16.mxu0 0
    %3117 = vmatpush1.bf16.msra.mxu0 0
    %3118 = vmatprep.subr.bf16.mxu0 0
    %3119 = vmatpush1.bf16.msra.mxu0 0
    %3120 = vmatprep.subr.bf16.mxu0 0
    %3121 = vmatpush1.bf16.msra.mxu0 0
    %3122 = vmatprep.subr.bf16.mxu0 0
    %3123 = vmatpush1.bf16.msra.mxu0 0
    %3124 = vmatprep.subr.bf16.mxu0 0
    %3125 = vmatpush1.bf16.msra.mxu0 0
    %3126 = vmatprep.subr.bf16.mxu0 0
    %3127 = vmatpush1.bf16.msra.mxu0 0
    %3128 = vmatprep.mubr.bf16.mxu0 0
    %3129 = vmatmul.mubr.bf16.gmra.mrb[0].mxu0 %v3076
    %v3130 = vpop.f32.mrb[0].mxu0
    %v3131 = vadd.f32 %v1039, %v3130
    %v3132 = vpop.f32.mrb[0].mxu0
    %v3133 = vadd.f32 %v1043, %v3132
    %v3134 = vpop.f32.mrb[0].mxu0
    %v3135 = vadd.f32 %v1039, %v3134
    %v3136 = vpop.f32.mrb[0].mxu0
    %v3137 = vadd.f32 %v1043, %v3136
    %3138 = vdwg.mxu0
    %3139 = vmatprep.subr.bf16.mxu0 0
    %3140 = vmatpush1.bf16.msra.mxu0 %v1150
    %3141 = vmatprep.subr.bf16.mxu0 0
    %3142 = vmatpush1.bf16.msra.mxu0 %v1153
    %3143 = vmatprep.subr.bf16.mxu0 0
    %3144 = vmatpush1.bf16.msra.mxu0 %v1156
    %3145 = vmatprep.subr.bf16.mxu0 0
    %3146 = vmatpush1.bf16.msra.mxu0 %v1159
    %3147 = vmatprep.subr.bf16.mxu0 0
    %3148 = vmatpush1.bf16.msra.mxu0 %v1162
    %3149 = vmatprep.subr.bf16.mxu0 0
    %3150 = vmatpush1.bf16.msra.mxu0 %v1165
    %3151 = vmatprep.subr.bf16.mxu0 0
    %3152 = vmatpush1.bf16.msra.mxu0 %v1168
    %3153 = vmatprep.subr.bf16.mxu0 0
    %3154 = vmatpush1.bf16.msra.mxu0 %v1171
    %3155 = vmatprep.subr.bf16.mxu0 0
    %3156 = vmatpush1.bf16.msra.mxu0 0
    %3157 = vmatprep.subr.bf16.mxu0 0
    %3158 = vmatpush1.bf16.msra.mxu0 0
    %3159 = vmatprep.subr.bf16.mxu0 0
    %3160 = vmatpush1.bf16.msra.mxu0 0
    %3161 = vmatprep.subr.bf16.mxu0 0
    %3162 = vmatpush1.bf16.msra.mxu0 0
    %3163 = vmatprep.subr.bf16.mxu0 0
    %3164 = vmatpush1.bf16.msra.mxu0 0
    %3165 = vmatprep.subr.bf16.mxu0 0
    %3166 = vmatpush1.bf16.msra.mxu0 0
    %3167 = vmatprep.subr.bf16.mxu0 0
    %3168 = vmatpush1.bf16.msra.mxu0 0
    %3169 = vmatprep.subr.bf16.mxu0 0
    %3170 = vmatpush1.bf16.msra.mxu0 0
    %3171 = vmatprep.mubr.bf16.mxu0 0
    %3172 = vmatmul.mubr.bf16.gmra.mrb[0].mxu0 %v3076
    %v3173 = vpop.f32.mrb[0].mxu0
    %v3174 = vadd.f32 %v1047, %v3173
    %v3175 = vpop.f32.mrb[0].mxu0
    %v3176 = vpop.f32.mrb[0].mxu0
    %v3177 = vadd.f32 %v1047, %v3176
    %v3178 = vpop.f32.mrb[0].mxu0
    %3179 = vdwg.mxu0
    %3180 = vmatprep.subr.bf16.mxu0 %v1361
    %3181 = vmatpush1.bf16.msra.mxu0 %v1360
    %3182 = vmatprep.subr.bf16.mxu0 %v1364
    %3183 = vmatpush1.bf16.msra.mxu0 %v1363
    %3184 = vmatprep.subr.bf16.mxu0 %v1367
    %3185 = vmatpush1.bf16.msra.mxu0 %v1366
    %3186 = vmatprep.subr.bf16.mxu0 %v1370
    %3187 = vmatpush1.bf16.msra.mxu0 %v1369
    %3188 = vmatprep.subr.bf16.mxu0 %v1373
    %3189 = vmatpush1.bf16.msra.mxu0 %v1372
    %3190 = vmatprep.subr.bf16.mxu0 %v1376
    %3191 = vmatpush1.bf16.msra.mxu0 %v1375
    %3192 = vmatprep.subr.bf16.mxu0 %v1379
    %3193 = vmatpush1.bf16.msra.mxu0 %v1378
    %3194 = vmatprep.subr.bf16.mxu0 %v1382
    %3195 = vmatpush1.bf16.msra.mxu0 %v1381
    %3196 = vmatprep.subr.bf16.mxu0 0
    %3197 = vmatpush1.bf16.msra.mxu0 0
    %3198 = vmatprep.subr.bf16.mxu0 0
    %3199 = vmatpush1.bf16.msra.mxu0 0
    %3200 = vmatprep.subr.bf16.mxu0 0
    %3201 = vmatpush1.bf16.msra.mxu0 0
    %3202 = vmatprep.subr.bf16.mxu0 0
    %3203 = vmatpush1.bf16.msra.mxu0 0
    %3204 = vmatprep.subr.bf16.mxu0 0
    %3205 = vmatpush1.bf16.msra.mxu0 0
    %3206 = vmatprep.subr.bf16.mxu0 0
    %3207 = vmatpush1.bf16.msra.mxu0 0
    %3208 = vmatprep.subr.bf16.mxu0 0
    %3209 = vmatpush1.bf16.msra.mxu0 0
    %3210 = vmatprep.subr.bf16.mxu0 0
    %3211 = vmatpush1.bf16.msra.mxu0 0
    %3212 = vmatprep.mubr.bf16.mxu0 0
    %3213 = vmatmul.mubr.bf16.gmra.mrb[0].mxu0 %v3086
    %v3214 = vpop.f32.mrb[0].mxu0
    %v3215 = vadd.f32 %v1056, %v3214
    %v3216 = vpop.f32.mrb[0].mxu0
    %v3217 = vadd.f32 %v1060, %v3216
    %v3218 = vpop.f32.mrb[0].mxu0
    %v3219 = vadd.f32 %v1056, %v3218
    %v3220 = vpop.f32.mrb[0].mxu0
    %v3221 = vadd.f32 %v1060, %v3220
    %3222 = vdwg.mxu0
    %3223 = vmatprep.subr.bf16.mxu0 0
    %3224 = vmatpush1.bf16.msra.mxu0 %v1362
    %3225 = vmatprep.subr.bf16.mxu0 0
    %3226 = vmatpush1.bf16.msra.mxu0 %v1365
    %3227 = vmatprep.subr.bf16.mxu0 0
    %3228 = vmatpush1.bf16.msra.mxu0 %v1368
    %3229 = vmatprep.subr.bf16.mxu0 0
    %3230 = vmatpush1.bf16.msra.mxu0 %v1371
    %3231 = vmatprep.subr.bf16.mxu0 0
    %3232 = vmatpush1.bf16.msra.mxu0 %v1374
    %3233 = vmatprep.subr.bf16.mxu0 0
    %3234 = vmatpush1.bf16.msra.mxu0 %v1377
    %3235 = vmatprep.subr.bf16.mxu0 0
    %3236 = vmatpush1.bf16.msra.mxu0 %v1380
    %3237 = vmatprep.subr.bf16.mxu0 0
    %3238 = vmatpush1.bf16.msra.mxu0 %v1383
    %3239 = vmatprep.subr.bf16.mxu0 0
    %3240 = vmatpush1.bf16.msra.mxu0 0
    %3241 = vmatprep.subr.bf16.mxu0 0
    %3242 = vmatpush1.bf16.msra.mxu0 0
    %3243 = vmatprep.subr.bf16.mxu0 0
    %3244 = vmatpush1.bf16.msra.mxu0 0
    %3245 = vmatprep.subr.bf16.mxu0 0
    %3246 = vmatpush1.bf16.msra.mxu0 0
    %3247 = vmatprep.subr.bf16.mxu0 0
    %3248 = vmatpush1.bf16.msra.mxu0 0
    %3249 = vmatprep.subr.bf16.mxu0 0
    %3250 = vmatpush1.bf16.msra.mxu0 0
    %3251 = vmatprep.subr.bf16.mxu0 0
    %3252 = vmatpush1.bf16.msra.mxu0 0
    %3253 = vmatprep.subr.bf16.mxu0 0
    %3254 = vmatpush1.bf16.msra.mxu0 0
    %3255 = vmatprep.mubr.bf16.mxu0 0
    %3256 = vmatmul.mubr.bf16.gmra.mrb[0].mxu0 %v3086
    %v3257 = vpop.f32.mrb[0].mxu0
    %v3258 = vadd.f32 %v1064, %v3257
    %v3259 = vpop.f32.mrb[0].mxu0
    %v3260 = vpop.f32.mrb[0].mxu0
    %v3261 = vadd.f32 %v1064, %v3260
    %v3262 = vpop.f32.mrb[0].mxu0
    %3263 = vdwg.mxu0
    %s3264 = smul.addr %s1802, 8
    %s3265 = scalar_lea.vmem [#allocation2], %s3264
    %v3266 = vld [vmem:[%s3265] sm:$0xff]
    %v3267 = vld [vmem:[%s3265 + $0x8] sm:$0xff]
    %v3268 = vld [vmem:[%s3265 + $0x10] sm:$0xff]
    %v3269 = vunpack.c.l.bf16 %v3266
    %v3270 = vunpack.c.l.bf16 %v3267
    %v3271 = vunpack.c.l.bf16 %v3268
    %v3272 = vunpack.c.h.bf16 %v3266
    %v3273 = vunpack.c.h.bf16 %v3267
    %v3274 = vunpack.c.h.bf16 %v3268
    %s3275 = smul.addr %s1790, 8
    %s3276 = scalar_lea.vmem [#allocation3], %s3275
    %v3277 = vld [vmem:[%s3276] sm:$0xff]
    %v3278 = vld [vmem:[%s3276 + $0x8] sm:$0xff]
    %v3279 = vld [vmem:[%s3276 + $0x10] sm:$0xff]
    %v3280 = vunpack.c.l.bf16 %v3277
    %v3281 = vunpack.c.l.bf16 %v3278
    %v3282 = vunpack.c.l.bf16 %v3279
    %v3283 = vunpack.c.h.bf16 %v3277
    %v3284 = vunpack.c.h.bf16 %v3278
    %v3285 = vunpack.c.h.bf16 %v3279
    %v3286 = vadd.f32 %v3269, %v3131
    %v3287 = vadd.f32 %v3270, %v3133
    %v3288 = vadd.f32 %v3272, %v3135
    %v3289 = vadd.f32 %v3273, %v3137
    %v3290 = vxor.u32 %v3286, 2147483648
    %v3291 = vxor.u32 %v3287, 2147483648
    %v3292 = vxor.u32 %v3288, 2147483648
    %v3293 = vxor.u32 %v3289, 2147483648
    %v3294 = vmul.f32 %v3290, 1.442695
    %v3295 = vpow.pop %v3294
    %v3296 = vmul.f32 %v3291, 1.442695
    %v3297 = vpow.pop %v3296
    %v3298 = vmul.f32 %v3292, 1.442695
    %v3299 = vpow.pop %v3298
    %v3300 = vmul.f32 %v3293, 1.442695
    %v3301 = vpow.pop %v3300
    %v3302 = vadd.f32 %v3295, 1.0
    %v3303 = vadd.f32 %v3297, 1.0
    %v3304 = vadd.f32 %v3299, 1.0
    %v3305 = vadd.f32 %v3301, 1.0
    %v3306 = vrcp.pop %v3302
    %v3307 = vmul.f32 1.0, %v3306
    %v3308 = vrcp.pop %v3303
    %v3309 = vmul.f32 1.0, %v3308
    %v3310 = vrcp.pop %v3304
    %v3311 = vmul.f32 1.0, %v3310
    %v3312 = vrcp.pop %v3305
    %v3313 = vmul.f32 1.0, %v3312
    %v3314 = vmul.f32 %v3307, %v3174
    %v3315 = vmul.f32 %v3311, %v3177
    %v3316 = vadd.f32 %v3271, %v3314
    %v3317 = vadd.f32 %v3274, %v3315
    %v3318 = vtanh.pop %v3316
    %v3319 = vtanh.pop %v3317
    %v3320 = vsub.f32 %v3034, %v3318
    %v3321 = vsub.f32 %v3035, %v3319
    %v3322 = vmul.f32 %v3309, %v3320
    %v3323 = vmul.f32 %v3313, %v3321
    %v3324 = vadd.f32 %v3318, %v3322
    %v3325 = vadd.f32 %v3319, %v3323
    %v3326 = vadd.f32 %v3280, %v3215
    %v3327 = vadd.f32 %v3281, %v3217
    %v3328 = vadd.f32 %v3283, %v3219
    %v3329 = vadd.f32 %v3284, %v3221
    %v3330 = vxor.u32 %v3326, 2147483648
    %v3331 = vxor.u32 %v3327, 2147483648
    %v3332 = vxor.u32 %v3328, 2147483648
    %v3333 = vxor.u32 %v3329, 2147483648
    %v3334 = vmul.f32 %v3330, 1.442695
    %v3335 = vpow.pop %v3334
    %v3336 = vmul.f32 %v3331, 1.442695
    %v3337 = vpow.pop %v3336
    %v3338 = vmul.f32 %v3332, 1.442695
    %v3339 = vpow.pop %v3338
    %v3340 = vmul.f32 %v3333, 1.442695
    %v3341 = vpow.pop %v3340
    %v3342 = vadd.f32 %v3335, 1.0
    %v3343 = vadd.f32 %v3337, 1.0
    %v3344 = vadd.f32 %v3339, 1.0
    %v3345 = vadd.f32 %v3341, 1.0
    %v3346 = vrcp.pop %v3342
    %v3347 = vmul.f32 1.0, %v3346
    %v3348 = vrcp.pop %v3343
    %v3349 = vmul.f32 1.0, %v3348
    %v3350 = vrcp.pop %v3344
    %v3351 = vmul.f32 1.0, %v3350
    %v3352 = vrcp.pop %v3345
    %v3353 = vmul.f32 1.0, %v3352
    %v3354 = vmul.f32 %v3347, %v3258
    %v3355 = vmul.f32 %v3351, %v3261
    %v3356 = vadd.f32 %v3282, %v3354
    %v3357 = vadd.f32 %v3285, %v3355
    %v3358 = vtanh.pop %v3356
    %v3359 = vtanh.pop %v3357
    %v3360 = vsub.f32 %v3074, %v3358
    %v3361 = vsub.f32 %v3075, %v3359
    %v3362 = vmul.f32 %v3349, %v3360
    %v3363 = vmul.f32 %v3353, %v3361
    %v3364 = vadd.f32 %v3358, %v3362
    %v3365 = vadd.f32 %v3359, %v3363
    %v3366 = vpack.c.bf16 %v3325, %v3324
    %v3368 = vunpack.c.l.b16 %v3366
    %v3369 = vunpack.c.h.b16 %v3366
    %v3370 = vpack.c.b16 %v3368, %v3368
    %v3371 = vpack.c.b16 %v3369, %v3369
    %3374 = vst [vmem:[%s1917] sm:$0xf] %v3370
    %3375 = vst [vmem:[%s1917 + $0x8] sm:$0xf] %v3371
    %v3376 = vpack.c.bf16 %v3365, %v3364
    %v3378 = vunpack.c.l.b16 %v3376
    %v3379 = vunpack.c.h.b16 %v3376
    %v3380 = vpack.c.b16 %v3378, %v3378
    %v3381 = vpack.c.b16 %v3379, %v3379
    %3384 = vst [vmem:[%s1904 + $0x4] sm:$0xf] %v3380
    %3385 = vst [vmem:[%s1904 + $0xc] sm:$0xf] %v3381
    %3386 = vmatprep.subr.bf16.mxu0 %v1149
    %3387 = vmatpush1.bf16.msra.mxu0 %v1148
    %3388 = vmatprep.subr.bf16.mxu0 %v1152
    %3389 = vmatpush1.bf16.msra.mxu0 %v1151
    %3390 = vmatprep.subr.bf16.mxu0 %v1155
    %3391 = vmatpush1.bf16.msra.mxu0 %v1154
    %3392 = vmatprep.subr.bf16.mxu0 %v1158
    %3393 = vmatpush1.bf16.msra.mxu0 %v1157
    %3394 = vmatprep.subr.bf16.mxu0 %v1161
    %3395 = vmatpush1.bf16.msra.mxu0 %v1160
    %3396 = vmatprep.subr.bf16.mxu0 %v1164
    %3397 = vmatpush1.bf16.msra.mxu0 %v1163
    %3398 = vmatprep.subr.bf16.mxu0 %v1167
    %3399 = vmatpush1.bf16.msra.mxu0 %v1166
    %3400 = vmatprep.subr.bf16.mxu0 %v1170
    %3401 = vmatpush1.bf16.msra.mxu0 %v1169
    %3402 = vmatprep.subr.bf16.mxu0 0
    %3403 = vmatpush1.bf16.msra.mxu0 0
    %3404 = vmatprep.subr.bf16.mxu0 0
    %3405 = vmatpush1.bf16.msra.mxu0 0
    %3406 = vmatprep.subr.bf16.mxu0 0
    %3407 = vmatpush1.bf16.msra.mxu0 0
    %3408 = vmatprep.subr.bf16.mxu0 0
    %3409 = vmatpush1.bf16.msra.mxu0 0
    %3410 = vmatprep.subr.bf16.mxu0 0
    %3411 = vmatpush1.bf16.msra.mxu0 0
    %3412 = vmatprep.subr.bf16.mxu0 0
    %3413 = vmatpush1.bf16.msra.mxu0 0
    %3414 = vmatprep.subr.bf16.mxu0 0
    %3415 = vmatpush1.bf16.msra.mxu0 0
    %3416 = vmatprep.subr.bf16.mxu0 0
    %3417 = vmatpush1.bf16.msra.mxu0 0
    %3418 = vmatprep.mubr.bf16.mxu0 0
    %3419 = vmatmul.mubr.bf16.gmra.mrb[0].mxu0 %v3366
    %v3420 = vpop.f32.mrb[0].mxu0
    %v3421 = vadd.f32 %v1039, %v3420
    %v3422 = vpop.f32.mrb[0].mxu0
    %v3423 = vadd.f32 %v1043, %v3422
    %v3424 = vpop.f32.mrb[0].mxu0
    %v3425 = vadd.f32 %v1039, %v3424
    %v3426 = vpop.f32.mrb[0].mxu0
    %v3427 = vadd.f32 %v1043, %v3426
    %3428 = vdwg.mxu0
    %3429 = vmatprep.subr.bf16.mxu0 0
    %3430 = vmatpush1.bf16.msra.mxu0 %v1150
    %3431 = vmatprep.subr.bf16.mxu0 0
    %3432 = vmatpush1.bf16.msra.mxu0 %v1153
    %3433 = vmatprep.subr.bf16.mxu0 0
    %3434 = vmatpush1.bf16.msra.mxu0 %v1156
    %3435 = vmatprep.subr.bf16.mxu0 0
    %3436 = vmatpush1.bf16.msra.mxu0 %v1159
    %3437 = vmatprep.subr.bf16.mxu0 0
    %3438 = vmatpush1.bf16.msra.mxu0 %v1162
    %3439 = vmatprep.subr.bf16.mxu0 0
    %3440 = vmatpush1.bf16.msra.mxu0 %v1165
    %3441 = vmatprep.subr.bf16.mxu0 0
    %3442 = vmatpush1.bf16.msra.mxu0 %v1168
    %3443 = vmatprep.subr.bf16.mxu0 0
    %3444 = vmatpush1.bf16.msra.mxu0 %v1171
    %3445 = vmatprep.subr.bf16.mxu0 0
    %3446 = vmatpush1.bf16.msra.mxu0 0
    %3447 = vmatprep.subr.bf16.mxu0 0
    %3448 = vmatpush1.bf16.msra.mxu0 0
    %3449 = vmatprep.subr.bf16.mxu0 0
    %3450 = vmatpush1.bf16.msra.mxu0 0
    %3451 = vmatprep.subr.bf16.mxu0 0
    %3452 = vmatpush1.bf16.msra.mxu0 0
    %3453 = vmatprep.subr.bf16.mxu0 0
    %3454 = vmatpush1.bf16.msra.mxu0 0
    %3455 = vmatprep.subr.bf16.mxu0 0
    %3456 = vmatpush1.bf16.msra.mxu0 0
    %3457 = vmatprep.subr.bf16.mxu0 0
    %3458 = vmatpush1.bf16.msra.mxu0 0
    %3459 = vmatprep.subr.bf16.mxu0 0
    %3460 = vmatpush1.bf16.msra.mxu0 0
    %3461 = vmatprep.mubr.bf16.mxu0 0
    %3462 = vmatmul.mubr.bf16.gmra.mrb[0].mxu0 %v3366
    %v3463 = vpop.f32.mrb[0].mxu0
    %v3464 = vadd.f32 %v1047, %v3463
    %v3465 = vpop.f32.mrb[0].mxu0
    %v3466 = vpop.f32.mrb[0].mxu0
    %v3467 = vadd.f32 %v1047, %v3466
    %v3468 = vpop.f32.mrb[0].mxu0
    %3469 = vdwg.mxu0
    %3470 = vmatprep.subr.bf16.mxu0 %v1361
    %3471 = vmatpush1.bf16.msra.mxu0 %v1360
    %3472 = vmatprep.subr.bf16.mxu0 %v1364
    %3473 = vmatpush1.bf16.msra.mxu0 %v1363
    %3474 = vmatprep.subr.bf16.mxu0 %v1367
    %3475 = vmatpush1.bf16.msra.mxu0 %v1366
    %3476 = vmatprep.subr.bf16.mxu0 %v1370
    %3477 = vmatpush1.bf16.msra.mxu0 %v1369
    %3478 = vmatprep.subr.bf16.mxu0 %v1373
    %3479 = vmatpush1.bf16.msra.mxu0 %v1372
    %3480 = vmatprep.subr.bf16.mxu0 %v1376
    %3481 = vmatpush1.bf16.msra.mxu0 %v1375
    %3482 = vmatprep.subr.bf16.mxu0 %v1379
    %3483 = vmatpush1.bf16.msra.mxu0 %v1378
    %3484 = vmatprep.subr.bf16.mxu0 %v1382
    %3485 = vmatpush1.bf16.msra.mxu0 %v1381
    %3486 = vmatprep.subr.bf16.mxu0 0
    %3487 = vmatpush1.bf16.msra.mxu0 0
    %3488 = vmatprep.subr.bf16.mxu0 0
    %3489 = vmatpush1.bf16.msra.mxu0 0
    %3490 = vmatprep.subr.bf16.mxu0 0
    %3491 = vmatpush1.bf16.msra.mxu0 0
    %3492 = vmatprep.subr.bf16.mxu0 0
    %3493 = vmatpush1.bf16.msra.mxu0 0
    %3494 = vmatprep.subr.bf16.mxu0 0
    %3495 = vmatpush1.bf16.msra.mxu0 0
    %3496 = vmatprep.subr.bf16.mxu0 0
    %3497 = vmatpush1.bf16.msra.mxu0 0
    %3498 = vmatprep.subr.bf16.mxu0 0
    %3499 = vmatpush1.bf16.msra.mxu0 0
    %3500 = vmatprep.subr.bf16.mxu0 0
    %3501 = vmatpush1.bf16.msra.mxu0 0
    %3502 = vmatprep.mubr.bf16.mxu0 0
    %3503 = vmatmul.mubr.bf16.gmra.mrb[0].mxu0 %v3376
    %v3504 = vpop.f32.mrb[0].mxu0
    %v3505 = vadd.f32 %v1056, %v3504
    %v3506 = vpop.f32.mrb[0].mxu0
    %v3507 = vadd.f32 %v1060, %v3506
    %v3508 = vpop.f32.mrb[0].mxu0
    %v3509 = vadd.f32 %v1056, %v3508
    %v3510 = vpop.f32.mrb[0].mxu0
    %v3511 = vadd.f32 %v1060, %v3510
    %3512 = vdwg.mxu0
    %3513 = vmatprep.subr.bf16.mxu0 0
    %3514 = vmatpush1.bf16.msra.mxu0 %v1362
    %3515 = vmatprep.subr.bf16.mxu0 0
    %3516 = vmatpush1.bf16.msra.mxu0 %v1365
    %3517 = vmatprep.subr.bf16.mxu0 0
    %3518 = vmatpush1.bf16.msra.mxu0 %v1368
    %3519 = vmatprep.subr.bf16.mxu0 0
    %3520 = vmatpush1.bf16.msra.mxu0 %v1371
    %3521 = vmatprep.subr.bf16.mxu0 0
    %3522 = vmatpush1.bf16.msra.mxu0 %v1374
    %3523 = vmatprep.subr.bf16.mxu0 0
    %3524 = vmatpush1.bf16.msra.mxu0 %v1377
    %3525 = vmatprep.subr.bf16.mxu0 0
    %3526 = vmatpush1.bf16.msra.mxu0 %v1380
    %3527 = vmatprep.subr.bf16.mxu0 0
    %3528 = vmatpush1.bf16.msra.mxu0 %v1383
    %3529 = vmatprep.subr.bf16.mxu0 0
    %3530 = vmatpush1.bf16.msra.mxu0 0
    %3531 = vmatprep.subr.bf16.mxu0 0
    %3532 = vmatpush1.bf16.msra.mxu0 0
    %3533 = vmatprep.subr.bf16.mxu0 0
    %3534 = vmatpush1.bf16.msra.mxu0 0
    %3535 = vmatprep.subr.bf16.mxu0 0
    %3536 = vmatpush1.bf16.msra.mxu0 0
    %3537 = vmatprep.subr.bf16.mxu0 0
    %3538 = vmatpush1.bf16.msra.mxu0 0
    %3539 = vmatprep.subr.bf16.mxu0 0
    %3540 = vmatpush1.bf16.msra.mxu0 0
    %3541 = vmatprep.subr.bf16.mxu0 0
    %3542 = vmatpush1.bf16.msra.mxu0 0
    %3543 = vmatprep.subr.bf16.mxu0 0
    %3544 = vmatpush1.bf16.msra.mxu0 0
    %3545 = vmatprep.mubr.bf16.mxu0 0
    %3546 = vmatmul.mubr.bf16.gmra.mrb[0].mxu0 %v3376
    %v3547 = vpop.f32.mrb[0].mxu0
    %v3548 = vadd.f32 %v1064, %v3547
    %v3549 = vpop.f32.mrb[0].mxu0
    %v3550 = vpop.f32.mrb[0].mxu0
    %v3551 = vadd.f32 %v1064, %v3550
    %v3552 = vpop.f32.mrb[0].mxu0
    %3553 = vdwg.mxu0
    %s3554 = smul.addr %s1504, 8
    %s3555 = scalar_lea.vmem [#allocation2], %s3554
    %v3556 = vld [vmem:[%s3555] sm:$0xff]
    %v3557 = vld [vmem:[%s3555 + $0x8] sm:$0xff]
    %v3558 = vld [vmem:[%s3555 + $0x10] sm:$0xff]
    %v3559 = vunpack.c.l.bf16 %v3556
    %v3560 = vunpack.c.l.bf16 %v3557
    %v3561 = vunpack.c.l.bf16 %v3558
    %v3562 = vunpack.c.h.bf16 %v3556
    %v3563 = vunpack.c.h.bf16 %v3557
    %v3564 = vunpack.c.h.bf16 %v3558
    %s3565 = smul.addr %s1492, 8
    %s3566 = scalar_lea.vmem [#allocation3], %s3565
    %v3567 = vld [vmem:[%s3566] sm:$0xff]
    %v3568 = vld [vmem:[%s3566 + $0x8] sm:$0xff]
    %v3569 = vld [vmem:[%s3566 + $0x10] sm:$0xff]
    %v3570 = vunpack.c.l.bf16 %v3567
    %v3571 = vunpack.c.l.bf16 %v3568
    %v3572 = vunpack.c.l.bf16 %v3569
    %v3573 = vunpack.c.h.bf16 %v3567
    %v3574 = vunpack.c.h.bf16 %v3568
    %v3575 = vunpack.c.h.bf16 %v3569
    %v3576 = vadd.f32 %v3559, %v3421
    %v3577 = vadd.f32 %v3560, %v3423
    %v3578 = vadd.f32 %v3562, %v3425
    %v3579 = vadd.f32 %v3563, %v3427
    %v3580 = vxor.u32 %v3576, 2147483648
    %v3581 = vxor.u32 %v3577, 2147483648
    %v3582 = vxor.u32 %v3578, 2147483648
    %v3583 = vxor.u32 %v3579, 2147483648
    %v3584 = vmul.f32 %v3580, 1.442695
    %v3585 = vpow.pop %v3584
    %v3586 = vmul.f32 %v3581, 1.442695
    %v3587 = vpow.pop %v3586
    %v3588 = vmul.f32 %v3582, 1.442695
    %v3589 = vpow.pop %v3588
    %v3590 = vmul.f32 %v3583, 1.442695
    %v3591 = vpow.pop %v3590
    %v3592 = vadd.f32 %v3585, 1.0
    %v3593 = vadd.f32 %v3587, 1.0
    %v3594 = vadd.f32 %v3589, 1.0
    %v3595 = vadd.f32 %v3591, 1.0
    %v3596 = vrcp.pop %v3592
    %v3597 = vmul.f32 1.0, %v3596
    %v3598 = vrcp.pop %v3593
    %v3599 = vmul.f32 1.0, %v3598
    %v3600 = vrcp.pop %v3594
    %v3601 = vmul.f32 1.0, %v3600
    %v3602 = vrcp.pop %v3595
    %v3603 = vmul.f32 1.0, %v3602
    %v3604 = vmul.f32 %v3597, %v3464
    %v3605 = vmul.f32 %v3601, %v3467
    %v3606 = vadd.f32 %v3561, %v3604
    %v3607 = vadd.f32 %v3564, %v3605
    %v3608 = vtanh.pop %v3606
    %v3609 = vtanh.pop %v3607
    %v3610 = vsub.f32 %v3324, %v3608
    %v3611 = vsub.f32 %v3325, %v3609
    %v3612 = vmul.f32 %v3599, %v3610
    %v3613 = vmul.f32 %v3603, %v3611
    %v3614 = vadd.f32 %v3608, %v3612
    %v3615 = vadd.f32 %v3609, %v3613
    %v3616 = vadd.f32 %v3570, %v3505
    %v3617 = vadd.f32 %v3571, %v3507
    %v3618 = vadd.f32 %v3573, %v3509
    %v3619 = vadd.f32 %v3574, %v3511
    %v3620 = vxor.u32 %v3616, 2147483648
    %v3621 = vxor.u32 %v3617, 2147483648
    %v3622 = vxor.u32 %v3618, 2147483648
    %v3623 = vxor.u32 %v3619, 2147483648
    %v3624 = vmul.f32 %v3620, 1.442695
    %v3625 = vpow.pop %v3624
    %v3626 = vmul.f32 %v3621, 1.442695
    %v3627 = vpow.pop %v3626
    %v3628 = vmul.f32 %v3622, 1.442695
    %v3629 = vpow.pop %v3628
    %v3630 = vmul.f32 %v3623, 1.442695
    %v3631 = vpow.pop %v3630
    %v3632 = vadd.f32 %v3625, 1.0
    %v3633 = vadd.f32 %v3627, 1.0
    %v3634 = vadd.f32 %v3629, 1.0
    %v3635 = vadd.f32 %v3631, 1.0
    %v3636 = vrcp.pop %v3632
    %v3637 = vmul.f32 1.0, %v3636
    %v3638 = vrcp.pop %v3633
    %v3639 = vmul.f32 1.0, %v3638
    %v3640 = vrcp.pop %v3634
    %v3641 = vmul.f32 1.0, %v3640
    %v3642 = vrcp.pop %v3635
    %v3643 = vmul.f32 1.0, %v3642
    %v3644 = vmul.f32 %v3637, %v3548
    %v3645 = vmul.f32 %v3641, %v3551
    %v3646 = vadd.f32 %v3572, %v3644
    %v3647 = vadd.f32 %v3575, %v3645
    %v3648 = vtanh.pop %v3646
    %v3649 = vtanh.pop %v3647
    %v3650 = vsub.f32 %v3364, %v3648
    %v3651 = vsub.f32 %v3365, %v3649
    %v3652 = vmul.f32 %v3639, %v3650
    %v3653 = vmul.f32 %v3643, %v3651
    %v3654 = vadd.f32 %v3648, %v3652
    %v3655 = vadd.f32 %v3649, %v3653
    %v3656 = vpack.c.bf16 %v3615, %v3614
    %v3658 = vunpack.c.l.b16 %v3656
    %v3659 = vunpack.c.h.b16 %v3656
    %v3660 = vpack.c.b16 %v3658, %v3658
    %v3661 = vpack.c.b16 %v3659, %v3659
    %3664 = vst [vmem:[%s1619] sm:$0xf] %v3660
    %3665 = vst [vmem:[%s1619 + $0x8] sm:$0xf] %v3661
    %v3666 = vpack.c.bf16 %v3655, %v3654
    %v3668 = vunpack.c.l.b16 %v3666
    %v3669 = vunpack.c.h.b16 %v3666
    %v3670 = vpack.c.b16 %v3668, %v3668
    %v3671 = vpack.c.b16 %v3669, %v3669
    %3674 = vst [vmem:[%s1606 + $0x4] sm:$0xf] %v3670
    %3675 = vst [vmem:[%s1606 + $0xc] sm:$0xf] %v3671
    %3676 = vst [vmem:[#allocation4] sm:$0xff] %v3614
    %3677 = vst [vmem:[#allocation4 + $0x10] sm:$0xff] %v3615
    %3678 = vst [vmem:[#allocation4 + $0x8] sm:$0xff] %v3654
    %3679 = vst [vmem:[#allocation4 + $0x18] sm:$0xff] %v3655
    // Predicated region
    $region38: #{rnn_forward.2} parent=1 // pred_check
      _
    $region39: #{rnn_forward.2} parent=1 // pred_check_branch
      %3681 = sbr.rel (0) target = $region41
    $region40: #{rnn_forward.2} parent=1 // pred_region
      _
    $region41: #{rnn_forward.2} parent=1 // pred_fallthru
      _
    // Predicated region
    $region42: #{rnn_forward.2} parent=1 // pred_check
      _
    $region43: #{rnn_forward.2} parent=1 // pred_check_branch
      %3683 = sbr.rel (0) target = $region45
    $region44: #{rnn_forward.2} parent=1 // pred_region
      %s3685 = ssub.s32 512, 512
      %3686 = vsyncadd [#allocation5], %s3685
      %s3687 = sshll.u32 [#allocation4], 4
      %s3688 = int_to_ptr.vmem [resolvable:$true] %s3687
      %3693 = dma.vmem_to_hbm [thread:$0]  %s3688, 512, %s10, [#allocation5], 256, 256, 16
    $region45: #{rnn_forward.2} parent=1 // pred_fallthru
      _
    // Predicated region
    $region46: #{rnn_forward.2} parent=1 // pred_check
      _
    $region47: #{rnn_forward.2} parent=1 // pred_check_branch
      %3695 = sbr.rel (0) target = $region49
    $region48: #{rnn_forward.2} parent=1 // pred_region
      _
    $region49: #{rnn_forward.2} parent=1 // pred_fallthru
      _
    // Predicated region
    $region50: #{rnn_forward.2} parent=1 // pred_check
      _
    $region51: #{rnn_forward.2} parent=1 // pred_check_branch
      %3697 = sbr.rel (0) target = $region53
    $region52: #{rnn_forward.2} parent=1 // pred_region
      %3698 = dma.done [#allocation5], 512
    $region53: #{rnn_forward.2} parent=1 // pred_fallthru
      _
    %3699 = vsyncpa [#allocation5], 1

// kernel: rnn_forward.3
$region0: #{rnn_forward.3}
  #allocation0 [shape = 'u32[]', space=smem, size = 0x4, offset = 0x4, fixed_abs, tag = 'smem constant byte address 0x4 - core index']
  #allocation1 [shape = 'u32[144,128]{1,0:T(1,128)}', space=vmem, size = 0x12000, scoped, tag = 'internal scratch']
  #allocation2 [shape = 'bf16[128,384]{1,0:T(16,128)(2,1)}', space=vmem, size = 0x18000, scoped, tag = 'scratch operand']
  #allocation3 [shape = 'bf16[128,384]{1,0:T(16,128)(2,1)}', space=vmem, size = 0x18000, scoped, tag = 'scratch operand']
  %s0 = inlined_call_operand.vmem [shape: bf16[128,256], index: 0, kind: input, shape index: {}]
  %s1 = inlined_call_operand.vmem [shape: bf16[256,384], index: 1, kind: input, shape index: {}]
  %s2 = inlined_call_operand.vmem [shape: bf16[256,384], index: 2, kind: input, shape index: {}]
  %s3 = inlined_call_operand.vmem [shape: bf16[128,384], index: 3, kind: input, shape index: {}]
  %s4 = inlined_call_operand.vmem [shape: bf16[128,384], index: 4, kind: input, shape index: {}]
  %s5 = inlined_call_operand.vmem [shape: f32[1,384], index: 5, kind: input, shape index: {}]
  %s6 = inlined_call_operand.vmem [shape: f32[1,384], index: 6, kind: input, shape index: {}]
  %s7 = inlined_call_operand.vmem [shape: f32[1,384], index: 7, kind: input, shape index: {}]
  %s8 = inlined_call_operand.vmem [shape: f32[1,384], index: 8, kind: input, shape index: {}]
  %s9 = inlined_call_operand.hbm [shape: bf16[128,256], index: 9, kind: output, shape index: {0}]
  %s10 = inlined_call_operand.vmem [shape: f32[16,256], index: 10, kind: output, shape index: {1}]
  %11 = xla_tuple %s9, %s10
  %s12 = sld [smem:[#allocation0]]
  $region54: #{rnn_forward.3} parent=0
    _
  %s14 = ssub.s32 1, %s12
  %s15 = scalar_select 0, %s14, %s12
  $region1: #{rnn_forward.3} parent=0
    #allocation4 [shape = 'u8[65536]{0}', space=vmem, size = 0x10000, scoped, tag = 'output window, operand 0, single buffered']
    #allocation5 [shape = 's32[1]{0}', space=sflag, size = 0x4, scoped, tag = 'scoped memory for rnn_forward.3']
    %16 = vsyncpa [#allocation5], 0
    // Predicated region
    $region2: #{rnn_forward.3} parent=1 // pred_check
      _
    $region3: #{rnn_forward.3} parent=1 // pred_check_branch
      %18 = sbr.rel (0) target = $region5
    $region4: #{rnn_forward.3} parent=1 // pred_region
      _
    $region5: #{rnn_forward.3} parent=1 // pred_fallthru
      _
    // Predicated region
    $region6: #{rnn_forward.3} parent=1 // pred_check
      _
    $region7: #{rnn_forward.3} parent=1 // pred_check_branch
      %20 = sbr.rel (0) target = $region9
    $region8: #{rnn_forward.3} parent=1 // pred_region
      _
    $region9: #{rnn_forward.3} parent=1 // pred_fallthru
      _
    // Predicated region
    $region10: #{rnn_forward.3} parent=1 // pred_check
      _
    $region11: #{rnn_forward.3} parent=1 // pred_check_branch
      %22 = sbr.rel (0) target = $region13
    $region12: #{rnn_forward.3} parent=1 // pred_region
      _
    $region13: #{rnn_forward.3} parent=1 // pred_fallthru
      _
    // Predicated region
    $region14: #{rnn_forward.3} parent=1 // pred_check
      _
    $region15: #{rnn_forward.3} parent=1 // pred_check_branch
      %24 = sbr.rel (0) target = $region17
    $region16: #{rnn_forward.3} parent=1 // pred_region
      _
    $region17: #{rnn_forward.3} parent=1 // pred_fallthru
      _
    // Predicated region
    $region18: #{rnn_forward.3} parent=1 // pred_check
      _
    $region19: #{rnn_forward.3} parent=1 // pred_check_branch
      %26 = sbr.rel (0) target = $region21
    $region20: #{rnn_forward.3} parent=1 // pred_region
      _
    $region21: #{rnn_forward.3} parent=1 // pred_fallthru
      _
    // Predicated region
    $region22: #{rnn_forward.3} parent=1 // pred_check
      _
    $region23: #{rnn_forward.3} parent=1 // pred_check_branch
      %28 = sbr.rel (0) target = $region25
    $region24: #{rnn_forward.3} parent=1 // pred_region
      _
    $region25: #{rnn_forward.3} parent=1 // pred_fallthru
      _
    // Predicated region
    $region26: #{rnn_forward.3} parent=1 // pred_check
      _
    $region27: #{rnn_forward.3} parent=1 // pred_check_branch
      %30 = sbr.rel (0) target = $region29
    $region28: #{rnn_forward.3} parent=1 // pred_region
      _
    $region29: #{rnn_forward.3} parent=1 // pred_fallthru
      _
    // Predicated region
    $region30: #{rnn_forward.3} parent=1 // pred_check
      _
    $region31: #{rnn_forward.3} parent=1 // pred_check_branch
      %32 = sbr.rel (0) target = $region33
    $region32: #{rnn_forward.3} parent=1 // pred_region
      _
    $region33: #{rnn_forward.3} parent=1 // pred_fallthru
      _
    // Predicated region
    $region34: #{rnn_forward.3} parent=1 // pred_check
      _
    $region35: #{rnn_forward.3} parent=1 // pred_check_branch
      %34 = sbr.rel (0) target = $region37
    $region36: #{rnn_forward.3} parent=1 // pred_region
      _
    $region37: #{rnn_forward.3} parent=1 // pred_fallthru
      _
    %v36 = vld [vmem:[%s0] sm:$0xff]
    %v37 = vld [vmem:[%s0 + $0x8] sm:$0xff]
    %v38 = vld [vmem:[%s0 + $0x10] sm:$0xff]
    %v39 = vld [vmem:[%s0 + $0x18] sm:$0xff]
    %v40 = vld [vmem:[%s0 + $0x20] sm:$0xff]
    %v41 = vld [vmem:[%s0 + $0x28] sm:$0xff]
    %v42 = vld [vmem:[%s0 + $0x30] sm:$0xff]
    %v43 = vld [vmem:[%s0 + $0x38] sm:$0xff]
    %v44 = vld [vmem:[%s0 + $0x40] sm:$0xff]
    %v45 = vld [vmem:[%s0 + $0x48] sm:$0xff]
    %v46 = vld [vmem:[%s0 + $0x50] sm:$0xff]
    %v47 = vld [vmem:[%s0 + $0x58] sm:$0xff]
    %v48 = vld [vmem:[%s0 + $0x60] sm:$0xff]
    %v49 = vld [vmem:[%s0 + $0x68] sm:$0xff]
    %v50 = vld [vmem:[%s0 + $0x70] sm:$0xff]
    %v51 = vld [vmem:[%s0 + $0x78] sm:$0xff]
    %v52 = vld [vmem:[%s1] sm:$0xff]
    %v53 = vld [vmem:[%s1 + $0x8] sm:$0xf]
    %v54 = vld [vmem:[%s1 + $0xc] sm:$0xff]
    %v55 = vld [vmem:[%s1 + $0x14] sm:$0xf]
    %v56 = vld [vmem:[%s1 + $0x18] sm:$0xff]
    %v57 = vld [vmem:[%s1 + $0x20] sm:$0xf]
    %v58 = vld [vmem:[%s1 + $0x24] sm:$0xff]
    %v59 = vld [vmem:[%s1 + $0x2c] sm:$0xf]
    %v60 = vld [vmem:[%s1 + $0x30] sm:$0xff]
    %v61 = vld [vmem:[%s1 + $0x38] sm:$0xf]
    %v62 = vld [vmem:[%s1 + $0x3c] sm:$0xff]
    %v63 = vld [vmem:[%s1 + $0x44] sm:$0xf]
    %v64 = vld [vmem:[%s1 + $0x48] sm:$0xff]
    %v65 = vld [vmem:[%s1 + $0x50] sm:$0xf]
    %v66 = vld [vmem:[%s1 + $0x54] sm:$0xff]
    %v67 = vld [vmem:[%s1 + $0x5c] sm:$0xf]
    %v68 = vld [vmem:[%s1 + $0x60] sm:$0xff]
    %v69 = vld [vmem:[%s1 + $0x68] sm:$0xf]
    %v70 = vld [vmem:[%s1 + $0x6c] sm:$0xff]
    %v71 = vld [vmem:[%s1 + $0x74] sm:$0xf]
    %v72 = vld [vmem:[%s1 + $0x78] sm:$0xff]
    %v73 = vld [vmem:[%s1 + $0x80] sm:$0xf]
    %v74 = vld [vmem:[%s1 + $0x84] sm:$0xff]
    %v75 = vld [vmem:[%s1 + $0x8c] sm:$0xf]
    %v76 = vld [vmem:[%s1 + $0x90] sm:$0xff]
    %v77 = vld [vmem:[%s1 + $0x98] sm:$0xf]
    %v78 = vld [vmem:[%s1 + $0x9c] sm:$0xff]
    %v79 = vld [vmem:[%s1 + $0xa4] sm:$0xf]
    %v80 = vld [vmem:[%s1 + $0xa8] sm:$0xff]
    %v81 = vld [vmem:[%s1 + $0xb0] sm:$0xf]
    %v82 = vld [vmem:[%s1 + $0xb4] sm:$0xff]
    %v83 = vld [vmem:[%s1 + $0xbc] sm:$0xf]
    %v84 = vld [vmem:[%s1 + $0xc0] sm:$0xff]
    %v85 = vld [vmem:[%s1 + $0xc8] sm:$0xf]
    %v86 = vld [vmem:[%s1 + $0xcc] sm:$0xff]
    %v87 = vld [vmem:[%s1 + $0xd4] sm:$0xf]
    %v88 = vld [vmem:[%s1 + $0xd8] sm:$0xff]
    %v89 = vld [vmem:[%s1 + $0xe0] sm:$0xf]
    %v90 = vld [vmem:[%s1 + $0xe4] sm:$0xff]
    %v91 = vld [vmem:[%s1 + $0xec] sm:$0xf]
    %v92 = vld [vmem:[%s1 + $0xf0] sm:$0xff]
    %v93 = vld [vmem:[%s1 + $0xf8] sm:$0xf]
    %v94 = vld [vmem:[%s1 + $0xfc] sm:$0xff]
    %v95 = vld [vmem:[%s1 + $0x104] sm:$0xf]
    %v96 = vld [vmem:[%s1 + $0x108] sm:$0xff]
    %v97 = vld [vmem:[%s1 + $0x110] sm:$0xf]
    %v98 = vld [vmem:[%s1 + $0x114] sm:$0xff]
    %v99 = vld [vmem:[%s1 + $0x11c] sm:$0xf]
    %v100 = vld [vmem:[%s1 + $0x120] sm:$0xff]
    %v101 = vld [vmem:[%s1 + $0x128] sm:$0xf]
    %v102 = vld [vmem:[%s1 + $0x12c] sm:$0xff]
    %v103 = vld [vmem:[%s1 + $0x134] sm:$0xf]
    %v104 = vld [vmem:[%s1 + $0x138] sm:$0xff]
    %v105 = vld [vmem:[%s1 + $0x140] sm:$0xf]
    %v106 = vld [vmem:[%s1 + $0x144] sm:$0xff]
    %v107 = vld [vmem:[%s1 + $0x14c] sm:$0xf]
    %v108 = vld [vmem:[%s1 + $0x150] sm:$0xff]
    %v109 = vld [vmem:[%s1 + $0x158] sm:$0xf]
    %v110 = vld [vmem:[%s1 + $0x15c] sm:$0xff]
    %v111 = vld [vmem:[%s1 + $0x164] sm:$0xf]
    %v112 = vld [vmem:[%s1 + $0x168] sm:$0xff]
    %v113 = vld [vmem:[%s1 + $0x170] sm:$0xf]
    %v114 = vld [vmem:[%s1 + $0x174] sm:$0xff]
    %v115 = vld [vmem:[%s1 + $0x17c] sm:$0xf]
    %v116 = vld [vmem:[%s5] sm:$0x7]
    %v118 = vlaneseq
    %v119 = vshrl.u32 %v118, 7
    %v120 = vsub.s32 0, %v119
    %v121 = vrot.slane %v116, %v120
    %v122 = vlaneseq
    %v123 = vshrl.u32 %v122, 7
    %v124 = vsub.s32 1, %v123
    %v125 = vrot.slane %v116, %v124
    %v126 = vlaneseq
    %v127 = vshrl.u32 %v126, 7
    %v128 = vsub.s32 2, %v127
    %v129 = vrot.slane %v116, %v128
    %v149 = vunpack.c.l.b16 %v36
    %v150 = vunpack.c.h.b16 %v36
    %v151 = vunpack.c.l.b16 %v37
    %v152 = vunpack.c.h.b16 %v37
    %v153 = vunpack.c.l.b16 %v38
    %v154 = vunpack.c.h.b16 %v38
    %v155 = vunpack.c.l.b16 %v39
    %v156 = vunpack.c.h.b16 %v39
    %v157 = vunpack.c.l.b16 %v40
    %v158 = vunpack.c.h.b16 %v40
    %v159 = vunpack.c.l.b16 %v41
    %v160 = vunpack.c.h.b16 %v41
    %v161 = vunpack.c.l.b16 %v42
    %v162 = vunpack.c.h.b16 %v42
    %v163 = vunpack.c.l.b16 %v43
    %v164 = vunpack.c.h.b16 %v43
    %v165 = vunpack.c.l.b16 %v44
    %v166 = vunpack.c.h.b16 %v44
    %v167 = vunpack.c.l.b16 %v45
    %v168 = vunpack.c.h.b16 %v45
    %v169 = vunpack.c.l.b16 %v46
    %v170 = vunpack.c.h.b16 %v46
    %v171 = vunpack.c.l.b16 %v47
    %v172 = vunpack.c.h.b16 %v47
    %v173 = vunpack.c.l.b16 %v48
    %v174 = vunpack.c.h.b16 %v48
    %v175 = vunpack.c.l.b16 %v49
    %v176 = vunpack.c.h.b16 %v49
    %v177 = vunpack.c.l.b16 %v50
    %v178 = vunpack.c.h.b16 %v50
    %v179 = vunpack.c.l.b16 %v51
    %v180 = vunpack.c.h.b16 %v51
    %v181 = vpack.c.b16 %v151, %v149
    %v182 = vpack.c.b16 %v152, %v150
    %v183 = vpack.c.b16 %v155, %v153
    %v184 = vpack.c.b16 %v156, %v154
    %v185 = vpack.c.b16 %v159, %v157
    %v186 = vpack.c.b16 %v160, %v158
    %v187 = vpack.c.b16 %v163, %v161
    %v188 = vpack.c.b16 %v164, %v162
    %v189 = vpack.c.b16 %v167, %v165
    %v190 = vpack.c.b16 %v168, %v166
    %v191 = vpack.c.b16 %v171, %v169
    %v192 = vpack.c.b16 %v172, %v170
    %v193 = vpack.c.b16 %v175, %v173
    %v194 = vpack.c.b16 %v176, %v174
    %v195 = vpack.c.b16 %v179, %v177
    %v196 = vpack.c.b16 %v180, %v178
    %v277 = vunpack.c.l.b16 %v52
    %v278 = vunpack.c.h.b16 %v52
    %v279 = vunpack.c.l.b16 %v53
    %v280 = vunpack.c.l.b16 %v54
    %v281 = vunpack.c.h.b16 %v54
    %v282 = vunpack.c.l.b16 %v55
    %v283 = vunpack.c.l.b16 %v56
    %v284 = vunpack.c.h.b16 %v56
    %v285 = vunpack.c.l.b16 %v57
    %v286 = vunpack.c.l.b16 %v58
    %v287 = vunpack.c.h.b16 %v58
    %v288 = vunpack.c.l.b16 %v59
    %v289 = vunpack.c.l.b16 %v60
    %v290 = vunpack.c.h.b16 %v60
    %v291 = vunpack.c.l.b16 %v61
    %v292 = vunpack.c.l.b16 %v62
    %v293 = vunpack.c.h.b16 %v62
    %v294 = vunpack.c.l.b16 %v63
    %v295 = vunpack.c.l.b16 %v64
    %v296 = vunpack.c.h.b16 %v64
    %v297 = vunpack.c.l.b16 %v65
    %v298 = vunpack.c.l.b16 %v66
    %v299 = vunpack.c.h.b16 %v66
    %v300 = vunpack.c.l.b16 %v67
    %v301 = vunpack.c.l.b16 %v68
    %v302 = vunpack.c.h.b16 %v68
    %v303 = vunpack.c.l.b16 %v69
    %v304 = vunpack.c.l.b16 %v70
    %v305 = vunpack.c.h.b16 %v70
    %v306 = vunpack.c.l.b16 %v71
    %v307 = vunpack.c.l.b16 %v72
    %v308 = vunpack.c.h.b16 %v72
    %v309 = vunpack.c.l.b16 %v73
    %v310 = vunpack.c.l.b16 %v74
    %v311 = vunpack.c.h.b16 %v74
    %v312 = vunpack.c.l.b16 %v75
    %v313 = vunpack.c.l.b16 %v76
    %v314 = vunpack.c.h.b16 %v76
    %v315 = vunpack.c.l.b16 %v77
    %v316 = vunpack.c.l.b16 %v78
    %v317 = vunpack.c.h.b16 %v78
    %v318 = vunpack.c.l.b16 %v79
    %v319 = vunpack.c.l.b16 %v80
    %v320 = vunpack.c.h.b16 %v80
    %v321 = vunpack.c.l.b16 %v81
    %v322 = vunpack.c.l.b16 %v82
    %v323 = vunpack.c.h.b16 %v82
    %v324 = vunpack.c.l.b16 %v83
    %v325 = vunpack.c.l.b16 %v84
    %v326 = vunpack.c.h.b16 %v84
    %v327 = vunpack.c.l.b16 %v85
    %v328 = vunpack.c.l.b16 %v86
    %v329 = vunpack.c.h.b16 %v86
    %v330 = vunpack.c.l.b16 %v87
    %v331 = vunpack.c.l.b16 %v88
    %v332 = vunpack.c.h.b16 %v88
    %v333 = vunpack.c.l.b16 %v89
    %v334 = vunpack.c.l.b16 %v90
    %v335 = vunpack.c.h.b16 %v90
    %v336 = vunpack.c.l.b16 %v91
    %v337 = vunpack.c.l.b16 %v92
    %v338 = vunpack.c.h.b16 %v92
    %v339 = vunpack.c.l.b16 %v93
    %v340 = vunpack.c.l.b16 %v94
    %v341 = vunpack.c.h.b16 %v94
    %v342 = vunpack.c.l.b16 %v95
    %v343 = vunpack.c.l.b16 %v96
    %v344 = vunpack.c.h.b16 %v96
    %v345 = vunpack.c.l.b16 %v97
    %v346 = vunpack.c.l.b16 %v98
    %v347 = vunpack.c.h.b16 %v98
    %v348 = vunpack.c.l.b16 %v99
    %v349 = vunpack.c.l.b16 %v100
    %v350 = vunpack.c.h.b16 %v100
    %v351 = vunpack.c.l.b16 %v101
    %v352 = vunpack.c.l.b16 %v102
    %v353 = vunpack.c.h.b16 %v102
    %v354 = vunpack.c.l.b16 %v103
    %v355 = vunpack.c.l.b16 %v104
    %v356 = vunpack.c.h.b16 %v104
    %v357 = vunpack.c.l.b16 %v105
    %v358 = vunpack.c.l.b16 %v106
    %v359 = vunpack.c.h.b16 %v106
    %v360 = vunpack.c.l.b16 %v107
    %v361 = vunpack.c.l.b16 %v108
    %v362 = vunpack.c.h.b16 %v108
    %v363 = vunpack.c.l.b16 %v109
    %v364 = vunpack.c.l.b16 %v110
    %v365 = vunpack.c.h.b16 %v110
    %v366 = vunpack.c.l.b16 %v111
    %v367 = vunpack.c.l.b16 %v112
    %v368 = vunpack.c.h.b16 %v112
    %v369 = vunpack.c.l.b16 %v113
    %v370 = vunpack.c.l.b16 %v114
    %v371 = vunpack.c.h.b16 %v114
    %v372 = vunpack.c.l.b16 %v115
    %v373 = vpack.c.b16 %v280, %v277
    %v374 = vpack.c.b16 %v281, %v278
    %v375 = vpack.c.b16 %v282, %v279
    %v376 = vpack.c.b16 %v286, %v283
    %v377 = vpack.c.b16 %v287, %v284
    %v378 = vpack.c.b16 %v288, %v285
    %v379 = vpack.c.b16 %v292, %v289
    %v380 = vpack.c.b16 %v293, %v290
    %v381 = vpack.c.b16 %v294, %v291
    %v382 = vpack.c.b16 %v298, %v295
    %v383 = vpack.c.b16 %v299, %v296
    %v384 = vpack.c.b16 %v300, %v297
    %v385 = vpack.c.b16 %v304, %v301
    %v386 = vpack.c.b16 %v305, %v302
    %v387 = vpack.c.b16 %v306, %v303
    %v388 = vpack.c.b16 %v310, %v307
    %v389 = vpack.c.b16 %v311, %v308
    %v390 = vpack.c.b16 %v312, %v309
    %v391 = vpack.c.b16 %v316, %v313
    %v392 = vpack.c.b16 %v317, %v314
    %v393 = vpack.c.b16 %v318, %v315
    %v394 = vpack.c.b16 %v322, %v319
    %v395 = vpack.c.b16 %v323, %v320
    %v396 = vpack.c.b16 %v324, %v321
    %v397 = vpack.c.b16 %v328, %v325
    %v398 = vpack.c.b16 %v329, %v326
    %v399 = vpack.c.b16 %v330, %v327
    %v400 = vpack.c.b16 %v334, %v331
    %v401 = vpack.c.b16 %v335, %v332
    %v402 = vpack.c.b16 %v336, %v333
    %v403 = vpack.c.b16 %v340, %v337
    %v404 = vpack.c.b16 %v341, %v338
    %v405 = vpack.c.b16 %v342, %v339
    %v406 = vpack.c.b16 %v346, %v343
    %v407 = vpack.c.b16 %v347, %v344
    %v408 = vpack.c.b16 %v348, %v345
    %v409 = vpack.c.b16 %v352, %v349
    %v410 = vpack.c.b16 %v353, %v350
    %v411 = vpack.c.b16 %v354, %v351
    %v412 = vpack.c.b16 %v358, %v355
    %v413 = vpack.c.b16 %v359, %v356
    %v414 = vpack.c.b16 %v360, %v357
    %v415 = vpack.c.b16 %v364, %v361
    %v416 = vpack.c.b16 %v365, %v362
    %v417 = vpack.c.b16 %v366, %v363
    %v418 = vpack.c.b16 %v370, %v367
    %v419 = vpack.c.b16 %v371, %v368
    %v420 = vpack.c.b16 %v372, %v369
    %469 = vmatprep.subr.bf16.mxu0 %v374
    %470 = vmatpush1.bf16.msra.mxu0 %v373
    %471 = vmatprep.subr.bf16.mxu0 %v377
    %472 = vmatpush1.bf16.msra.mxu0 %v376
    %473 = vmatprep.subr.bf16.mxu0 %v380
    %474 = vmatpush1.bf16.msra.mxu0 %v379
    %475 = vmatprep.subr.bf16.mxu0 %v383
    %476 = vmatpush1.bf16.msra.mxu0 %v382
    %477 = vmatprep.subr.bf16.mxu0 %v386
    %478 = vmatpush1.bf16.msra.mxu0 %v385
    %479 = vmatprep.subr.bf16.mxu0 %v389
    %480 = vmatpush1.bf16.msra.mxu0 %v388
    %481 = vmatprep.subr.bf16.mxu0 %v392
    %482 = vmatpush1.bf16.msra.mxu0 %v391
    %483 = vmatprep.subr.bf16.mxu0 %v395
    %484 = vmatpush1.bf16.msra.mxu0 %v394
    %485 = vmatprep.subr.bf16.mxu0 %v398
    %486 = vmatpush1.bf16.msra.mxu0 %v397
    %487 = vmatprep.subr.bf16.mxu0 %v401
    %488 = vmatpush1.bf16.msra.mxu0 %v400
    %489 = vmatprep.subr.bf16.mxu0 %v404
    %490 = vmatpush1.bf16.msra.mxu0 %v403
    %491 = vmatprep.subr.bf16.mxu0 %v407
    %492 = vmatpush1.bf16.msra.mxu0 %v406
    %493 = vmatprep.subr.bf16.mxu0 %v410
    %494 = vmatpush1.bf16.msra.mxu0 %v409
    %495 = vmatprep.subr.bf16.mxu0 %v413
    %496 = vmatpush1.bf16.msra.mxu0 %v412
    %497 = vmatprep.subr.bf16.mxu0 %v416
    %498 = vmatpush1.bf16.msra.mxu0 %v415
    %499 = vmatprep.subr.bf16.mxu0 %v419
    %500 = vmatpush1.bf16.msra.mxu0 %v418
    %501 = vmatprep.mubr.bf16.mxu0 %v182
    %502 = vmatmul.mubr.bf16.gmra.mrb[0].mxu0 %v181
    %v503 = vpop.f32.mrb[0].mxu0
    %v504 = vadd.f32 %v121, %v503
    %v505 = vpop.f32.mrb[0].mxu0
    %v506 = vadd.f32 %v125, %v505
    %v507 = vpop.f32.mrb[0].mxu0
    %v508 = vadd.f32 %v121, %v507
    %v509 = vpop.f32.mrb[0].mxu0
    %v510 = vadd.f32 %v125, %v509
    %511 = vmatprep.mubr.bf16.mxu0 %v184
    %512 = vmatmul.mubr.bf16.gmra.mrb[0].mxu0 %v183
    %v513 = vpop.f32.mrb[0].mxu0
    %v514 = vadd.f32 %v121, %v513
    %v515 = vpop.f32.mrb[0].mxu0
    %v516 = vadd.f32 %v125, %v515
    %v517 = vpop.f32.mrb[0].mxu0
    %v518 = vadd.f32 %v121, %v517
    %v519 = vpop.f32.mrb[0].mxu0
    %v520 = vadd.f32 %v125, %v519
    %521 = vmatprep.mubr.bf16.mxu0 %v186
    %522 = vmatmul.mubr.bf16.gmra.mrb[0].mxu0 %v185
    %v523 = vpop.f32.mrb[0].mxu0
    %v524 = vadd.f32 %v121, %v523
    %v525 = vpop.f32.mrb[0].mxu0
    %v526 = vadd.f32 %v125, %v525
    %v527 = vpop.f32.mrb[0].mxu0
    %v528 = vadd.f32 %v121, %v527
    %v529 = vpop.f32.mrb[0].mxu0
    %v530 = vadd.f32 %v125, %v529
    %531 = vmatprep.mubr.bf16.mxu0 %v188
    %532 = vmatmul.mubr.bf16.gmra.mrb[0].mxu0 %v187
    %v533 = vpop.f32.mrb[0].mxu0
    %v534 = vadd.f32 %v121, %v533
    %v535 = vpop.f32.mrb[0].mxu0
    %v536 = vadd.f32 %v125, %v535
    %v537 = vpop.f32.mrb[0].mxu0
    %v538 = vadd.f32 %v121, %v537
    %v539 = vpop.f32.mrb[0].mxu0
    %v540 = vadd.f32 %v125, %v539
    %541 = vmatprep.mubr.bf16.mxu0 %v190
    %542 = vmatmul.mubr.bf16.gmra.mrb[0].mxu0 %v189
    %v543 = vpop.f32.mrb[0].mxu0
    %v544 = vadd.f32 %v121, %v543
    %v545 = vpop.f32.mrb[0].mxu0
    %v546 = vadd.f32 %v125, %v545
    %v547 = vpop.f32.mrb[0].mxu0
    %v548 = vadd.f32 %v121, %v547
    %v549 = vpop.f32.mrb[0].mxu0
    %v550 = vadd.f32 %v125, %v549
    %551 = vmatprep.mubr.bf16.mxu0 %v192
    %552 = vmatmul.mubr.bf16.gmra.mrb[0].mxu0 %v191
    %v553 = vpop.f32.mrb[0].mxu0
    %v554 = vadd.f32 %v121, %v553
    %v555 = vpop.f32.mrb[0].mxu0
    %v556 = vadd.f32 %v125, %v555
    %v557 = vpop.f32.mrb[0].mxu0
    %v558 = vadd.f32 %v121, %v557
    %v559 = vpop.f32.mrb[0].mxu0
    %v560 = vadd.f32 %v125, %v559
    %561 = vmatprep.mubr.bf16.mxu0 %v194
    %562 = vmatmul.mubr.bf16.gmra.mrb[0].mxu0 %v193
    %v563 = vpop.f32.mrb[0].mxu0
    %v564 = vadd.f32 %v121, %v563
    %v565 = vpop.f32.mrb[0].mxu0
    %v566 = vadd.f32 %v125, %v565
    %v567 = vpop.f32.mrb[0].mxu0
    %v568 = vadd.f32 %v121, %v567
    %v569 = vpop.f32.mrb[0].mxu0
    %v570 = vadd.f32 %v125, %v569
    %571 = vmatprep.mubr.bf16.mxu0 %v196
    %572 = vmatmul.mubr.bf16.gmra.mrb[0].mxu0 %v195
    %v573 = vpop.f32.mrb[0].mxu0
    %v574 = vadd.f32 %v121, %v573
    %v575 = vpop.f32.mrb[0].mxu0
    %v576 = vadd.f32 %v125, %v575
    %v577 = vpop.f32.mrb[0].mxu0
    %v578 = vadd.f32 %v121, %v577
    %v579 = vpop.f32.mrb[0].mxu0
    %v580 = vadd.f32 %v125, %v579
    %581 = vdwg.mxu0
    %582 = vmatprep.subr.bf16.mxu0 0
    %583 = vmatpush1.bf16.msra.mxu0 %v375
    %584 = vmatprep.subr.bf16.mxu0 0
    %585 = vmatpush1.bf16.msra.mxu0 %v378
    %586 = vmatprep.subr.bf16.mxu0 0
    %587 = vmatpush1.bf16.msra.mxu0 %v381
    %588 = vmatprep.subr.bf16.mxu0 0
    %589 = vmatpush1.bf16.msra.mxu0 %v384
    %590 = vmatprep.subr.bf16.mxu0 0
    %591 = vmatpush1.bf16.msra.mxu0 %v387
    %592 = vmatprep.subr.bf16.mxu0 0
    %593 = vmatpush1.bf16.msra.mxu0 %v390
    %594 = vmatprep.subr.bf16.mxu0 0
    %595 = vmatpush1.bf16.msra.mxu0 %v393
    %596 = vmatprep.subr.bf16.mxu0 0
    %597 = vmatpush1.bf16.msra.mxu0 %v396
    %598 = vmatprep.subr.bf16.mxu0 0
    %599 = vmatpush1.bf16.msra.mxu0 %v399
    %600 = vmatprep.subr.bf16.mxu0 0
    %601 = vmatpush1.bf16.msra.mxu0 %v402
    %602 = vmatprep.subr.bf16.mxu0 0
    %603 = vmatpush1.bf16.msra.mxu0 %v405
    %604 = vmatprep.subr.bf16.mxu0 0
    %605 = vmatpush1.bf16.msra.mxu0 %v408
    %606 = vmatprep.subr.bf16.mxu0 0
    %607 = vmatpush1.bf16.msra.mxu0 %v411
    %608 = vmatprep.subr.bf16.mxu0 0
    %609 = vmatpush1.bf16.msra.mxu0 %v414
    %610 = vmatprep.subr.bf16.mxu0 0
    %611 = vmatpush1.bf16.msra.mxu0 %v417
    %612 = vmatprep.subr.bf16.mxu0 0
    %613 = vmatpush1.bf16.msra.mxu0 %v420
    %614 = vmatprep.mubr.bf16.mxu0 %v182
    %615 = vmatmul.mubr.bf16.gmra.mrb[0].mxu0 %v181
    %v616 = vpop.f32.mrb[0].mxu0
    %v617 = vadd.f32 %v129, %v616
    %v618 = vpop.f32.mrb[0].mxu0
    %v619 = vpop.f32.mrb[0].mxu0
    %v620 = vadd.f32 %v129, %v619
    %v621 = vpop.f32.mrb[0].mxu0
    %622 = vmatprep.mubr.bf16.mxu0 %v184
    %623 = vmatmul.mubr.bf16.gmra.mrb[0].mxu0 %v183
    %v624 = vpop.f32.mrb[0].mxu0
    %v625 = vadd.f32 %v129, %v624
    %v626 = vpop.f32.mrb[0].mxu0
    %v627 = vpop.f32.mrb[0].mxu0
    %v628 = vadd.f32 %v129, %v627
    %v629 = vpop.f32.mrb[0].mxu0
    %630 = vmatprep.mubr.bf16.mxu0 %v186
    %631 = vmatmul.mubr.bf16.gmra.mrb[0].mxu0 %v185
    %v632 = vpop.f32.mrb[0].mxu0
    %v633 = vadd.f32 %v129, %v632
    %v634 = vpop.f32.mrb[0].mxu0
    %v635 = vpop.f32.mrb[0].mxu0
    %v636 = vadd.f32 %v129, %v635
    %v637 = vpop.f32.mrb[0].mxu0
    %638 = vmatprep.mubr.bf16.mxu0 %v188
    %639 = vmatmul.mubr.bf16.gmra.mrb[0].mxu0 %v187
    %v640 = vpop.f32.mrb[0].mxu0
    %v641 = vadd.f32 %v129, %v640
    %v642 = vpop.f32.mrb[0].mxu0
    %v643 = vpop.f32.mrb[0].mxu0
    %v644 = vadd.f32 %v129, %v643
    %v645 = vpop.f32.mrb[0].mxu0
    %646 = vmatprep.mubr.bf16.mxu0 %v190
    %647 = vmatmul.mubr.bf16.gmra.mrb[0].mxu0 %v189
    %v648 = vpop.f32.mrb[0].mxu0
    %v649 = vadd.f32 %v129, %v648
    %v650 = vpop.f32.mrb[0].mxu0
    %v651 = vpop.f32.mrb[0].mxu0
    %v652 = vadd.f32 %v129, %v651
    %v653 = vpop.f32.mrb[0].mxu0
    %654 = vmatprep.mubr.bf16.mxu0 %v192
    %655 = vmatmul.mubr.bf16.gmra.mrb[0].mxu0 %v191
    %v656 = vpop.f32.mrb[0].mxu0
    %v657 = vadd.f32 %v129, %v656
    %v658 = vpop.f32.mrb[0].mxu0
    %v659 = vpop.f32.mrb[0].mxu0
    %v660 = vadd.f32 %v129, %v659
    %v661 = vpop.f32.mrb[0].mxu0
    %662 = vmatprep.mubr.bf16.mxu0 %v194
    %663 = vmatmul.mubr.bf16.gmra.mrb[0].mxu0 %v193
    %v664 = vpop.f32.mrb[0].mxu0
    %v665 = vadd.f32 %v129, %v664
    %v666 = vpop.f32.mrb[0].mxu0
    %v667 = vpop.f32.mrb[0].mxu0
    %v668 = vadd.f32 %v129, %v667
    %v669 = vpop.f32.mrb[0].mxu0
    %670 = vmatprep.mubr.bf16.mxu0 %v196
    %671 = vmatmul.mubr.bf16.gmra.mrb[0].mxu0 %v195
    %v672 = vpop.f32.mrb[0].mxu0
    %v673 = vadd.f32 %v129, %v672
    %v674 = vpop.f32.mrb[0].mxu0
    %v675 = vpop.f32.mrb[0].mxu0
    %v676 = vadd.f32 %v129, %v675
    %v677 = vpop.f32.mrb[0].mxu0
    %678 = vdwg.mxu0
    %v679 = vpack.c.bf16 %v508, %v504
    %v680 = vpack.c.bf16 %v510, %v506
    %v681 = vpack.c.bf16 %v620, %v617
    %v682 = vpack.c.bf16 %v518, %v514
    %v683 = vpack.c.bf16 %v520, %v516
    %v684 = vpack.c.bf16 %v628, %v625
    %v685 = vpack.c.bf16 %v528, %v524
    %v686 = vpack.c.bf16 %v530, %v526
    %v687 = vpack.c.bf16 %v636, %v633
    %v688 = vpack.c.bf16 %v538, %v534
    %v689 = vpack.c.bf16 %v540, %v536
    %v690 = vpack.c.bf16 %v644, %v641
    %v691 = vpack.c.bf16 %v548, %v544
    %v692 = vpack.c.bf16 %v550, %v546
    %v693 = vpack.c.bf16 %v652, %v649
    %v694 = vpack.c.bf16 %v558, %v554
    %v695 = vpack.c.bf16 %v560, %v556
    %v696 = vpack.c.bf16 %v660, %v657
    %v697 = vpack.c.bf16 %v568, %v564
    %v698 = vpack.c.bf16 %v570, %v566
    %v699 = vpack.c.bf16 %v668, %v665
    %v700 = vpack.c.bf16 %v578, %v574
    %v701 = vpack.c.bf16 %v580, %v576
    %v702 = vpack.c.bf16 %v676, %v673
    %703 = vst [vmem:[#allocation2] sm:$0xff] %v679
    %704 = vst [vmem:[#allocation2 + $0x8] sm:$0xff] %v680
    %705 = vst [vmem:[#allocation2 + $0x10] sm:$0xff] %v681
    %706 = vst [vmem:[#allocation2 + $0x18] sm:$0xff] %v682
    %707 = vst [vmem:[#allocation2 + $0x20] sm:$0xff] %v683
    %708 = vst [vmem:[#allocation2 + $0x28] sm:$0xff] %v684
    %709 = vst [vmem:[#allocation2 + $0x30] sm:$0xff] %v685
    %710 = vst [vmem:[#allocation2 + $0x38] sm:$0xff] %v686
    %711 = vst [vmem:[#allocation2 + $0x40] sm:$0xff] %v687
    %712 = vst [vmem:[#allocation2 + $0x48] sm:$0xff] %v688
    %713 = vst [vmem:[#allocation2 + $0x50] sm:$0xff] %v689
    %714 = vst [vmem:[#allocation2 + $0x58] sm:$0xff] %v690
    %715 = vst [vmem:[#allocation2 + $0x60] sm:$0xff] %v691
    %716 = vst [vmem:[#allocation2 + $0x68] sm:$0xff] %v692
    %717 = vst [vmem:[#allocation2 + $0x70] sm:$0xff] %v693
    %718 = vst [vmem:[#allocation2 + $0x78] sm:$0xff] %v694
    %719 = vst [vmem:[#allocation2 + $0x80] sm:$0xff] %v695
    %720 = vst [vmem:[#allocation2 + $0x88] sm:$0xff] %v696
    %721 = vst [vmem:[#allocation2 + $0x90] sm:$0xff] %v697
    %722 = vst [vmem:[#allocation2 + $0x98] sm:$0xff] %v698
    %723 = vst [vmem:[#allocation2 + $0xa0] sm:$0xff] %v699
    %724 = vst [vmem:[#allocation2 + $0xa8] sm:$0xff] %v700
    %725 = vst [vmem:[#allocation2 + $0xb0] sm:$0xff] %v701
    %726 = vst [vmem:[#allocation2 + $0xb8] sm:$0xff] %v702
    %v727 = vld [vmem:[%s2] sm:$0xff]
    %v728 = vld [vmem:[%s2 + $0x8] sm:$0xf]
    %v729 = vld [vmem:[%s2 + $0xc] sm:$0xff]
    %v730 = vld [vmem:[%s2 + $0x14] sm:$0xf]
    %v731 = vld [vmem:[%s2 + $0x18] sm:$0xff]
    %v732 = vld [vmem:[%s2 + $0x20] sm:$0xf]
    %v733 = vld [vmem:[%s2 + $0x24] sm:$0xff]
    %v734 = vld [vmem:[%s2 + $0x2c] sm:$0xf]
    %v735 = vld [vmem:[%s2 + $0x30] sm:$0xff]
    %v736 = vld [vmem:[%s2 + $0x38] sm:$0xf]
    %v737 = vld [vmem:[%s2 + $0x3c] sm:$0xff]
    %v738 = vld [vmem:[%s2 + $0x44] sm:$0xf]
    %v739 = vld [vmem:[%s2 + $0x48] sm:$0xff]
    %v740 = vld [vmem:[%s2 + $0x50] sm:$0xf]
    %v741 = vld [vmem:[%s2 + $0x54] sm:$0xff]
    %v742 = vld [vmem:[%s2 + $0x5c] sm:$0xf]
    %v743 = vld [vmem:[%s2 + $0x60] sm:$0xff]
    %v744 = vld [vmem:[%s2 + $0x68] sm:$0xf]
    %v745 = vld [vmem:[%s2 + $0x6c] sm:$0xff]
    %v746 = vld [vmem:[%s2 + $0x74] sm:$0xf]
    %v747 = vld [vmem:[%s2 + $0x78] sm:$0xff]
    %v748 = vld [vmem:[%s2 + $0x80] sm:$0xf]
    %v749 = vld [vmem:[%s2 + $0x84] sm:$0xff]
    %v750 = vld [vmem:[%s2 + $0x8c] sm:$0xf]
    %v751 = vld [vmem:[%s2 + $0x90] sm:$0xff]
    %v752 = vld [vmem:[%s2 + $0x98] sm:$0xf]
    %v753 = vld [vmem:[%s2 + $0x9c] sm:$0xff]
    %v754 = vld [vmem:[%s2 + $0xa4] sm:$0xf]
    %v755 = vld [vmem:[%s2 + $0xa8] sm:$0xff]
    %v756 = vld [vmem:[%s2 + $0xb0] sm:$0xf]
    %v757 = vld [vmem:[%s2 + $0xb4] sm:$0xff]
    %v758 = vld [vmem:[%s2 + $0xbc] sm:$0xf]
    %v759 = vld [vmem:[%s2 + $0xc0] sm:$0xff]
    %v760 = vld [vmem:[%s2 + $0xc8] sm:$0xf]
    %v761 = vld [vmem:[%s2 + $0xcc] sm:$0xff]
    %v762 = vld [vmem:[%s2 + $0xd4] sm:$0xf]
    %v763 = vld [vmem:[%s2 + $0xd8] sm:$0xff]
    %v764 = vld [vmem:[%s2 + $0xe0] sm:$0xf]
    %v765 = vld [vmem:[%s2 + $0xe4] sm:$0xff]
    %v766 = vld [vmem:[%s2 + $0xec] sm:$0xf]
    %v767 = vld [vmem:[%s2 + $0xf0] sm:$0xff]
    %v768 = vld [vmem:[%s2 + $0xf8] sm:$0xf]
    %v769 = vld [vmem:[%s2 + $0xfc] sm:$0xff]
    %v770 = vld [vmem:[%s2 + $0x104] sm:$0xf]
    %v771 = vld [vmem:[%s2 + $0x108] sm:$0xff]
    %v772 = vld [vmem:[%s2 + $0x110] sm:$0xf]
    %v773 = vld [vmem:[%s2 + $0x114] sm:$0xff]
    %v774 = vld [vmem:[%s2 + $0x11c] sm:$0xf]
    %v775 = vld [vmem:[%s2 + $0x120] sm:$0xff]
    %v776 = vld [vmem:[%s2 + $0x128] sm:$0xf]
    %v777 = vld [vmem:[%s2 + $0x12c] sm:$0xff]
    %v778 = vld [vmem:[%s2 + $0x134] sm:$0xf]
    %v779 = vld [vmem:[%s2 + $0x138] sm:$0xff]
    %v780 = vld [vmem:[%s2 + $0x140] sm:$0xf]
    %v781 = vld [vmem:[%s2 + $0x144] sm:$0xff]
    %v782 = vld [vmem:[%s2 + $0x14c] sm:$0xf]
    %v783 = vld [vmem:[%s2 + $0x150] sm:$0xff]
    %v784 = vld [vmem:[%s2 + $0x158] sm:$0xf]
    %v785 = vld [vmem:[%s2 + $0x15c] sm:$0xff]
    %v786 = vld [vmem:[%s2 + $0x164] sm:$0xf]
    %v787 = vld [vmem:[%s2 + $0x168] sm:$0xff]
    %v788 = vld [vmem:[%s2 + $0x170] sm:$0xf]
    %v789 = vld [vmem:[%s2 + $0x174] sm:$0xff]
    %v790 = vld [vmem:[%s2 + $0x17c] sm:$0xf]
    %v791 = vld [vmem:[%s6] sm:$0x7]
    %v793 = vlaneseq
    %v794 = vshrl.u32 %v793, 7
    %v795 = vsub.s32 0, %v794
    %v796 = vrot.slane %v791, %v795
    %v797 = vlaneseq
    %v798 = vshrl.u32 %v797, 7
    %v799 = vsub.s32 1, %v798
    %v800 = vrot.slane %v791, %v799
    %v801 = vlaneseq
    %v802 = vshrl.u32 %v801, 7
    %v803 = vsub.s32 2, %v802
    %v804 = vrot.slane %v791, %v803
    %v872 = vunpack.c.l.b16 %v727
    %v873 = vunpack.c.h.b16 %v727
    %v874 = vunpack.c.l.b16 %v728
    %v875 = vunpack.c.l.b16 %v729
    %v876 = vunpack.c.h.b16 %v729
    %v877 = vunpack.c.l.b16 %v730
    %v878 = vunpack.c.l.b16 %v731
    %v879 = vunpack.c.h.b16 %v731
    %v880 = vunpack.c.l.b16 %v732
    %v881 = vunpack.c.l.b16 %v733
    %v882 = vunpack.c.h.b16 %v733
    %v883 = vunpack.c.l.b16 %v734
    %v884 = vunpack.c.l.b16 %v735
    %v885 = vunpack.c.h.b16 %v735
    %v886 = vunpack.c.l.b16 %v736
    %v887 = vunpack.c.l.b16 %v737
    %v888 = vunpack.c.h.b16 %v737
    %v889 = vunpack.c.l.b16 %v738
    %v890 = vunpack.c.l.b16 %v739
    %v891 = vunpack.c.h.b16 %v739
    %v892 = vunpack.c.l.b16 %v740
    %v893 = vunpack.c.l.b16 %v741
    %v894 = vunpack.c.h.b16 %v741
    %v895 = vunpack.c.l.b16 %v742
    %v896 = vunpack.c.l.b16 %v743
    %v897 = vunpack.c.h.b16 %v743
    %v898 = vunpack.c.l.b16 %v744
    %v899 = vunpack.c.l.b16 %v745
    %v900 = vunpack.c.h.b16 %v745
    %v901 = vunpack.c.l.b16 %v746
    %v902 = vunpack.c.l.b16 %v747
    %v903 = vunpack.c.h.b16 %v747
    %v904 = vunpack.c.l.b16 %v748
    %v905 = vunpack.c.l.b16 %v749
    %v906 = vunpack.c.h.b16 %v749
    %v907 = vunpack.c.l.b16 %v750
    %v908 = vunpack.c.l.b16 %v751
    %v909 = vunpack.c.h.b16 %v751
    %v910 = vunpack.c.l.b16 %v752
    %v911 = vunpack.c.l.b16 %v753
    %v912 = vunpack.c.h.b16 %v753
    %v913 = vunpack.c.l.b16 %v754
    %v914 = vunpack.c.l.b16 %v755
    %v915 = vunpack.c.h.b16 %v755
    %v916 = vunpack.c.l.b16 %v756
    %v917 = vunpack.c.l.b16 %v757
    %v918 = vunpack.c.h.b16 %v757
    %v919 = vunpack.c.l.b16 %v758
    %v920 = vunpack.c.l.b16 %v759
    %v921 = vunpack.c.h.b16 %v759
    %v922 = vunpack.c.l.b16 %v760
    %v923 = vunpack.c.l.b16 %v761
    %v924 = vunpack.c.h.b16 %v761
    %v925 = vunpack.c.l.b16 %v762
    %v926 = vunpack.c.l.b16 %v763
    %v927 = vunpack.c.h.b16 %v763
    %v928 = vunpack.c.l.b16 %v764
    %v929 = vunpack.c.l.b16 %v765
    %v930 = vunpack.c.h.b16 %v765
    %v931 = vunpack.c.l.b16 %v766
    %v932 = vunpack.c.l.b16 %v767
    %v933 = vunpack.c.h.b16 %v767
    %v934 = vunpack.c.l.b16 %v768
    %v935 = vunpack.c.l.b16 %v769
    %v936 = vunpack.c.h.b16 %v769
    %v937 = vunpack.c.l.b16 %v770
    %v938 = vunpack.c.l.b16 %v771
    %v939 = vunpack.c.h.b16 %v771
    %v940 = vunpack.c.l.b16 %v772
    %v941 = vunpack.c.l.b16 %v773
    %v942 = vunpack.c.h.b16 %v773
    %v943 = vunpack.c.l.b16 %v774
    %v944 = vunpack.c.l.b16 %v775
    %v945 = vunpack.c.h.b16 %v775
    %v946 = vunpack.c.l.b16 %v776
    %v947 = vunpack.c.l.b16 %v777
    %v948 = vunpack.c.h.b16 %v777
    %v949 = vunpack.c.l.b16 %v778
    %v950 = vunpack.c.l.b16 %v779
    %v951 = vunpack.c.h.b16 %v779
    %v952 = vunpack.c.l.b16 %v780
    %v953 = vunpack.c.l.b16 %v781
    %v954 = vunpack.c.h.b16 %v781
    %v955 = vunpack.c.l.b16 %v782
    %v956 = vunpack.c.l.b16 %v783
    %v957 = vunpack.c.h.b16 %v783
    %v958 = vunpack.c.l.b16 %v784
    %v959 = vunpack.c.l.b16 %v785
    %v960 = vunpack.c.h.b16 %v785
    %v961 = vunpack.c.l.b16 %v786
    %v962 = vunpack.c.l.b16 %v787
    %v963 = vunpack.c.h.b16 %v787
    %v964 = vunpack.c.l.b16 %v788
    %v965 = vunpack.c.l.b16 %v789
    %v966 = vunpack.c.h.b16 %v789
    %v967 = vunpack.c.l.b16 %v790
    %v968 = vpack.c.b16 %v875, %v872
    %v969 = vpack.c.b16 %v876, %v873
    %v970 = vpack.c.b16 %v877, %v874
    %v971 = vpack.c.b16 %v881, %v878
    %v972 = vpack.c.b16 %v882, %v879
    %v973 = vpack.c.b16 %v883, %v880
    %v974 = vpack.c.b16 %v887, %v884
    %v975 = vpack.c.b16 %v888, %v885
    %v976 = vpack.c.b16 %v889, %v886
    %v977 = vpack.c.b16 %v893, %v890
    %v978 = vpack.c.b16 %v894, %v891
    %v979 = vpack.c.b16 %v895, %v892
    %v980 = vpack.c.b16 %v899, %v896
    %v981 = vpack.c.b16 %v900, %v897
    %v982 = vpack.c.b16 %v901, %v898
    %v983 = vpack.c.b16 %v905, %v902
    %v984 = vpack.c.b16 %v906, %v903
    %v985 = vpack.c.b16 %v907, %v904
    %v986 = vpack.c.b16 %v911, %v908
    %v987 = vpack.c.b16 %v912, %v909
    %v988 = vpack.c.b16 %v913, %v910
    %v989 = vpack.c.b16 %v917, %v914
    %v990 = vpack.c.b16 %v918, %v915
    %v991 = vpack.c.b16 %v919, %v916
    %v992 = vpack.c.b16 %v923, %v920
    %v993 = vpack.c.b16 %v924, %v921
    %v994 = vpack.c.b16 %v925, %v922
    %v995 = vpack.c.b16 %v929, %v926
    %v996 = vpack.c.b16 %v930, %v927
    %v997 = vpack.c.b16 %v931, %v928
    %v998 = vpack.c.b16 %v935, %v932
    %v999 = vpack.c.b16 %v936, %v933
    %v1000 = vpack.c.b16 %v937, %v934
    %v1001 = vpack.c.b16 %v941, %v938
    %v1002 = vpack.c.b16 %v942, %v939
    %v1003 = vpack.c.b16 %v943, %v940
    %v1004 = vpack.c.b16 %v947, %v944
    %v1005 = vpack.c.b16 %v948, %v945
    %v1006 = vpack.c.b16 %v949, %v946
    %v1007 = vpack.c.b16 %v953, %v950
    %v1008 = vpack.c.b16 %v954, %v951
    %v1009 = vpack.c.b16 %v955, %v952
    %v1010 = vpack.c.b16 %v959, %v956
    %v1011 = vpack.c.b16 %v960, %v957
    %v1012 = vpack.c.b16 %v961, %v958
    %v1013 = vpack.c.b16 %v965, %v962
    %v1014 = vpack.c.b16 %v966, %v963
    %v1015 = vpack.c.b16 %v967, %v964
    %1064 = vmatprep.subr.bf16.mxu0 %v969
    %1065 = vmatpush1.bf16.msra.mxu0 %v968
    %1066 = vmatprep.subr.bf16.mxu0 %v972
    %1067 = vmatpush1.bf16.msra.mxu0 %v971
    %1068 = vmatprep.subr.bf16.mxu0 %v975
    %1069 = vmatpush1.bf16.msra.mxu0 %v974
    %1070 = vmatprep.subr.bf16.mxu0 %v978
    %1071 = vmatpush1.bf16.msra.mxu0 %v977
    %1072 = vmatprep.subr.bf16.mxu0 %v981
    %1073 = vmatpush1.bf16.msra.mxu0 %v980
    %1074 = vmatprep.subr.bf16.mxu0 %v984
    %1075 = vmatpush1.bf16.msra.mxu0 %v983
    %1076 = vmatprep.subr.bf16.mxu0 %v987
    %1077 = vmatpush1.bf16.msra.mxu0 %v986
    %1078 = vmatprep.subr.bf16.mxu0 %v990
    %1079 = vmatpush1.bf16.msra.mxu0 %v989
    %1080 = vmatprep.subr.bf16.mxu0 %v993
    %1081 = vmatpush1.bf16.msra.mxu0 %v992
    %1082 = vmatprep.subr.bf16.mxu0 %v996
    %1083 = vmatpush1.bf16.msra.mxu0 %v995
    %1084 = vmatprep.subr.bf16.mxu0 %v999
    %1085 = vmatpush1.bf16.msra.mxu0 %v998
    %1086 = vmatprep.subr.bf16.mxu0 %v1002
    %1087 = vmatpush1.bf16.msra.mxu0 %v1001
    %1088 = vmatprep.subr.bf16.mxu0 %v1005
    %1089 = vmatpush1.bf16.msra.mxu0 %v1004
    %1090 = vmatprep.subr.bf16.mxu0 %v1008
    %1091 = vmatpush1.bf16.msra.mxu0 %v1007
    %1092 = vmatprep.subr.bf16.mxu0 %v1011
    %1093 = vmatpush1.bf16.msra.mxu0 %v1010
    %1094 = vmatprep.subr.bf16.mxu0 %v1014
    %1095 = vmatpush1.bf16.msra.mxu0 %v1013
    %1096 = vmatprep.mubr.bf16.mxu0 %v182
    %1097 = vmatmul.mubr.bf16.gmra.mrb[0].mxu0 %v181
    %v1098 = vpop.f32.mrb[0].mxu0
    %v1099 = vadd.f32 %v796, %v1098
    %v1100 = vpop.f32.mrb[0].mxu0
    %v1101 = vadd.f32 %v800, %v1100
    %v1102 = vpop.f32.mrb[0].mxu0
    %v1103 = vadd.f32 %v796, %v1102
    %v1104 = vpop.f32.mrb[0].mxu0
    %v1105 = vadd.f32 %v800, %v1104
    %1106 = vmatprep.mubr.bf16.mxu0 %v184
    %1107 = vmatmul.mubr.bf16.gmra.mrb[0].mxu0 %v183
    %v1108 = vpop.f32.mrb[0].mxu0
    %v1109 = vadd.f32 %v796, %v1108
    %v1110 = vpop.f32.mrb[0].mxu0
    %v1111 = vadd.f32 %v800, %v1110
    %v1112 = vpop.f32.mrb[0].mxu0
    %v1113 = vadd.f32 %v796, %v1112
    %v1114 = vpop.f32.mrb[0].mxu0
    %v1115 = vadd.f32 %v800, %v1114
    %1116 = vmatprep.mubr.bf16.mxu0 %v186
    %1117 = vmatmul.mubr.bf16.gmra.mrb[0].mxu0 %v185
    %v1118 = vpop.f32.mrb[0].mxu0
    %v1119 = vadd.f32 %v796, %v1118
    %v1120 = vpop.f32.mrb[0].mxu0
    %v1121 = vadd.f32 %v800, %v1120
    %v1122 = vpop.f32.mrb[0].mxu0
    %v1123 = vadd.f32 %v796, %v1122
    %v1124 = vpop.f32.mrb[0].mxu0
    %v1125 = vadd.f32 %v800, %v1124
    %1126 = vmatprep.mubr.bf16.mxu0 %v188
    %1127 = vmatmul.mubr.bf16.gmra.mrb[0].mxu0 %v187
    %v1128 = vpop.f32.mrb[0].mxu0
    %v1129 = vadd.f32 %v796, %v1128
    %v1130 = vpop.f32.mrb[0].mxu0
    %v1131 = vadd.f32 %v800, %v1130
    %v1132 = vpop.f32.mrb[0].mxu0
    %v1133 = vadd.f32 %v796, %v1132
    %v1134 = vpop.f32.mrb[0].mxu0
    %v1135 = vadd.f32 %v800, %v1134
    %1136 = vmatprep.mubr.bf16.mxu0 %v190
    %1137 = vmatmul.mubr.bf16.gmra.mrb[0].mxu0 %v189
    %v1138 = vpop.f32.mrb[0].mxu0
    %v1139 = vadd.f32 %v796, %v1138
    %v1140 = vpop.f32.mrb[0].mxu0
    %v1141 = vadd.f32 %v800, %v1140
    %v1142 = vpop.f32.mrb[0].mxu0
    %v1143 = vadd.f32 %v796, %v1142
    %v1144 = vpop.f32.mrb[0].mxu0
    %v1145 = vadd.f32 %v800, %v1144
    %1146 = vmatprep.mubr.bf16.mxu0 %v192
    %1147 = vmatmul.mubr.bf16.gmra.mrb[0].mxu0 %v191
    %v1148 = vpop.f32.mrb[0].mxu0
    %v1149 = vadd.f32 %v796, %v1148
    %v1150 = vpop.f32.mrb[0].mxu0
    %v1151 = vadd.f32 %v800, %v1150
    %v1152 = vpop.f32.mrb[0].mxu0
    %v1153 = vadd.f32 %v796, %v1152
    %v1154 = vpop.f32.mrb[0].mxu0
    %v1155 = vadd.f32 %v800, %v1154
    %1156 = vmatprep.mubr.bf16.mxu0 %v194
    %1157 = vmatmul.mubr.bf16.gmra.mrb[0].mxu0 %v193
    %v1158 = vpop.f32.mrb[0].mxu0
    %v1159 = vadd.f32 %v796, %v1158
    %v1160 = vpop.f32.mrb[0].mxu0
    %v1161 = vadd.f32 %v800, %v1160
    %v1162 = vpop.f32.mrb[0].mxu0
    %v1163 = vadd.f32 %v796, %v1162
    %v1164 = vpop.f32.mrb[0].mxu0
    %v1165 = vadd.f32 %v800, %v1164
    %1166 = vmatprep.mubr.bf16.mxu0 %v196
    %1167 = vmatmul.mubr.bf16.gmra.mrb[0].mxu0 %v195
    %v1168 = vpop.f32.mrb[0].mxu0
    %v1169 = vadd.f32 %v796, %v1168
    %v1170 = vpop.f32.mrb[0].mxu0
    %v1171 = vadd.f32 %v800, %v1170
    %v1172 = vpop.f32.mrb[0].mxu0
    %v1173 = vadd.f32 %v796, %v1172
    %v1174 = vpop.f32.mrb[0].mxu0
    %v1175 = vadd.f32 %v800, %v1174
    %1176 = vdwg.mxu0
    %1177 = vmatprep.subr.bf16.mxu0 0
    %1178 = vmatpush1.bf16.msra.mxu0 %v970
    %1179 = vmatprep.subr.bf16.mxu0 0
    %1180 = vmatpush1.bf16.msra.mxu0 %v973
    %1181 = vmatprep.subr.bf16.mxu0 0
    %1182 = vmatpush1.bf16.msra.mxu0 %v976
    %1183 = vmatprep.subr.bf16.mxu0 0
    %1184 = vmatpush1.bf16.msra.mxu0 %v979
    %1185 = vmatprep.subr.bf16.mxu0 0
    %1186 = vmatpush1.bf16.msra.mxu0 %v982
    %1187 = vmatprep.subr.bf16.mxu0 0
    %1188 = vmatpush1.bf16.msra.mxu0 %v985
    %1189 = vmatprep.subr.bf16.mxu0 0
    %1190 = vmatpush1.bf16.msra.mxu0 %v988
    %1191 = vmatprep.subr.bf16.mxu0 0
    %1192 = vmatpush1.bf16.msra.mxu0 %v991
    %1193 = vmatprep.subr.bf16.mxu0 0
    %1194 = vmatpush1.bf16.msra.mxu0 %v994
    %1195 = vmatprep.subr.bf16.mxu0 0
    %1196 = vmatpush1.bf16.msra.mxu0 %v997
    %1197 = vmatprep.subr.bf16.mxu0 0
    %1198 = vmatpush1.bf16.msra.mxu0 %v1000
    %1199 = vmatprep.subr.bf16.mxu0 0
    %1200 = vmatpush1.bf16.msra.mxu0 %v1003
    %1201 = vmatprep.subr.bf16.mxu0 0
    %1202 = vmatpush1.bf16.msra.mxu0 %v1006
    %1203 = vmatprep.subr.bf16.mxu0 0
    %1204 = vmatpush1.bf16.msra.mxu0 %v1009
    %1205 = vmatprep.subr.bf16.mxu0 0
    %1206 = vmatpush1.bf16.msra.mxu0 %v1012
    %1207 = vmatprep.subr.bf16.mxu0 0
    %1208 = vmatpush1.bf16.msra.mxu0 %v1015
    %1209 = vmatprep.mubr.bf16.mxu0 %v182
    %1210 = vmatmul.mubr.bf16.gmra.mrb[0].mxu0 %v181
    %v1211 = vpop.f32.mrb[0].mxu0
    %v1212 = vadd.f32 %v804, %v1211
    %v1213 = vpop.f32.mrb[0].mxu0
    %v1214 = vpop.f32.mrb[0].mxu0
    %v1215 = vadd.f32 %v804, %v1214
    %v1216 = vpop.f32.mrb[0].mxu0
    %1217 = vmatprep.mubr.bf16.mxu0 %v184
    %1218 = vmatmul.mubr.bf16.gmra.mrb[0].mxu0 %v183
    %v1219 = vpop.f32.mrb[0].mxu0
    %v1220 = vadd.f32 %v804, %v1219
    %v1221 = vpop.f32.mrb[0].mxu0
    %v1222 = vpop.f32.mrb[0].mxu0
    %v1223 = vadd.f32 %v804, %v1222
    %v1224 = vpop.f32.mrb[0].mxu0
    %1225 = vmatprep.mubr.bf16.mxu0 %v186
    %1226 = vmatmul.mubr.bf16.gmra.mrb[0].mxu0 %v185
    %v1227 = vpop.f32.mrb[0].mxu0
    %v1228 = vadd.f32 %v804, %v1227
    %v1229 = vpop.f32.mrb[0].mxu0
    %v1230 = vpop.f32.mrb[0].mxu0
    %v1231 = vadd.f32 %v804, %v1230
    %v1232 = vpop.f32.mrb[0].mxu0
    %1233 = vmatprep.mubr.bf16.mxu0 %v188
    %1234 = vmatmul.mubr.bf16.gmra.mrb[0].mxu0 %v187
    %v1235 = vpop.f32.mrb[0].mxu0
    %v1236 = vadd.f32 %v804, %v1235
    %v1237 = vpop.f32.mrb[0].mxu0
    %v1238 = vpop.f32.mrb[0].mxu0
    %v1239 = vadd.f32 %v804, %v1238
    %v1240 = vpop.f32.mrb[0].mxu0
    %1241 = vmatprep.mubr.bf16.mxu0 %v190
    %1242 = vmatmul.mubr.bf16.gmra.mrb[0].mxu0 %v189
    %v1243 = vpop.f32.mrb[0].mxu0
    %v1244 = vadd.f32 %v804, %v1243
    %v1245 = vpop.f32.mrb[0].mxu0
    %v1246 = vpop.f32.mrb[0].mxu0
    %v1247 = vadd.f32 %v804, %v1246
    %v1248 = vpop.f32.mrb[0].mxu0
    %1249 = vmatprep.mubr.bf16.mxu0 %v192
    %1250 = vmatmul.mubr.bf16.gmra.mrb[0].mxu0 %v191
    %v1251 = vpop.f32.mrb[0].mxu0
    %v1252 = vadd.f32 %v804, %v1251
    %v1253 = vpop.f32.mrb[0].mxu0
    %v1254 = vpop.f32.mrb[0].mxu0
    %v1255 = vadd.f32 %v804, %v1254
    %v1256 = vpop.f32.mrb[0].mxu0
    %1257 = vmatprep.mubr.bf16.mxu0 %v194
    %1258 = vmatmul.mubr.bf16.gmra.mrb[0].mxu0 %v193
    %v1259 = vpop.f32.mrb[0].mxu0
    %v1260 = vadd.f32 %v804, %v1259
    %v1261 = vpop.f32.mrb[0].mxu0
    %v1262 = vpop.f32.mrb[0].mxu0
    %v1263 = vadd.f32 %v804, %v1262
    %v1264 = vpop.f32.mrb[0].mxu0
    %1265 = vmatprep.mubr.bf16.mxu0 %v196
    %1266 = vmatmul.mubr.bf16.gmra.mrb[0].mxu0 %v195
    %v1267 = vpop.f32.mrb[0].mxu0
    %v1268 = vadd.f32 %v804, %v1267
    %v1269 = vpop.f32.mrb[0].mxu0
    %v1270 = vpop.f32.mrb[0].mxu0
    %v1271 = vadd.f32 %v804, %v1270
    %v1272 = vpop.f32.mrb[0].mxu0
    %1273 = vdwg.mxu0
    %v1274 = vpack.c.bf16 %v1103, %v1099
    %v1275 = vpack.c.bf16 %v1105, %v1101
    %v1276 = vpack.c.bf16 %v1215, %v1212
    %v1277 = vpack.c.bf16 %v1113, %v1109
    %v1278 = vpack.c.bf16 %v1115, %v1111
    %v1279 = vpack.c.bf16 %v1223, %v1220
    %v1280 = vpack.c.bf16 %v1123, %v1119
    %v1281 = vpack.c.bf16 %v1125, %v1121
    %v1282 = vpack.c.bf16 %v1231, %v1228
    %v1283 = vpack.c.bf16 %v1133, %v1129
    %v1284 = vpack.c.bf16 %v1135, %v1131
    %v1285 = vpack.c.bf16 %v1239, %v1236
    %v1286 = vpack.c.bf16 %v1143, %v1139
    %v1287 = vpack.c.bf16 %v1145, %v1141
    %v1288 = vpack.c.bf16 %v1247, %v1244
    %v1289 = vpack.c.bf16 %v1153, %v1149
    %v1290 = vpack.c.bf16 %v1155, %v1151
    %v1291 = vpack.c.bf16 %v1255, %v1252
    %v1292 = vpack.c.bf16 %v1163, %v1159
    %v1293 = vpack.c.bf16 %v1165, %v1161
    %v1294 = vpack.c.bf16 %v1263, %v1260
    %v1295 = vpack.c.bf16 %v1173, %v1169
    %v1296 = vpack.c.bf16 %v1175, %v1171
    %v1297 = vpack.c.bf16 %v1271, %v1268
    %1298 = vst [vmem:[#allocation3] sm:$0xff] %v1274
    %1299 = vst [vmem:[#allocation3 + $0x8] sm:$0xff] %v1275
    %1300 = vst [vmem:[#allocation3 + $0x10] sm:$0xff] %v1276
    %1301 = vst [vmem:[#allocation3 + $0x18] sm:$0xff] %v1277
    %1302 = vst [vmem:[#allocation3 + $0x20] sm:$0xff] %v1278
    %1303 = vst [vmem:[#allocation3 + $0x28] sm:$0xff] %v1279
    %1304 = vst [vmem:[#allocation3 + $0x30] sm:$0xff] %v1280
    %1305 = vst [vmem:[#allocation3 + $0x38] sm:$0xff] %v1281
    %1306 = vst [vmem:[#allocation3 + $0x40] sm:$0xff] %v1282
    %1307 = vst [vmem:[#allocation3 + $0x48] sm:$0xff] %v1283
    %1308 = vst [vmem:[#allocation3 + $0x50] sm:$0xff] %v1284
    %1309 = vst [vmem:[#allocation3 + $0x58] sm:$0xff] %v1285
    %1310 = vst [vmem:[#allocation3 + $0x60] sm:$0xff] %v1286
    %1311 = vst [vmem:[#allocation3 + $0x68] sm:$0xff] %v1287
    %1312 = vst [vmem:[#allocation3 + $0x70] sm:$0xff] %v1288
    %1313 = vst [vmem:[#allocation3 + $0x78] sm:$0xff] %v1289
    %1314 = vst [vmem:[#allocation3 + $0x80] sm:$0xff] %v1290
    %1315 = vst [vmem:[#allocation3 + $0x88] sm:$0xff] %v1291
    %1316 = vst [vmem:[#allocation3 + $0x90] sm:$0xff] %v1292
    %1317 = vst [vmem:[#allocation3 + $0x98] sm:$0xff] %v1293
    %1318 = vst [vmem:[#allocation3 + $0xa0] sm:$0xff] %v1294
    %1319 = vst [vmem:[#allocation3 + $0xa8] sm:$0xff] %v1295
    %1320 = vst [vmem:[#allocation3 + $0xb0] sm:$0xff] %v1296
    %1321 = vst [vmem:[#allocation3 + $0xb8] sm:$0xff] %v1297
    %v1322 = vld [vmem:[%s3] sm:$0xff]
    %v1323 = vld [vmem:[%s3 + $0x8] sm:$0xf]
    %v1324 = vld [vmem:[%s3 + $0xc] sm:$0xff]
    %v1325 = vld [vmem:[%s3 + $0x14] sm:$0xf]
    %v1326 = vld [vmem:[%s3 + $0x18] sm:$0xff]
    %v1327 = vld [vmem:[%s3 + $0x20] sm:$0xf]
    %v1328 = vld [vmem:[%s3 + $0x24] sm:$0xff]
    %v1329 = vld [vmem:[%s3 + $0x2c] sm:$0xf]
    %v1330 = vld [vmem:[%s3 + $0x30] sm:$0xff]
    %v1331 = vld [vmem:[%s3 + $0x38] sm:$0xf]
    %v1332 = vld [vmem:[%s3 + $0x3c] sm:$0xff]
    %v1333 = vld [vmem:[%s3 + $0x44] sm:$0xf]
    %v1334 = vld [vmem:[%s3 + $0x48] sm:$0xff]
    %v1335 = vld [vmem:[%s3 + $0x50] sm:$0xf]
    %v1336 = vld [vmem:[%s3 + $0x54] sm:$0xff]
    %v1337 = vld [vmem:[%s3 + $0x5c] sm:$0xf]
    %v1338 = vld [vmem:[%s3 + $0x60] sm:$0xff]
    %v1339 = vld [vmem:[%s3 + $0x68] sm:$0xf]
    %v1340 = vld [vmem:[%s3 + $0x6c] sm:$0xff]
    %v1341 = vld [vmem:[%s3 + $0x74] sm:$0xf]
    %v1342 = vld [vmem:[%s3 + $0x78] sm:$0xff]
    %v1343 = vld [vmem:[%s3 + $0x80] sm:$0xf]
    %v1344 = vld [vmem:[%s3 + $0x84] sm:$0xff]
    %v1345 = vld [vmem:[%s3 + $0x8c] sm:$0xf]
    %v1346 = vld [vmem:[%s3 + $0x90] sm:$0xff]
    %v1347 = vld [vmem:[%s3 + $0x98] sm:$0xf]
    %v1348 = vld [vmem:[%s3 + $0x9c] sm:$0xff]
    %v1349 = vld [vmem:[%s3 + $0xa4] sm:$0xf]
    %v1350 = vld [vmem:[%s3 + $0xa8] sm:$0xff]
    %v1351 = vld [vmem:[%s3 + $0xb0] sm:$0xf]
    %v1352 = vld [vmem:[%s3 + $0xb4] sm:$0xff]
    %v1353 = vld [vmem:[%s3 + $0xbc] sm:$0xf]
    %v1354 = vld [vmem:[%s4] sm:$0xff]
    %v1355 = vld [vmem:[%s4 + $0x8] sm:$0xf]
    %v1356 = vld [vmem:[%s4 + $0xc] sm:$0xff]
    %v1357 = vld [vmem:[%s4 + $0x14] sm:$0xf]
    %v1358 = vld [vmem:[%s4 + $0x18] sm:$0xff]
    %v1359 = vld [vmem:[%s4 + $0x20] sm:$0xf]
    %v1360 = vld [vmem:[%s4 + $0x24] sm:$0xff]
    %v1361 = vld [vmem:[%s4 + $0x2c] sm:$0xf]
    %v1362 = vld [vmem:[%s4 + $0x30] sm:$0xff]
    %v1363 = vld [vmem:[%s4 + $0x38] sm:$0xf]
    %v1364 = vld [vmem:[%s4 + $0x3c] sm:$0xff]
    %v1365 = vld [vmem:[%s4 + $0x44] sm:$0xf]
    %v1366 = vld [vmem:[%s4 + $0x48] sm:$0xff]
    %v1367 = vld [vmem:[%s4 + $0x50] sm:$0xf]
    %v1368 = vld [vmem:[%s4 + $0x54] sm:$0xff]
    %v1369 = vld [vmem:[%s4 + $0x5c] sm:$0xf]
    %v1370 = vld [vmem:[%s4 + $0x60] sm:$0xff]
    %v1371 = vld [vmem:[%s4 + $0x68] sm:$0xf]
    %v1372 = vld [vmem:[%s4 + $0x6c] sm:$0xff]
    %v1373 = vld [vmem:[%s4 + $0x74] sm:$0xf]
    %v1374 = vld [vmem:[%s4 + $0x78] sm:$0xff]
    %v1375 = vld [vmem:[%s4 + $0x80] sm:$0xf]
    %v1376 = vld [vmem:[%s4 + $0x84] sm:$0xff]
    %v1377 = vld [vmem:[%s4 + $0x8c] sm:$0xf]
    %v1378 = vld [vmem:[%s4 + $0x90] sm:$0xff]
    %v1379 = vld [vmem:[%s4 + $0x98] sm:$0xf]
    %v1380 = vld [vmem:[%s4 + $0x9c] sm:$0xff]
    %v1381 = vld [vmem:[%s4 + $0xa4] sm:$0xf]
    %v1382 = vld [vmem:[%s4 + $0xa8] sm:$0xff]
    %v1383 = vld [vmem:[%s4 + $0xb0] sm:$0xf]
    %v1384 = vld [vmem:[%s4 + $0xb4] sm:$0xff]
    %v1385 = vld [vmem:[%s4 + $0xbc] sm:$0xf]
    %v1386 = vld [vmem:[%s7] sm:$0x7]
    %v1388 = vlaneseq
    %v1389 = vshrl.u32 %v1388, 7
    %v1390 = vsub.s32 0, %v1389
    %v1391 = vrot.slane %v1386, %v1390
    %v1392 = vlaneseq
    %v1393 = vshrl.u32 %v1392, 7
    %v1394 = vsub.s32 1, %v1393
    %v1395 = vrot.slane %v1386, %v1394
    %v1396 = vlaneseq
    %v1397 = vshrl.u32 %v1396, 7
    %v1398 = vsub.s32 2, %v1397
    %v1399 = vrot.slane %v1386, %v1398
    %v1403 = vld [vmem:[%s8] sm:$0x7]
    %v1405 = vlaneseq
    %v1406 = vshrl.u32 %v1405, 7
    %v1407 = vsub.s32 0, %v1406
    %v1408 = vrot.slane %v1403, %v1407
    %v1409 = vlaneseq
    %v1410 = vshrl.u32 %v1409, 7
    %v1411 = vsub.s32 1, %v1410
    %v1412 = vrot.slane %v1403, %v1411
    %v1413 = vlaneseq
    %v1414 = vshrl.u32 %v1413, 7
    %v1415 = vsub.s32 2, %v1414
    %v1416 = vrot.slane %v1403, %v1415
    %v1452 = vunpack.c.l.b16 %v1322
    %v1453 = vunpack.c.h.b16 %v1322
    %v1454 = vunpack.c.l.b16 %v1323
    %v1455 = vunpack.c.l.b16 %v1324
    %v1456 = vunpack.c.h.b16 %v1324
    %v1457 = vunpack.c.l.b16 %v1325
    %v1458 = vunpack.c.l.b16 %v1326
    %v1459 = vunpack.c.h.b16 %v1326
    %v1460 = vunpack.c.l.b16 %v1327
    %v1461 = vunpack.c.l.b16 %v1328
    %v1462 = vunpack.c.h.b16 %v1328
    %v1463 = vunpack.c.l.b16 %v1329
    %v1464 = vunpack.c.l.b16 %v1330
    %v1465 = vunpack.c.h.b16 %v1330
    %v1466 = vunpack.c.l.b16 %v1331
    %v1467 = vunpack.c.l.b16 %v1332
    %v1468 = vunpack.c.h.b16 %v1332
    %v1469 = vunpack.c.l.b16 %v1333
    %v1470 = vunpack.c.l.b16 %v1334
    %v1471 = vunpack.c.h.b16 %v1334
    %v1472 = vunpack.c.l.b16 %v1335
    %v1473 = vunpack.c.l.b16 %v1336
    %v1474 = vunpack.c.h.b16 %v1336
    %v1475 = vunpack.c.l.b16 %v1337
    %v1476 = vunpack.c.l.b16 %v1338
    %v1477 = vunpack.c.h.b16 %v1338
    %v1478 = vunpack.c.l.b16 %v1339
    %v1479 = vunpack.c.l.b16 %v1340
    %v1480 = vunpack.c.h.b16 %v1340
    %v1481 = vunpack.c.l.b16 %v1341
    %v1482 = vunpack.c.l.b16 %v1342
    %v1483 = vunpack.c.h.b16 %v1342
    %v1484 = vunpack.c.l.b16 %v1343
    %v1485 = vunpack.c.l.b16 %v1344
    %v1486 = vunpack.c.h.b16 %v1344
    %v1487 = vunpack.c.l.b16 %v1345
    %v1488 = vunpack.c.l.b16 %v1346
    %v1489 = vunpack.c.h.b16 %v1346
    %v1490 = vunpack.c.l.b16 %v1347
    %v1491 = vunpack.c.l.b16 %v1348
    %v1492 = vunpack.c.h.b16 %v1348
    %v1493 = vunpack.c.l.b16 %v1349
    %v1494 = vunpack.c.l.b16 %v1350
    %v1495 = vunpack.c.h.b16 %v1350
    %v1496 = vunpack.c.l.b16 %v1351
    %v1497 = vunpack.c.l.b16 %v1352
    %v1498 = vunpack.c.h.b16 %v1352
    %v1499 = vunpack.c.l.b16 %v1353
    %v1500 = vpack.c.b16 %v1455, %v1452
    %v1501 = vpack.c.b16 %v1456, %v1453
    %v1502 = vpack.c.b16 %v1457, %v1454
    %v1503 = vpack.c.b16 %v1461, %v1458
    %v1504 = vpack.c.b16 %v1462, %v1459
    %v1505 = vpack.c.b16 %v1463, %v1460
    %v1506 = vpack.c.b16 %v1467, %v1464
    %v1507 = vpack.c.b16 %v1468, %v1465
    %v1508 = vpack.c.b16 %v1469, %v1466
    %v1509 = vpack.c.b16 %v1473, %v1470
    %v1510 = vpack.c.b16 %v1474, %v1471
    %v1511 = vpack.c.b16 %v1475, %v1472
    %v1512 = vpack.c.b16 %v1479, %v1476
    %v1513 = vpack.c.b16 %v1480, %v1477
    %v1514 = vpack.c.b16 %v1481, %v1478
    %v1515 = vpack.c.b16 %v1485, %v1482
    %v1516 = vpack.c.b16 %v1486, %v1483
    %v1517 = vpack.c.b16 %v1487, %v1484
    %v1518 = vpack.c.b16 %v1491, %v1488
    %v1519 = vpack.c.b16 %v1492, %v1489
    %v1520 = vpack.c.b16 %v1493, %v1490
    %v1521 = vpack.c.b16 %v1497, %v1494
    %v1522 = vpack.c.b16 %v1498, %v1495
    %v1523 = vpack.c.b16 %v1499, %v1496
    %1548 = vmatprep.subr.bf16.mxu0 %v1501
    %1549 = vmatpush1.bf16.msra.mxu0 %v1500
    %1550 = vmatprep.subr.bf16.mxu0 %v1504
    %1551 = vmatpush1.bf16.msra.mxu0 %v1503
    %1552 = vmatprep.subr.bf16.mxu0 %v1507
    %1553 = vmatpush1.bf16.msra.mxu0 %v1506
    %1554 = vmatprep.subr.bf16.mxu0 %v1510
    %1555 = vmatpush1.bf16.msra.mxu0 %v1509
    %1556 = vmatprep.subr.bf16.mxu0 %v1513
    %1557 = vmatpush1.bf16.msra.mxu0 %v1512
    %1558 = vmatprep.subr.bf16.mxu0 %v1516
    %1559 = vmatpush1.bf16.msra.mxu0 %v1515
    %1560 = vmatprep.subr.bf16.mxu0 %v1519
    %1561 = vmatpush1.bf16.msra.mxu0 %v1518
    %1562 = vmatprep.subr.bf16.mxu0 %v1522
    %1563 = vmatpush1.bf16.msra.mxu0 %v1521
    %1564 = vmatprep.subr.bf16.mxu0 0
    %1565 = vmatpush1.bf16.msra.mxu0 0
    %1566 = vmatprep.subr.bf16.mxu0 0
    %1567 = vmatpush1.bf16.msra.mxu0 0
    %1568 = vmatprep.subr.bf16.mxu0 0
    %1569 = vmatpush1.bf16.msra.mxu0 0
    %1570 = vmatprep.subr.bf16.mxu0 0
    %1571 = vmatpush1.bf16.msra.mxu0 0
    %1572 = vmatprep.subr.bf16.mxu0 0
    %1573 = vmatpush1.bf16.msra.mxu0 0
    %1574 = vmatprep.subr.bf16.mxu0 0
    %1575 = vmatpush1.bf16.msra.mxu0 0
    %1576 = vmatprep.subr.bf16.mxu0 0
    %1577 = vmatpush1.bf16.msra.mxu0 0
    %1578 = vmatprep.subr.bf16.mxu0 0
    %1579 = vmatpush1.bf16.msra.mxu0 0
    %1580 = vmatprep.mubr.bf16.mxu0 0
    %1581 = vmatmul.mubr.bf16.gmra.mrb[0].mxu0 0
    %v1582 = vpop.f32.mrb[0].mxu0
    %v1583 = vadd.f32 %v1391, %v1582
    %v1584 = vpop.f32.mrb[0].mxu0
    %v1585 = vadd.f32 %v1395, %v1584
    %v1586 = vpop.f32.mrb[0].mxu0
    %v1587 = vadd.f32 %v1391, %v1586
    %v1588 = vpop.f32.mrb[0].mxu0
    %v1589 = vadd.f32 %v1395, %v1588
    %1590 = vdwg.mxu0
    %1591 = vmatprep.subr.bf16.mxu0 0
    %1592 = vmatpush1.bf16.msra.mxu0 %v1502
    %1593 = vmatprep.subr.bf16.mxu0 0
    %1594 = vmatpush1.bf16.msra.mxu0 %v1505
    %1595 = vmatprep.subr.bf16.mxu0 0
    %1596 = vmatpush1.bf16.msra.mxu0 %v1508
    %1597 = vmatprep.subr.bf16.mxu0 0
    %1598 = vmatpush1.bf16.msra.mxu0 %v1511
    %1599 = vmatprep.subr.bf16.mxu0 0
    %1600 = vmatpush1.bf16.msra.mxu0 %v1514
    %1601 = vmatprep.subr.bf16.mxu0 0
    %1602 = vmatpush1.bf16.msra.mxu0 %v1517
    %1603 = vmatprep.subr.bf16.mxu0 0
    %1604 = vmatpush1.bf16.msra.mxu0 %v1520
    %1605 = vmatprep.subr.bf16.mxu0 0
    %1606 = vmatpush1.bf16.msra.mxu0 %v1523
    %1607 = vmatprep.subr.bf16.mxu0 0
    %1608 = vmatpush1.bf16.msra.mxu0 0
    %1609 = vmatprep.subr.bf16.mxu0 0
    %1610 = vmatpush1.bf16.msra.mxu0 0
    %1611 = vmatprep.subr.bf16.mxu0 0
    %1612 = vmatpush1.bf16.msra.mxu0 0
    %1613 = vmatprep.subr.bf16.mxu0 0
    %1614 = vmatpush1.bf16.msra.mxu0 0
    %1615 = vmatprep.subr.bf16.mxu0 0
    %1616 = vmatpush1.bf16.msra.mxu0 0
    %1617 = vmatprep.subr.bf16.mxu0 0
    %1618 = vmatpush1.bf16.msra.mxu0 0
    %1619 = vmatprep.subr.bf16.mxu0 0
    %1620 = vmatpush1.bf16.msra.mxu0 0
    %1621 = vmatprep.subr.bf16.mxu0 0
    %1622 = vmatpush1.bf16.msra.mxu0 0
    %1623 = vmatprep.mubr.bf16.mxu0 0
    %1624 = vmatmul.mubr.bf16.gmra.mrb[0].mxu0 0
    %v1625 = vpop.f32.mrb[0].mxu0
    %v1626 = vadd.f32 %v1399, %v1625
    %v1627 = vpop.f32.mrb[0].mxu0
    %v1628 = vpop.f32.mrb[0].mxu0
    %v1629 = vadd.f32 %v1399, %v1628
    %v1630 = vpop.f32.mrb[0].mxu0
    %1631 = vdwg.mxu0
    %v1664 = vunpack.c.l.b16 %v1354
    %v1665 = vunpack.c.h.b16 %v1354
    %v1666 = vunpack.c.l.b16 %v1355
    %v1667 = vunpack.c.l.b16 %v1356
    %v1668 = vunpack.c.h.b16 %v1356
    %v1669 = vunpack.c.l.b16 %v1357
    %v1670 = vunpack.c.l.b16 %v1358
    %v1671 = vunpack.c.h.b16 %v1358
    %v1672 = vunpack.c.l.b16 %v1359
    %v1673 = vunpack.c.l.b16 %v1360
    %v1674 = vunpack.c.h.b16 %v1360
    %v1675 = vunpack.c.l.b16 %v1361
    %v1676 = vunpack.c.l.b16 %v1362
    %v1677 = vunpack.c.h.b16 %v1362
    %v1678 = vunpack.c.l.b16 %v1363
    %v1679 = vunpack.c.l.b16 %v1364
    %v1680 = vunpack.c.h.b16 %v1364
    %v1681 = vunpack.c.l.b16 %v1365
    %v1682 = vunpack.c.l.b16 %v1366
    %v1683 = vunpack.c.h.b16 %v1366
    %v1684 = vunpack.c.l.b16 %v1367
    %v1685 = vunpack.c.l.b16 %v1368
    %v1686 = vunpack.c.h.b16 %v1368
    %v1687 = vunpack.c.l.b16 %v1369
    %v1688 = vunpack.c.l.b16 %v1370
    %v1689 = vunpack.c.h.b16 %v1370
    %v1690 = vunpack.c.l.b16 %v1371
    %v1691 = vunpack.c.l.b16 %v1372
    %v1692 = vunpack.c.h.b16 %v1372
    %v1693 = vunpack.c.l.b16 %v1373
    %v1694 = vunpack.c.l.b16 %v1374
    %v1695 = vunpack.c.h.b16 %v1374
    %v1696 = vunpack.c.l.b16 %v1375
    %v1697 = vunpack.c.l.b16 %v1376
    %v1698 = vunpack.c.h.b16 %v1376
    %v1699 = vunpack.c.l.b16 %v1377
    %v1700 = vunpack.c.l.b16 %v1378
    %v1701 = vunpack.c.h.b16 %v1378
    %v1702 = vunpack.c.l.b16 %v1379
    %v1703 = vunpack.c.l.b16 %v1380
    %v1704 = vunpack.c.h.b16 %v1380
    %v1705 = vunpack.c.l.b16 %v1381
    %v1706 = vunpack.c.l.b16 %v1382
    %v1707 = vunpack.c.h.b16 %v1382
    %v1708 = vunpack.c.l.b16 %v1383
    %v1709 = vunpack.c.l.b16 %v1384
    %v1710 = vunpack.c.h.b16 %v1384
    %v1711 = vunpack.c.l.b16 %v1385
    %v1712 = vpack.c.b16 %v1667, %v1664
    %v1713 = vpack.c.b16 %v1668, %v1665
    %v1714 = vpack.c.b16 %v1669, %v1666
    %v1715 = vpack.c.b16 %v1673, %v1670
    %v1716 = vpack.c.b16 %v1674, %v1671
    %v1717 = vpack.c.b16 %v1675, %v1672
    %v1718 = vpack.c.b16 %v1679, %v1676
    %v1719 = vpack.c.b16 %v1680, %v1677
    %v1720 = vpack.c.b16 %v1681, %v1678
    %v1721 = vpack.c.b16 %v1685, %v1682
    %v1722 = vpack.c.b16 %v1686, %v1683
    %v1723 = vpack.c.b16 %v1687, %v1684
    %v1724 = vpack.c.b16 %v1691, %v1688
    %v1725 = vpack.c.b16 %v1692, %v1689
    %v1726 = vpack.c.b16 %v1693, %v1690
    %v1727 = vpack.c.b16 %v1697, %v1694
    %v1728 = vpack.c.b16 %v1698, %v1695
    %v1729 = vpack.c.b16 %v1699, %v1696
    %v1730 = vpack.c.b16 %v1703, %v1700
    %v1731 = vpack.c.b16 %v1704, %v1701
    %v1732 = vpack.c.b16 %v1705, %v1702
    %v1733 = vpack.c.b16 %v1709, %v1706
    %v1734 = vpack.c.b16 %v1710, %v1707
    %v1735 = vpack.c.b16 %v1711, %v1708
    %1760 = vmatprep.subr.bf16.mxu0 %v1713
    %1761 = vmatpush1.bf16.msra.mxu0 %v1712
    %1762 = vmatprep.subr.bf16.mxu0 %v1716
    %1763 = vmatpush1.bf16.msra.mxu0 %v1715
    %1764 = vmatprep.subr.bf16.mxu0 %v1719
    %1765 = vmatpush1.bf16.msra.mxu0 %v1718
    %1766 = vmatprep.subr.bf16.mxu0 %v1722
    %1767 = vmatpush1.bf16.msra.mxu0 %v1721
    %1768 = vmatprep.subr.bf16.mxu0 %v1725
    %1769 = vmatpush1.bf16.msra.mxu0 %v1724
    %1770 = vmatprep.subr.bf16.mxu0 %v1728
    %1771 = vmatpush1.bf16.msra.mxu0 %v1727
    %1772 = vmatprep.subr.bf16.mxu0 %v1731
    %1773 = vmatpush1.bf16.msra.mxu0 %v1730
    %1774 = vmatprep.subr.bf16.mxu0 %v1734
    %1775 = vmatpush1.bf16.msra.mxu0 %v1733
    %1776 = vmatprep.subr.bf16.mxu0 0
    %1777 = vmatpush1.bf16.msra.mxu0 0
    %1778 = vmatprep.subr.bf16.mxu0 0
    %1779 = vmatpush1.bf16.msra.mxu0 0
    %1780 = vmatprep.subr.bf16.mxu0 0
    %1781 = vmatpush1.bf16.msra.mxu0 0
    %1782 = vmatprep.subr.bf16.mxu0 0
    %1783 = vmatpush1.bf16.msra.mxu0 0
    %1784 = vmatprep.subr.bf16.mxu0 0
    %1785 = vmatpush1.bf16.msra.mxu0 0
    %1786 = vmatprep.subr.bf16.mxu0 0
    %1787 = vmatpush1.bf16.msra.mxu0 0
    %1788 = vmatprep.subr.bf16.mxu0 0
    %1789 = vmatpush1.bf16.msra.mxu0 0
    %1790 = vmatprep.subr.bf16.mxu0 0
    %1791 = vmatpush1.bf16.msra.mxu0 0
    %1792 = vmatprep.mubr.bf16.mxu0 0
    %1793 = vmatmul.mubr.bf16.gmra.mrb[0].mxu0 0
    %v1794 = vpop.f32.mrb[0].mxu0
    %v1795 = vadd.f32 %v1408, %v1794
    %v1796 = vpop.f32.mrb[0].mxu0
    %v1797 = vadd.f32 %v1412, %v1796
    %v1798 = vpop.f32.mrb[0].mxu0
    %v1799 = vadd.f32 %v1408, %v1798
    %v1800 = vpop.f32.mrb[0].mxu0
    %v1801 = vadd.f32 %v1412, %v1800
    %1802 = vdwg.mxu0
    %1803 = vmatprep.subr.bf16.mxu0 0
    %1804 = vmatpush1.bf16.msra.mxu0 %v1714
    %1805 = vmatprep.subr.bf16.mxu0 0
    %1806 = vmatpush1.bf16.msra.mxu0 %v1717
    %1807 = vmatprep.subr.bf16.mxu0 0
    %1808 = vmatpush1.bf16.msra.mxu0 %v1720
    %1809 = vmatprep.subr.bf16.mxu0 0
    %1810 = vmatpush1.bf16.msra.mxu0 %v1723
    %1811 = vmatprep.subr.bf16.mxu0 0
    %1812 = vmatpush1.bf16.msra.mxu0 %v1726
    %1813 = vmatprep.subr.bf16.mxu0 0
    %1814 = vmatpush1.bf16.msra.mxu0 %v1729
    %1815 = vmatprep.subr.bf16.mxu0 0
    %1816 = vmatpush1.bf16.msra.mxu0 %v1732
    %1817 = vmatprep.subr.bf16.mxu0 0
    %1818 = vmatpush1.bf16.msra.mxu0 %v1735
    %1819 = vmatprep.subr.bf16.mxu0 0
    %1820 = vmatpush1.bf16.msra.mxu0 0
    %1821 = vmatprep.subr.bf16.mxu0 0
    %1822 = vmatpush1.bf16.msra.mxu0 0
    %1823 = vmatprep.subr.bf16.mxu0 0
    %1824 = vmatpush1.bf16.msra.mxu0 0
    %1825 = vmatprep.subr.bf16.mxu0 0
    %1826 = vmatpush1.bf16.msra.mxu0 0
    %1827 = vmatprep.subr.bf16.mxu0 0
    %1828 = vmatpush1.bf16.msra.mxu0 0
    %1829 = vmatprep.subr.bf16.mxu0 0
    %1830 = vmatpush1.bf16.msra.mxu0 0
    %1831 = vmatprep.subr.bf16.mxu0 0
    %1832 = vmatpush1.bf16.msra.mxu0 0
    %1833 = vmatprep.subr.bf16.mxu0 0
    %1834 = vmatpush1.bf16.msra.mxu0 0
    %1835 = vmatprep.mubr.bf16.mxu0 0
    %1836 = vmatmul.mubr.bf16.gmra.mrb[0].mxu0 0
    %v1837 = vpop.f32.mrb[0].mxu0
    %v1838 = vadd.f32 %v1416, %v1837
    %v1839 = vpop.f32.mrb[0].mxu0
    %v1840 = vpop.f32.mrb[0].mxu0
    %v1841 = vadd.f32 %v1416, %v1840
    %v1842 = vpop.f32.mrb[0].mxu0
    %1843 = vdwg.mxu0
    %s1844 = smul.u32 0, 3
    %s1845 = smul.addr %s1844, 8
    %s1846 = scalar_lea.vmem [#allocation2], %s1845
    %v1847 = vld [vmem:[%s1846] sm:$0xff]
    %v1848 = vld [vmem:[%s1846 + $0x8] sm:$0xff]
    %v1849 = vld [vmem:[%s1846 + $0x10] sm:$0xff]
    %v1850 = vunpack.c.l.bf16 %v1847
    %v1851 = vunpack.c.l.bf16 %v1848
    %v1852 = vunpack.c.l.bf16 %v1849
    %v1853 = vunpack.c.h.bf16 %v1847
    %v1854 = vunpack.c.h.bf16 %v1848
    %v1855 = vunpack.c.h.bf16 %v1849
    %s1856 = smul.u32 7, 3
    %s1857 = smul.addr %s1856, 8
    %s1858 = scalar_lea.vmem [#allocation3], %s1857
    %v1859 = vld [vmem:[%s1858] sm:$0xff]
    %v1860 = vld [vmem:[%s1858 + $0x8] sm:$0xff]
    %v1861 = vld [vmem:[%s1858 + $0x10] sm:$0xff]
    %v1862 = vunpack.c.l.bf16 %v1859
    %v1863 = vunpack.c.l.bf16 %v1860
    %v1864 = vunpack.c.l.bf16 %v1861
    %v1865 = vunpack.c.h.bf16 %v1859
    %v1866 = vunpack.c.h.bf16 %v1860
    %v1867 = vunpack.c.h.bf16 %v1861
    %v1868 = vadd.f32 %v1850, %v1583
    %v1869 = vadd.f32 %v1851, %v1585
    %v1870 = vadd.f32 %v1853, %v1587
    %v1871 = vadd.f32 %v1854, %v1589
    %v1872 = vxor.u32 %v1868, 2147483648
    %v1873 = vxor.u32 %v1869, 2147483648
    %v1874 = vxor.u32 %v1870, 2147483648
    %v1875 = vxor.u32 %v1871, 2147483648
    %v1876 = vmul.f32 %v1872, 1.442695
    %v1877 = vpow.pop %v1876
    %v1878 = vmul.f32 %v1873, 1.442695
    %v1879 = vpow.pop %v1878
    %v1880 = vmul.f32 %v1874, 1.442695
    %v1881 = vpow.pop %v1880
    %v1882 = vmul.f32 %v1875, 1.442695
    %v1883 = vpow.pop %v1882
    %v1884 = vadd.f32 %v1877, 1.0
    %v1885 = vadd.f32 %v1879, 1.0
    %v1886 = vadd.f32 %v1881, 1.0
    %v1887 = vadd.f32 %v1883, 1.0
    %v1888 = vrcp.pop %v1884
    %v1889 = vmul.f32 1.0, %v1888
    %v1890 = vrcp.pop %v1885
    %v1891 = vmul.f32 1.0, %v1890
    %v1892 = vrcp.pop %v1886
    %v1893 = vmul.f32 1.0, %v1892
    %v1894 = vrcp.pop %v1887
    %v1895 = vmul.f32 1.0, %v1894
    %v1896 = vmul.f32 %v1889, %v1626
    %v1897 = vmul.f32 %v1893, %v1629
    %v1898 = vadd.f32 %v1852, %v1896
    %v1899 = vadd.f32 %v1855, %v1897
    %v1900 = vtanh.pop %v1898
    %v1901 = vtanh.pop %v1899
    %v1902 = vsub.f32 0.0, %v1900
    %v1903 = vsub.f32 0.0, %v1901
    %v1904 = vmul.f32 %v1891, %v1902
    %v1905 = vmul.f32 %v1895, %v1903
    %v1906 = vadd.f32 %v1900, %v1904
    %v1907 = vadd.f32 %v1901, %v1905
    %v1908 = vadd.f32 %v1862, %v1795
    %v1909 = vadd.f32 %v1863, %v1797
    %v1910 = vadd.f32 %v1865, %v1799
    %v1911 = vadd.f32 %v1866, %v1801
    %v1912 = vxor.u32 %v1908, 2147483648
    %v1913 = vxor.u32 %v1909, 2147483648
    %v1914 = vxor.u32 %v1910, 2147483648
    %v1915 = vxor.u32 %v1911, 2147483648
    %v1916 = vmul.f32 %v1912, 1.442695
    %v1917 = vpow.pop %v1916
    %v1918 = vmul.f32 %v1913, 1.442695
    %v1919 = vpow.pop %v1918
    %v1920 = vmul.f32 %v1914, 1.442695
    %v1921 = vpow.pop %v1920
    %v1922 = vmul.f32 %v1915, 1.442695
    %v1923 = vpow.pop %v1922
    %v1924 = vadd.f32 %v1917, 1.0
    %v1925 = vadd.f32 %v1919, 1.0
    %v1926 = vadd.f32 %v1921, 1.0
    %v1927 = vadd.f32 %v1923, 1.0
    %v1928 = vrcp.pop %v1924
    %v1929 = vmul.f32 1.0, %v1928
    %v1930 = vrcp.pop %v1925
    %v1931 = vmul.f32 1.0, %v1930
    %v1932 = vrcp.pop %v1926
    %v1933 = vmul.f32 1.0, %v1932
    %v1934 = vrcp.pop %v1927
    %v1935 = vmul.f32 1.0, %v1934
    %v1936 = vmul.f32 %v1929, %v1838
    %v1937 = vmul.f32 %v1933, %v1841
    %v1938 = vadd.f32 %v1864, %v1936
    %v1939 = vadd.f32 %v1867, %v1937
    %v1940 = vtanh.pop %v1938
    %v1941 = vtanh.pop %v1939
    %v1942 = vsub.f32 0.0, %v1940
    %v1943 = vsub.f32 0.0, %v1941
    %v1944 = vmul.f32 %v1931, %v1942
    %v1945 = vmul.f32 %v1935, %v1943
    %v1946 = vadd.f32 %v1940, %v1944
    %v1947 = vadd.f32 %v1941, %v1945
    %v1948 = vpack.c.bf16 %v1907, %v1906
    %v1950 = vunpack.c.l.b16 %v1948
    %v1951 = vunpack.c.h.b16 %v1948
    %v1952 = vpack.c.b16 %v1950, %v1950
    %v1953 = vpack.c.b16 %v1951, %v1951
    %s1956 = smul.u32 0, 2
    %s1957 = smul.addr %s1956, 4
    %s1958 = scalar_lea.vmem [#allocation4], %s1957
    %1959 = vst [vmem:[%s1958] sm:$0xf] %v1952
    %1960 = vst [vmem:[%s1958 + $0x8] sm:$0xf] %v1953
    %v1961 = vpack.c.bf16 %v1947, %v1946
    %v1963 = vunpack.c.l.b16 %v1961
    %v1964 = vunpack.c.h.b16 %v1961
    %v1965 = vpack.c.b16 %v1963, %v1963
    %v1966 = vpack.c.b16 %v1964, %v1964
    %s1969 = smul.u32 14, 2
    %s1970 = smul.addr %s1969, 4
    %s1971 = scalar_lea.vmem [#allocation4], %s1970
    %1972 = vst [vmem:[%s1971 + $0x4] sm:$0xf] %v1965
    %1973 = vst [vmem:[%s1971 + $0xc] sm:$0xf] %v1966
    %1974 = vmatprep.subr.bf16.mxu0 %v1501
    %1975 = vmatpush1.bf16.msra.mxu0 %v1500
    %1976 = vmatprep.subr.bf16.mxu0 %v1504
    %1977 = vmatpush1.bf16.msra.mxu0 %v1503
    %1978 = vmatprep.subr.bf16.mxu0 %v1507
    %1979 = vmatpush1.bf16.msra.mxu0 %v1506
    %1980 = vmatprep.subr.bf16.mxu0 %v1510
    %1981 = vmatpush1.bf16.msra.mxu0 %v1509
    %1982 = vmatprep.subr.bf16.mxu0 %v1513
    %1983 = vmatpush1.bf16.msra.mxu0 %v1512
    %1984 = vmatprep.subr.bf16.mxu0 %v1516
    %1985 = vmatpush1.bf16.msra.mxu0 %v1515
    %1986 = vmatprep.subr.bf16.mxu0 %v1519
    %1987 = vmatpush1.bf16.msra.mxu0 %v1518
    %1988 = vmatprep.subr.bf16.mxu0 %v1522
    %1989 = vmatpush1.bf16.msra.mxu0 %v1521
    %1990 = vmatprep.subr.bf16.mxu0 0
    %1991 = vmatpush1.bf16.msra.mxu0 0
    %1992 = vmatprep.subr.bf16.mxu0 0
    %1993 = vmatpush1.bf16.msra.mxu0 0
    %1994 = vmatprep.subr.bf16.mxu0 0
    %1995 = vmatpush1.bf16.msra.mxu0 0
    %1996 = vmatprep.subr.bf16.mxu0 0
    %1997 = vmatpush1.bf16.msra.mxu0 0
    %1998 = vmatprep.subr.bf16.mxu0 0
    %1999 = vmatpush1.bf16.msra.mxu0 0
    %2000 = vmatprep.subr.bf16.mxu0 0
    %2001 = vmatpush1.bf16.msra.mxu0 0
    %2002 = vmatprep.subr.bf16.mxu0 0
    %2003 = vmatpush1.bf16.msra.mxu0 0
    %2004 = vmatprep.subr.bf16.mxu0 0
    %2005 = vmatpush1.bf16.msra.mxu0 0
    %2006 = vmatprep.mubr.bf16.mxu0 0
    %2007 = vmatmul.mubr.bf16.gmra.mrb[0].mxu0 %v1948
    %v2008 = vpop.f32.mrb[0].mxu0
    %v2009 = vadd.f32 %v1391, %v2008
    %v2010 = vpop.f32.mrb[0].mxu0
    %v2011 = vadd.f32 %v1395, %v2010
    %v2012 = vpop.f32.mrb[0].mxu0
    %v2013 = vadd.f32 %v1391, %v2012
    %v2014 = vpop.f32.mrb[0].mxu0
    %v2015 = vadd.f32 %v1395, %v2014
    %2016 = vdwg.mxu0
    %2017 = vmatprep.subr.bf16.mxu0 0
    %2018 = vmatpush1.bf16.msra.mxu0 %v1502
    %2019 = vmatprep.subr.bf16.mxu0 0
    %2020 = vmatpush1.bf16.msra.mxu0 %v1505
    %2021 = vmatprep.subr.bf16.mxu0 0
    %2022 = vmatpush1.bf16.msra.mxu0 %v1508
    %2023 = vmatprep.subr.bf16.mxu0 0
    %2024 = vmatpush1.bf16.msra.mxu0 %v1511
    %2025 = vmatprep.subr.bf16.mxu0 0
    %2026 = vmatpush1.bf16.msra.mxu0 %v1514
    %2027 = vmatprep.subr.bf16.mxu0 0
    %2028 = vmatpush1.bf16.msra.mxu0 %v1517
    %2029 = vmatprep.subr.bf16.mxu0 0
    %2030 = vmatpush1.bf16.msra.mxu0 %v1520
    %2031 = vmatprep.subr.bf16.mxu0 0
    %2032 = vmatpush1.bf16.msra.mxu0 %v1523
    %2033 = vmatprep.subr.bf16.mxu0 0
    %2034 = vmatpush1.bf16.msra.mxu0 0
    %2035 = vmatprep.subr.bf16.mxu0 0
    %2036 = vmatpush1.bf16.msra.mxu0 0
    %2037 = vmatprep.subr.bf16.mxu0 0
    %2038 = vmatpush1.bf16.msra.mxu0 0
    %2039 = vmatprep.subr.bf16.mxu0 0
    %2040 = vmatpush1.bf16.msra.mxu0 0
    %2041 = vmatprep.subr.bf16.mxu0 0
    %2042 = vmatpush1.bf16.msra.mxu0 0
    %2043 = vmatprep.subr.bf16.mxu0 0
    %2044 = vmatpush1.bf16.msra.mxu0 0
    %2045 = vmatprep.subr.bf16.mxu0 0
    %2046 = vmatpush1.bf16.msra.mxu0 0
    %2047 = vmatprep.subr.bf16.mxu0 0
    %2048 = vmatpush1.bf16.msra.mxu0 0
    %2049 = vmatprep.mubr.bf16.mxu0 0
    %2050 = vmatmul.mubr.bf16.gmra.mrb[0].mxu0 %v1948
    %v2051 = vpop.f32.mrb[0].mxu0
    %v2052 = vadd.f32 %v1399, %v2051
    %v2053 = vpop.f32.mrb[0].mxu0
    %v2054 = vpop.f32.mrb[0].mxu0
    %v2055 = vadd.f32 %v1399, %v2054
    %v2056 = vpop.f32.mrb[0].mxu0
    %2057 = vdwg.mxu0
    %2058 = vmatprep.subr.bf16.mxu0 %v1713
    %2059 = vmatpush1.bf16.msra.mxu0 %v1712
    %2060 = vmatprep.subr.bf16.mxu0 %v1716
    %2061 = vmatpush1.bf16.msra.mxu0 %v1715
    %2062 = vmatprep.subr.bf16.mxu0 %v1719
    %2063 = vmatpush1.bf16.msra.mxu0 %v1718
    %2064 = vmatprep.subr.bf16.mxu0 %v1722
    %2065 = vmatpush1.bf16.msra.mxu0 %v1721
    %2066 = vmatprep.subr.bf16.mxu0 %v1725
    %2067 = vmatpush1.bf16.msra.mxu0 %v1724
    %2068 = vmatprep.subr.bf16.mxu0 %v1728
    %2069 = vmatpush1.bf16.msra.mxu0 %v1727
    %2070 = vmatprep.subr.bf16.mxu0 %v1731
    %2071 = vmatpush1.bf16.msra.mxu0 %v1730
    %2072 = vmatprep.subr.bf16.mxu0 %v1734
    %2073 = vmatpush1.bf16.msra.mxu0 %v1733
    %2074 = vmatprep.subr.bf16.mxu0 0
    %2075 = vmatpush1.bf16.msra.mxu0 0
    %2076 = vmatprep.subr.bf16.mxu0 0
    %2077 = vmatpush1.bf16.msra.mxu0 0
    %2078 = vmatprep.subr.bf16.mxu0 0
    %2079 = vmatpush1.bf16.msra.mxu0 0
    %2080 = vmatprep.subr.bf16.mxu0 0
    %2081 = vmatpush1.bf16.msra.mxu0 0
    %2082 = vmatprep.subr.bf16.mxu0 0
    %2083 = vmatpush1.bf16.msra.mxu0 0
    %2084 = vmatprep.subr.bf16.mxu0 0
    %2085 = vmatpush1.bf16.msra.mxu0 0
    %2086 = vmatprep.subr.bf16.mxu0 0
    %2087 = vmatpush1.bf16.msra.mxu0 0
    %2088 = vmatprep.subr.bf16.mxu0 0
    %2089 = vmatpush1.bf16.msra.mxu0 0
    %2090 = vmatprep.mubr.bf16.mxu0 0
    %2091 = vmatmul.mubr.bf16.gmra.mrb[0].mxu0 %v1961
    %v2092 = vpop.f32.mrb[0].mxu0
    %v2093 = vadd.f32 %v1408, %v2092
    %v2094 = vpop.f32.mrb[0].mxu0
    %v2095 = vadd.f32 %v1412, %v2094
    %v2096 = vpop.f32.mrb[0].mxu0
    %v2097 = vadd.f32 %v1408, %v2096
    %v2098 = vpop.f32.mrb[0].mxu0
    %v2099 = vadd.f32 %v1412, %v2098
    %2100 = vdwg.mxu0
    %2101 = vmatprep.subr.bf16.mxu0 0
    %2102 = vmatpush1.bf16.msra.mxu0 %v1714
    %2103 = vmatprep.subr.bf16.mxu0 0
    %2104 = vmatpush1.bf16.msra.mxu0 %v1717
    %2105 = vmatprep.subr.bf16.mxu0 0
    %2106 = vmatpush1.bf16.msra.mxu0 %v1720
    %2107 = vmatprep.subr.bf16.mxu0 0
    %2108 = vmatpush1.bf16.msra.mxu0 %v1723
    %2109 = vmatprep.subr.bf16.mxu0 0
    %2110 = vmatpush1.bf16.msra.mxu0 %v1726
    %2111 = vmatprep.subr.bf16.mxu0 0
    %2112 = vmatpush1.bf16.msra.mxu0 %v1729
    %2113 = vmatprep.subr.bf16.mxu0 0
    %2114 = vmatpush1.bf16.msra.mxu0 %v1732
    %2115 = vmatprep.subr.bf16.mxu0 0
    %2116 = vmatpush1.bf16.msra.mxu0 %v1735
    %2117 = vmatprep.subr.bf16.mxu0 0
    %2118 = vmatpush1.bf16.msra.mxu0 0
    %2119 = vmatprep.subr.bf16.mxu0 0
    %2120 = vmatpush1.bf16.msra.mxu0 0
    %2121 = vmatprep.subr.bf16.mxu0 0
    %2122 = vmatpush1.bf16.msra.mxu0 0
    %2123 = vmatprep.subr.bf16.mxu0 0
    %2124 = vmatpush1.bf16.msra.mxu0 0
    %2125 = vmatprep.subr.bf16.mxu0 0
    %2126 = vmatpush1.bf16.msra.mxu0 0
    %2127 = vmatprep.subr.bf16.mxu0 0
    %2128 = vmatpush1.bf16.msra.mxu0 0
    %2129 = vmatprep.subr.bf16.mxu0 0
    %2130 = vmatpush1.bf16.msra.mxu0 0
    %2131 = vmatprep.subr.bf16.mxu0 0
    %2132 = vmatpush1.bf16.msra.mxu0 0
    %2133 = vmatprep.mubr.bf16.mxu0 0
    %2134 = vmatmul.mubr.bf16.gmra.mrb[0].mxu0 %v1961
    %v2135 = vpop.f32.mrb[0].mxu0
    %v2136 = vadd.f32 %v1416, %v2135
    %v2137 = vpop.f32.mrb[0].mxu0
    %v2138 = vpop.f32.mrb[0].mxu0
    %v2139 = vadd.f32 %v1416, %v2138
    %v2140 = vpop.f32.mrb[0].mxu0
    %2141 = vdwg.mxu0
    %s2142 = smul.u32 1, 3
    %s2143 = smul.addr %s2142, 8
    %s2144 = scalar_lea.vmem [#allocation2], %s2143
    %v2145 = vld [vmem:[%s2144] sm:$0xff]
    %v2146 = vld [vmem:[%s2144 + $0x8] sm:$0xff]
    %v2147 = vld [vmem:[%s2144 + $0x10] sm:$0xff]
    %v2148 = vunpack.c.l.bf16 %v2145
    %v2149 = vunpack.c.l.bf16 %v2146
    %v2150 = vunpack.c.l.bf16 %v2147
    %v2151 = vunpack.c.h.bf16 %v2145
    %v2152 = vunpack.c.h.bf16 %v2146
    %v2153 = vunpack.c.h.bf16 %v2147
    %s2154 = smul.u32 6, 3
    %s2155 = smul.addr %s2154, 8
    %s2156 = scalar_lea.vmem [#allocation3], %s2155
    %v2157 = vld [vmem:[%s2156] sm:$0xff]
    %v2158 = vld [vmem:[%s2156 + $0x8] sm:$0xff]
    %v2159 = vld [vmem:[%s2156 + $0x10] sm:$0xff]
    %v2160 = vunpack.c.l.bf16 %v2157
    %v2161 = vunpack.c.l.bf16 %v2158
    %v2162 = vunpack.c.l.bf16 %v2159
    %v2163 = vunpack.c.h.bf16 %v2157
    %v2164 = vunpack.c.h.bf16 %v2158
    %v2165 = vunpack.c.h.bf16 %v2159
    %v2166 = vadd.f32 %v2148, %v2009
    %v2167 = vadd.f32 %v2149, %v2011
    %v2168 = vadd.f32 %v2151, %v2013
    %v2169 = vadd.f32 %v2152, %v2015
    %v2170 = vxor.u32 %v2166, 2147483648
    %v2171 = vxor.u32 %v2167, 2147483648
    %v2172 = vxor.u32 %v2168, 2147483648
    %v2173 = vxor.u32 %v2169, 2147483648
    %v2174 = vmul.f32 %v2170, 1.442695
    %v2175 = vpow.pop %v2174
    %v2176 = vmul.f32 %v2171, 1.442695
    %v2177 = vpow.pop %v2176
    %v2178 = vmul.f32 %v2172, 1.442695
    %v2179 = vpow.pop %v2178
    %v2180 = vmul.f32 %v2173, 1.442695
    %v2181 = vpow.pop %v2180
    %v2182 = vadd.f32 %v2175, 1.0
    %v2183 = vadd.f32 %v2177, 1.0
    %v2184 = vadd.f32 %v2179, 1.0
    %v2185 = vadd.f32 %v2181, 1.0
    %v2186 = vrcp.pop %v2182
    %v2187 = vmul.f32 1.0, %v2186
    %v2188 = vrcp.pop %v2183
    %v2189 = vmul.f32 1.0, %v2188
    %v2190 = vrcp.pop %v2184
    %v2191 = vmul.f32 1.0, %v2190
    %v2192 = vrcp.pop %v2185
    %v2193 = vmul.f32 1.0, %v2192
    %v2194 = vmul.f32 %v2187, %v2052
    %v2195 = vmul.f32 %v2191, %v2055
    %v2196 = vadd.f32 %v2150, %v2194
    %v2197 = vadd.f32 %v2153, %v2195
    %v2198 = vtanh.pop %v2196
    %v2199 = vtanh.pop %v2197
    %v2200 = vsub.f32 %v1906, %v2198
    %v2201 = vsub.f32 %v1907, %v2199
    %v2202 = vmul.f32 %v2189, %v2200
    %v2203 = vmul.f32 %v2193, %v2201
    %v2204 = vadd.f32 %v2198, %v2202
    %v2205 = vadd.f32 %v2199, %v2203
    %v2206 = vadd.f32 %v2160, %v2093
    %v2207 = vadd.f32 %v2161, %v2095
    %v2208 = vadd.f32 %v2163, %v2097
    %v2209 = vadd.f32 %v2164, %v2099
    %v2210 = vxor.u32 %v2206, 2147483648
    %v2211 = vxor.u32 %v2207, 2147483648
    %v2212 = vxor.u32 %v2208, 2147483648
    %v2213 = vxor.u32 %v2209, 2147483648
    %v2214 = vmul.f32 %v2210, 1.442695
    %v2215 = vpow.pop %v2214
    %v2216 = vmul.f32 %v2211, 1.442695
    %v2217 = vpow.pop %v2216
    %v2218 = vmul.f32 %v2212, 1.442695
    %v2219 = vpow.pop %v2218
    %v2220 = vmul.f32 %v2213, 1.442695
    %v2221 = vpow.pop %v2220
    %v2222 = vadd.f32 %v2215, 1.0
    %v2223 = vadd.f32 %v2217, 1.0
    %v2224 = vadd.f32 %v2219, 1.0
    %v2225 = vadd.f32 %v2221, 1.0
    %v2226 = vrcp.pop %v2222
    %v2227 = vmul.f32 1.0, %v2226
    %v2228 = vrcp.pop %v2223
    %v2229 = vmul.f32 1.0, %v2228
    %v2230 = vrcp.pop %v2224
    %v2231 = vmul.f32 1.0, %v2230
    %v2232 = vrcp.pop %v2225
    %v2233 = vmul.f32 1.0, %v2232
    %v2234 = vmul.f32 %v2227, %v2136
    %v2235 = vmul.f32 %v2231, %v2139
    %v2236 = vadd.f32 %v2162, %v2234
    %v2237 = vadd.f32 %v2165, %v2235
    %v2238 = vtanh.pop %v2236
    %v2239 = vtanh.pop %v2237
    %v2240 = vsub.f32 %v1946, %v2238
    %v2241 = vsub.f32 %v1947, %v2239
    %v2242 = vmul.f32 %v2229, %v2240
    %v2243 = vmul.f32 %v2233, %v2241
    %v2244 = vadd.f32 %v2238, %v2242
    %v2245 = vadd.f32 %v2239, %v2243
    %v2246 = vpack.c.bf16 %v2205, %v2204
    %v2248 = vunpack.c.l.b16 %v2246
    %v2249 = vunpack.c.h.b16 %v2246
    %v2250 = vpack.c.b16 %v2248, %v2248
    %v2251 = vpack.c.b16 %v2249, %v2249
    %s2254 = smul.u32 2, 2
    %s2255 = smul.addr %s2254, 4
    %s2256 = scalar_lea.vmem [#allocation4], %s2255
    %2257 = vst [vmem:[%s2256] sm:$0xf] %v2250
    %2258 = vst [vmem:[%s2256 + $0x8] sm:$0xf] %v2251
    %v2259 = vpack.c.bf16 %v2245, %v2244
    %v2261 = vunpack.c.l.b16 %v2259
    %v2262 = vunpack.c.h.b16 %v2259
    %v2263 = vpack.c.b16 %v2261, %v2261
    %v2264 = vpack.c.b16 %v2262, %v2262
    %s2267 = smul.u32 12, 2
    %s2268 = smul.addr %s2267, 4
    %s2269 = scalar_lea.vmem [#allocation4], %s2268
    %2270 = vst [vmem:[%s2269 + $0x4] sm:$0xf] %v2263
    %2271 = vst [vmem:[%s2269 + $0xc] sm:$0xf] %v2264
    %2272 = vmatprep.subr.bf16.mxu0 %v1501
    %2273 = vmatpush1.bf16.msra.mxu0 %v1500
    %2274 = vmatprep.subr.bf16.mxu0 %v1504
    %2275 = vmatpush1.bf16.msra.mxu0 %v1503
    %2276 = vmatprep.subr.bf16.mxu0 %v1507
    %2277 = vmatpush1.bf16.msra.mxu0 %v1506
    %2278 = vmatprep.subr.bf16.mxu0 %v1510
    %2279 = vmatpush1.bf16.msra.mxu0 %v1509
    %2280 = vmatprep.subr.bf16.mxu0 %v1513
    %2281 = vmatpush1.bf16.msra.mxu0 %v1512
    %2282 = vmatprep.subr.bf16.mxu0 %v1516
    %2283 = vmatpush1.bf16.msra.mxu0 %v1515
    %2284 = vmatprep.subr.bf16.mxu0 %v1519
    %2285 = vmatpush1.bf16.msra.mxu0 %v1518
    %2286 = vmatprep.subr.bf16.mxu0 %v1522
    %2287 = vmatpush1.bf16.msra.mxu0 %v1521
    %2288 = vmatprep.subr.bf16.mxu0 0
    %2289 = vmatpush1.bf16.msra.mxu0 0
    %2290 = vmatprep.subr.bf16.mxu0 0
    %2291 = vmatpush1.bf16.msra.mxu0 0
    %2292 = vmatprep.subr.bf16.mxu0 0
    %2293 = vmatpush1.bf16.msra.mxu0 0
    %2294 = vmatprep.subr.bf16.mxu0 0
    %2295 = vmatpush1.bf16.msra.mxu0 0
    %2296 = vmatprep.subr.bf16.mxu0 0
    %2297 = vmatpush1.bf16.msra.mxu0 0
    %2298 = vmatprep.subr.bf16.mxu0 0
    %2299 = vmatpush1.bf16.msra.mxu0 0
    %2300 = vmatprep.subr.bf16.mxu0 0
    %2301 = vmatpush1.bf16.msra.mxu0 0
    %2302 = vmatprep.subr.bf16.mxu0 0
    %2303 = vmatpush1.bf16.msra.mxu0 0
    %2304 = vmatprep.mubr.bf16.mxu0 0
    %2305 = vmatmul.mubr.bf16.gmra.mrb[0].mxu0 %v2246
    %v2306 = vpop.f32.mrb[0].mxu0
    %v2307 = vadd.f32 %v1391, %v2306
    %v2308 = vpop.f32.mrb[0].mxu0
    %v2309 = vadd.f32 %v1395, %v2308
    %v2310 = vpop.f32.mrb[0].mxu0
    %v2311 = vadd.f32 %v1391, %v2310
    %v2312 = vpop.f32.mrb[0].mxu0
    %v2313 = vadd.f32 %v1395, %v2312
    %2314 = vdwg.mxu0
    %2315 = vmatprep.subr.bf16.mxu0 0
    %2316 = vmatpush1.bf16.msra.mxu0 %v1502
    %2317 = vmatprep.subr.bf16.mxu0 0
    %2318 = vmatpush1.bf16.msra.mxu0 %v1505
    %2319 = vmatprep.subr.bf16.mxu0 0
    %2320 = vmatpush1.bf16.msra.mxu0 %v1508
    %2321 = vmatprep.subr.bf16.mxu0 0
    %2322 = vmatpush1.bf16.msra.mxu0 %v1511
    %2323 = vmatprep.subr.bf16.mxu0 0
    %2324 = vmatpush1.bf16.msra.mxu0 %v1514
    %2325 = vmatprep.subr.bf16.mxu0 0
    %2326 = vmatpush1.bf16.msra.mxu0 %v1517
    %2327 = vmatprep.subr.bf16.mxu0 0
    %2328 = vmatpush1.bf16.msra.mxu0 %v1520
    %2329 = vmatprep.subr.bf16.mxu0 0
    %2330 = vmatpush1.bf16.msra.mxu0 %v1523
    %2331 = vmatprep.subr.bf16.mxu0 0
    %2332 = vmatpush1.bf16.msra.mxu0 0
    %2333 = vmatprep.subr.bf16.mxu0 0
    %2334 = vmatpush1.bf16.msra.mxu0 0
    %2335 = vmatprep.subr.bf16.mxu0 0
    %2336 = vmatpush1.bf16.msra.mxu0 0
    %2337 = vmatprep.subr.bf16.mxu0 0
    %2338 = vmatpush1.bf16.msra.mxu0 0
    %2339 = vmatprep.subr.bf16.mxu0 0
    %2340 = vmatpush1.bf16.msra.mxu0 0
    %2341 = vmatprep.subr.bf16.mxu0 0
    %2342 = vmatpush1.bf16.msra.mxu0 0
    %2343 = vmatprep.subr.bf16.mxu0 0
    %2344 = vmatpush1.bf16.msra.mxu0 0
    %2345 = vmatprep.subr.bf16.mxu0 0
    %2346 = vmatpush1.bf16.msra.mxu0 0
    %2347 = vmatprep.mubr.bf16.mxu0 0
    %2348 = vmatmul.mubr.bf16.gmra.mrb[0].mxu0 %v2246
    %v2349 = vpop.f32.mrb[0].mxu0
    %v2350 = vadd.f32 %v1399, %v2349
    %v2351 = vpop.f32.mrb[0].mxu0
    %v2352 = vpop.f32.mrb[0].mxu0
    %v2353 = vadd.f32 %v1399, %v2352
    %v2354 = vpop.f32.mrb[0].mxu0
    %2355 = vdwg.mxu0
    %2356 = vmatprep.subr.bf16.mxu0 %v1713
    %2357 = vmatpush1.bf16.msra.mxu0 %v1712
    %2358 = vmatprep.subr.bf16.mxu0 %v1716
    %2359 = vmatpush1.bf16.msra.mxu0 %v1715
    %2360 = vmatprep.subr.bf16.mxu0 %v1719
    %2361 = vmatpush1.bf16.msra.mxu0 %v1718
    %2362 = vmatprep.subr.bf16.mxu0 %v1722
    %2363 = vmatpush1.bf16.msra.mxu0 %v1721
    %2364 = vmatprep.subr.bf16.mxu0 %v1725
    %2365 = vmatpush1.bf16.msra.mxu0 %v1724
    %2366 = vmatprep.subr.bf16.mxu0 %v1728
    %2367 = vmatpush1.bf16.msra.mxu0 %v1727
    %2368 = vmatprep.subr.bf16.mxu0 %v1731
    %2369 = vmatpush1.bf16.msra.mxu0 %v1730
    %2370 = vmatprep.subr.bf16.mxu0 %v1734
    %2371 = vmatpush1.bf16.msra.mxu0 %v1733
    %2372 = vmatprep.subr.bf16.mxu0 0
    %2373 = vmatpush1.bf16.msra.mxu0 0
    %2374 = vmatprep.subr.bf16.mxu0 0
    %2375 = vmatpush1.bf16.msra.mxu0 0
    %2376 = vmatprep.subr.bf16.mxu0 0
    %2377 = vmatpush1.bf16.msra.mxu0 0
    %2378 = vmatprep.subr.bf16.mxu0 0
    %2379 = vmatpush1.bf16.msra.mxu0 0
    %2380 = vmatprep.subr.bf16.mxu0 0
    %2381 = vmatpush1.bf16.msra.mxu0 0
    %2382 = vmatprep.subr.bf16.mxu0 0
    %2383 = vmatpush1.bf16.msra.mxu0 0
    %2384 = vmatprep.subr.bf16.mxu0 0
    %2385 = vmatpush1.bf16.msra.mxu0 0
    %2386 = vmatprep.subr.bf16.mxu0 0
    %2387 = vmatpush1.bf16.msra.mxu0 0
    %2388 = vmatprep.mubr.bf16.mxu0 0
    %2389 = vmatmul.mubr.bf16.gmra.mrb[0].mxu0 %v2259
    %v2390 = vpop.f32.mrb[0].mxu0
    %v2391 = vadd.f32 %v1408, %v2390
    %v2392 = vpop.f32.mrb[0].mxu0
    %v2393 = vadd.f32 %v1412, %v2392
    %v2394 = vpop.f32.mrb[0].mxu0
    %v2395 = vadd.f32 %v1408, %v2394
    %v2396 = vpop.f32.mrb[0].mxu0
    %v2397 = vadd.f32 %v1412, %v2396
    %2398 = vdwg.mxu0
    %2399 = vmatprep.subr.bf16.mxu0 0
    %2400 = vmatpush1.bf16.msra.mxu0 %v1714
    %2401 = vmatprep.subr.bf16.mxu0 0
    %2402 = vmatpush1.bf16.msra.mxu0 %v1717
    %2403 = vmatprep.subr.bf16.mxu0 0
    %2404 = vmatpush1.bf16.msra.mxu0 %v1720
    %2405 = vmatprep.subr.bf16.mxu0 0
    %2406 = vmatpush1.bf16.msra.mxu0 %v1723
    %2407 = vmatprep.subr.bf16.mxu0 0
    %2408 = vmatpush1.bf16.msra.mxu0 %v1726
    %2409 = vmatprep.subr.bf16.mxu0 0
    %2410 = vmatpush1.bf16.msra.mxu0 %v1729
    %2411 = vmatprep.subr.bf16.mxu0 0
    %2412 = vmatpush1.bf16.msra.mxu0 %v1732
    %2413 = vmatprep.subr.bf16.mxu0 0
    %2414 = vmatpush1.bf16.msra.mxu0 %v1735
    %2415 = vmatprep.subr.bf16.mxu0 0
    %2416 = vmatpush1.bf16.msra.mxu0 0
    %2417 = vmatprep.subr.bf16.mxu0 0
    %2418 = vmatpush1.bf16.msra.mxu0 0
    %2419 = vmatprep.subr.bf16.mxu0 0
    %2420 = vmatpush1.bf16.msra.mxu0 0
    %2421 = vmatprep.subr.bf16.mxu0 0
    %2422 = vmatpush1.bf16.msra.mxu0 0
    %2423 = vmatprep.subr.bf16.mxu0 0
    %2424 = vmatpush1.bf16.msra.mxu0 0
    %2425 = vmatprep.subr.bf16.mxu0 0
    %2426 = vmatpush1.bf16.msra.mxu0 0
    %2427 = vmatprep.subr.bf16.mxu0 0
    %2428 = vmatpush1.bf16.msra.mxu0 0
    %2429 = vmatprep.subr.bf16.mxu0 0
    %2430 = vmatpush1.bf16.msra.mxu0 0
    %2431 = vmatprep.mubr.bf16.mxu0 0
    %2432 = vmatmul.mubr.bf16.gmra.mrb[0].mxu0 %v2259
    %v2433 = vpop.f32.mrb[0].mxu0
    %v2434 = vadd.f32 %v1416, %v2433
    %v2435 = vpop.f32.mrb[0].mxu0
    %v2436 = vpop.f32.mrb[0].mxu0
    %v2437 = vadd.f32 %v1416, %v2436
    %v2438 = vpop.f32.mrb[0].mxu0
    %2439 = vdwg.mxu0
    %s2440 = smul.u32 2, 3
    %s2441 = smul.addr %s2440, 8
    %s2442 = scalar_lea.vmem [#allocation2], %s2441
    %v2443 = vld [vmem:[%s2442] sm:$0xff]
    %v2444 = vld [vmem:[%s2442 + $0x8] sm:$0xff]
    %v2445 = vld [vmem:[%s2442 + $0x10] sm:$0xff]
    %v2446 = vunpack.c.l.bf16 %v2443
    %v2447 = vunpack.c.l.bf16 %v2444
    %v2448 = vunpack.c.l.bf16 %v2445
    %v2449 = vunpack.c.h.bf16 %v2443
    %v2450 = vunpack.c.h.bf16 %v2444
    %v2451 = vunpack.c.h.bf16 %v2445
    %s2452 = smul.u32 5, 3
    %s2453 = smul.addr %s2452, 8
    %s2454 = scalar_lea.vmem [#allocation3], %s2453
    %v2455 = vld [vmem:[%s2454] sm:$0xff]
    %v2456 = vld [vmem:[%s2454 + $0x8] sm:$0xff]
    %v2457 = vld [vmem:[%s2454 + $0x10] sm:$0xff]
    %v2458 = vunpack.c.l.bf16 %v2455
    %v2459 = vunpack.c.l.bf16 %v2456
    %v2460 = vunpack.c.l.bf16 %v2457
    %v2461 = vunpack.c.h.bf16 %v2455
    %v2462 = vunpack.c.h.bf16 %v2456
    %v2463 = vunpack.c.h.bf16 %v2457
    %v2464 = vadd.f32 %v2446, %v2307
    %v2465 = vadd.f32 %v2447, %v2309
    %v2466 = vadd.f32 %v2449, %v2311
    %v2467 = vadd.f32 %v2450, %v2313
    %v2468 = vxor.u32 %v2464, 2147483648
    %v2469 = vxor.u32 %v2465, 2147483648
    %v2470 = vxor.u32 %v2466, 2147483648
    %v2471 = vxor.u32 %v2467, 2147483648
    %v2472 = vmul.f32 %v2468, 1.442695
    %v2473 = vpow.pop %v2472
    %v2474 = vmul.f32 %v2469, 1.442695
    %v2475 = vpow.pop %v2474
    %v2476 = vmul.f32 %v2470, 1.442695
    %v2477 = vpow.pop %v2476
    %v2478 = vmul.f32 %v2471, 1.442695
    %v2479 = vpow.pop %v2478
    %v2480 = vadd.f32 %v2473, 1.0
    %v2481 = vadd.f32 %v2475, 1.0
    %v2482 = vadd.f32 %v2477, 1.0
    %v2483 = vadd.f32 %v2479, 1.0
    %v2484 = vrcp.pop %v2480
    %v2485 = vmul.f32 1.0, %v2484
    %v2486 = vrcp.pop %v2481
    %v2487 = vmul.f32 1.0, %v2486
    %v2488 = vrcp.pop %v2482
    %v2489 = vmul.f32 1.0, %v2488
    %v2490 = vrcp.pop %v2483
    %v2491 = vmul.f32 1.0, %v2490
    %v2492 = vmul.f32 %v2485, %v2350
    %v2493 = vmul.f32 %v2489, %v2353
    %v2494 = vadd.f32 %v2448, %v2492
    %v2495 = vadd.f32 %v2451, %v2493
    %v2496 = vtanh.pop %v2494
    %v2497 = vtanh.pop %v2495
    %v2498 = vsub.f32 %v2204, %v2496
    %v2499 = vsub.f32 %v2205, %v2497
    %v2500 = vmul.f32 %v2487, %v2498
    %v2501 = vmul.f32 %v2491, %v2499
    %v2502 = vadd.f32 %v2496, %v2500
    %v2503 = vadd.f32 %v2497, %v2501
    %v2504 = vadd.f32 %v2458, %v2391
    %v2505 = vadd.f32 %v2459, %v2393
    %v2506 = vadd.f32 %v2461, %v2395
    %v2507 = vadd.f32 %v2462, %v2397
    %v2508 = vxor.u32 %v2504, 2147483648
    %v2509 = vxor.u32 %v2505, 2147483648
    %v2510 = vxor.u32 %v2506, 2147483648
    %v2511 = vxor.u32 %v2507, 2147483648
    %v2512 = vmul.f32 %v2508, 1.442695
    %v2513 = vpow.pop %v2512
    %v2514 = vmul.f32 %v2509, 1.442695
    %v2515 = vpow.pop %v2514
    %v2516 = vmul.f32 %v2510, 1.442695
    %v2517 = vpow.pop %v2516
    %v2518 = vmul.f32 %v2511, 1.442695
    %v2519 = vpow.pop %v2518
    %v2520 = vadd.f32 %v2513, 1.0
    %v2521 = vadd.f32 %v2515, 1.0
    %v2522 = vadd.f32 %v2517, 1.0
    %v2523 = vadd.f32 %v2519, 1.0
    %v2524 = vrcp.pop %v2520
    %v2525 = vmul.f32 1.0, %v2524
    %v2526 = vrcp.pop %v2521
    %v2527 = vmul.f32 1.0, %v2526
    %v2528 = vrcp.pop %v2522
    %v2529 = vmul.f32 1.0, %v2528
    %v2530 = vrcp.pop %v2523
    %v2531 = vmul.f32 1.0, %v2530
    %v2532 = vmul.f32 %v2525, %v2434
    %v2533 = vmul.f32 %v2529, %v2437
    %v2534 = vadd.f32 %v2460, %v2532
    %v2535 = vadd.f32 %v2463, %v2533
    %v2536 = vtanh.pop %v2534
    %v2537 = vtanh.pop %v2535
    %v2538 = vsub.f32 %v2244, %v2536
    %v2539 = vsub.f32 %v2245, %v2537
    %v2540 = vmul.f32 %v2527, %v2538
    %v2541 = vmul.f32 %v2531, %v2539
    %v2542 = vadd.f32 %v2536, %v2540
    %v2543 = vadd.f32 %v2537, %v2541
    %v2544 = vpack.c.bf16 %v2503, %v2502
    %v2546 = vunpack.c.l.b16 %v2544
    %v2547 = vunpack.c.h.b16 %v2544
    %v2548 = vpack.c.b16 %v2546, %v2546
    %v2549 = vpack.c.b16 %v2547, %v2547
    %s2552 = smul.u32 4, 2
    %s2553 = smul.addr %s2552, 4
    %s2554 = scalar_lea.vmem [#allocation4], %s2553
    %2555 = vst [vmem:[%s2554] sm:$0xf] %v2548
    %2556 = vst [vmem:[%s2554 + $0x8] sm:$0xf] %v2549
    %v2557 = vpack.c.bf16 %v2543, %v2542
    %v2559 = vunpack.c.l.b16 %v2557
    %v2560 = vunpack.c.h.b16 %v2557
    %v2561 = vpack.c.b16 %v2559, %v2559
    %v2562 = vpack.c.b16 %v2560, %v2560
    %s2565 = smul.u32 10, 2
    %s2566 = smul.addr %s2565, 4
    %s2567 = scalar_lea.vmem [#allocation4], %s2566
    %2568 = vst [vmem:[%s2567 + $0x4] sm:$0xf] %v2561
    %2569 = vst [vmem:[%s2567 + $0xc] sm:$0xf] %v2562
    %2570 = vmatprep.subr.bf16.mxu0 %v1501
    %2571 = vmatpush1.bf16.msra.mxu0 %v1500
    %2572 = vmatprep.subr.bf16.mxu0 %v1504
    %2573 = vmatpush1.bf16.msra.mxu0 %v1503
    %2574 = vmatprep.subr.bf16.mxu0 %v1507
    %2575 = vmatpush1.bf16.msra.mxu0 %v1506
    %2576 = vmatprep.subr.bf16.mxu0 %v1510
    %2577 = vmatpush1.bf16.msra.mxu0 %v1509
    %2578 = vmatprep.subr.bf16.mxu0 %v1513
    %2579 = vmatpush1.bf16.msra.mxu0 %v1512
    %2580 = vmatprep.subr.bf16.mxu0 %v1516
    %2581 = vmatpush1.bf16.msra.mxu0 %v1515
    %2582 = vmatprep.subr.bf16.mxu0 %v1519
    %2583 = vmatpush1.bf16.msra.mxu0 %v1518
    %2584 = vmatprep.subr.bf16.mxu0 %v1522
    %2585 = vmatpush1.bf16.msra.mxu0 %v1521
    %2586 = vmatprep.subr.bf16.mxu0 0
    %2587 = vmatpush1.bf16.msra.mxu0 0
    %2588 = vmatprep.subr.bf16.mxu0 0
    %2589 = vmatpush1.bf16.msra.mxu0 0
    %2590 = vmatprep.subr.bf16.mxu0 0
    %2591 = vmatpush1.bf16.msra.mxu0 0
    %2592 = vmatprep.subr.bf16.mxu0 0
    %2593 = vmatpush1.bf16.msra.mxu0 0
    %2594 = vmatprep.subr.bf16.mxu0 0
    %2595 = vmatpush1.bf16.msra.mxu0 0
    %2596 = vmatprep.subr.bf16.mxu0 0
    %2597 = vmatpush1.bf16.msra.mxu0 0
    %2598 = vmatprep.subr.bf16.mxu0 0
    %2599 = vmatpush1.bf16.msra.mxu0 0
    %2600 = vmatprep.subr.bf16.mxu0 0
    %2601 = vmatpush1.bf16.msra.mxu0 0
    %2602 = vmatprep.mubr.bf16.mxu0 0
    %2603 = vmatmul.mubr.bf16.gmra.mrb[0].mxu0 %v2544
    %v2604 = vpop.f32.mrb[0].mxu0
    %v2605 = vadd.f32 %v1391, %v2604
    %v2606 = vpop.f32.mrb[0].mxu0
    %v2607 = vadd.f32 %v1395, %v2606
    %v2608 = vpop.f32.mrb[0].mxu0
    %v2609 = vadd.f32 %v1391, %v2608
    %v2610 = vpop.f32.mrb[0].mxu0
    %v2611 = vadd.f32 %v1395, %v2610
    %2612 = vdwg.mxu0
    %2613 = vmatprep.subr.bf16.mxu0 0
    %2614 = vmatpush1.bf16.msra.mxu0 %v1502
    %2615 = vmatprep.subr.bf16.mxu0 0
    %2616 = vmatpush1.bf16.msra.mxu0 %v1505
    %2617 = vmatprep.subr.bf16.mxu0 0
    %2618 = vmatpush1.bf16.msra.mxu0 %v1508
    %2619 = vmatprep.subr.bf16.mxu0 0
    %2620 = vmatpush1.bf16.msra.mxu0 %v1511
    %2621 = vmatprep.subr.bf16.mxu0 0
    %2622 = vmatpush1.bf16.msra.mxu0 %v1514
    %2623 = vmatprep.subr.bf16.mxu0 0
    %2624 = vmatpush1.bf16.msra.mxu0 %v1517
    %2625 = vmatprep.subr.bf16.mxu0 0
    %2626 = vmatpush1.bf16.msra.mxu0 %v1520
    %2627 = vmatprep.subr.bf16.mxu0 0
    %2628 = vmatpush1.bf16.msra.mxu0 %v1523
    %2629 = vmatprep.subr.bf16.mxu0 0
    %2630 = vmatpush1.bf16.msra.mxu0 0
    %2631 = vmatprep.subr.bf16.mxu0 0
    %2632 = vmatpush1.bf16.msra.mxu0 0
    %2633 = vmatprep.subr.bf16.mxu0 0
    %2634 = vmatpush1.bf16.msra.mxu0 0
    %2635 = vmatprep.subr.bf16.mxu0 0
    %2636 = vmatpush1.bf16.msra.mxu0 0
    %2637 = vmatprep.subr.bf16.mxu0 0
    %2638 = vmatpush1.bf16.msra.mxu0 0
    %2639 = vmatprep.subr.bf16.mxu0 0
    %2640 = vmatpush1.bf16.msra.mxu0 0
    %2641 = vmatprep.subr.bf16.mxu0 0
    %2642 = vmatpush1.bf16.msra.mxu0 0
    %2643 = vmatprep.subr.bf16.mxu0 0
    %2644 = vmatpush1.bf16.msra.mxu0 0
    %2645 = vmatprep.mubr.bf16.mxu0 0
    %2646 = vmatmul.mubr.bf16.gmra.mrb[0].mxu0 %v2544
    %v2647 = vpop.f32.mrb[0].mxu0
    %v2648 = vadd.f32 %v1399, %v2647
    %v2649 = vpop.f32.mrb[0].mxu0
    %v2650 = vpop.f32.mrb[0].mxu0
    %v2651 = vadd.f32 %v1399, %v2650
    %v2652 = vpop.f32.mrb[0].mxu0
    %2653 = vdwg.mxu0
    %2654 = vmatprep.subr.bf16.mxu0 %v1713
    %2655 = vmatpush1.bf16.msra.mxu0 %v1712
    %2656 = vmatprep.subr.bf16.mxu0 %v1716
    %2657 = vmatpush1.bf16.msra.mxu0 %v1715
    %2658 = vmatprep.subr.bf16.mxu0 %v1719
    %2659 = vmatpush1.bf16.msra.mxu0 %v1718
    %2660 = vmatprep.subr.bf16.mxu0 %v1722
    %2661 = vmatpush1.bf16.msra.mxu0 %v1721
    %2662 = vmatprep.subr.bf16.mxu0 %v1725
    %2663 = vmatpush1.bf16.msra.mxu0 %v1724
    %2664 = vmatprep.subr.bf16.mxu0 %v1728
    %2665 = vmatpush1.bf16.msra.mxu0 %v1727
    %2666 = vmatprep.subr.bf16.mxu0 %v1731
    %2667 = vmatpush1.bf16.msra.mxu0 %v1730
    %2668 = vmatprep.subr.bf16.mxu0 %v1734
    %2669 = vmatpush1.bf16.msra.mxu0 %v1733
    %2670 = vmatprep.subr.bf16.mxu0 0
    %2671 = vmatpush1.bf16.msra.mxu0 0
    %2672 = vmatprep.subr.bf16.mxu0 0
    %2673 = vmatpush1.bf16.msra.mxu0 0
    %2674 = vmatprep.subr.bf16.mxu0 0
    %2675 = vmatpush1.bf16.msra.mxu0 0
    %2676 = vmatprep.subr.bf16.mxu0 0
    %2677 = vmatpush1.bf16.msra.mxu0 0
    %2678 = vmatprep.subr.bf16.mxu0 0
    %2679 = vmatpush1.bf16.msra.mxu0 0
    %2680 = vmatprep.subr.bf16.mxu0 0
    %2681 = vmatpush1.bf16.msra.mxu0 0
    %2682 = vmatprep.subr.bf16.mxu0 0
    %2683 = vmatpush1.bf16.msra.mxu0 0
    %2684 = vmatprep.subr.bf16.mxu0 0
    %2685 = vmatpush1.bf16.msra.mxu0 0
    %2686 = vmatprep.mubr.bf16.mxu0 0
    %2687 = vmatmul.mubr.bf16.gmra.mrb[0].mxu0 %v2557
    %v2688 = vpop.f32.mrb[0].mxu0
    %v2689 = vadd.f32 %v1408, %v2688
    %v2690 = vpop.f32.mrb[0].mxu0
    %v2691 = vadd.f32 %v1412, %v2690
    %v2692 = vpop.f32.mrb[0].mxu0
    %v2693 = vadd.f32 %v1408, %v2692
    %v2694 = vpop.f32.mrb[0].mxu0
    %v2695 = vadd.f32 %v1412, %v2694
    %2696 = vdwg.mxu0
    %2697 = vmatprep.subr.bf16.mxu0 0
    %2698 = vmatpush1.bf16.msra.mxu0 %v1714
    %2699 = vmatprep.subr.bf16.mxu0 0
    %2700 = vmatpush1.bf16.msra.mxu0 %v1717
    %2701 = vmatprep.subr.bf16.mxu0 0
    %2702 = vmatpush1.bf16.msra.mxu0 %v1720
    %2703 = vmatprep.subr.bf16.mxu0 0
    %2704 = vmatpush1.bf16.msra.mxu0 %v1723
    %2705 = vmatprep.subr.bf16.mxu0 0
    %2706 = vmatpush1.bf16.msra.mxu0 %v1726
    %2707 = vmatprep.subr.bf16.mxu0 0
    %2708 = vmatpush1.bf16.msra.mxu0 %v1729
    %2709 = vmatprep.subr.bf16.mxu0 0
    %2710 = vmatpush1.bf16.msra.mxu0 %v1732
    %2711 = vmatprep.subr.bf16.mxu0 0
    %2712 = vmatpush1.bf16.msra.mxu0 %v1735
    %2713 = vmatprep.subr.bf16.mxu0 0
    %2714 = vmatpush1.bf16.msra.mxu0 0
    %2715 = vmatprep.subr.bf16.mxu0 0
    %2716 = vmatpush1.bf16.msra.mxu0 0
    %2717 = vmatprep.subr.bf16.mxu0 0
    %2718 = vmatpush1.bf16.msra.mxu0 0
    %2719 = vmatprep.subr.bf16.mxu0 0
    %2720 = vmatpush1.bf16.msra.mxu0 0
    %2721 = vmatprep.subr.bf16.mxu0 0
    %2722 = vmatpush1.bf16.msra.mxu0 0
    %2723 = vmatprep.subr.bf16.mxu0 0
    %2724 = vmatpush1.bf16.msra.mxu0 0
    %2725 = vmatprep.subr.bf16.mxu0 0
    %2726 = vmatpush1.bf16.msra.mxu0 0
    %2727 = vmatprep.subr.bf16.mxu0 0
    %2728 = vmatpush1.bf16.msra.mxu0 0
    %2729 = vmatprep.mubr.bf16.mxu0 0
    %2730 = vmatmul.mubr.bf16.gmra.mrb[0].mxu0 %v2557
    %v2731 = vpop.f32.mrb[0].mxu0
    %v2732 = vadd.f32 %v1416, %v2731
    %v2733 = vpop.f32.mrb[0].mxu0
    %v2734 = vpop.f32.mrb[0].mxu0
    %v2735 = vadd.f32 %v1416, %v2734
    %v2736 = vpop.f32.mrb[0].mxu0
    %2737 = vdwg.mxu0
    %s2738 = smul.u32 3, 3
    %s2739 = smul.addr %s2738, 8
    %s2740 = scalar_lea.vmem [#allocation2], %s2739
    %v2741 = vld [vmem:[%s2740] sm:$0xff]
    %v2742 = vld [vmem:[%s2740 + $0x8] sm:$0xff]
    %v2743 = vld [vmem:[%s2740 + $0x10] sm:$0xff]
    %v2744 = vunpack.c.l.bf16 %v2741
    %v2745 = vunpack.c.l.bf16 %v2742
    %v2746 = vunpack.c.l.bf16 %v2743
    %v2747 = vunpack.c.h.bf16 %v2741
    %v2748 = vunpack.c.h.bf16 %v2742
    %v2749 = vunpack.c.h.bf16 %v2743
    %s2750 = smul.u32 4, 3
    %s2751 = smul.addr %s2750, 8
    %s2752 = scalar_lea.vmem [#allocation3], %s2751
    %v2753 = vld [vmem:[%s2752] sm:$0xff]
    %v2754 = vld [vmem:[%s2752 + $0x8] sm:$0xff]
    %v2755 = vld [vmem:[%s2752 + $0x10] sm:$0xff]
    %v2756 = vunpack.c.l.bf16 %v2753
    %v2757 = vunpack.c.l.bf16 %v2754
    %v2758 = vunpack.c.l.bf16 %v2755
    %v2759 = vunpack.c.h.bf16 %v2753
    %v2760 = vunpack.c.h.bf16 %v2754
    %v2761 = vunpack.c.h.bf16 %v2755
    %v2762 = vadd.f32 %v2744, %v2605
    %v2763 = vadd.f32 %v2745, %v2607
    %v2764 = vadd.f32 %v2747, %v2609
    %v2765 = vadd.f32 %v2748, %v2611
    %v2766 = vxor.u32 %v2762, 2147483648
    %v2767 = vxor.u32 %v2763, 2147483648
    %v2768 = vxor.u32 %v2764, 2147483648
    %v2769 = vxor.u32 %v2765, 2147483648
    %v2770 = vmul.f32 %v2766, 1.442695
    %v2771 = vpow.pop %v2770
    %v2772 = vmul.f32 %v2767, 1.442695
    %v2773 = vpow.pop %v2772
    %v2774 = vmul.f32 %v2768, 1.442695
    %v2775 = vpow.pop %v2774
    %v2776 = vmul.f32 %v2769, 1.442695
    %v2777 = vpow.pop %v2776
    %v2778 = vadd.f32 %v2771, 1.0
    %v2779 = vadd.f32 %v2773, 1.0
    %v2780 = vadd.f32 %v2775, 1.0
    %v2781 = vadd.f32 %v2777, 1.0
    %v2782 = vrcp.pop %v2778
    %v2783 = vmul.f32 1.0, %v2782
    %v2784 = vrcp.pop %v2779
    %v2785 = vmul.f32 1.0, %v2784
    %v2786 = vrcp.pop %v2780
    %v2787 = vmul.f32 1.0, %v2786
    %v2788 = vrcp.pop %v2781
    %v2789 = vmul.f32 1.0, %v2788
    %v2790 = vmul.f32 %v2783, %v2648
    %v2791 = vmul.f32 %v2787, %v2651
    %v2792 = vadd.f32 %v2746, %v2790
    %v2793 = vadd.f32 %v2749, %v2791
    %v2794 = vtanh.pop %v2792
    %v2795 = vtanh.pop %v2793
    %v2796 = vsub.f32 %v2502, %v2794
    %v2797 = vsub.f32 %v2503, %v2795
    %v2798 = vmul.f32 %v2785, %v2796
    %v2799 = vmul.f32 %v2789, %v2797
    %v2800 = vadd.f32 %v2794, %v2798
    %v2801 = vadd.f32 %v2795, %v2799
    %v2802 = vadd.f32 %v2756, %v2689
    %v2803 = vadd.f32 %v2757, %v2691
    %v2804 = vadd.f32 %v2759, %v2693
    %v2805 = vadd.f32 %v2760, %v2695
    %v2806 = vxor.u32 %v2802, 2147483648
    %v2807 = vxor.u32 %v2803, 2147483648
    %v2808 = vxor.u32 %v2804, 2147483648
    %v2809 = vxor.u32 %v2805, 2147483648
    %v2810 = vmul.f32 %v2806, 1.442695
    %v2811 = vpow.pop %v2810
    %v2812 = vmul.f32 %v2807, 1.442695
    %v2813 = vpow.pop %v2812
    %v2814 = vmul.f32 %v2808, 1.442695
    %v2815 = vpow.pop %v2814
    %v2816 = vmul.f32 %v2809, 1.442695
    %v2817 = vpow.pop %v2816
    %v2818 = vadd.f32 %v2811, 1.0
    %v2819 = vadd.f32 %v2813, 1.0
    %v2820 = vadd.f32 %v2815, 1.0
    %v2821 = vadd.f32 %v2817, 1.0
    %v2822 = vrcp.pop %v2818
    %v2823 = vmul.f32 1.0, %v2822
    %v2824 = vrcp.pop %v2819
    %v2825 = vmul.f32 1.0, %v2824
    %v2826 = vrcp.pop %v2820
    %v2827 = vmul.f32 1.0, %v2826
    %v2828 = vrcp.pop %v2821
    %v2829 = vmul.f32 1.0, %v2828
    %v2830 = vmul.f32 %v2823, %v2732
    %v2831 = vmul.f32 %v2827, %v2735
    %v2832 = vadd.f32 %v2758, %v2830
    %v2833 = vadd.f32 %v2761, %v2831
    %v2834 = vtanh.pop %v2832
    %v2835 = vtanh.pop %v2833
    %v2836 = vsub.f32 %v2542, %v2834
    %v2837 = vsub.f32 %v2543, %v2835
    %v2838 = vmul.f32 %v2825, %v2836
    %v2839 = vmul.f32 %v2829, %v2837
    %v2840 = vadd.f32 %v2834, %v2838
    %v2841 = vadd.f32 %v2835, %v2839
    %v2842 = vpack.c.bf16 %v2801, %v2800
    %v2844 = vunpack.c.l.b16 %v2842
    %v2845 = vunpack.c.h.b16 %v2842
    %v2846 = vpack.c.b16 %v2844, %v2844
    %v2847 = vpack.c.b16 %v2845, %v2845
    %s2850 = smul.u32 6, 2
    %s2851 = smul.addr %s2850, 4
    %s2852 = scalar_lea.vmem [#allocation4], %s2851
    %2853 = vst [vmem:[%s2852] sm:$0xf] %v2846
    %2854 = vst [vmem:[%s2852 + $0x8] sm:$0xf] %v2847
    %v2855 = vpack.c.bf16 %v2841, %v2840
    %v2857 = vunpack.c.l.b16 %v2855
    %v2858 = vunpack.c.h.b16 %v2855
    %v2859 = vpack.c.b16 %v2857, %v2857
    %v2860 = vpack.c.b16 %v2858, %v2858
    %s2863 = smul.u32 8, 2
    %s2864 = smul.addr %s2863, 4
    %s2865 = scalar_lea.vmem [#allocation4], %s2864
    %2866 = vst [vmem:[%s2865 + $0x4] sm:$0xf] %v2859
    %2867 = vst [vmem:[%s2865 + $0xc] sm:$0xf] %v2860
    %2868 = vmatprep.subr.bf16.mxu0 %v1501
    %2869 = vmatpush1.bf16.msra.mxu0 %v1500
    %2870 = vmatprep.subr.bf16.mxu0 %v1504
    %2871 = vmatpush1.bf16.msra.mxu0 %v1503
    %2872 = vmatprep.subr.bf16.mxu0 %v1507
    %2873 = vmatpush1.bf16.msra.mxu0 %v1506
    %2874 = vmatprep.subr.bf16.mxu0 %v1510
    %2875 = vmatpush1.bf16.msra.mxu0 %v1509
    %2876 = vmatprep.subr.bf16.mxu0 %v1513
    %2877 = vmatpush1.bf16.msra.mxu0 %v1512
    %2878 = vmatprep.subr.bf16.mxu0 %v1516
    %2879 = vmatpush1.bf16.msra.mxu0 %v1515
    %2880 = vmatprep.subr.bf16.mxu0 %v1519
    %2881 = vmatpush1.bf16.msra.mxu0 %v1518
    %2882 = vmatprep.subr.bf16.mxu0 %v1522
    %2883 = vmatpush1.bf16.msra.mxu0 %v1521
    %2884 = vmatprep.subr.bf16.mxu0 0
    %2885 = vmatpush1.bf16.msra.mxu0 0
    %2886 = vmatprep.subr.bf16.mxu0 0
    %2887 = vmatpush1.bf16.msra.mxu0 0
    %2888 = vmatprep.subr.bf16.mxu0 0
    %2889 = vmatpush1.bf16.msra.mxu0 0
    %2890 = vmatprep.subr.bf16.mxu0 0
    %2891 = vmatpush1.bf16.msra.mxu0 0
    %2892 = vmatprep.subr.bf16.mxu0 0
    %2893 = vmatpush1.bf16.msra.mxu0 0
    %2894 = vmatprep.subr.bf16.mxu0 0
    %2895 = vmatpush1.bf16.msra.mxu0 0
    %2896 = vmatprep.subr.bf16.mxu0 0
    %2897 = vmatpush1.bf16.msra.mxu0 0
    %2898 = vmatprep.subr.bf16.mxu0 0
    %2899 = vmatpush1.bf16.msra.mxu0 0
    %2900 = vmatprep.mubr.bf16.mxu0 0
    %2901 = vmatmul.mubr.bf16.gmra.mrb[0].mxu0 %v2842
    %v2902 = vpop.f32.mrb[0].mxu0
    %v2903 = vadd.f32 %v1391, %v2902
    %v2904 = vpop.f32.mrb[0].mxu0
    %v2905 = vadd.f32 %v1395, %v2904
    %v2906 = vpop.f32.mrb[0].mxu0
    %v2907 = vadd.f32 %v1391, %v2906
    %v2908 = vpop.f32.mrb[0].mxu0
    %v2909 = vadd.f32 %v1395, %v2908
    %2910 = vdwg.mxu0
    %2911 = vmatprep.subr.bf16.mxu0 0
    %2912 = vmatpush1.bf16.msra.mxu0 %v1502
    %2913 = vmatprep.subr.bf16.mxu0 0
    %2914 = vmatpush1.bf16.msra.mxu0 %v1505
    %2915 = vmatprep.subr.bf16.mxu0 0
    %2916 = vmatpush1.bf16.msra.mxu0 %v1508
    %2917 = vmatprep.subr.bf16.mxu0 0
    %2918 = vmatpush1.bf16.msra.mxu0 %v1511
    %2919 = vmatprep.subr.bf16.mxu0 0
    %2920 = vmatpush1.bf16.msra.mxu0 %v1514
    %2921 = vmatprep.subr.bf16.mxu0 0
    %2922 = vmatpush1.bf16.msra.mxu0 %v1517
    %2923 = vmatprep.subr.bf16.mxu0 0
    %2924 = vmatpush1.bf16.msra.mxu0 %v1520
    %2925 = vmatprep.subr.bf16.mxu0 0
    %2926 = vmatpush1.bf16.msra.mxu0 %v1523
    %2927 = vmatprep.subr.bf16.mxu0 0
    %2928 = vmatpush1.bf16.msra.mxu0 0
    %2929 = vmatprep.subr.bf16.mxu0 0
    %2930 = vmatpush1.bf16.msra.mxu0 0
    %2931 = vmatprep.subr.bf16.mxu0 0
    %2932 = vmatpush1.bf16.msra.mxu0 0
    %2933 = vmatprep.subr.bf16.mxu0 0
    %2934 = vmatpush1.bf16.msra.mxu0 0
    %2935 = vmatprep.subr.bf16.mxu0 0
    %2936 = vmatpush1.bf16.msra.mxu0 0
    %2937 = vmatprep.subr.bf16.mxu0 0
    %2938 = vmatpush1.bf16.msra.mxu0 0
    %2939 = vmatprep.subr.bf16.mxu0 0
    %2940 = vmatpush1.bf16.msra.mxu0 0
    %2941 = vmatprep.subr.bf16.mxu0 0
    %2942 = vmatpush1.bf16.msra.mxu0 0
    %2943 = vmatprep.mubr.bf16.mxu0 0
    %2944 = vmatmul.mubr.bf16.gmra.mrb[0].mxu0 %v2842
    %v2945 = vpop.f32.mrb[0].mxu0
    %v2946 = vadd.f32 %v1399, %v2945
    %v2947 = vpop.f32.mrb[0].mxu0
    %v2948 = vpop.f32.mrb[0].mxu0
    %v2949 = vadd.f32 %v1399, %v2948
    %v2950 = vpop.f32.mrb[0].mxu0
    %2951 = vdwg.mxu0
    %2952 = vmatprep.subr.bf16.mxu0 %v1713
    %2953 = vmatpush1.bf16.msra.mxu0 %v1712
    %2954 = vmatprep.subr.bf16.mxu0 %v1716
    %2955 = vmatpush1.bf16.msra.mxu0 %v1715
    %2956 = vmatprep.subr.bf16.mxu0 %v1719
    %2957 = vmatpush1.bf16.msra.mxu0 %v1718
    %2958 = vmatprep.subr.bf16.mxu0 %v1722
    %2959 = vmatpush1.bf16.msra.mxu0 %v1721
    %2960 = vmatprep.subr.bf16.mxu0 %v1725
    %2961 = vmatpush1.bf16.msra.mxu0 %v1724
    %2962 = vmatprep.subr.bf16.mxu0 %v1728
    %2963 = vmatpush1.bf16.msra.mxu0 %v1727
    %2964 = vmatprep.subr.bf16.mxu0 %v1731
    %2965 = vmatpush1.bf16.msra.mxu0 %v1730
    %2966 = vmatprep.subr.bf16.mxu0 %v1734
    %2967 = vmatpush1.bf16.msra.mxu0 %v1733
    %2968 = vmatprep.subr.bf16.mxu0 0
    %2969 = vmatpush1.bf16.msra.mxu0 0
    %2970 = vmatprep.subr.bf16.mxu0 0
    %2971 = vmatpush1.bf16.msra.mxu0 0
    %2972 = vmatprep.subr.bf16.mxu0 0
    %2973 = vmatpush1.bf16.msra.mxu0 0
    %2974 = vmatprep.subr.bf16.mxu0 0
    %2975 = vmatpush1.bf16.msra.mxu0 0
    %2976 = vmatprep.subr.bf16.mxu0 0
    %2977 = vmatpush1.bf16.msra.mxu0 0
    %2978 = vmatprep.subr.bf16.mxu0 0
    %2979 = vmatpush1.bf16.msra.mxu0 0
    %2980 = vmatprep.subr.bf16.mxu0 0
    %2981 = vmatpush1.bf16.msra.mxu0 0
    %2982 = vmatprep.subr.bf16.mxu0 0
    %2983 = vmatpush1.bf16.msra.mxu0 0
    %2984 = vmatprep.mubr.bf16.mxu0 0
    %2985 = vmatmul.mubr.bf16.gmra.mrb[0].mxu0 %v2855
    %v2986 = vpop.f32.mrb[0].mxu0
    %v2987 = vadd.f32 %v1408, %v2986
    %v2988 = vpop.f32.mrb[0].mxu0
    %v2989 = vadd.f32 %v1412, %v2988
    %v2990 = vpop.f32.mrb[0].mxu0
    %v2991 = vadd.f32 %v1408, %v2990
    %v2992 = vpop.f32.mrb[0].mxu0
    %v2993 = vadd.f32 %v1412, %v2992
    %2994 = vdwg.mxu0
    %2995 = vmatprep.subr.bf16.mxu0 0
    %2996 = vmatpush1.bf16.msra.mxu0 %v1714
    %2997 = vmatprep.subr.bf16.mxu0 0
    %2998 = vmatpush1.bf16.msra.mxu0 %v1717
    %2999 = vmatprep.subr.bf16.mxu0 0
    %3000 = vmatpush1.bf16.msra.mxu0 %v1720
    %3001 = vmatprep.subr.bf16.mxu0 0
    %3002 = vmatpush1.bf16.msra.mxu0 %v1723
    %3003 = vmatprep.subr.bf16.mxu0 0
    %3004 = vmatpush1.bf16.msra.mxu0 %v1726
    %3005 = vmatprep.subr.bf16.mxu0 0
    %3006 = vmatpush1.bf16.msra.mxu0 %v1729
    %3007 = vmatprep.subr.bf16.mxu0 0
    %3008 = vmatpush1.bf16.msra.mxu0 %v1732
    %3009 = vmatprep.subr.bf16.mxu0 0
    %3010 = vmatpush1.bf16.msra.mxu0 %v1735
    %3011 = vmatprep.subr.bf16.mxu0 0
    %3012 = vmatpush1.bf16.msra.mxu0 0
    %3013 = vmatprep.subr.bf16.mxu0 0
    %3014 = vmatpush1.bf16.msra.mxu0 0
    %3015 = vmatprep.subr.bf16.mxu0 0
    %3016 = vmatpush1.bf16.msra.mxu0 0
    %3017 = vmatprep.subr.bf16.mxu0 0
    %3018 = vmatpush1.bf16.msra.mxu0 0
    %3019 = vmatprep.subr.bf16.mxu0 0
    %3020 = vmatpush1.bf16.msra.mxu0 0
    %3021 = vmatprep.subr.bf16.mxu0 0
    %3022 = vmatpush1.bf16.msra.mxu0 0
    %3023 = vmatprep.subr.bf16.mxu0 0
    %3024 = vmatpush1.bf16.msra.mxu0 0
    %3025 = vmatprep.subr.bf16.mxu0 0
    %3026 = vmatpush1.bf16.msra.mxu0 0
    %3027 = vmatprep.mubr.bf16.mxu0 0
    %3028 = vmatmul.mubr.bf16.gmra.mrb[0].mxu0 %v2855
    %v3029 = vpop.f32.mrb[0].mxu0
    %v3030 = vadd.f32 %v1416, %v3029
    %v3031 = vpop.f32.mrb[0].mxu0
    %v3032 = vpop.f32.mrb[0].mxu0
    %v3033 = vadd.f32 %v1416, %v3032
    %v3034 = vpop.f32.mrb[0].mxu0
    %3035 = vdwg.mxu0
    %s3036 = smul.addr %s2750, 8
    %s3037 = scalar_lea.vmem [#allocation2], %s3036
    %v3038 = vld [vmem:[%s3037] sm:$0xff]
    %v3039 = vld [vmem:[%s3037 + $0x8] sm:$0xff]
    %v3040 = vld [vmem:[%s3037 + $0x10] sm:$0xff]
    %v3041 = vunpack.c.l.bf16 %v3038
    %v3042 = vunpack.c.l.bf16 %v3039
    %v3043 = vunpack.c.l.bf16 %v3040
    %v3044 = vunpack.c.h.bf16 %v3038
    %v3045 = vunpack.c.h.bf16 %v3039
    %v3046 = vunpack.c.h.bf16 %v3040
    %s3047 = smul.addr %s2738, 8
    %s3048 = scalar_lea.vmem [#allocation3], %s3047
    %v3049 = vld [vmem:[%s3048] sm:$0xff]
    %v3050 = vld [vmem:[%s3048 + $0x8] sm:$0xff]
    %v3051 = vld [vmem:[%s3048 + $0x10] sm:$0xff]
    %v3052 = vunpack.c.l.bf16 %v3049
    %v3053 = vunpack.c.l.bf16 %v3050
    %v3054 = vunpack.c.l.bf16 %v3051
    %v3055 = vunpack.c.h.bf16 %v3049
    %v3056 = vunpack.c.h.bf16 %v3050
    %v3057 = vunpack.c.h.bf16 %v3051
    %v3058 = vadd.f32 %v3041, %v2903
    %v3059 = vadd.f32 %v3042, %v2905
    %v3060 = vadd.f32 %v3044, %v2907
    %v3061 = vadd.f32 %v3045, %v2909
    %v3062 = vxor.u32 %v3058, 2147483648
    %v3063 = vxor.u32 %v3059, 2147483648
    %v3064 = vxor.u32 %v3060, 2147483648
    %v3065 = vxor.u32 %v3061, 2147483648
    %v3066 = vmul.f32 %v3062, 1.442695
    %v3067 = vpow.pop %v3066
    %v3068 = vmul.f32 %v3063, 1.442695
    %v3069 = vpow.pop %v3068
    %v3070 = vmul.f32 %v3064, 1.442695
    %v3071 = vpow.pop %v3070
    %v3072 = vmul.f32 %v3065, 1.442695
    %v3073 = vpow.pop %v3072
    %v3074 = vadd.f32 %v3067, 1.0
    %v3075 = vadd.f32 %v3069, 1.0
    %v3076 = vadd.f32 %v3071, 1.0
    %v3077 = vadd.f32 %v3073, 1.0
    %v3078 = vrcp.pop %v3074
    %v3079 = vmul.f32 1.0, %v3078
    %v3080 = vrcp.pop %v3075
    %v3081 = vmul.f32 1.0, %v3080
    %v3082 = vrcp.pop %v3076
    %v3083 = vmul.f32 1.0, %v3082
    %v3084 = vrcp.pop %v3077
    %v3085 = vmul.f32 1.0, %v3084
    %v3086 = vmul.f32 %v3079, %v2946
    %v3087 = vmul.f32 %v3083, %v2949
    %v3088 = vadd.f32 %v3043, %v3086
    %v3089 = vadd.f32 %v3046, %v3087
    %v3090 = vtanh.pop %v3088
    %v3091 = vtanh.pop %v3089
    %v3092 = vsub.f32 %v2800, %v3090
    %v3093 = vsub.f32 %v2801, %v3091
    %v3094 = vmul.f32 %v3081, %v3092
    %v3095 = vmul.f32 %v3085, %v3093
    %v3096 = vadd.f32 %v3090, %v3094
    %v3097 = vadd.f32 %v3091, %v3095
    %v3098 = vadd.f32 %v3052, %v2987
    %v3099 = vadd.f32 %v3053, %v2989
    %v3100 = vadd.f32 %v3055, %v2991
    %v3101 = vadd.f32 %v3056, %v2993
    %v3102 = vxor.u32 %v3098, 2147483648
    %v3103 = vxor.u32 %v3099, 2147483648
    %v3104 = vxor.u32 %v3100, 2147483648
    %v3105 = vxor.u32 %v3101, 2147483648
    %v3106 = vmul.f32 %v3102, 1.442695
    %v3107 = vpow.pop %v3106
    %v3108 = vmul.f32 %v3103, 1.442695
    %v3109 = vpow.pop %v3108
    %v3110 = vmul.f32 %v3104, 1.442695
    %v3111 = vpow.pop %v3110
    %v3112 = vmul.f32 %v3105, 1.442695
    %v3113 = vpow.pop %v3112
    %v3114 = vadd.f32 %v3107, 1.0
    %v3115 = vadd.f32 %v3109, 1.0
    %v3116 = vadd.f32 %v3111, 1.0
    %v3117 = vadd.f32 %v3113, 1.0
    %v3118 = vrcp.pop %v3114
    %v3119 = vmul.f32 1.0, %v3118
    %v3120 = vrcp.pop %v3115
    %v3121 = vmul.f32 1.0, %v3120
    %v3122 = vrcp.pop %v3116
    %v3123 = vmul.f32 1.0, %v3122
    %v3124 = vrcp.pop %v3117
    %v3125 = vmul.f32 1.0, %v3124
    %v3126 = vmul.f32 %v3119, %v3030
    %v3127 = vmul.f32 %v3123, %v3033
    %v3128 = vadd.f32 %v3054, %v3126
    %v3129 = vadd.f32 %v3057, %v3127
    %v3130 = vtanh.pop %v3128
    %v3131 = vtanh.pop %v3129
    %v3132 = vsub.f32 %v2840, %v3130
    %v3133 = vsub.f32 %v2841, %v3131
    %v3134 = vmul.f32 %v3121, %v3132
    %v3135 = vmul.f32 %v3125, %v3133
    %v3136 = vadd.f32 %v3130, %v3134
    %v3137 = vadd.f32 %v3131, %v3135
    %v3138 = vpack.c.bf16 %v3097, %v3096
    %v3140 = vunpack.c.l.b16 %v3138
    %v3141 = vunpack.c.h.b16 %v3138
    %v3142 = vpack.c.b16 %v3140, %v3140
    %v3143 = vpack.c.b16 %v3141, %v3141
    %3146 = vst [vmem:[%s2865] sm:$0xf] %v3142
    %3147 = vst [vmem:[%s2865 + $0x8] sm:$0xf] %v3143
    %v3148 = vpack.c.bf16 %v3137, %v3136
    %v3150 = vunpack.c.l.b16 %v3148
    %v3151 = vunpack.c.h.b16 %v3148
    %v3152 = vpack.c.b16 %v3150, %v3150
    %v3153 = vpack.c.b16 %v3151, %v3151
    %3156 = vst [vmem:[%s2852 + $0x4] sm:$0xf] %v3152
    %3157 = vst [vmem:[%s2852 + $0xc] sm:$0xf] %v3153
    %3158 = vmatprep.subr.bf16.mxu0 %v1501
    %3159 = vmatpush1.bf16.msra.mxu0 %v1500
    %3160 = vmatprep.subr.bf16.mxu0 %v1504
    %3161 = vmatpush1.bf16.msra.mxu0 %v1503
    %3162 = vmatprep.subr.bf16.mxu0 %v1507
    %3163 = vmatpush1.bf16.msra.mxu0 %v1506
    %3164 = vmatprep.subr.bf16.mxu0 %v1510
    %3165 = vmatpush1.bf16.msra.mxu0 %v1509
    %3166 = vmatprep.subr.bf16.mxu0 %v1513
    %3167 = vmatpush1.bf16.msra.mxu0 %v1512
    %3168 = vmatprep.subr.bf16.mxu0 %v1516
    %3169 = vmatpush1.bf16.msra.mxu0 %v1515
    %3170 = vmatprep.subr.bf16.mxu0 %v1519
    %3171 = vmatpush1.bf16.msra.mxu0 %v1518
    %3172 = vmatprep.subr.bf16.mxu0 %v1522
    %3173 = vmatpush1.bf16.msra.mxu0 %v1521
    %3174 = vmatprep.subr.bf16.mxu0 0
    %3175 = vmatpush1.bf16.msra.mxu0 0
    %3176 = vmatprep.subr.bf16.mxu0 0
    %3177 = vmatpush1.bf16.msra.mxu0 0
    %3178 = vmatprep.subr.bf16.mxu0 0
    %3179 = vmatpush1.bf16.msra.mxu0 0
    %3180 = vmatprep.subr.bf16.mxu0 0
    %3181 = vmatpush1.bf16.msra.mxu0 0
    %3182 = vmatprep.subr.bf16.mxu0 0
    %3183 = vmatpush1.bf16.msra.mxu0 0
    %3184 = vmatprep.subr.bf16.mxu0 0
    %3185 = vmatpush1.bf16.msra.mxu0 0
    %3186 = vmatprep.subr.bf16.mxu0 0
    %3187 = vmatpush1.bf16.msra.mxu0 0
    %3188 = vmatprep.subr.bf16.mxu0 0
    %3189 = vmatpush1.bf16.msra.mxu0 0
    %3190 = vmatprep.mubr.bf16.mxu0 0
    %3191 = vmatmul.mubr.bf16.gmra.mrb[0].mxu0 %v3138
    %v3192 = vpop.f32.mrb[0].mxu0
    %v3193 = vadd.f32 %v1391, %v3192
    %v3194 = vpop.f32.mrb[0].mxu0
    %v3195 = vadd.f32 %v1395, %v3194
    %v3196 = vpop.f32.mrb[0].mxu0
    %v3197 = vadd.f32 %v1391, %v3196
    %v3198 = vpop.f32.mrb[0].mxu0
    %v3199 = vadd.f32 %v1395, %v3198
    %3200 = vdwg.mxu0
    %3201 = vmatprep.subr.bf16.mxu0 0
    %3202 = vmatpush1.bf16.msra.mxu0 %v1502
    %3203 = vmatprep.subr.bf16.mxu0 0
    %3204 = vmatpush1.bf16.msra.mxu0 %v1505
    %3205 = vmatprep.subr.bf16.mxu0 0
    %3206 = vmatpush1.bf16.msra.mxu0 %v1508
    %3207 = vmatprep.subr.bf16.mxu0 0
    %3208 = vmatpush1.bf16.msra.mxu0 %v1511
    %3209 = vmatprep.subr.bf16.mxu0 0
    %3210 = vmatpush1.bf16.msra.mxu0 %v1514
    %3211 = vmatprep.subr.bf16.mxu0 0
    %3212 = vmatpush1.bf16.msra.mxu0 %v1517
    %3213 = vmatprep.subr.bf16.mxu0 0
    %3214 = vmatpush1.bf16.msra.mxu0 %v1520
    %3215 = vmatprep.subr.bf16.mxu0 0
    %3216 = vmatpush1.bf16.msra.mxu0 %v1523
    %3217 = vmatprep.subr.bf16.mxu0 0
    %3218 = vmatpush1.bf16.msra.mxu0 0
    %3219 = vmatprep.subr.bf16.mxu0 0
    %3220 = vmatpush1.bf16.msra.mxu0 0
    %3221 = vmatprep.subr.bf16.mxu0 0
    %3222 = vmatpush1.bf16.msra.mxu0 0
    %3223 = vmatprep.subr.bf16.mxu0 0
    %3224 = vmatpush1.bf16.msra.mxu0 0
    %3225 = vmatprep.subr.bf16.mxu0 0
    %3226 = vmatpush1.bf16.msra.mxu0 0
    %3227 = vmatprep.subr.bf16.mxu0 0
    %3228 = vmatpush1.bf16.msra.mxu0 0
    %3229 = vmatprep.subr.bf16.mxu0 0
    %3230 = vmatpush1.bf16.msra.mxu0 0
    %3231 = vmatprep.subr.bf16.mxu0 0
    %3232 = vmatpush1.bf16.msra.mxu0 0
    %3233 = vmatprep.mubr.bf16.mxu0 0
    %3234 = vmatmul.mubr.bf16.gmra.mrb[0].mxu0 %v3138
    %v3235 = vpop.f32.mrb[0].mxu0
    %v3236 = vadd.f32 %v1399, %v3235
    %v3237 = vpop.f32.mrb[0].mxu0
    %v3238 = vpop.f32.mrb[0].mxu0
    %v3239 = vadd.f32 %v1399, %v3238
    %v3240 = vpop.f32.mrb[0].mxu0
    %3241 = vdwg.mxu0
    %3242 = vmatprep.subr.bf16.mxu0 %v1713
    %3243 = vmatpush1.bf16.msra.mxu0 %v1712
    %3244 = vmatprep.subr.bf16.mxu0 %v1716
    %3245 = vmatpush1.bf16.msra.mxu0 %v1715
    %3246 = vmatprep.subr.bf16.mxu0 %v1719
    %3247 = vmatpush1.bf16.msra.mxu0 %v1718
    %3248 = vmatprep.subr.bf16.mxu0 %v1722
    %3249 = vmatpush1.bf16.msra.mxu0 %v1721
    %3250 = vmatprep.subr.bf16.mxu0 %v1725
    %3251 = vmatpush1.bf16.msra.mxu0 %v1724
    %3252 = vmatprep.subr.bf16.mxu0 %v1728
    %3253 = vmatpush1.bf16.msra.mxu0 %v1727
    %3254 = vmatprep.subr.bf16.mxu0 %v1731
    %3255 = vmatpush1.bf16.msra.mxu0 %v1730
    %3256 = vmatprep.subr.bf16.mxu0 %v1734
    %3257 = vmatpush1.bf16.msra.mxu0 %v1733
    %3258 = vmatprep.subr.bf16.mxu0 0
    %3259 = vmatpush1.bf16.msra.mxu0 0
    %3260 = vmatprep.subr.bf16.mxu0 0
    %3261 = vmatpush1.bf16.msra.mxu0 0
    %3262 = vmatprep.subr.bf16.mxu0 0
    %3263 = vmatpush1.bf16.msra.mxu0 0
    %3264 = vmatprep.subr.bf16.mxu0 0
    %3265 = vmatpush1.bf16.msra.mxu0 0
    %3266 = vmatprep.subr.bf16.mxu0 0
    %3267 = vmatpush1.bf16.msra.mxu0 0
    %3268 = vmatprep.subr.bf16.mxu0 0
    %3269 = vmatpush1.bf16.msra.mxu0 0
    %3270 = vmatprep.subr.bf16.mxu0 0
    %3271 = vmatpush1.bf16.msra.mxu0 0
    %3272 = vmatprep.subr.bf16.mxu0 0
    %3273 = vmatpush1.bf16.msra.mxu0 0
    %3274 = vmatprep.mubr.bf16.mxu0 0
    %3275 = vmatmul.mubr.bf16.gmra.mrb[0].mxu0 %v3148
    %v3276 = vpop.f32.mrb[0].mxu0
    %v3277 = vadd.f32 %v1408, %v3276
    %v3278 = vpop.f32.mrb[0].mxu0
    %v3279 = vadd.f32 %v1412, %v3278
    %v3280 = vpop.f32.mrb[0].mxu0
    %v3281 = vadd.f32 %v1408, %v3280
    %v3282 = vpop.f32.mrb[0].mxu0
    %v3283 = vadd.f32 %v1412, %v3282
    %3284 = vdwg.mxu0
    %3285 = vmatprep.subr.bf16.mxu0 0
    %3286 = vmatpush1.bf16.msra.mxu0 %v1714
    %3287 = vmatprep.subr.bf16.mxu0 0
    %3288 = vmatpush1.bf16.msra.mxu0 %v1717
    %3289 = vmatprep.subr.bf16.mxu0 0
    %3290 = vmatpush1.bf16.msra.mxu0 %v1720
    %3291 = vmatprep.subr.bf16.mxu0 0
    %3292 = vmatpush1.bf16.msra.mxu0 %v1723
    %3293 = vmatprep.subr.bf16.mxu0 0
    %3294 = vmatpush1.bf16.msra.mxu0 %v1726
    %3295 = vmatprep.subr.bf16.mxu0 0
    %3296 = vmatpush1.bf16.msra.mxu0 %v1729
    %3297 = vmatprep.subr.bf16.mxu0 0
    %3298 = vmatpush1.bf16.msra.mxu0 %v1732
    %3299 = vmatprep.subr.bf16.mxu0 0
    %3300 = vmatpush1.bf16.msra.mxu0 %v1735
    %3301 = vmatprep.subr.bf16.mxu0 0
    %3302 = vmatpush1.bf16.msra.mxu0 0
    %3303 = vmatprep.subr.bf16.mxu0 0
    %3304 = vmatpush1.bf16.msra.mxu0 0
    %3305 = vmatprep.subr.bf16.mxu0 0
    %3306 = vmatpush1.bf16.msra.mxu0 0
    %3307 = vmatprep.subr.bf16.mxu0 0
    %3308 = vmatpush1.bf16.msra.mxu0 0
    %3309 = vmatprep.subr.bf16.mxu0 0
    %3310 = vmatpush1.bf16.msra.mxu0 0
    %3311 = vmatprep.subr.bf16.mxu0 0
    %3312 = vmatpush1.bf16.msra.mxu0 0
    %3313 = vmatprep.subr.bf16.mxu0 0
    %3314 = vmatpush1.bf16.msra.mxu0 0
    %3315 = vmatprep.subr.bf16.mxu0 0
    %3316 = vmatpush1.bf16.msra.mxu0 0
    %3317 = vmatprep.mubr.bf16.mxu0 0
    %3318 = vmatmul.mubr.bf16.gmra.mrb[0].mxu0 %v3148
    %v3319 = vpop.f32.mrb[0].mxu0
    %v3320 = vadd.f32 %v1416, %v3319
    %v3321 = vpop.f32.mrb[0].mxu0
    %v3322 = vpop.f32.mrb[0].mxu0
    %v3323 = vadd.f32 %v1416, %v3322
    %v3324 = vpop.f32.mrb[0].mxu0
    %3325 = vdwg.mxu0
    %s3326 = smul.addr %s2452, 8
    %s3327 = scalar_lea.vmem [#allocation2], %s3326
    %v3328 = vld [vmem:[%s3327] sm:$0xff]
    %v3329 = vld [vmem:[%s3327 + $0x8] sm:$0xff]
    %v3330 = vld [vmem:[%s3327 + $0x10] sm:$0xff]
    %v3331 = vunpack.c.l.bf16 %v3328
    %v3332 = vunpack.c.l.bf16 %v3329
    %v3333 = vunpack.c.l.bf16 %v3330
    %v3334 = vunpack.c.h.bf16 %v3328
    %v3335 = vunpack.c.h.bf16 %v3329
    %v3336 = vunpack.c.h.bf16 %v3330
    %s3337 = smul.addr %s2440, 8
    %s3338 = scalar_lea.vmem [#allocation3], %s3337
    %v3339 = vld [vmem:[%s3338] sm:$0xff]
    %v3340 = vld [vmem:[%s3338 + $0x8] sm:$0xff]
    %v3341 = vld [vmem:[%s3338 + $0x10] sm:$0xff]
    %v3342 = vunpack.c.l.bf16 %v3339
    %v3343 = vunpack.c.l.bf16 %v3340
    %v3344 = vunpack.c.l.bf16 %v3341
    %v3345 = vunpack.c.h.bf16 %v3339
    %v3346 = vunpack.c.h.bf16 %v3340
    %v3347 = vunpack.c.h.bf16 %v3341
    %v3348 = vadd.f32 %v3331, %v3193
    %v3349 = vadd.f32 %v3332, %v3195
    %v3350 = vadd.f32 %v3334, %v3197
    %v3351 = vadd.f32 %v3335, %v3199
    %v3352 = vxor.u32 %v3348, 2147483648
    %v3353 = vxor.u32 %v3349, 2147483648
    %v3354 = vxor.u32 %v3350, 2147483648
    %v3355 = vxor.u32 %v3351, 2147483648
    %v3356 = vmul.f32 %v3352, 1.442695
    %v3357 = vpow.pop %v3356
    %v3358 = vmul.f32 %v3353, 1.442695
    %v3359 = vpow.pop %v3358
    %v3360 = vmul.f32 %v3354, 1.442695
    %v3361 = vpow.pop %v3360
    %v3362 = vmul.f32 %v3355, 1.442695
    %v3363 = vpow.pop %v3362
    %v3364 = vadd.f32 %v3357, 1.0
    %v3365 = vadd.f32 %v3359, 1.0
    %v3366 = vadd.f32 %v3361, 1.0
    %v3367 = vadd.f32 %v3363, 1.0
    %v3368 = vrcp.pop %v3364
    %v3369 = vmul.f32 1.0, %v3368
    %v3370 = vrcp.pop %v3365
    %v3371 = vmul.f32 1.0, %v3370
    %v3372 = vrcp.pop %v3366
    %v3373 = vmul.f32 1.0, %v3372
    %v3374 = vrcp.pop %v3367
    %v3375 = vmul.f32 1.0, %v3374
    %v3376 = vmul.f32 %v3369, %v3236
    %v3377 = vmul.f32 %v3373, %v3239
    %v3378 = vadd.f32 %v3333, %v3376
    %v3379 = vadd.f32 %v3336, %v3377
    %v3380 = vtanh.pop %v3378
    %v3381 = vtanh.pop %v3379
    %v3382 = vsub.f32 %v3096, %v3380
    %v3383 = vsub.f32 %v3097, %v3381
    %v3384 = vmul.f32 %v3371, %v3382
    %v3385 = vmul.f32 %v3375, %v3383
    %v3386 = vadd.f32 %v3380, %v3384
    %v3387 = vadd.f32 %v3381, %v3385
    %v3388 = vadd.f32 %v3342, %v3277
    %v3389 = vadd.f32 %v3343, %v3279
    %v3390 = vadd.f32 %v3345, %v3281
    %v3391 = vadd.f32 %v3346, %v3283
    %v3392 = vxor.u32 %v3388, 2147483648
    %v3393 = vxor.u32 %v3389, 2147483648
    %v3394 = vxor.u32 %v3390, 2147483648
    %v3395 = vxor.u32 %v3391, 2147483648
    %v3396 = vmul.f32 %v3392, 1.442695
    %v3397 = vpow.pop %v3396
    %v3398 = vmul.f32 %v3393, 1.442695
    %v3399 = vpow.pop %v3398
    %v3400 = vmul.f32 %v3394, 1.442695
    %v3401 = vpow.pop %v3400
    %v3402 = vmul.f32 %v3395, 1.442695
    %v3403 = vpow.pop %v3402
    %v3404 = vadd.f32 %v3397, 1.0
    %v3405 = vadd.f32 %v3399, 1.0
    %v3406 = vadd.f32 %v3401, 1.0
    %v3407 = vadd.f32 %v3403, 1.0
    %v3408 = vrcp.pop %v3404
    %v3409 = vmul.f32 1.0, %v3408
    %v3410 = vrcp.pop %v3405
    %v3411 = vmul.f32 1.0, %v3410
    %v3412 = vrcp.pop %v3406
    %v3413 = vmul.f32 1.0, %v3412
    %v3414 = vrcp.pop %v3407
    %v3415 = vmul.f32 1.0, %v3414
    %v3416 = vmul.f32 %v3409, %v3320
    %v3417 = vmul.f32 %v3413, %v3323
    %v3418 = vadd.f32 %v3344, %v3416
    %v3419 = vadd.f32 %v3347, %v3417
    %v3420 = vtanh.pop %v3418
    %v3421 = vtanh.pop %v3419
    %v3422 = vsub.f32 %v3136, %v3420
    %v3423 = vsub.f32 %v3137, %v3421
    %v3424 = vmul.f32 %v3411, %v3422
    %v3425 = vmul.f32 %v3415, %v3423
    %v3426 = vadd.f32 %v3420, %v3424
    %v3427 = vadd.f32 %v3421, %v3425
    %v3428 = vpack.c.bf16 %v3387, %v3386
    %v3430 = vunpack.c.l.b16 %v3428
    %v3431 = vunpack.c.h.b16 %v3428
    %v3432 = vpack.c.b16 %v3430, %v3430
    %v3433 = vpack.c.b16 %v3431, %v3431
    %3436 = vst [vmem:[%s2567] sm:$0xf] %v3432
    %3437 = vst [vmem:[%s2567 + $0x8] sm:$0xf] %v3433
    %v3438 = vpack.c.bf16 %v3427, %v3426
    %v3440 = vunpack.c.l.b16 %v3438
    %v3441 = vunpack.c.h.b16 %v3438
    %v3442 = vpack.c.b16 %v3440, %v3440
    %v3443 = vpack.c.b16 %v3441, %v3441
    %3446 = vst [vmem:[%s2554 + $0x4] sm:$0xf] %v3442
    %3447 = vst [vmem:[%s2554 + $0xc] sm:$0xf] %v3443
    %3448 = vmatprep.subr.bf16.mxu0 %v1501
    %3449 = vmatpush1.bf16.msra.mxu0 %v1500
    %3450 = vmatprep.subr.bf16.mxu0 %v1504
    %3451 = vmatpush1.bf16.msra.mxu0 %v1503
    %3452 = vmatprep.subr.bf16.mxu0 %v1507
    %3453 = vmatpush1.bf16.msra.mxu0 %v1506
    %3454 = vmatprep.subr.bf16.mxu0 %v1510
    %3455 = vmatpush1.bf16.msra.mxu0 %v1509
    %3456 = vmatprep.subr.bf16.mxu0 %v1513
    %3457 = vmatpush1.bf16.msra.mxu0 %v1512
    %3458 = vmatprep.subr.bf16.mxu0 %v1516
    %3459 = vmatpush1.bf16.msra.mxu0 %v1515
    %3460 = vmatprep.subr.bf16.mxu0 %v1519
    %3461 = vmatpush1.bf16.msra.mxu0 %v1518
    %3462 = vmatprep.subr.bf16.mxu0 %v1522
    %3463 = vmatpush1.bf16.msra.mxu0 %v1521
    %3464 = vmatprep.subr.bf16.mxu0 0
    %3465 = vmatpush1.bf16.msra.mxu0 0
    %3466 = vmatprep.subr.bf16.mxu0 0
    %3467 = vmatpush1.bf16.msra.mxu0 0
    %3468 = vmatprep.subr.bf16.mxu0 0
    %3469 = vmatpush1.bf16.msra.mxu0 0
    %3470 = vmatprep.subr.bf16.mxu0 0
    %3471 = vmatpush1.bf16.msra.mxu0 0
    %3472 = vmatprep.subr.bf16.mxu0 0
    %3473 = vmatpush1.bf16.msra.mxu0 0
    %3474 = vmatprep.subr.bf16.mxu0 0
    %3475 = vmatpush1.bf16.msra.mxu0 0
    %3476 = vmatprep.subr.bf16.mxu0 0
    %3477 = vmatpush1.bf16.msra.mxu0 0
    %3478 = vmatprep.subr.bf16.mxu0 0
    %3479 = vmatpush1.bf16.msra.mxu0 0
    %3480 = vmatprep.mubr.bf16.mxu0 0
    %3481 = vmatmul.mubr.bf16.gmra.mrb[0].mxu0 %v3428
    %v3482 = vpop.f32.mrb[0].mxu0
    %v3483 = vadd.f32 %v1391, %v3482
    %v3484 = vpop.f32.mrb[0].mxu0
    %v3485 = vadd.f32 %v1395, %v3484
    %v3486 = vpop.f32.mrb[0].mxu0
    %v3487 = vadd.f32 %v1391, %v3486
    %v3488 = vpop.f32.mrb[0].mxu0
    %v3489 = vadd.f32 %v1395, %v3488
    %3490 = vdwg.mxu0
    %3491 = vmatprep.subr.bf16.mxu0 0
    %3492 = vmatpush1.bf16.msra.mxu0 %v1502
    %3493 = vmatprep.subr.bf16.mxu0 0
    %3494 = vmatpush1.bf16.msra.mxu0 %v1505
    %3495 = vmatprep.subr.bf16.mxu0 0
    %3496 = vmatpush1.bf16.msra.mxu0 %v1508
    %3497 = vmatprep.subr.bf16.mxu0 0
    %3498 = vmatpush1.bf16.msra.mxu0 %v1511
    %3499 = vmatprep.subr.bf16.mxu0 0
    %3500 = vmatpush1.bf16.msra.mxu0 %v1514
    %3501 = vmatprep.subr.bf16.mxu0 0
    %3502 = vmatpush1.bf16.msra.mxu0 %v1517
    %3503 = vmatprep.subr.bf16.mxu0 0
    %3504 = vmatpush1.bf16.msra.mxu0 %v1520
    %3505 = vmatprep.subr.bf16.mxu0 0
    %3506 = vmatpush1.bf16.msra.mxu0 %v1523
    %3507 = vmatprep.subr.bf16.mxu0 0
    %3508 = vmatpush1.bf16.msra.mxu0 0
    %3509 = vmatprep.subr.bf16.mxu0 0
    %3510 = vmatpush1.bf16.msra.mxu0 0
    %3511 = vmatprep.subr.bf16.mxu0 0
    %3512 = vmatpush1.bf16.msra.mxu0 0
    %3513 = vmatprep.subr.bf16.mxu0 0
    %3514 = vmatpush1.bf16.msra.mxu0 0
    %3515 = vmatprep.subr.bf16.mxu0 0
    %3516 = vmatpush1.bf16.msra.mxu0 0
    %3517 = vmatprep.subr.bf16.mxu0 0
    %3518 = vmatpush1.bf16.msra.mxu0 0
    %3519 = vmatprep.subr.bf16.mxu0 0
    %3520 = vmatpush1.bf16.msra.mxu0 0
    %3521 = vmatprep.subr.bf16.mxu0 0
    %3522 = vmatpush1.bf16.msra.mxu0 0
    %3523 = vmatprep.mubr.bf16.mxu0 0
    %3524 = vmatmul.mubr.bf16.gmra.mrb[0].mxu0 %v3428
    %v3525 = vpop.f32.mrb[0].mxu0
    %v3526 = vadd.f32 %v1399, %v3525
    %v3527 = vpop.f32.mrb[0].mxu0
    %v3528 = vpop.f32.mrb[0].mxu0
    %v3529 = vadd.f32 %v1399, %v3528
    %v3530 = vpop.f32.mrb[0].mxu0
    %3531 = vdwg.mxu0
    %3532 = vmatprep.subr.bf16.mxu0 %v1713
    %3533 = vmatpush1.bf16.msra.mxu0 %v1712
    %3534 = vmatprep.subr.bf16.mxu0 %v1716
    %3535 = vmatpush1.bf16.msra.mxu0 %v1715
    %3536 = vmatprep.subr.bf16.mxu0 %v1719
    %3537 = vmatpush1.bf16.msra.mxu0 %v1718
    %3538 = vmatprep.subr.bf16.mxu0 %v1722
    %3539 = vmatpush1.bf16.msra.mxu0 %v1721
    %3540 = vmatprep.subr.bf16.mxu0 %v1725
    %3541 = vmatpush1.bf16.msra.mxu0 %v1724
    %3542 = vmatprep.subr.bf16.mxu0 %v1728
    %3543 = vmatpush1.bf16.msra.mxu0 %v1727
    %3544 = vmatprep.subr.bf16.mxu0 %v1731
    %3545 = vmatpush1.bf16.msra.mxu0 %v1730
    %3546 = vmatprep.subr.bf16.mxu0 %v1734
    %3547 = vmatpush1.bf16.msra.mxu0 %v1733
    %3548 = vmatprep.subr.bf16.mxu0 0
    %3549 = vmatpush1.bf16.msra.mxu0 0
    %3550 = vmatprep.subr.bf16.mxu0 0
    %3551 = vmatpush1.bf16.msra.mxu0 0
    %3552 = vmatprep.subr.bf16.mxu0 0
    %3553 = vmatpush1.bf16.msra.mxu0 0
    %3554 = vmatprep.subr.bf16.mxu0 0
    %3555 = vmatpush1.bf16.msra.mxu0 0
    %3556 = vmatprep.subr.bf16.mxu0 0
    %3557 = vmatpush1.bf16.msra.mxu0 0
    %3558 = vmatprep.subr.bf16.mxu0 0
    %3559 = vmatpush1.bf16.msra.mxu0 0
    %3560 = vmatprep.subr.bf16.mxu0 0
    %3561 = vmatpush1.bf16.msra.mxu0 0
    %3562 = vmatprep.subr.bf16.mxu0 0
    %3563 = vmatpush1.bf16.msra.mxu0 0
    %3564 = vmatprep.mubr.bf16.mxu0 0
    %3565 = vmatmul.mubr.bf16.gmra.mrb[0].mxu0 %v3438
    %v3566 = vpop.f32.mrb[0].mxu0
    %v3567 = vadd.f32 %v1408, %v3566
    %v3568 = vpop.f32.mrb[0].mxu0
    %v3569 = vadd.f32 %v1412, %v3568
    %v3570 = vpop.f32.mrb[0].mxu0
    %v3571 = vadd.f32 %v1408, %v3570
    %v3572 = vpop.f32.mrb[0].mxu0
    %v3573 = vadd.f32 %v1412, %v3572
    %3574 = vdwg.mxu0
    %3575 = vmatprep.subr.bf16.mxu0 0
    %3576 = vmatpush1.bf16.msra.mxu0 %v1714
    %3577 = vmatprep.subr.bf16.mxu0 0
    %3578 = vmatpush1.bf16.msra.mxu0 %v1717
    %3579 = vmatprep.subr.bf16.mxu0 0
    %3580 = vmatpush1.bf16.msra.mxu0 %v1720
    %3581 = vmatprep.subr.bf16.mxu0 0
    %3582 = vmatpush1.bf16.msra.mxu0 %v1723
    %3583 = vmatprep.subr.bf16.mxu0 0
    %3584 = vmatpush1.bf16.msra.mxu0 %v1726
    %3585 = vmatprep.subr.bf16.mxu0 0
    %3586 = vmatpush1.bf16.msra.mxu0 %v1729
    %3587 = vmatprep.subr.bf16.mxu0 0
    %3588 = vmatpush1.bf16.msra.mxu0 %v1732
    %3589 = vmatprep.subr.bf16.mxu0 0
    %3590 = vmatpush1.bf16.msra.mxu0 %v1735
    %3591 = vmatprep.subr.bf16.mxu0 0
    %3592 = vmatpush1.bf16.msra.mxu0 0
    %3593 = vmatprep.subr.bf16.mxu0 0
    %3594 = vmatpush1.bf16.msra.mxu0 0
    %3595 = vmatprep.subr.bf16.mxu0 0
    %3596 = vmatpush1.bf16.msra.mxu0 0
    %3597 = vmatprep.subr.bf16.mxu0 0
    %3598 = vmatpush1.bf16.msra.mxu0 0
    %3599 = vmatprep.subr.bf16.mxu0 0
    %3600 = vmatpush1.bf16.msra.mxu0 0
    %3601 = vmatprep.subr.bf16.mxu0 0
    %3602 = vmatpush1.bf16.msra.mxu0 0
    %3603 = vmatprep.subr.bf16.mxu0 0
    %3604 = vmatpush1.bf16.msra.mxu0 0
    %3605 = vmatprep.subr.bf16.mxu0 0
    %3606 = vmatpush1.bf16.msra.mxu0 0
    %3607 = vmatprep.mubr.bf16.mxu0 0
    %3608 = vmatmul.mubr.bf16.gmra.mrb[0].mxu0 %v3438
    %v3609 = vpop.f32.mrb[0].mxu0
    %v3610 = vadd.f32 %v1416, %v3609
    %v3611 = vpop.f32.mrb[0].mxu0
    %v3612 = vpop.f32.mrb[0].mxu0
    %v3613 = vadd.f32 %v1416, %v3612
    %v3614 = vpop.f32.mrb[0].mxu0
    %3615 = vdwg.mxu0
    %s3616 = smul.addr %s2154, 8
    %s3617 = scalar_lea.vmem [#allocation2], %s3616
    %v3618 = vld [vmem:[%s3617] sm:$0xff]
    %v3619 = vld [vmem:[%s3617 + $0x8] sm:$0xff]
    %v3620 = vld [vmem:[%s3617 + $0x10] sm:$0xff]
    %v3621 = vunpack.c.l.bf16 %v3618
    %v3622 = vunpack.c.l.bf16 %v3619
    %v3623 = vunpack.c.l.bf16 %v3620
    %v3624 = vunpack.c.h.bf16 %v3618
    %v3625 = vunpack.c.h.bf16 %v3619
    %v3626 = vunpack.c.h.bf16 %v3620
    %s3627 = smul.addr %s2142, 8
    %s3628 = scalar_lea.vmem [#allocation3], %s3627
    %v3629 = vld [vmem:[%s3628] sm:$0xff]
    %v3630 = vld [vmem:[%s3628 + $0x8] sm:$0xff]
    %v3631 = vld [vmem:[%s3628 + $0x10] sm:$0xff]
    %v3632 = vunpack.c.l.bf16 %v3629
    %v3633 = vunpack.c.l.bf16 %v3630
    %v3634 = vunpack.c.l.bf16 %v3631
    %v3635 = vunpack.c.h.bf16 %v3629
    %v3636 = vunpack.c.h.bf16 %v3630
    %v3637 = vunpack.c.h.bf16 %v3631
    %v3638 = vadd.f32 %v3621, %v3483
    %v3639 = vadd.f32 %v3622, %v3485
    %v3640 = vadd.f32 %v3624, %v3487
    %v3641 = vadd.f32 %v3625, %v3489
    %v3642 = vxor.u32 %v3638, 2147483648
    %v3643 = vxor.u32 %v3639, 2147483648
    %v3644 = vxor.u32 %v3640, 2147483648
    %v3645 = vxor.u32 %v3641, 2147483648
    %v3646 = vmul.f32 %v3642, 1.442695
    %v3647 = vpow.pop %v3646
    %v3648 = vmul.f32 %v3643, 1.442695
    %v3649 = vpow.pop %v3648
    %v3650 = vmul.f32 %v3644, 1.442695
    %v3651 = vpow.pop %v3650
    %v3652 = vmul.f32 %v3645, 1.442695
    %v3653 = vpow.pop %v3652
    %v3654 = vadd.f32 %v3647, 1.0
    %v3655 = vadd.f32 %v3649, 1.0
    %v3656 = vadd.f32 %v3651, 1.0
    %v3657 = vadd.f32 %v3653, 1.0
    %v3658 = vrcp.pop %v3654
    %v3659 = vmul.f32 1.0, %v3658
    %v3660 = vrcp.pop %v3655
    %v3661 = vmul.f32 1.0, %v3660
    %v3662 = vrcp.pop %v3656
    %v3663 = vmul.f32 1.0, %v3662
    %v3664 = vrcp.pop %v3657
    %v3665 = vmul.f32 1.0, %v3664
    %v3666 = vmul.f32 %v3659, %v3526
    %v3667 = vmul.f32 %v3663, %v3529
    %v3668 = vadd.f32 %v3623, %v3666
    %v3669 = vadd.f32 %v3626, %v3667
    %v3670 = vtanh.pop %v3668
    %v3671 = vtanh.pop %v3669
    %v3672 = vsub.f32 %v3386, %v3670
    %v3673 = vsub.f32 %v3387, %v3671
    %v3674 = vmul.f32 %v3661, %v3672
    %v3675 = vmul.f32 %v3665, %v3673
    %v3676 = vadd.f32 %v3670, %v3674
    %v3677 = vadd.f32 %v3671, %v3675
    %v3678 = vadd.f32 %v3632, %v3567
    %v3679 = vadd.f32 %v3633, %v3569
    %v3680 = vadd.f32 %v3635, %v3571
    %v3681 = vadd.f32 %v3636, %v3573
    %v3682 = vxor.u32 %v3678, 2147483648
    %v3683 = vxor.u32 %v3679, 2147483648
    %v3684 = vxor.u32 %v3680, 2147483648
    %v3685 = vxor.u32 %v3681, 2147483648
    %v3686 = vmul.f32 %v3682, 1.442695
    %v3687 = vpow.pop %v3686
    %v3688 = vmul.f32 %v3683, 1.442695
    %v3689 = vpow.pop %v3688
    %v3690 = vmul.f32 %v3684, 1.442695
    %v3691 = vpow.pop %v3690
    %v3692 = vmul.f32 %v3685, 1.442695
    %v3693 = vpow.pop %v3692
    %v3694 = vadd.f32 %v3687, 1.0
    %v3695 = vadd.f32 %v3689, 1.0
    %v3696 = vadd.f32 %v3691, 1.0
    %v3697 = vadd.f32 %v3693, 1.0
    %v3698 = vrcp.pop %v3694
    %v3699 = vmul.f32 1.0, %v3698
    %v3700 = vrcp.pop %v3695
    %v3701 = vmul.f32 1.0, %v3700
    %v3702 = vrcp.pop %v3696
    %v3703 = vmul.f32 1.0, %v3702
    %v3704 = vrcp.pop %v3697
    %v3705 = vmul.f32 1.0, %v3704
    %v3706 = vmul.f32 %v3699, %v3610
    %v3707 = vmul.f32 %v3703, %v3613
    %v3708 = vadd.f32 %v3634, %v3706
    %v3709 = vadd.f32 %v3637, %v3707
    %v3710 = vtanh.pop %v3708
    %v3711 = vtanh.pop %v3709
    %v3712 = vsub.f32 %v3426, %v3710
    %v3713 = vsub.f32 %v3427, %v3711
    %v3714 = vmul.f32 %v3701, %v3712
    %v3715 = vmul.f32 %v3705, %v3713
    %v3716 = vadd.f32 %v3710, %v3714
    %v3717 = vadd.f32 %v3711, %v3715
    %v3718 = vpack.c.bf16 %v3677, %v3676
    %v3720 = vunpack.c.l.b16 %v3718
    %v3721 = vunpack.c.h.b16 %v3718
    %v3722 = vpack.c.b16 %v3720, %v3720
    %v3723 = vpack.c.b16 %v3721, %v3721
    %3726 = vst [vmem:[%s2269] sm:$0xf] %v3722
    %3727 = vst [vmem:[%s2269 + $0x8] sm:$0xf] %v3723
    %v3728 = vpack.c.bf16 %v3717, %v3716
    %v3730 = vunpack.c.l.b16 %v3728
    %v3731 = vunpack.c.h.b16 %v3728
    %v3732 = vpack.c.b16 %v3730, %v3730
    %v3733 = vpack.c.b16 %v3731, %v3731
    %3736 = vst [vmem:[%s2256 + $0x4] sm:$0xf] %v3732
    %3737 = vst [vmem:[%s2256 + $0xc] sm:$0xf] %v3733
    %3738 = vmatprep.subr.bf16.mxu0 %v1501
    %3739 = vmatpush1.bf16.msra.mxu0 %v1500
    %3740 = vmatprep.subr.bf16.mxu0 %v1504
    %3741 = vmatpush1.bf16.msra.mxu0 %v1503
    %3742 = vmatprep.subr.bf16.mxu0 %v1507
    %3743 = vmatpush1.bf16.msra.mxu0 %v1506
    %3744 = vmatprep.subr.bf16.mxu0 %v1510
    %3745 = vmatpush1.bf16.msra.mxu0 %v1509
    %3746 = vmatprep.subr.bf16.mxu0 %v1513
    %3747 = vmatpush1.bf16.msra.mxu0 %v1512
    %3748 = vmatprep.subr.bf16.mxu0 %v1516
    %3749 = vmatpush1.bf16.msra.mxu0 %v1515
    %3750 = vmatprep.subr.bf16.mxu0 %v1519
    %3751 = vmatpush1.bf16.msra.mxu0 %v1518
    %3752 = vmatprep.subr.bf16.mxu0 %v1522
    %3753 = vmatpush1.bf16.msra.mxu0 %v1521
    %3754 = vmatprep.subr.bf16.mxu0 0
    %3755 = vmatpush1.bf16.msra.mxu0 0
    %3756 = vmatprep.subr.bf16.mxu0 0
    %3757 = vmatpush1.bf16.msra.mxu0 0
    %3758 = vmatprep.subr.bf16.mxu0 0
    %3759 = vmatpush1.bf16.msra.mxu0 0
    %3760 = vmatprep.subr.bf16.mxu0 0
    %3761 = vmatpush1.bf16.msra.mxu0 0
    %3762 = vmatprep.subr.bf16.mxu0 0
    %3763 = vmatpush1.bf16.msra.mxu0 0
    %3764 = vmatprep.subr.bf16.mxu0 0
    %3765 = vmatpush1.bf16.msra.mxu0 0
    %3766 = vmatprep.subr.bf16.mxu0 0
    %3767 = vmatpush1.bf16.msra.mxu0 0
    %3768 = vmatprep.subr.bf16.mxu0 0
    %3769 = vmatpush1.bf16.msra.mxu0 0
    %3770 = vmatprep.mubr.bf16.mxu0 0
    %3771 = vmatmul.mubr.bf16.gmra.mrb[0].mxu0 %v3718
    %v3772 = vpop.f32.mrb[0].mxu0
    %v3773 = vadd.f32 %v1391, %v3772
    %v3774 = vpop.f32.mrb[0].mxu0
    %v3775 = vadd.f32 %v1395, %v3774
    %v3776 = vpop.f32.mrb[0].mxu0
    %v3777 = vadd.f32 %v1391, %v3776
    %v3778 = vpop.f32.mrb[0].mxu0
    %v3779 = vadd.f32 %v1395, %v3778
    %3780 = vdwg.mxu0
    %3781 = vmatprep.subr.bf16.mxu0 0
    %3782 = vmatpush1.bf16.msra.mxu0 %v1502
    %3783 = vmatprep.subr.bf16.mxu0 0
    %3784 = vmatpush1.bf16.msra.mxu0 %v1505
    %3785 = vmatprep.subr.bf16.mxu0 0
    %3786 = vmatpush1.bf16.msra.mxu0 %v1508
    %3787 = vmatprep.subr.bf16.mxu0 0
    %3788 = vmatpush1.bf16.msra.mxu0 %v1511
    %3789 = vmatprep.subr.bf16.mxu0 0
    %3790 = vmatpush1.bf16.msra.mxu0 %v1514
    %3791 = vmatprep.subr.bf16.mxu0 0
    %3792 = vmatpush1.bf16.msra.mxu0 %v1517
    %3793 = vmatprep.subr.bf16.mxu0 0
    %3794 = vmatpush1.bf16.msra.mxu0 %v1520
    %3795 = vmatprep.subr.bf16.mxu0 0
    %3796 = vmatpush1.bf16.msra.mxu0 %v1523
    %3797 = vmatprep.subr.bf16.mxu0 0
    %3798 = vmatpush1.bf16.msra.mxu0 0
    %3799 = vmatprep.subr.bf16.mxu0 0
    %3800 = vmatpush1.bf16.msra.mxu0 0
    %3801 = vmatprep.subr.bf16.mxu0 0
    %3802 = vmatpush1.bf16.msra.mxu0 0
    %3803 = vmatprep.subr.bf16.mxu0 0
    %3804 = vmatpush1.bf16.msra.mxu0 0
    %3805 = vmatprep.subr.bf16.mxu0 0
    %3806 = vmatpush1.bf16.msra.mxu0 0
    %3807 = vmatprep.subr.bf16.mxu0 0
    %3808 = vmatpush1.bf16.msra.mxu0 0
    %3809 = vmatprep.subr.bf16.mxu0 0
    %3810 = vmatpush1.bf16.msra.mxu0 0
    %3811 = vmatprep.subr.bf16.mxu0 0
    %3812 = vmatpush1.bf16.msra.mxu0 0
    %3813 = vmatprep.mubr.bf16.mxu0 0
    %3814 = vmatmul.mubr.bf16.gmra.mrb[0].mxu0 %v3718
    %v3815 = vpop.f32.mrb[0].mxu0
    %v3816 = vadd.f32 %v1399, %v3815
    %v3817 = vpop.f32.mrb[0].mxu0
    %v3818 = vpop.f32.mrb[0].mxu0
    %v3819 = vadd.f32 %v1399, %v3818
    %v3820 = vpop.f32.mrb[0].mxu0
    %3821 = vdwg.mxu0
    %3822 = vmatprep.subr.bf16.mxu0 %v1713
    %3823 = vmatpush1.bf16.msra.mxu0 %v1712
    %3824 = vmatprep.subr.bf16.mxu0 %v1716
    %3825 = vmatpush1.bf16.msra.mxu0 %v1715
    %3826 = vmatprep.subr.bf16.mxu0 %v1719
    %3827 = vmatpush1.bf16.msra.mxu0 %v1718
    %3828 = vmatprep.subr.bf16.mxu0 %v1722
    %3829 = vmatpush1.bf16.msra.mxu0 %v1721
    %3830 = vmatprep.subr.bf16.mxu0 %v1725
    %3831 = vmatpush1.bf16.msra.mxu0 %v1724
    %3832 = vmatprep.subr.bf16.mxu0 %v1728
    %3833 = vmatpush1.bf16.msra.mxu0 %v1727
    %3834 = vmatprep.subr.bf16.mxu0 %v1731
    %3835 = vmatpush1.bf16.msra.mxu0 %v1730
    %3836 = vmatprep.subr.bf16.mxu0 %v1734
    %3837 = vmatpush1.bf16.msra.mxu0 %v1733
    %3838 = vmatprep.subr.bf16.mxu0 0
    %3839 = vmatpush1.bf16.msra.mxu0 0
    %3840 = vmatprep.subr.bf16.mxu0 0
    %3841 = vmatpush1.bf16.msra.mxu0 0
    %3842 = vmatprep.subr.bf16.mxu0 0
    %3843 = vmatpush1.bf16.msra.mxu0 0
    %3844 = vmatprep.subr.bf16.mxu0 0
    %3845 = vmatpush1.bf16.msra.mxu0 0
    %3846 = vmatprep.subr.bf16.mxu0 0
    %3847 = vmatpush1.bf16.msra.mxu0 0
    %3848 = vmatprep.subr.bf16.mxu0 0
    %3849 = vmatpush1.bf16.msra.mxu0 0
    %3850 = vmatprep.subr.bf16.mxu0 0
    %3851 = vmatpush1.bf16.msra.mxu0 0
    %3852 = vmatprep.subr.bf16.mxu0 0
    %3853 = vmatpush1.bf16.msra.mxu0 0
    %3854 = vmatprep.mubr.bf16.mxu0 0
    %3855 = vmatmul.mubr.bf16.gmra.mrb[0].mxu0 %v3728
    %v3856 = vpop.f32.mrb[0].mxu0
    %v3857 = vadd.f32 %v1408, %v3856
    %v3858 = vpop.f32.mrb[0].mxu0
    %v3859 = vadd.f32 %v1412, %v3858
    %v3860 = vpop.f32.mrb[0].mxu0
    %v3861 = vadd.f32 %v1408, %v3860
    %v3862 = vpop.f32.mrb[0].mxu0
    %v3863 = vadd.f32 %v1412, %v3862
    %3864 = vdwg.mxu0
    %3865 = vmatprep.subr.bf16.mxu0 0
    %3866 = vmatpush1.bf16.msra.mxu0 %v1714
    %3867 = vmatprep.subr.bf16.mxu0 0
    %3868 = vmatpush1.bf16.msra.mxu0 %v1717
    %3869 = vmatprep.subr.bf16.mxu0 0
    %3870 = vmatpush1.bf16.msra.mxu0 %v1720
    %3871 = vmatprep.subr.bf16.mxu0 0
    %3872 = vmatpush1.bf16.msra.mxu0 %v1723
    %3873 = vmatprep.subr.bf16.mxu0 0
    %3874 = vmatpush1.bf16.msra.mxu0 %v1726
    %3875 = vmatprep.subr.bf16.mxu0 0
    %3876 = vmatpush1.bf16.msra.mxu0 %v1729
    %3877 = vmatprep.subr.bf16.mxu0 0
    %3878 = vmatpush1.bf16.msra.mxu0 %v1732
    %3879 = vmatprep.subr.bf16.mxu0 0
    %3880 = vmatpush1.bf16.msra.mxu0 %v1735
    %3881 = vmatprep.subr.bf16.mxu0 0
    %3882 = vmatpush1.bf16.msra.mxu0 0
    %3883 = vmatprep.subr.bf16.mxu0 0
    %3884 = vmatpush1.bf16.msra.mxu0 0
    %3885 = vmatprep.subr.bf16.mxu0 0
    %3886 = vmatpush1.bf16.msra.mxu0 0
    %3887 = vmatprep.subr.bf16.mxu0 0
    %3888 = vmatpush1.bf16.msra.mxu0 0
    %3889 = vmatprep.subr.bf16.mxu0 0
    %3890 = vmatpush1.bf16.msra.mxu0 0
    %3891 = vmatprep.subr.bf16.mxu0 0
    %3892 = vmatpush1.bf16.msra.mxu0 0
    %3893 = vmatprep.subr.bf16.mxu0 0
    %3894 = vmatpush1.bf16.msra.mxu0 0
    %3895 = vmatprep.subr.bf16.mxu0 0
    %3896 = vmatpush1.bf16.msra.mxu0 0
    %3897 = vmatprep.mubr.bf16.mxu0 0
    %3898 = vmatmul.mubr.bf16.gmra.mrb[0].mxu0 %v3728
    %v3899 = vpop.f32.mrb[0].mxu0
    %v3900 = vadd.f32 %v1416, %v3899
    %v3901 = vpop.f32.mrb[0].mxu0
    %v3902 = vpop.f32.mrb[0].mxu0
    %v3903 = vadd.f32 %v1416, %v3902
    %v3904 = vpop.f32.mrb[0].mxu0
    %3905 = vdwg.mxu0
    %s3906 = smul.addr %s1856, 8
    %s3907 = scalar_lea.vmem [#allocation2], %s3906
    %v3908 = vld [vmem:[%s3907] sm:$0xff]
    %v3909 = vld [vmem:[%s3907 + $0x8] sm:$0xff]
    %v3910 = vld [vmem:[%s3907 + $0x10] sm:$0xff]
    %v3911 = vunpack.c.l.bf16 %v3908
    %v3912 = vunpack.c.l.bf16 %v3909
    %v3913 = vunpack.c.l.bf16 %v3910
    %v3914 = vunpack.c.h.bf16 %v3908
    %v3915 = vunpack.c.h.bf16 %v3909
    %v3916 = vunpack.c.h.bf16 %v3910
    %s3917 = smul.addr %s1844, 8
    %s3918 = scalar_lea.vmem [#allocation3], %s3917
    %v3919 = vld [vmem:[%s3918] sm:$0xff]
    %v3920 = vld [vmem:[%s3918 + $0x8] sm:$0xff]
    %v3921 = vld [vmem:[%s3918 + $0x10] sm:$0xff]
    %v3922 = vunpack.c.l.bf16 %v3919
    %v3923 = vunpack.c.l.bf16 %v3920
    %v3924 = vunpack.c.l.bf16 %v3921
    %v3925 = vunpack.c.h.bf16 %v3919
    %v3926 = vunpack.c.h.bf16 %v3920
    %v3927 = vunpack.c.h.bf16 %v3921
    %v3928 = vadd.f32 %v3911, %v3773
    %v3929 = vadd.f32 %v3912, %v3775
    %v3930 = vadd.f32 %v3914, %v3777
    %v3931 = vadd.f32 %v3915, %v3779
    %v3932 = vxor.u32 %v3928, 2147483648
    %v3933 = vxor.u32 %v3929, 2147483648
    %v3934 = vxor.u32 %v3930, 2147483648
    %v3935 = vxor.u32 %v3931, 2147483648
    %v3936 = vmul.f32 %v3932, 1.442695
    %v3937 = vpow.pop %v3936
    %v3938 = vmul.f32 %v3933, 1.442695
    %v3939 = vpow.pop %v3938
    %v3940 = vmul.f32 %v3934, 1.442695
    %v3941 = vpow.pop %v3940
    %v3942 = vmul.f32 %v3935, 1.442695
    %v3943 = vpow.pop %v3942
    %v3944 = vadd.f32 %v3937, 1.0
    %v3945 = vadd.f32 %v3939, 1.0
    %v3946 = vadd.f32 %v3941, 1.0
    %v3947 = vadd.f32 %v3943, 1.0
    %v3948 = vrcp.pop %v3944
    %v3949 = vmul.f32 1.0, %v3948
    %v3950 = vrcp.pop %v3945
    %v3951 = vmul.f32 1.0, %v3950
    %v3952 = vrcp.pop %v3946
    %v3953 = vmul.f32 1.0, %v3952
    %v3954 = vrcp.pop %v3947
    %v3955 = vmul.f32 1.0, %v3954
    %v3956 = vmul.f32 %v3949, %v3816
    %v3957 = vmul.f32 %v3953, %v3819
    %v3958 = vadd.f32 %v3913, %v3956
    %v3959 = vadd.f32 %v3916, %v3957
    %v3960 = vtanh.pop %v3958
    %v3961 = vtanh.pop %v3959
    %v3962 = vsub.f32 %v3676, %v3960
    %v3963 = vsub.f32 %v3677, %v3961
    %v3964 = vmul.f32 %v3951, %v3962
    %v3965 = vmul.f32 %v3955, %v3963
    %v3966 = vadd.f32 %v3960, %v3964
    %v3967 = vadd.f32 %v3961, %v3965
    %v3968 = vadd.f32 %v3922, %v3857
    %v3969 = vadd.f32 %v3923, %v3859
    %v3970 = vadd.f32 %v3925, %v3861
    %v3971 = vadd.f32 %v3926, %v3863
    %v3972 = vxor.u32 %v3968, 2147483648
    %v3973 = vxor.u32 %v3969, 2147483648
    %v3974 = vxor.u32 %v3970, 2147483648
    %v3975 = vxor.u32 %v3971, 2147483648
    %v3976 = vmul.f32 %v3972, 1.442695
    %v3977 = vpow.pop %v3976
    %v3978 = vmul.f32 %v3973, 1.442695
    %v3979 = vpow.pop %v3978
    %v3980 = vmul.f32 %v3974, 1.442695
    %v3981 = vpow.pop %v3980
    %v3982 = vmul.f32 %v3975, 1.442695
    %v3983 = vpow.pop %v3982
    %v3984 = vadd.f32 %v3977, 1.0
    %v3985 = vadd.f32 %v3979, 1.0
    %v3986 = vadd.f32 %v3981, 1.0
    %v3987 = vadd.f32 %v3983, 1.0
    %v3988 = vrcp.pop %v3984
    %v3989 = vmul.f32 1.0, %v3988
    %v3990 = vrcp.pop %v3985
    %v3991 = vmul.f32 1.0, %v3990
    %v3992 = vrcp.pop %v3986
    %v3993 = vmul.f32 1.0, %v3992
    %v3994 = vrcp.pop %v3987
    %v3995 = vmul.f32 1.0, %v3994
    %v3996 = vmul.f32 %v3989, %v3900
    %v3997 = vmul.f32 %v3993, %v3903
    %v3998 = vadd.f32 %v3924, %v3996
    %v3999 = vadd.f32 %v3927, %v3997
    %v4000 = vtanh.pop %v3998
    %v4001 = vtanh.pop %v3999
    %v4002 = vsub.f32 %v3716, %v4000
    %v4003 = vsub.f32 %v3717, %v4001
    %v4004 = vmul.f32 %v3991, %v4002
    %v4005 = vmul.f32 %v3995, %v4003
    %v4006 = vadd.f32 %v4000, %v4004
    %v4007 = vadd.f32 %v4001, %v4005
    %v4008 = vpack.c.bf16 %v3967, %v3966
    %v4010 = vunpack.c.l.b16 %v4008
    %v4011 = vunpack.c.h.b16 %v4008
    %v4012 = vpack.c.b16 %v4010, %v4010
    %v4013 = vpack.c.b16 %v4011, %v4011
    %4016 = vst [vmem:[%s1971] sm:$0xf] %v4012
    %4017 = vst [vmem:[%s1971 + $0x8] sm:$0xf] %v4013
    %v4018 = vpack.c.bf16 %v4007, %v4006
    %v4020 = vunpack.c.l.b16 %v4018
    %v4021 = vunpack.c.h.b16 %v4018
    %v4022 = vpack.c.b16 %v4020, %v4020
    %v4023 = vpack.c.b16 %v4021, %v4021
    %4026 = vst [vmem:[%s1958 + $0x4] sm:$0xf] %v4022
    %4027 = vst [vmem:[%s1958 + $0xc] sm:$0xf] %v4023
    %4028 = vst [vmem:[%s10] sm:$0xff] %v3966
    %4029 = vst [vmem:[%s10 + $0x10] sm:$0xff] %v3967
    %4030 = vst [vmem:[%s10 + $0x8] sm:$0xff] %v4006
    %4031 = vst [vmem:[%s10 + $0x18] sm:$0xff] %v4007
    // Predicated region
    $region38: #{rnn_forward.3} parent=1 // pred_check
      _
    $region39: #{rnn_forward.3} parent=1 // pred_check_branch
      %4033 = sbr.rel (0) target = $region41
    $region40: #{rnn_forward.3} parent=1 // pred_region
      %s4035 = ssub.s32 2048, 2048
      %4036 = vsyncadd [#allocation5], %s4035
      %s4037 = sshll.u32 [#allocation4], 4
      %s4038 = int_to_ptr.vmem [resolvable:$true] %s4037
      %4043 = dma.vmem_to_hbm [thread:$0]  %s4038, 2048, %s9, [#allocation5], 128, 128, 8
    $region41: #{rnn_forward.3} parent=1 // pred_fallthru
      _
    // Predicated region
    $region42: #{rnn_forward.3} parent=1 // pred_check
      _
    $region43: #{rnn_forward.3} parent=1 // pred_check_branch
      %4045 = sbr.rel (0) target = $region45
    $region44: #{rnn_forward.3} parent=1 // pred_region
      _
    $region45: #{rnn_forward.3} parent=1 // pred_fallthru
      _
    // Predicated region
    $region46: #{rnn_forward.3} parent=1 // pred_check
      _
    $region47: #{rnn_forward.3} parent=1 // pred_check_branch
      %4047 = sbr.rel (0) target = $region49
    $region48: #{rnn_forward.3} parent=1 // pred_region
      %4048 = dma.done [#allocation5], 2048
    $region49: #{rnn_forward.3} parent=1 // pred_fallthru
      _
    // Predicated region
    $region50: #{rnn_forward.3} parent=1 // pred_check
      _
    $region51: #{rnn_forward.3} parent=1 // pred_check_branch
      %4050 = sbr.rel (0) target = $region53
    $region52: #{rnn_forward.3} parent=1 // pred_region
      _
    $region53: #{rnn_forward.3} parent=1 // pred_fallthru
      _
    %4051 = vsyncpa [#allocation5], 1

</llo_original>
